<compile_context>
chip_gen: v5e
topology: v5e:2x2
jax: 0.10.0
libtpu: 0.0.40
codegen_flags: <defaults>
</compile_context>

<pallas_src>
import functools
import math

import numpy as np
import jax
import jax.numpy as jnp
from jax import lax
from jax.experimental import pallas as pl
from jax.experimental.pallas import tpu as pltpu

BN_EPS = 1e-5


# ----------------------------------------------------------------------------- #
#  Pallas kernel 1: fused GEMM
#    out = epilogue(A @ Bw + shift)   (BN scale folded into Bw columns, bf16 in,
#                                      f32 accumulate)
#    epilogue: optional residual add either BEFORE the ReLU (Res3DBlock:
#    relu(res+skip)) or AFTER it (Upsample3DBlock: relu(deconv)+skip); ReLU applied
#    to the first n_relu output columns only (lets the 1x1 skip conv ride in the
#    same GEMM as extra non-relu'd columns).
# ----------------------------------------------------------------------------- #
def _gemm_kernel(n_relu, n_out, add_before_relu, has_add, *refs):
    if has_add:
        a_ref, b_ref, shift_ref, add_ref, o_ref = refs
    else:
        a_ref, b_ref, shift_ref, o_ref = refs
    acc = jnp.dot(a_ref[...], b_ref[...], preferred_element_type=jnp.float32)
    acc = acc + shift_ref[...]
    if has_add and add_before_relu:
        acc = acc + add_ref[...].astype(jnp.float32)
    if n_relu >= n_out:
        acc = jnp.maximum(acc, 0.0)
    elif n_relu > 0:
        col = lax.broadcasted_iota(jnp.int32, acc.shape, 1)
        acc = jnp.where(col < n_relu, jnp.maximum(acc, 0.0), acc)
    if has_add and not add_before_relu:
        acc = acc + add_ref[...].astype(jnp.float32)
    o_ref[...] = acc.astype(o_ref.dtype)


def _choose_tm(M):
    """Row tile: largest multiple-of-8 divisor of M that is <= 512, preferring a
    choice that leaves >= 2 grid steps so both v7x TensorCores get work."""
    if M <= 8:
        return M
    divs = [t for t in range(8, min(M, 512) + 1, 8) if M % t == 0]
    if not divs:
        return M
    two_plus = [t for t in divs if M // t >= 2]
    return max(two_plus) if two_plus else max(divs)


def fused_gemm(a, b_bf16, shift, add=None, n_relu=0, add_before_relu=True,
               out_dtype=jnp.bfloat16):
    """a: (M, K), b_bf16: (K, N) bf16 (BN scale folded), shift: (N,) f32,
    add: optional (M, N) residual."""
    M, K = a.shape
    K2, N = b_bf16.shape
    assert K == K2
    tm = _choose_tm(M)
    grid = (M // tm,)

    a = a.astype(jnp.bfloat16)
    shift2 = shift.astype(jnp.float32).reshape(1, N)

    in_specs = [
        pl.BlockSpec((tm, K), lambda i: (i, 0)),
        pl.BlockSpec((K, N), lambda i: (0, 0)),
        pl.BlockSpec((1, N), lambda i: (0, 0)),
    ]
    args = [a, b_bf16, shift2]
    if add is not None:
        in_specs.append(pl.BlockSpec((tm, N), lambda i: (i, 0)))
        args.append(add)

    kern = functools.partial(_gemm_kernel, int(n_relu), int(N),
                             bool(add_before_relu), add is not None)
    return pl.pallas_call(
        kern,
        out_shape=jax.ShapeDtypeStruct((M, N), out_dtype),
        grid=grid,
        in_specs=in_specs,
        out_specs=pl.BlockSpec((tm, N), lambda i: (i, 0)),
        compiler_params=pltpu.CompilerParams(dimension_semantics=("parallel",)),
    )(*args)


# ----------------------------------------------------------------------------- #
#  Pallas kernel 2: batched pairwise-attention GEMM over the 6 skeleton edges
#    out[e] = mult[e] * (a[e] @ dequant(q[e]) + bias[e])
#  The Conv3d(1,1,33,pad=16) is a Toeplitz (V,V) matrix, stored int8; its per-edge
#  scale is pre-folded into a[e] (bf16), the bias lives in SMEM, and the per-edge
#  elementwise probability multiply is fused into the epilogue.
# ----------------------------------------------------------------------------- #
def _pairwise_kernel(a_ref, q_ref, mult_ref, bias_ref, o_ref):
    e = pl.program_id(0)
    bmat = q_ref[...].astype(jnp.float32).astype(jnp.bfloat16)
    acc = jnp.dot(a_ref[...], bmat, preferred_element_type=jnp.float32)
    o_ref[...] = mult_ref[...].astype(jnp.float32) * (acc + bias_ref[e])


def batched_pairwise(a, mult, qmats, scales, biases):
    """a, mult: (E, B, V) f32; qmats: (E, V, V) int8; scales, biases: (E,) f32.
    Returns (E, B, V) f32 = mult * (a @ (scale * qmat) + bias)."""
    E, Bt, V = a.shape
    a_scaled = (a * scales[:, None, None]).astype(jnp.bfloat16)
    mult_bf = mult.astype(jnp.bfloat16)
    return pl.pallas_call(
        _pairwise_kernel,
        out_shape=jax.ShapeDtypeStruct((E, Bt, V), jnp.float32),
        grid=(E,),
        in_specs=[
            pl.BlockSpec((None, Bt, V), lambda e: (e, 0, 0)),
            pl.BlockSpec((None, V, V), lambda e: (e, 0, 0)),
            pl.BlockSpec((None, Bt, V), lambda e: (e, 0, 0)),
            pl.BlockSpec(memory_space=pltpu.MemorySpace.SMEM),
        ],
        out_specs=pl.BlockSpec((None, Bt, V), lambda e: (e, 0, 0)),
        compiler_params=pltpu.CompilerParams(dimension_semantics=("parallel",)),
    )(a_scaled, qmats, mult_bf, biases)


# ----------------------------------------------------------------------------- #
#  Channels-last building blocks (all heavy compute routed through fused_gemm)
# ----------------------------------------------------------------------------- #
def _bn_fold(bn, bias):
    scale = bn['gamma'] / jnp.sqrt(bn['var'] + BN_EPS)
    shift = bn['beta'] - bn['mean'] * scale + bias * scale
    return scale, shift


def _im2col_3x3(x_cl):
    """(B, D, H, W, C) channels-last -> (B*D*H*W, 27*C) bf16, columns ordered (tap, cin)."""
    B, D, H, W, C = x_cl.shape
    xp = jnp.pad(x_cl.astype(jnp.bfloat16), ((0, 0), (1, 1), (1, 1), (1, 1), (0, 0)))
    taps = [xp[:, kd:kd + D, kh:kh + H, kw:kw + W, :]
            for kd in range(3) for kh in range(3) for kw in range(3)]
    return jnp.concatenate(taps, axis=-1).reshape(B * D * H * W, 27 * C)


def _fold_w3(w, bias, bn):
    """w: (cout, cin, 3, 3, 3) -> (27*cin, cout) f32 with BN scale folded, plus shift."""
    cout, cin = w.shape[0], w.shape[1]
    wm = w.transpose(2, 3, 4, 1, 0).reshape(27 * cin, cout)   # rows = (tap, cin)
    scale, shift = _bn_fold(bn, bias)
    return wm * scale[None, :], shift


def res3d_block(x_cl, p, out_dtype=jnp.bfloat16):
    """Res3DBlock: relu(conv2(bn2) applied to relu(conv1(bn1)) + skip), channels-last."""
    B, D, H, W, C = x_cl.shape
    cout = p['w1'].shape[0]
    M = B * D * H * W

    cols = _im2col_3x3(x_cl)
    w1m, shift1 = _fold_w3(p['w1'], p['b1'], p['bn1'])

    if 'wskip' in p:
        # Fuse the 1x1 skip conv into the same GEMM: embed it in the centre-tap
        # (kd=kh=kw=1 -> tap index 13) rows, concatenate along N, ReLU only on the
        # first cout columns.
        wsk = p['wskip'].reshape(cout, C).T                               # (C, cout)
        ssk, shsk = _bn_fold(p['bnskip'], p['bskip'])
        wsk = wsk * ssk[None, :]
        wsk_full = jnp.zeros((27 * C, cout), jnp.float32).at[13 * C:14 * C, :].set(wsk)
        wm = jnp.concatenate([w1m, wsk_full], axis=1).astype(jnp.bfloat16)  # (27C, 2*cout)
        shift = jnp.concatenate([shift1, shsk])
        both = fused_gemm(cols, wm, shift, n_relu=cout, out_dtype=jnp.bfloat16)
        t = both[:, :cout]
        skip = both[:, cout:]
    else:
        t = fused_gemm(cols, w1m.astype(jnp.bfloat16), shift1,
                       n_relu=cout, out_dtype=jnp.bfloat16)
        skip = x_cl.reshape(M, C)          # identity skip (cin == cout)

    t_cl = t.reshape(B, D, H, W, cout)
    cols2 = _im2col_3x3(t_cl)
    w2m, shift2 = _fold_w3(p['w2'], p['b2'], p['bn2'])
    out = fused_gemm(cols2, w2m.astype(jnp.bfloat16), shift2, add=skip,
                     n_relu=cout, add_before_relu=True, out_dtype=out_dtype)
    return out.reshape(B, D, H, W, cout)


def upsample3d_block(x_cl, p, skip_cl=None, out_dtype=jnp.bfloat16):
    """ConvTranspose3d(k=2, s=2) -> BN -> ReLU (+ optional fused skip add after the
    ReLU), channels-last."""
    B, D, H, W, C = x_cl.shape
    cin, cout = p['w'].shape[0], p['w'].shape[1]
    rows = x_cl.reshape(B * D * H * W, cin)
    # columns ordered (kd, kh, kw, cout) so cout stays the lane-minor dim.
    wm = p['w'].transpose(0, 2, 3, 4, 1).reshape(cin, 8 * cout)
    scale_c, shift_c = _bn_fold(p['bn'], p['b'])
    wm = (wm * jnp.tile(scale_c, 8)[None, :]).astype(jnp.bfloat16)
    shift = jnp.tile(shift_c, 8)

    add = None
    if skip_cl is not None:
        # present the fine-resolution skip in the (M, 8*cout) pixel-shuffle layout
        add = (skip_cl.reshape(B, D, 2, H, 2, W, 2, cout)
               .transpose(0, 1, 3, 5, 2, 4, 6, 7)
               .reshape(B * D * H * W, 8 * cout))

    out = fused_gemm(rows, wm, shift, add=add, n_relu=8 * cout,
                     add_before_relu=False, out_dtype=out_dtype)       # (M, 8*cout)
    out = out.reshape(B, D, H, W, 2, 2, 2, cout)
    out = out.transpose(0, 1, 4, 2, 5, 3, 6, 7).reshape(B, 2 * D, 2 * H, 2 * W, cout)
    return out


def maxpool2(x_cl):
    B, D, H, W, C = x_cl.shape
    return x_cl.reshape(B, D // 2, 2, H // 2, 2, W // 2, 2, C).max(axis=(2, 4, 6))


# ----------------------------------------------------------------------------- #
#  Skeleton utilities
# ----------------------------------------------------------------------------- #
def make_skeleton():
    children = {6: [4, 5], 4: [2], 5: [3], 2: [0], 3: [1], 0: [], 1: []}
    return [dict(idx=i, name=f"joint{i}", children=children[i]) for i in range(7)]


def sort_skeleton_by_level(skeleton, root=6):
    n = len(skeleton)
    level = np.zeros(n)
    queue = [skeleton[root]]
    while queue:
        cur = queue.pop(0)
        for child in cur['children']:
            level[child] = level[cur['idx']] + 1
            queue.append(skeleton[child])
    asc = [skeleton[i] for i in np.argsort(level)]
    desc = [skeleton[i] for i in np.argsort(level)[::-1]]
    return asc, desc


def build_pairwise_matrix(kernel_np, D, H, W):
    """Toeplitz-style (V, V) matrix equivalent to Conv3d(1,1,33,pad=16)."""
    def off(n):
        o = np.arange(n)[:, None] - np.arange(n)[None, :] + 16   # o[q, p] = q - p + 16
        valid = (o >= 0) & (o < 33)
        return np.clip(o, 0, 32), valid
    oD, vD = off(D)
    oH, vH = off(H)
    oW, vW = off(W)
    Bm = kernel_np[oD[:, None, None, :, None, None],
                   oH[None, :, None, None, :, None],
                   oW[None, None, :, None, None, :]]
    valid = (vD[:, None, None, :, None, None]
             & vH[None, :, None, None, :, None]
             & vW[None, None, :, None, None, :])
    Bm = np.where(valid, Bm, 0.0)
    return Bm.reshape(D * H * W, D * H * W).astype(np.float32)


# ----------------------------------------------------------------------------- #
#  Parameter construction (deterministic, synthetic)
# ----------------------------------------------------------------------------- #
def make_bn(c):
    return dict(gamma=jnp.ones((c,), jnp.float32), beta=jnp.zeros((c,), jnp.float32),
                mean=jnp.zeros((c,), jnp.float32), var=jnp.ones((c,), jnp.float32))


def xavier_normal(key, shape, fan_in, fan_out):
    std = math.sqrt(2.0 / (fan_in + fan_out))
    return std * jax.random.normal(key, shape, jnp.float32)


def make_res_params(key, cin, cout):
    k1, k2, k3 = jax.random.split(key, 3)
    p = dict(
        w1=xavier_normal(k1, (cout, cin, 3, 3, 3), cin * 27, cout * 27),
        b1=jnp.zeros((cout,), jnp.float32), bn1=make_bn(cout),
        w2=xavier_normal(k2, (cout, cout, 3, 3, 3), cout * 27, cout * 27),
        b2=jnp.zeros((cout,), jnp.float32), bn2=make_bn(cout),
    )
    if cin != cout:
        p['wskip'] = xavier_normal(k3, (cout, cin, 1, 1, 1), cin, cout)
        p['bskip'] = jnp.zeros((cout,), jnp.float32)
        p['bnskip'] = make_bn(cout)
    return p


def make_up_params(key, cin, cout):
    w = xavier_normal(key, (cin, cout, 2, 2, 2), cout * 8, cin * 8)
    return dict(w=w, b=jnp.zeros((cout,), jnp.float32), bn=make_bn(cout))


def make_pairwise_params(key, skeleton, D, H, W):
    """Canonical edge list + int8 Toeplitz matrices + per-edge scale/bias."""
    edge_list = []
    for node in skeleton:
        for child in node['children']:
            edge_list.append((node['idx'], child))
    bound = 1.0 / math.sqrt(33 ** 3)
    qmats, scales, biases = [], [], []
    for _ in edge_list:
        key, kw_key, b_key = jax.random.split(key, 3)
        kernel = jax.random.uniform(kw_key, (33, 33, 33), jnp.float32, -bound, bound)
        bias = float(jax.random.uniform(b_key, (), jnp.float32, -bound, bound))
        Bm = build_pairwise_matrix(np.asarray(kernel), D, H, W)
        s = max(float(np.abs(Bm).max()) / 127.0, 1e-12)
        q = np.clip(np.rint(Bm / s), -127, 127).astype(np.int8)
        qmats.append(q)
        scales.append(s)
        biases.append(bias)
    return (edge_list,
            jnp.asarray(np.stack(qmats)),                          # (E, V, V) int8
            jnp.asarray(np.array(scales, np.float32)),             # (E,)
            jnp.asarray(np.array(biases, np.float32)))             # (E,)


def make_params(key, skeleton, in_ch, out_ch, D, H, W):
    keys = jax.random.split(key, 9)
    params = dict(
        skip_res1=make_res_params(keys[0], in_ch, out_ch),
        skip_res2=make_res_params(keys[1], 32, 32),
        encoder_res1=make_res_params(keys[2], in_ch, 32),
        encoder_res2=make_res_params(keys[3], 32, 64),
        decoder_res1=make_res_params(keys[4], 32, 32),
        decoder_res2=make_res_params(keys[5], 64, 64),
        decoder_upsample1=make_up_params(keys[6], 32, out_ch),
        decoder_upsample2=make_up_params(keys[7], 64, 32),
    )
    edge_list, qmats, scales, biases = make_pairwise_params(keys[8], skeleton, D, H, W)
    params['pairwise_qmats'] = qmats
    params['pairwise_scale'] = scales
    params['pairwise_bias'] = biases
    return params, edge_list


# ----------------------------------------------------------------------------- #
#  Forward pass (if_conv=True, prob_softmax=True)
# ----------------------------------------------------------------------------- #
def psm_gnn_forward(x, params, *, leaf_to_root, root_to_leaf, edge_list, prob_softmax=True):
    B, J, D, H, W = x.shape
    V = D * H * W
    xf = x.reshape(B, J, V).astype(jnp.float32)

    edge_index = {e: i for i, e in enumerate(edge_list)}
    parent_ids = np.array([p for (p, _c) in edge_list])
    child_ids = np.array([c for (_p, c) in edge_list])
    # multiply the node probability into exactly one of its edges (the first)
    first_of_parent = np.zeros(len(edge_list), bool)
    seen = set()
    for i, (p, _c) in enumerate(edge_list):
        if p not in seen:
            first_of_parent[i] = True
            seen.add(p)
    qm = params['pairwise_qmats']
    sc = params['pairwise_scale']
    bs = params['pairwise_bias']

    # ---- leaf-to-root: all edge convs read the original x -> one batched call ----
    a_l2r = xf[:, child_ids].swapaxes(0, 1)                                   # (E, B, V)
    mult_l2r = jnp.where(jnp.asarray(first_of_parent)[:, None, None],
                         xf[:, parent_ids].swapaxes(0, 1), 1.0)
    y1 = batched_pairwise(a_l2r, mult_l2r, qm, sc, bs)                        # (E, B, V)
    x1 = xf
    for node in leaf_to_root:
        idx, childs = node['idx'], node['children']
        if not childs:
            continue
        node_prob = y1[edge_index[(idx, childs[0])]]
        for child in childs[1:]:
            node_prob = node_prob * y1[edge_index[(idx, child)]]
        if prob_softmax:
            node_prob = jax.nn.softmax(node_prob, axis=1)
        x1 = x1.at[:, idx].set(node_prob)

    # ---- root-to-leaf: all edge convs read x1 -> one batched call ----
    a_r2l = x1[:, parent_ids].swapaxes(0, 1)
    mult_r2l = x1[:, child_ids].swapaxes(0, 1)
    y2 = batched_pairwise(a_r2l, mult_r2l, qm, sc, bs)                        # (E, B, V)
    x2 = x1
    for node in root_to_leaf:
        idx, childs = node['idx'], node['children']
        for child in childs:
            child_prob = y2[edge_index[(idx, child)]]
            if prob_softmax:
                child_prob = jax.nn.softmax(child_prob, axis=1)
            x2 = x2.at[:, child].set(child_prob)

    # ---- encoder / decoder V2V-style trunk, channels-last end-to-end ----
    x_cl = x2.reshape(B, J, D, H, W).transpose(0, 2, 3, 4, 1)        # (B, D, H, W, J)
    skip_x1 = res3d_block(x_cl, params['skip_res1'])
    t = maxpool2(x_cl)                                               # encoder_pool1
    t = res3d_block(t, params['encoder_res1'])
    skip_x2 = res3d_block(t, params['skip_res2'])
    t = maxpool2(t)                                                  # encoder_pool2
    t = res3d_block(t, params['encoder_res2'])
    t = res3d_block(t, params['decoder_res2'])
    t = upsample3d_block(t, params['decoder_upsample2'], skip_cl=skip_x2)
    t = res3d_block(t, params['decoder_res1'])
    t = upsample3d_block(t, params['decoder_upsample1'], skip_cl=skip_x1,
                         out_dtype=jnp.float32)
    return t.transpose(0, 4, 1, 2, 3)                                # back to NCDHW


# ----------------------------------------------------------------------------- #
if __name__ == "__main__":
    B, J, Dv, Hv, Wv = 2, 7, 8, 8, 8        # batch, joints (=input_channels), volume
    out_ch = 7                              # output_channels

    skeleton = make_skeleton()
    asc, desc = sort_skeleton_by_level(skeleton)   # root-to-leaf, leaf-to-root orders

    key = jax.random.PRNGKey(0)
    k_x, k_p = jax.random.split(key)
    params, edge_list = make_params(k_p, skeleton, J, out_ch, Dv, Hv, Wv)
    x = jax.random.normal(k_x, (B, J, Dv, Hv, Wv), jnp.float32)

    fwd = jax.jit(functools.partial(psm_gnn_forward,
                                    leaf_to_root=desc, root_to_leaf=asc,
                                    edge_list=edge_list, prob_softmax=True))
    out = fwd(x, params)
    jax.block_until_ready(out)
    assert out.shape == (B, out_ch, Dv, Hv, Wv)
    print("KERNEL_OK")
</pallas_src>

<mosaic_0001>
module attributes {stable_mosaic.version = 11 : i64} {
  func.func @_pairwise_kernel(%arg0: i32, %arg1: memref<1x2x512xbf16, #tpu.memory_space<vmem>>, %arg2: memref<1x512x512xi8, #tpu.memory_space<vmem>>, %arg3: memref<1x2x512xbf16, #tpu.memory_space<vmem>>, %arg4: memref<6xf32, #tpu.memory_space<smem>>, %arg5: memref<1x2x512xf32, #tpu.memory_space<vmem>>) attributes {dimension_semantics = [#tpu.dimension_semantics<parallel>], iteration_bounds = array<i64: 6>, scalar_prefetch = 0 : i64, scratch_operands = 0 : i64, tpu.core_type = #tpu.core_type<tc>, window_params = [{transform_indices = @transform_0, window_bounds = array<i64: 1, 2, 512>}, {transform_indices = @transform_1, window_bounds = array<i64: 1, 512, 512>}, {transform_indices = @transform_2, window_bounds = array<i64: 1, 2, 512>}, {transform_indices = @transform_3, window_bounds = array<i64: 6>}, {transform_indices = @transform_4, window_bounds = array<i64: 1, 2, 512>}]} {
    %c0 = arith.constant 0 : index
    %c0_0 = arith.constant 0 : index
    %c0_1 = arith.constant 0 : index
    %0 = vector.load %arg2[%c0, %c0_0, %c0_1] : memref<1x512x512xi8, #tpu.memory_space<vmem>>, vector<1x512x512xi8>
    %1 = vector.shape_cast %0 : vector<1x512x512xi8> to vector<512x512xi8>
    %2 = arith.sitofp %1 : vector<512x512xi8> to vector<512x512xf32>
    %3 = arith.truncf %2 : vector<512x512xf32> to vector<512x512xbf16>
    %c0_2 = arith.constant 0 : index
    %c0_3 = arith.constant 0 : index
    %c0_4 = arith.constant 0 : index
    %4 = vector.load %arg1[%c0_2, %c0_3, %c0_4] : memref<1x2x512xbf16, #tpu.memory_space<vmem>>, vector<1x2x512xbf16>
    %5 = vector.shape_cast %4 : vector<1x2x512xbf16> to vector<2x512xbf16>
    %cst = arith.constant dense<0.000000e+00> : vector<2x512xf32>
    %6 = tpu.matmul %5, %3, %cst {dimension_numbers = #tpu.dot_dimension_numbers<[1], [0], [0], [1], [0, 0, 1, 1], [], []>} : vector<2x512xbf16>, vector<512x512xbf16>, vector<2x512xf32> -> vector<2x512xf32>
    %c0_5 = arith.constant 0 : index
    %c0_6 = arith.constant 0 : index
    %c0_7 = arith.constant 0 : index
    %7 = vector.load %arg3[%c0_5, %c0_6, %c0_7] : memref<1x2x512xbf16, #tpu.memory_space<vmem>>, vector<1x2x512xbf16>
    %8 = vector.shape_cast %7 : vector<1x2x512xbf16> to vector<2x512xbf16>
    %9 = arith.extf %8 : vector<2x512xbf16> to vector<2x512xf32>
    %10 = arith.index_cast %arg0 : i32 to index
    %11 = memref.load %arg4[%10] : memref<6xf32, #tpu.memory_space<smem>>
    %12 = vector.broadcast %11 : f32 to vector<2x512xf32>
    %13 = arith.addf %6, %12 : vector<2x512xf32>
    %14 = arith.mulf %9, %13 : vector<2x512xf32>
    %c0_8 = arith.constant 0 : index
    %c0_9 = arith.constant 0 : index
    %c0_10 = arith.constant 0 : index
    %15 = vector.load %arg5[%c0_8, %c0_9, %c0_10] : memref<1x2x512xf32, #tpu.memory_space<vmem>>, vector<1x2x512xf32>
    %16 = vector.shape_cast %15 : vector<1x2x512xf32> to vector<2x512xf32>
    %17 = vector.shape_cast %14 : vector<2x512xf32> to vector<1x2x512xf32>
    tpu.vector_store %arg5[%c0_8, %c0_9, %c0_10], %17 {strides = array<i32>} : memref<1x2x512xf32, #tpu.memory_space<vmem>>, vector<1x2x512xf32>,
    return
  }
  func.func @transform_0(%arg0: i32) -> (i32, i32, i32) {
    %c0_i32 = arith.constant 0 : i32
    %c0_i32_0 = arith.constant 0 : i32
    %c0_i32_1 = arith.constant 0 : i32
    return %arg0, %c0_i32, %c0_i32_0 : i32, i32, i32
  }
  func.func @transform_1(%arg0: i32) -> (i32, i32, i32) {
    %c0_i32 = arith.constant 0 : i32
    %c0_i32_0 = arith.constant 0 : i32
    %c0_i32_1 = arith.constant 0 : i32
    return %arg0, %c0_i32, %c0_i32_0 : i32, i32, i32
  }
  func.func @transform_2(%arg0: i32) -> (i32, i32, i32) {
    %c0_i32 = arith.constant 0 : i32
    %c0_i32_0 = arith.constant 0 : i32
    %c0_i32_1 = arith.constant 0 : i32
    return %arg0, %c0_i32, %c0_i32_0 : i32, i32, i32
  }
  func.func @transform_3(%arg0: i32) -> i32 {
    %c0_i32 = arith.constant 0 : i32
    %c0_i32_0 = arith.constant 0 : i32
    return %c0_i32 : i32
  }
  func.func @transform_4(%arg0: i32) -> (i32, i32, i32) {
    %c0_i32 = arith.constant 0 : i32
    %c0_i32_0 = arith.constant 0 : i32
    %c0_i32_1 = arith.constant 0 : i32
    return %arg0, %c0_i32, %c0_i32_0 : i32, i32, i32
  }
}

module attributes {stable_mosaic.version = 11 : i64} {
  func.func @_gemm_kernel(%arg0: i32, %arg1: memref<512x189xbf16, #tpu.memory_space<vmem>>, %arg2: memref<189x7xbf16, #tpu.memory_space<vmem>>, %arg3: memref<1x7xf32, #tpu.memory_space<vmem>>, %arg4: memref<512x7xbf16, #tpu.memory_space<vmem>>) attributes {dimension_semantics = [#tpu.dimension_semantics<parallel>], iteration_bounds = array<i64: 2>, scalar_prefetch = 0 : i64, scratch_operands = 0 : i64, tpu.core_type = #tpu.core_type<tc>, window_params = [{transform_indices = @transform_0, window_bounds = array<i64: 512, 189>}, {pipeline_mode = #tpu.pipeline_mode<synchronous>, transform_indices = @transform_1, window_bounds = array<i64: 189, 7>}, {pipeline_mode = #tpu.pipeline_mode<synchronous>, transform_indices = @transform_2, window_bounds = array<i64: 1, 7>}, {transform_indices = @transform_3, window_bounds = array<i64: 512, 7>}]} {
    %c0 = arith.constant 0 : index
    %c0_0 = arith.constant 0 : index
    %0 = vector.load %arg1[%c0, %c0_0] : memref<512x189xbf16, #tpu.memory_space<vmem>>, vector<512x189xbf16>
    %c0_1 = arith.constant 0 : index
    %c0_2 = arith.constant 0 : index
    %1 = vector.load %arg2[%c0_1, %c0_2] : memref<189x7xbf16, #tpu.memory_space<vmem>>, vector<189x7xbf16>
    %cst = arith.constant dense<0.000000e+00> : vector<512x7xf32>
    %2 = tpu.matmul %0, %1, %cst {dimension_numbers = #tpu.dot_dimension_numbers<[1], [0], [0], [1], [0, 0, 1, 1], [], []>} : vector<512x189xbf16>, vector<189x7xbf16>, vector<512x7xf32> -> vector<512x7xf32>
    %c0_3 = arith.constant 0 : index
    %c0_4 = arith.constant 0 : index
    %3 = vector.load %arg3[%c0_3, %c0_4] : memref<1x7xf32, #tpu.memory_space<vmem>>, vector<1x7xf32>
    %4 = vector.broadcast %3 : vector<1x7xf32> to vector<512x7xf32>
    %5 = arith.addf %2, %4 : vector<512x7xf32>
    %cst_5 = arith.constant 0.000000e+00 : f32
    %6 = vector.broadcast %cst_5 : f32 to vector<512x7xf32>
    %7 = arith.maximumf %5, %6 : vector<512x7xf32>
    %8 = arith.truncf %7 : vector<512x7xf32> to vector<512x7xbf16>
    %c0_6 = arith.constant 0 : index
    %c0_7 = arith.constant 0 : index
    %9 = vector.load %arg4[%c0_6, %c0_7] : memref<512x7xbf16, #tpu.memory_space<vmem>>, vector<512x7xbf16>
    tpu.vector_store %arg4[%c0_6, %c0_7], %8 {strides = array<i32>} : memref<512x7xbf16, #tpu.memory_space<vmem>>, vector<512x7xbf16>,
    return
  }
  func.func @transform_0(%arg0: i32) -> (i32, i32) {
    %c0_i32 = arith.constant 0 : i32
    %c0_i32_0 = arith.constant 0 : i32
    return %arg0, %c0_i32 : i32, i32
  }
  func.func @transform_1(%arg0: i32) -> (i32, i32) {
    %c0_i32 = arith.constant 0 : i32
    %c0_i32_0 = arith.constant 0 : i32
    %c0_i32_1 = arith.constant 0 : i32
    return %c0_i32, %c0_i32_0 : i32, i32
  }
  func.func @transform_2(%arg0: i32) -> (i32, i32) {
    %c0_i32 = arith.constant 0 : i32
    %c0_i32_0 = arith.constant 0 : i32
    %c0_i32_1 = arith.constant 0 : i32
    return %c0_i32, %c0_i32_0 : i32, i32
  }
  func.func @transform_3(%arg0: i32) -> (i32, i32) {
    %c0_i32 = arith.constant 0 : i32
    %c0_i32_0 = arith.constant 0 : i32
    return %arg0, %c0_i32 : i32, i32
  }
}

module attributes {stable_mosaic.version = 11 : i64} {
  func.func @_gemm_kernel(%arg0: i32, %arg1: memref<512x189xbf16, #tpu.memory_space<vmem>>, %arg2: memref<189x7xbf16, #tpu.memory_space<vmem>>, %arg3: memref<1x7xf32, #tpu.memory_space<vmem>>, %arg4: memref<512x7xf32, #tpu.memory_space<vmem>>, %arg5: memref<512x7xbf16, #tpu.memory_space<vmem>>) attributes {dimension_semantics = [#tpu.dimension_semantics<parallel>], iteration_bounds = array<i64: 2>, scalar_prefetch = 0 : i64, scratch_operands = 0 : i64, tpu.core_type = #tpu.core_type<tc>, window_params = [{transform_indices = @transform_0, window_bounds = array<i64: 512, 189>}, {pipeline_mode = #tpu.pipeline_mode<synchronous>, transform_indices = @transform_1, window_bounds = array<i64: 189, 7>}, {pipeline_mode = #tpu.pipeline_mode<synchronous>, transform_indices = @transform_2, window_bounds = array<i64: 1, 7>}, {transform_indices = @transform_3, window_bounds = array<i64: 512, 7>}, {transform_indices = @transform_4, window_bounds = array<i64: 512, 7>}]} {
    %c0 = arith.constant 0 : index
    %c0_0 = arith.constant 0 : index
    %0 = vector.load %arg1[%c0, %c0_0] : memref<512x189xbf16, #tpu.memory_space<vmem>>, vector<512x189xbf16>
    %c0_1 = arith.constant 0 : index
    %c0_2 = arith.constant 0 : index
    %1 = vector.load %arg2[%c0_1, %c0_2] : memref<189x7xbf16, #tpu.memory_space<vmem>>, vector<189x7xbf16>
    %cst = arith.constant dense<0.000000e+00> : vector<512x7xf32>
    %2 = tpu.matmul %0, %1, %cst {dimension_numbers = #tpu.dot_dimension_numbers<[1], [0], [0], [1], [0, 0, 1, 1], [], []>} : vector<512x189xbf16>, vector<189x7xbf16>, vector<512x7xf32> -> vector<512x7xf32>
    %c0_3 = arith.constant 0 : index
    %c0_4 = arith.constant 0 : index
    %3 = vector.load %arg3[%c0_3, %c0_4] : memref<1x7xf32, #tpu.memory_space<vmem>>, vector<1x7xf32>
    %4 = vector.broadcast %3 : vector<1x7xf32> to vector<512x7xf32>
    %5 = arith.addf %2, %4 : vector<512x7xf32>
    %c0_5 = arith.constant 0 : index
    %c0_6 = arith.constant 0 : index
    %6 = vector.load %arg4[%c0_5, %c0_6] : memref<512x7xf32, #tpu.memory_space<vmem>>, vector<512x7xf32>
    %7 = arith.addf %5, %6 : vector<512x7xf32>
    %cst_7 = arith.constant 0.000000e+00 : f32
    %8 = vector.broadcast %cst_7 : f32 to vector<512x7xf32>
    %9 = arith.maximumf %7, %8 : vector<512x7xf32>
    %10 = arith.truncf %9 : vector<512x7xf32> to vector<512x7xbf16>
    %c0_8 = arith.constant 0 : index
    %c0_9 = arith.constant 0 : index
    %11 = vector.load %arg5[%c0_8, %c0_9] : memref<512x7xbf16, #tpu.memory_space<vmem>>, vector<512x7xbf16>
    tpu.vector_store %arg5[%c0_8, %c0_9], %10 {strides = array<i32>} : memref<512x7xbf16, #tpu.memory_space<vmem>>, vector<512x7xbf16>,
    return
  }
  func.func @transform_0(%arg0: i32) -> (i32, i32) {
    %c0_i32 = arith.constant 0 : i32
    %c0_i32_0 = arith.constant 0 : i32
    return %arg0, %c0_i32 : i32, i32
  }
  func.func @transform_1(%arg0: i32) -> (i32, i32) {
    %c0_i32 = arith.constant 0 : i32
    %c0_i32_0 = arith.constant 0 : i32
    %c0_i32_1 = arith.constant 0 : i32
    return %c0_i32, %c0_i32_0 : i32, i32
  }
  func.func @transform_2(%arg0: i32) -> (i32, i32) {
    %c0_i32 = arith.constant 0 : i32
    %c0_i32_0 = arith.constant 0 : i32
    %c0_i32_1 = arith.constant 0 : i32
    return %c0_i32, %c0_i32_0 : i32, i32
  }
  func.func @transform_3(%arg0: i32) -> (i32, i32) {
    %c0_i32 = arith.constant 0 : i32
    %c0_i32_0 = arith.constant 0 : i32
    return %arg0, %c0_i32 : i32, i32
  }
  func.func @transform_4(%arg0: i32) -> (i32, i32) {
    %c0_i32 = arith.constant 0 : i32
    %c0_i32_0 = arith.constant 0 : i32
    return %arg0, %c0_i32 : i32, i32
  }
}

module attributes {stable_mosaic.version = 11 : i64} {
  func.func @_gemm_kernel(%arg0: i32, %arg1: memref<64x189xbf16, #tpu.memory_space<vmem>>, %arg2: memref<189x64xbf16, #tpu.memory_space<vmem>>, %arg3: memref<1x64xf32, #tpu.memory_space<vmem>>, %arg4: memref<64x64xbf16, #tpu.memory_space<vmem>>) attributes {dimension_semantics = [#tpu.dimension_semantics<parallel>], iteration_bounds = array<i64: 2>, scalar_prefetch = 0 : i64, scratch_operands = 0 : i64, tpu.core_type = #tpu.core_type<tc>, window_params = [{transform_indices = @transform_0, window_bounds = array<i64: 64, 189>}, {pipeline_mode = #tpu.pipeline_mode<synchronous>, transform_indices = @transform_1, window_bounds = array<i64: 189, 64>}, {pipeline_mode = #tpu.pipeline_mode<synchronous>, transform_indices = @transform_2, window_bounds = array<i64: 1, 64>}, {transform_indices = @transform_3, window_bounds = array<i64: 64, 64>}]} {
    %c0 = arith.constant 0 : index
    %c0_0 = arith.constant 0 : index
    %0 = vector.load %arg1[%c0, %c0_0] : memref<64x189xbf16, #tpu.memory_space<vmem>>, vector<64x189xbf16>
    %c0_1 = arith.constant 0 : index
    %c0_2 = arith.constant 0 : index
    %1 = vector.load %arg2[%c0_1, %c0_2] : memref<189x64xbf16, #tpu.memory_space<vmem>>, vector<189x64xbf16>
    %cst = arith.constant dense<0.000000e+00> : vector<64x64xf32>
    %2 = tpu.matmul %0, %1, %cst {dimension_numbers = #tpu.dot_dimension_numbers<[1], [0], [0], [1], [0, 0, 1, 1], [], []>} : vector<64x189xbf16>, vector<189x64xbf16>, vector<64x64xf32> -> vector<64x64xf32>
    %c0_3 = arith.constant 0 : index
    %c0_4 = arith.constant 0 : index
    %3 = vector.load %arg3[%c0_3, %c0_4] : memref<1x64xf32, #tpu.memory_space<vmem>>, vector<1x64xf32>
    %4 = vector.broadcast %3 : vector<1x64xf32> to vector<64x64xf32>
    %5 = arith.addf %2, %4 : vector<64x64xf32>
    %6 = tpu.iota {dimensions = array<i32: 1>} : vector<64x64xi32>
    %c32_i32 = arith.constant 32 : i32
    %7 = vector.broadcast %c32_i32 : i32 to vector<64x64xi32>
    %8 = arith.cmpi slt, %6, %7 : vector<64x64xi32>
    %cst_5 = arith.constant 0.000000e+00 : f32
    %9 = vector.broadcast %cst_5 : f32 to vector<64x64xf32>
    %10 = arith.maximumf %5, %9 : vector<64x64xf32>
    %11 = arith.select %8, %10, %5 : vector<64x64xi1>, vector<64x64xf32>
    %12 = arith.truncf %11 : vector<64x64xf32> to vector<64x64xbf16>
    %c0_6 = arith.constant 0 : index
    %c0_7 = arith.constant 0 : index
    %13 = vector.load %arg4[%c0_6, %c0_7] : memref<64x64xbf16, #tpu.memory_space<vmem>>, vector<64x64xbf16>
    tpu.vector_store %arg4[%c0_6, %c0_7], %12 {strides = array<i32>} : memref<64x64xbf16, #tpu.memory_space<vmem>>, vector<64x64xbf16>,
    return
  }
  func.func @transform_0(%arg0: i32) -> (i32, i32) {
    %c0_i32 = arith.constant 0 : i32
    %c0_i32_0 = arith.constant 0 : i32
    return %arg0, %c0_i32 : i32, i32
  }
  func.func @transform_1(%arg0: i32) -> (i32, i32) {
    %c0_i32 = arith.constant 0 : i32
    %c0_i32_0 = arith.constant 0 : i32
    %c0_i32_1 = arith.constant 0 : i32
    return %c0_i32, %c0_i32_0 : i32, i32
  }
  func.func @transform_2(%arg0: i32) -> (i32, i32) {
    %c0_i32 = arith.constant 0 : i32
    %c0_i32_0 = arith.constant 0 : i32
    %c0_i32_1 = arith.constant 0 : i32
    return %c0_i32, %c0_i32_0 : i32, i32
  }
  func.func @transform_3(%arg0: i32) -> (i32, i32) {
    %c0_i32 = arith.constant 0 : i32
    %c0_i32_0 = arith.constant 0 : i32
    return %arg0, %c0_i32 : i32, i32
  }
}

module attributes {stable_mosaic.version = 11 : i64} {
  func.func @_gemm_kernel(%arg0: i32, %arg1: memref<64x864xbf16, #tpu.memory_space<vmem>>, %arg2: memref<864x32xbf16, #tpu.memory_space<vmem>>, %arg3: memref<1x32xf32, #tpu.memory_space<vmem>>, %arg4: memref<64x32xbf16, #tpu.memory_space<vmem>>, %arg5: memref<64x32xbf16, #tpu.memory_space<vmem>>) attributes {dimension_semantics = [#tpu.dimension_semantics<parallel>], iteration_bounds = array<i64: 2>, scalar_prefetch = 0 : i64, scratch_operands = 0 : i64, tpu.core_type = #tpu.core_type<tc>, window_params = [{transform_indices = @transform_0, window_bounds = array<i64: 64, 864>}, {pipeline_mode = #tpu.pipeline_mode<synchronous>, transform_indices = @transform_1, window_bounds = array<i64: 864, 32>}, {pipeline_mode = #tpu.pipeline_mode<synchronous>, transform_indices = @transform_2, window_bounds = array<i64: 1, 32>}, {transform_indices = @transform_3, window_bounds = array<i64: 64, 32>}, {transform_indices = @transform_4, window_bounds = array<i64: 64, 32>}]} {
    %c0 = arith.constant 0 : index
    %c0_0 = arith.constant 0 : index
    %0 = vector.load %arg1[%c0, %c0_0] : memref<64x864xbf16, #tpu.memory_space<vmem>>, vector<64x864xbf16>
    %c0_1 = arith.constant 0 : index
    %c0_2 = arith.constant 0 : index
    %1 = vector.load %arg2[%c0_1, %c0_2] : memref<864x32xbf16, #tpu.memory_space<vmem>>, vector<864x32xbf16>
    %cst = arith.constant dense<0.000000e+00> : vector<64x32xf32>
    %2 = tpu.matmul %0, %1, %cst {dimension_numbers = #tpu.dot_dimension_numbers<[1], [0], [0], [1], [0, 0, 1, 1], [], []>} : vector<64x864xbf16>, vector<864x32xbf16>, vector<64x32xf32> -> vector<64x32xf32>
    %c0_3 = arith.constant 0 : index
    %c0_4 = arith.constant 0 : index
    %3 = vector.load %arg3[%c0_3, %c0_4] : memref<1x32xf32, #tpu.memory_space<vmem>>, vector<1x32xf32>
    %4 = vector.broadcast %3 : vector<1x32xf32> to vector<64x32xf32>
    %5 = arith.addf %2, %4 : vector<64x32xf32>
    %c0_5 = arith.constant 0 : index
    %c0_6 = arith.constant 0 : index
    %6 = vector.load %arg4[%c0_5, %c0_6] : memref<64x32xbf16, #tpu.memory_space<vmem>>, vector<64x32xbf16>
    %7 = arith.extf %6 : vector<64x32xbf16> to vector<64x32xf32>
    %8 = arith.addf %5, %7 : vector<64x32xf32>
    %cst_7 = arith.constant 0.000000e+00 : f32
    %9 = vector.broadcast %cst_7 : f32 to vector<64x32xf32>
    %10 = arith.maximumf %8, %9 : vector<64x32xf32>
    %11 = arith.truncf %10 : vector<64x32xf32> to vector<64x32xbf16>
    %c0_8 = arith.constant 0 : index
    %c0_9 = arith.constant 0 : index
    %12 = vector.load %arg5[%c0_8, %c0_9] : memref<64x32xbf16, #tpu.memory_space<vmem>>, vector<64x32xbf16>
    tpu.vector_store %arg5[%c0_8, %c0_9], %11 {strides = array<i32>} : memref<64x32xbf16, #tpu.memory_space<vmem>>, vector<64x32xbf16>,
    return
  }
  func.func @transform_0(%arg0: i32) -> (i32, i32) {
    %c0_i32 = arith.constant 0 : i32
    %c0_i32_0 = arith.constant 0 : i32
    return %arg0, %c0_i32 : i32, i32
  }
  func.func @transform_1(%arg0: i32) -> (i32, i32) {
    %c0_i32 = arith.constant 0 : i32
    %c0_i32_0 = arith.constant 0 : i32
    %c0_i32_1 = arith.constant 0 : i32
    return %c0_i32, %c0_i32_0 : i32, i32
  }
  func.func @transform_2(%arg0: i32) -> (i32, i32) {
    %c0_i32 = arith.constant 0 : i32
    %c0_i32_0 = arith.constant 0 : i32
    %c0_i32_1 = arith.constant 0 : i32
    return %c0_i32, %c0_i32_0 : i32, i32
  }
  func.func @transform_3(%arg0: i32) -> (i32, i32) {
    %c0_i32 = arith.constant 0 : i32
    %c0_i32_0 = arith.constant 0 : i32
    return %arg0, %c0_i32 : i32, i32
  }
  func.func @transform_4(%arg0: i32) -> (i32, i32) {
    %c0_i32 = arith.constant 0 : i32
    %c0_i32_0 = arith.constant 0 : i32
    return %arg0, %c0_i32 : i32, i32
  }
}

module attributes {stable_mosaic.version = 11 : i64} {
  func.func @_gemm_kernel(%arg0: i32, %arg1: memref<64x864xbf16, #tpu.memory_space<vmem>>, %arg2: memref<864x32xbf16, #tpu.memory_space<vmem>>, %arg3: memref<1x32xf32, #tpu.memory_space<vmem>>, %arg4: memref<64x32xbf16, #tpu.memory_space<vmem>>) attributes {dimension_semantics = [#tpu.dimension_semantics<parallel>], iteration_bounds = array<i64: 2>, scalar_prefetch = 0 : i64, scratch_operands = 0 : i64, tpu.core_type = #tpu.core_type<tc>, window_params = [{transform_indices = @transform_0, window_bounds = array<i64: 64, 864>}, {pipeline_mode = #tpu.pipeline_mode<synchronous>, transform_indices = @transform_1, window_bounds = array<i64: 864, 32>}, {pipeline_mode = #tpu.pipeline_mode<synchronous>, transform_indices = @transform_2, window_bounds = array<i64: 1, 32>}, {transform_indices = @transform_3, window_bounds = array<i64: 64, 32>}]} {
    %c0 = arith.constant 0 : index
    %c0_0 = arith.constant 0 : index
    %0 = vector.load %arg1[%c0, %c0_0] : memref<64x864xbf16, #tpu.memory_space<vmem>>, vector<64x864xbf16>
    %c0_1 = arith.constant 0 : index
    %c0_2 = arith.constant 0 : index
    %1 = vector.load %arg2[%c0_1, %c0_2] : memref<864x32xbf16, #tpu.memory_space<vmem>>, vector<864x32xbf16>
    %cst = arith.constant dense<0.000000e+00> : vector<64x32xf32>
    %2 = tpu.matmul %0, %1, %cst {dimension_numbers = #tpu.dot_dimension_numbers<[1], [0], [0], [1], [0, 0, 1, 1], [], []>} : vector<64x864xbf16>, vector<864x32xbf16>, vector<64x32xf32> -> vector<64x32xf32>
    %c0_3 = arith.constant 0 : index
    %c0_4 = arith.constant 0 : index
    %3 = vector.load %arg3[%c0_3, %c0_4] : memref<1x32xf32, #tpu.memory_space<vmem>>, vector<1x32xf32>
    %4 = vector.broadcast %3 : vector<1x32xf32> to vector<64x32xf32>
    %5 = arith.addf %2, %4 : vector<64x32xf32>
    %cst_5 = arith.constant 0.000000e+00 : f32
    %6 = vector.broadcast %cst_5 : f32 to vector<64x32xf32>
    %7 = arith.maximumf %5, %6 : vector<64x32xf32>
    %8 = arith.truncf %7 : vector<64x32xf32> to vector<64x32xbf16>
    %c0_6 = arith.constant 0 : index
    %c0_7 = arith.constant 0 : index
    %9 = vector.load %arg4[%c0_6, %c0_7] : memref<64x32xbf16, #tpu.memory_space<vmem>>, vector<64x32xbf16>
    tpu.vector_store %arg4[%c0_6, %c0_7], %8 {strides = array<i32>} : memref<64x32xbf16, #tpu.memory_space<vmem>>, vector<64x32xbf16>,
    return
  }
  func.func @transform_0(%arg0: i32) -> (i32, i32) {
    %c0_i32 = arith.constant 0 : i32
    %c0_i32_0 = arith.constant 0 : i32
    return %arg0, %c0_i32 : i32, i32
  }
  func.func @transform_1(%arg0: i32) -> (i32, i32) {
    %c0_i32 = arith.constant 0 : i32
    %c0_i32_0 = arith.constant 0 : i32
    %c0_i32_1 = arith.constant 0 : i32
    return %c0_i32, %c0_i32_0 : i32, i32
  }
  func.func @transform_2(%arg0: i32) -> (i32, i32) {
    %c0_i32 = arith.constant 0 : i32
    %c0_i32_0 = arith.constant 0 : i32
    %c0_i32_1 = arith.constant 0 : i32
    return %c0_i32, %c0_i32_0 : i32, i32
  }
  func.func @transform_3(%arg0: i32) -> (i32, i32) {
    %c0_i32 = arith.constant 0 : i32
    %c0_i32_0 = arith.constant 0 : i32
    return %arg0, %c0_i32 : i32, i32
  }
}

module attributes {stable_mosaic.version = 11 : i64} {
  func.func @_gemm_kernel(%arg0: i32, %arg1: memref<8x864xbf16, #tpu.memory_space<vmem>>, %arg2: memref<864x128xbf16, #tpu.memory_space<vmem>>, %arg3: memref<1x128xf32, #tpu.memory_space<vmem>>, %arg4: memref<8x128xbf16, #tpu.memory_space<vmem>>) attributes {dimension_semantics = [#tpu.dimension_semantics<parallel>], iteration_bounds = array<i64: 2>, scalar_prefetch = 0 : i64, scratch_operands = 0 : i64, tpu.core_type = #tpu.core_type<tc>, window_params = [{transform_indices = @transform_0, window_bounds = array<i64: 8, 864>}, {pipeline_mode = #tpu.pipeline_mode<synchronous>, transform_indices = @transform_1, window_bounds = array<i64: 864, 128>}, {pipeline_mode = #tpu.pipeline_mode<synchronous>, transform_indices = @transform_2, window_bounds = array<i64: 1, 128>}, {transform_indices = @transform_3, window_bounds = array<i64: 8, 128>}]} {
    %c0 = arith.constant 0 : index
    %c0_0 = arith.constant 0 : index
    %0 = vector.load %arg1[%c0, %c0_0] : memref<8x864xbf16, #tpu.memory_space<vmem>>, vector<8x864xbf16>
    %c0_1 = arith.constant 0 : index
    %c0_2 = arith.constant 0 : index
    %1 = vector.load %arg2[%c0_1, %c0_2] : memref<864x128xbf16, #tpu.memory_space<vmem>>, vector<864x128xbf16>
    %cst = arith.constant dense<0.000000e+00> : vector<8x128xf32>
    %2 = tpu.matmul %0, %1, %cst {dimension_numbers = #tpu.dot_dimension_numbers<[1], [0], [0], [1], [0, 0, 1, 1], [], []>} : vector<8x864xbf16>, vector<864x128xbf16>, vector<8x128xf32> -> vector<8x128xf32>
    %c0_3 = arith.constant 0 : index
    %c0_4 = arith.constant 0 : index
    %3 = vector.load %arg3[%c0_3, %c0_4] : memref<1x128xf32, #tpu.memory_space<vmem>>, vector<1x128xf32>
    %4 = vector.broadcast %3 : vector<1x128xf32> to vector<8x128xf32>
    %5 = arith.addf %2, %4 : vector<8x128xf32>
    %6 = tpu.iota {dimensions = array<i32: 1>} : vector<8x128xi32>
    %c64_i32 = arith.constant 64 : i32
    %7 = vector.broadcast %c64_i32 : i32 to vector<8x128xi32>
    %8 = arith.cmpi slt, %6, %7 : vector<8x128xi32>
    %cst_5 = arith.constant 0.000000e+00 : f32
    %9 = vector.broadcast %cst_5 : f32 to vector<8x128xf32>
    %10 = arith.maximumf %5, %9 : vector<8x128xf32>
    %11 = arith.select %8, %10, %5 : vector<8x128xi1>, vector<8x128xf32>
    %12 = arith.truncf %11 : vector<8x128xf32> to vector<8x128xbf16>
    %c0_6 = arith.constant 0 : index
    %c0_7 = arith.constant 0 : index
    %13 = vector.load %arg4[%c0_6, %c0_7] : memref<8x128xbf16, #tpu.memory_space<vmem>>, vector<8x128xbf16>
    tpu.vector_store %arg4[%c0_6, %c0_7], %12 {strides = array<i32>} : memref<8x128xbf16, #tpu.memory_space<vmem>>, vector<8x128xbf16>,
    return
  }
  func.func @transform_0(%arg0: i32) -> (i32, i32) {
    %c0_i32 = arith.constant 0 : i32
    %c0_i32_0 = arith.constant 0 : i32
    return %arg0, %c0_i32 : i32, i32
  }
  func.func @transform_1(%arg0: i32) -> (i32, i32) {
    %c0_i32 = arith.constant 0 : i32
    %c0_i32_0 = arith.constant 0 : i32
    %c0_i32_1 = arith.constant 0 : i32
    return %c0_i32, %c0_i32_0 : i32, i32
  }
  func.func @transform_2(%arg0: i32) -> (i32, i32) {
    %c0_i32 = arith.constant 0 : i32
    %c0_i32_0 = arith.constant 0 : i32
    %c0_i32_1 = arith.constant 0 : i32
    return %c0_i32, %c0_i32_0 : i32, i32
  }
  func.func @transform_3(%arg0: i32) -> (i32, i32) {
    %c0_i32 = arith.constant 0 : i32
    %c0_i32_0 = arith.constant 0 : i32
    return %arg0, %c0_i32 : i32, i32
  }
}

module attributes {stable_mosaic.version = 11 : i64} {
  func.func @_gemm_kernel(%arg0: i32, %arg1: memref<8x1728xbf16, #tpu.memory_space<vmem>>, %arg2: memref<1728x64xbf16, #tpu.memory_space<vmem>>, %arg3: memref<1x64xf32, #tpu.memory_space<vmem>>, %arg4: memref<8x64xbf16, #tpu.memory_space<vmem>>) attributes {dimension_semantics = [#tpu.dimension_semantics<parallel>], iteration_bounds = array<i64: 2>, scalar_prefetch = 0 : i64, scratch_operands = 0 : i64, tpu.core_type = #tpu.core_type<tc>, window_params = [{transform_indices = @transform_0, window_bounds = array<i64: 8, 1728>}, {pipeline_mode = #tpu.pipeline_mode<synchronous>, transform_indices = @transform_1, window_bounds = array<i64: 1728, 64>}, {pipeline_mode = #tpu.pipeline_mode<synchronous>, transform_indices = @transform_2, window_bounds = array<i64: 1, 64>}, {transform_indices = @transform_3, window_bounds = array<i64: 8, 64>}]} {
    %c0 = arith.constant 0 : index
    %c0_0 = arith.constant 0 : index
    %0 = vector.load %arg1[%c0, %c0_0] : memref<8x1728xbf16, #tpu.memory_space<vmem>>, vector<8x1728xbf16>
    %c0_1 = arith.constant 0 : index
    %c0_2 = arith.constant 0 : index
    %1 = vector.load %arg2[%c0_1, %c0_2] : memref<1728x64xbf16, #tpu.memory_space<vmem>>, vector<1728x64xbf16>
    %cst = arith.constant dense<0.000000e+00> : vector<8x64xf32>
    %2 = tpu.matmul %0, %1, %cst {dimension_numbers = #tpu.dot_dimension_numbers<[1], [0], [0], [1], [0, 0, 1, 1], [], []>} : vector<8x1728xbf16>, vector<1728x64xbf16>, vector<8x64xf32> -> vector<8x64xf32>
    %c0_3 = arith.constant 0 : index
    %c0_4 = arith.constant 0 : index
    %3 = vector.load %arg3[%c0_3, %c0_4] : memref<1x64xf32, #tpu.memory_space<vmem>>, vector<1x64xf32>
    %4 = vector.broadcast %3 : vector<1x64xf32> to vector<8x64xf32>
    %5 = arith.addf %2, %4 : vector<8x64xf32>
    %cst_5 = arith.constant 0.000000e+00 : f32
    %6 = vector.broadcast %cst_5 : f32 to vector<8x64xf32>
    %7 = arith.maximumf %5, %6 : vector<8x64xf32>
    %8 = arith.truncf %7 : vector<8x64xf32> to vector<8x64xbf16>
    %c0_6 = arith.constant 0 : index
    %c0_7 = arith.constant 0 : index
    %9 = vector.load %arg4[%c0_6, %c0_7] : memref<8x64xbf16, #tpu.memory_space<vmem>>, vector<8x64xbf16>
    tpu.vector_store %arg4[%c0_6, %c0_7], %8 {strides = array<i32>} : memref<8x64xbf16, #tpu.memory_space<vmem>>, vector<8x64xbf16>,
    return
  }
  func.func @transform_0(%arg0: i32) -> (i32, i32) {
    %c0_i32 = arith.constant 0 : i32
    %c0_i32_0 = arith.constant 0 : i32
    return %arg0, %c0_i32 : i32, i32
  }
  func.func @transform_1(%arg0: i32) -> (i32, i32) {
    %c0_i32 = arith.constant 0 : i32
    %c0_i32_0 = arith.constant 0 : i32
    %c0_i32_1 = arith.constant 0 : i32
    return %c0_i32, %c0_i32_0 : i32, i32
  }
  func.func @transform_2(%arg0: i32) -> (i32, i32) {
    %c0_i32 = arith.constant 0 : i32
    %c0_i32_0 = arith.constant 0 : i32
    %c0_i32_1 = arith.constant 0 : i32
    return %c0_i32, %c0_i32_0 : i32, i32
  }
  func.func @transform_3(%arg0: i32) -> (i32, i32) {
    %c0_i32 = arith.constant 0 : i32
    %c0_i32_0 = arith.constant 0 : i32
    return %arg0, %c0_i32 : i32, i32
  }
}

module attributes {stable_mosaic.version = 11 : i64} {
  func.func @_gemm_kernel(%arg0: i32, %arg1: memref<8x1728xbf16, #tpu.memory_space<vmem>>, %arg2: memref<1728x64xbf16, #tpu.memory_space<vmem>>, %arg3: memref<1x64xf32, #tpu.memory_space<vmem>>, %arg4: memref<8x64xbf16, #tpu.memory_space<vmem>>, %arg5: memref<8x64xbf16, #tpu.memory_space<vmem>>) attributes {dimension_semantics = [#tpu.dimension_semantics<parallel>], iteration_bounds = array<i64: 2>, scalar_prefetch = 0 : i64, scratch_operands = 0 : i64, tpu.core_type = #tpu.core_type<tc>, window_params = [{transform_indices = @transform_0, window_bounds = array<i64: 8, 1728>}, {pipeline_mode = #tpu.pipeline_mode<synchronous>, transform_indices = @transform_1, window_bounds = array<i64: 1728, 64>}, {pipeline_mode = #tpu.pipeline_mode<synchronous>, transform_indices = @transform_2, window_bounds = array<i64: 1, 64>}, {transform_indices = @transform_3, window_bounds = array<i64: 8, 64>}, {transform_indices = @transform_4, window_bounds = array<i64: 8, 64>}]} {
    %c0 = arith.constant 0 : index
    %c0_0 = arith.constant 0 : index
    %0 = vector.load %arg1[%c0, %c0_0] : memref<8x1728xbf16, #tpu.memory_space<vmem>>, vector<8x1728xbf16>
    %c0_1 = arith.constant 0 : index
    %c0_2 = arith.constant 0 : index
    %1 = vector.load %arg2[%c0_1, %c0_2] : memref<1728x64xbf16, #tpu.memory_space<vmem>>, vector<1728x64xbf16>
    %cst = arith.constant dense<0.000000e+00> : vector<8x64xf32>
    %2 = tpu.matmul %0, %1, %cst {dimension_numbers = #tpu.dot_dimension_numbers<[1], [0], [0], [1], [0, 0, 1, 1], [], []>} : vector<8x1728xbf16>, vector<1728x64xbf16>, vector<8x64xf32> -> vector<8x64xf32>
    %c0_3 = arith.constant 0 : index
    %c0_4 = arith.constant 0 : index
    %3 = vector.load %arg3[%c0_3, %c0_4] : memref<1x64xf32, #tpu.memory_space<vmem>>, vector<1x64xf32>
    %4 = vector.broadcast %3 : vector<1x64xf32> to vector<8x64xf32>
    %5 = arith.addf %2, %4 : vector<8x64xf32>
    %c0_5 = arith.constant 0 : index
    %c0_6 = arith.constant 0 : index
    %6 = vector.load %arg4[%c0_5, %c0_6] : memref<8x64xbf16, #tpu.memory_space<vmem>>, vector<8x64xbf16>
    %7 = arith.extf %6 : vector<8x64xbf16> to vector<8x64xf32>
    %8 = arith.addf %5, %7 : vector<8x64xf32>
    %cst_7 = arith.constant 0.000000e+00 : f32
    %9 = vector.broadcast %cst_7 : f32 to vector<8x64xf32>
    %10 = arith.maximumf %8, %9 : vector<8x64xf32>
    %11 = arith.truncf %10 : vector<8x64xf32> to vector<8x64xbf16>
    %c0_8 = arith.constant 0 : index
    %c0_9 = arith.constant 0 : index
    %12 = vector.load %arg5[%c0_8, %c0_9] : memref<8x64xbf16, #tpu.memory_space<vmem>>, vector<8x64xbf16>
    tpu.vector_store %arg5[%c0_8, %c0_9], %11 {strides = array<i32>} : memref<8x64xbf16, #tpu.memory_space<vmem>>, vector<8x64xbf16>,
    return
  }
  func.func @transform_0(%arg0: i32) -> (i32, i32) {
    %c0_i32 = arith.constant 0 : i32
    %c0_i32_0 = arith.constant 0 : i32
    return %arg0, %c0_i32 : i32, i32
  }
  func.func @transform_1(%arg0: i32) -> (i32, i32) {
    %c0_i32 = arith.constant 0 : i32
    %c0_i32_0 = arith.constant 0 : i32
    %c0_i32_1 = arith.constant 0 : i32
    return %c0_i32, %c0_i32_0 : i32, i32
  }
  func.func @transform_2(%arg0: i32) -> (i32, i32) {
    %c0_i32 = arith.constant 0 : i32
    %c0_i32_0 = arith.constant 0 : i32
    %c0_i32_1 = arith.constant 0 : i32
    return %c0_i32, %c0_i32_0 : i32, i32
  }
  func.func @transform_3(%arg0: i32) -> (i32, i32) {
    %c0_i32 = arith.constant 0 : i32
    %c0_i32_0 = arith.constant 0 : i32
    return %arg0, %c0_i32 : i32, i32
  }
  func.func @transform_4(%arg0: i32) -> (i32, i32) {
    %c0_i32 = arith.constant 0 : i32
    %c0_i32_0 = arith.constant 0 : i32
    return %arg0, %c0_i32 : i32, i32
  }
}

module attributes {stable_mosaic.version = 11 : i64} {
  func.func @_gemm_kernel(%arg0: i32, %arg1: memref<8x64xbf16, #tpu.memory_space<vmem>>, %arg2: memref<64x256xbf16, #tpu.memory_space<vmem>>, %arg3: memref<1x256xf32, #tpu.memory_space<vmem>>, %arg4: memref<8x256xbf16, #tpu.memory_space<vmem>>, %arg5: memref<8x256xbf16, #tpu.memory_space<vmem>>) attributes {dimension_semantics = [#tpu.dimension_semantics<parallel>], iteration_bounds = array<i64: 2>, scalar_prefetch = 0 : i64, scratch_operands = 0 : i64, tpu.core_type = #tpu.core_type<tc>, window_params = [{transform_indices = @transform_0, window_bounds = array<i64: 8, 64>}, {pipeline_mode = #tpu.pipeline_mode<synchronous>, transform_indices = @transform_1, window_bounds = array<i64: 64, 256>}, {pipeline_mode = #tpu.pipeline_mode<synchronous>, transform_indices = @transform_2, window_bounds = array<i64: 1, 256>}, {transform_indices = @transform_3, window_bounds = array<i64: 8, 256>}, {transform_indices = @transform_4, window_bounds = array<i64: 8, 256>}]} {
    %c0 = arith.constant 0 : index
    %c0_0 = arith.constant 0 : index
    %0 = vector.load %arg1[%c0, %c0_0] : memref<8x64xbf16, #tpu.memory_space<vmem>>, vector<8x64xbf16>
    %c0_1 = arith.constant 0 : index
    %c0_2 = arith.constant 0 : index
    %1 = vector.load %arg2[%c0_1, %c0_2] : memref<64x256xbf16, #tpu.memory_space<vmem>>, vector<64x256xbf16>
    %cst = arith.constant dense<0.000000e+00> : vector<8x256xf32>
    %2 = tpu.matmul %0, %1, %cst {dimension_numbers = #tpu.dot_dimension_numbers<[1], [0], [0], [1], [0, 0, 1, 1], [], []>} : vector<8x64xbf16>, vector<64x256xbf16>, vector<8x256xf32> -> vector<8x256xf32>
    %c0_3 = arith.constant 0 : index
    %c0_4 = arith.constant 0 : index
    %3 = vector.load %arg3[%c0_3, %c0_4] : memref<1x256xf32, #tpu.memory_space<vmem>>, vector<1x256xf32>
    %4 = vector.broadcast %3 : vector<1x256xf32> to vector<8x256xf32>
    %5 = arith.addf %2, %4 : vector<8x256xf32>
    %cst_5 = arith.constant 0.000000e+00 : f32
    %6 = vector.broadcast %cst_5 : f32 to vector<8x256xf32>
    %7 = arith.maximumf %5, %6 : vector<8x256xf32>
    %c0_6 = arith.constant 0 : index
    %c0_7 = arith.constant 0 : index
    %8 = vector.load %arg4[%c0_6, %c0_7] : memref<8x256xbf16, #tpu.memory_space<vmem>>, vector<8x256xbf16>
    %9 = arith.extf %8 : vector<8x256xbf16> to vector<8x256xf32>
    %10 = arith.addf %7, %9 : vector<8x256xf32>
    %11 = arith.truncf %10 : vector<8x256xf32> to vector<8x256xbf16>
    %c0_8 = arith.constant 0 : index
    %c0_9 = arith.constant 0 : index
    %12 = vector.load %arg5[%c0_8, %c0_9] : memref<8x256xbf16, #tpu.memory_space<vmem>>, vector<8x256xbf16>
    tpu.vector_store %arg5[%c0_8, %c0_9], %11 {strides = array<i32>} : memref<8x256xbf16, #tpu.memory_space<vmem>>, vector<8x256xbf16>,
    return
  }
  func.func @transform_0(%arg0: i32) -> (i32, i32) {
    %c0_i32 = arith.constant 0 : i32
    %c0_i32_0 = arith.constant 0 : i32
    return %arg0, %c0_i32 : i32, i32
  }
  func.func @transform_1(%arg0: i32) -> (i32, i32) {
    %c0_i32 = arith.constant 0 : i32
    %c0_i32_0 = arith.constant 0 : i32
    %c0_i32_1 = arith.constant 0 : i32
    return %c0_i32, %c0_i32_0 : i32, i32
  }
  func.func @transform_2(%arg0: i32) -> (i32, i32) {
    %c0_i32 = arith.constant 0 : i32
    %c0_i32_0 = arith.constant 0 : i32
    %c0_i32_1 = arith.constant 0 : i32
    return %c0_i32, %c0_i32_0 : i32, i32
  }
  func.func @transform_3(%arg0: i32) -> (i32, i32) {
    %c0_i32 = arith.constant 0 : i32
    %c0_i32_0 = arith.constant 0 : i32
    return %arg0, %c0_i32 : i32, i32
  }
  func.func @transform_4(%arg0: i32) -> (i32, i32) {
    %c0_i32 = arith.constant 0 : i32
    %c0_i32_0 = arith.constant 0 : i32
    return %arg0, %c0_i32 : i32, i32
  }
}

module attributes {stable_mosaic.version = 11 : i64} {
  func.func @_gemm_kernel(%arg0: i32, %arg1: memref<64x32xbf16, #tpu.memory_space<vmem>>, %arg2: memref<32x56xbf16, #tpu.memory_space<vmem>>, %arg3: memref<1x56xf32, #tpu.memory_space<vmem>>, %arg4: memref<64x56xbf16, #tpu.memory_space<vmem>>, %arg5: memref<64x56xf32, #tpu.memory_space<vmem>>) attributes {dimension_semantics = [#tpu.dimension_semantics<parallel>], iteration_bounds = array<i64: 2>, scalar_prefetch = 0 : i64, scratch_operands = 0 : i64, tpu.core_type = #tpu.core_type<tc>, window_params = [{transform_indices = @transform_0, window_bounds = array<i64: 64, 32>}, {pipeline_mode = #tpu.pipeline_mode<synchronous>, transform_indices = @transform_1, window_bounds = array<i64: 32, 56>}, {pipeline_mode = #tpu.pipeline_mode<synchronous>, transform_indices = @transform_2, window_bounds = array<i64: 1, 56>}, {transform_indices = @transform_3, window_bounds = array<i64: 64, 56>}, {transform_indices = @transform_4, window_bounds = array<i64: 64, 56>}]} {
    %c0 = arith.constant 0 : index
    %c0_0 = arith.constant 0 : index
    %0 = vector.load %arg1[%c0, %c0_0] : memref<64x32xbf16, #tpu.memory_space<vmem>>, vector<64x32xbf16>
    %c0_1 = arith.constant 0 : index
    %c0_2 = arith.constant 0 : index
    %1 = vector.load %arg2[%c0_1, %c0_2] : memref<32x56xbf16, #tpu.memory_space<vmem>>, vector<32x56xbf16>
    %cst = arith.constant dense<0.000000e+00> : vector<64x56xf32>
    %2 = tpu.matmul %0, %1, %cst {dimension_numbers = #tpu.dot_dimension_numbers<[1], [0], [0], [1], [0, 0, 1, 1], [], []>} : vector<64x32xbf16>, vector<32x56xbf16>, vector<64x56xf32> -> vector<64x56xf32>
    %c0_3 = arith.constant 0 : index
    %c0_4 = arith.constant 0 : index
    %3 = vector.load %arg3[%c0_3, %c0_4] : memref<1x56xf32, #tpu.memory_space<vmem>>, vector<1x56xf32>
    %4 = vector.broadcast %3 : vector<1x56xf32> to vector<64x56xf32>
    %5 = arith.addf %2, %4 : vector<64x56xf32>
    %cst_5 = arith.constant 0.000000e+00 : f32
    %6 = vector.broadcast %cst_5 : f32 to vector<64x56xf32>
    %7 = arith.maximumf %5, %6 : vector<64x56xf32>
    %c0_6 = arith.constant 0 : index
    %c0_7 = arith.constant 0 : index
    %8 = vector.load %arg4[%c0_6, %c0_7] : memref<64x56xbf16, #tpu.memory_space<vmem>>, vector<64x56xbf16>
    %9 = arith.extf %8 : vector<64x56xbf16> to vector<64x56xf32>
    %10 = arith.addf %7, %9 : vector<64x56xf32>
    %c0_8 = arith.constant 0 : index
    %c0_9 = arith.constant 0 : index
    %11 = vector.load %arg5[%c0_8, %c0_9] : memref<64x56xf32, #tpu.memory_space<vmem>>, vector<64x56xf32>
    tpu.vector_store %arg5[%c0_8, %c0_9], %10 {strides = array<i32>} : memref<64x56xf32, #tpu.memory_space<vmem>>, vector<64x56xf32>,
    return
  }
  func.func @transform_0(%arg0: i32) -> (i32, i32) {
    %c0_i32 = arith.constant 0 : i32
    %c0_i32_0 = arith.constant 0 : i32
    return %arg0, %c0_i32 : i32, i32
  }
  func.func @transform_1(%arg0: i32) -> (i32, i32) {
    %c0_i32 = arith.constant 0 : i32
    %c0_i32_0 = arith.constant 0 : i32
    %c0_i32_1 = arith.constant 0 : i32
    return %c0_i32, %c0_i32_0 : i32, i32
  }
  func.func @transform_2(%arg0: i32) -> (i32, i32) {
    %c0_i32 = arith.constant 0 : i32
    %c0_i32_0 = arith.constant 0 : i32
    %c0_i32_1 = arith.constant 0 : i32
    return %c0_i32, %c0_i32_0 : i32, i32
  }
  func.func @transform_3(%arg0: i32) -> (i32, i32) {
    %c0_i32 = arith.constant 0 : i32
    %c0_i32_0 = arith.constant 0 : i32
    return %arg0, %c0_i32 : i32, i32
  }
  func.func @transform_4(%arg0: i32) -> (i32, i32) {
    %c0_i32 = arith.constant 0 : i32
    %c0_i32_0 = arith.constant 0 : i32
    return %arg0, %c0_i32 : i32, i32
  }
}

</mosaic_0001>

<llo_original>
// kernel: psm_gnn_forward.16
$region0: #{psm_gnn_forward.16}
  #allocation0 [shape = 'u32[]', space=smem, size = 0x4, offset = 0x4, fixed_abs, tag = 'smem constant byte address 0x4 - core index']
  #allocation1 [shape = 'u32[72,128]{1,0:T(1,128)}', space=vmem, size = 0x9000, scoped, tag = 'internal scratch']
  %s0 = inlined_call_operand.vmem [shape: bf16[6,2,512], index: 0, kind: input, shape index: {}]
  %s1 = inlined_call_operand.hbm [shape: s8[6,512,512], index: 1, kind: input, shape index: {}]
  %s2 = inlined_call_operand.vmem [shape: bf16[6,2,512], index: 2, kind: input, shape index: {}]
  %s3 = inlined_call_operand.hbm [shape: f32[6], index: 3, kind: input, shape index: {}]
  %s4 = inlined_call_operand.vmem [shape: f32[6,2,512], index: 4, kind: output, shape index: {}]
  %s5 = sld [smem:[#allocation0]]
  $region57: #{psm_gnn_forward.16} parent=0
    _
  %s7 = ssub.s32 1, %s5
  %s8 = scalar_select 0, %s7, %s5
  $region1: #{psm_gnn_forward.16} parent=0
    #allocation2 [shape = 'u8[524288]{0}', space=vmem, size = 0x80000, scoped, tag = 'input window, operand 1']
    #allocation3 [shape = 's32[2]{0}', space=sflag, size = 0x8, scoped, tag = 'scoped memory for psm_gnn_forward.16']
    #allocation4 [shape = 's32[2]{0}', space=sflag, size = 0x8, scoped, tag = 'scoped memory for psm_gnn_forward.16']
    #allocation5 [shape = 'u8[512]{0}', space=smem, size = 0x200, scoped, tag = 'input window, operand 3, single buffered']
    %9 = vsyncpa [#allocation3], 0
    %s10 = scalar_lea.sflag [#allocation3], 1
    %11 = vsyncpa %s10, 0
    %12 = vsyncpa [#allocation4], 0
    loop: start=0, step=1, limit=8
    $region2: #{psm_gnn_forward.16} parent=1 // loop_pre_header
      _
    $region3: #{psm_gnn_forward.16} parent=1 // loop_header
      %s14 = sphi 0, %s18
      %p15 = scmp.ge.s32.totalorder %s14, 8
      %s24 = sphi 0, %s26
      %s27 = sphi 0, %s24
      %s28 = sphi 0, %s27
      %s44 = sphi 0, %s28
      %s50 = sphi 0, %s52
      %s53 = sphi 0, %s50
      %s54 = sphi 0, %s53
      %s70 = sphi 0, %s54
      %s76 = sphi 0, %s78
      %s79 = sphi 0, %s76
      %s80 = sphi 0, %s79
      %s96 = sphi 0, %s80
      %s100 = sphi 0, %s100
      %s102 = sphi 0, %s100
      %s103 = sphi 0, %s102
      %s117 = sphi 0, %s103
      %s123 = sphi 0, %s125
      %s126 = sphi 0, %s123
      %s127 = sphi 0, %s126
      %s143 = sphi 0, %s127
    $region4: #{psm_gnn_forward.16} parent=1 // loop_header_branch
      %17 = sbr.rel (%p15) target = $region8
    $region5: #{psm_gnn_forward.16} parent=1 // loop_body
      %s19 = ssub.s32 %s14, 1
      %s20 = ssub.s32 %s14, 2
      %s21 = sadd.s32 %s14, 1
      %s22 = ssub.s32 %s14, %s21
      %p23 = scmp.eq.s32.totalorder %s22, 0
      %s25 = sadd.s32 %s24, 1
      %s26 = scalar_select %p23, %s24, %s25
      %p29 = pneg %p23
      %p30 = scmp.eq.s32.totalorder %s14, 5
      %p31 = por %p29, %p30
      %p32 = scmp.ne.s32.totalorder %s24, %s27
      %p33 = scmp.eq.s32.totalorder %s14, 0
      %p34 = por %p32, %p33
      %p35 = scmp.ne.s32.totalorder %s24, %s27
      %p36 = scmp.eq.s32.totalorder %s19, 5
      %p37 = por %p35, %p36
      %p38 = scmp.ne.s32.totalorder %s27, %s28
      %p39 = scmp.eq.s32.totalorder %s19, 0
      %p40 = por %p38, %p39
      %p41 = scmp.ne.s32.totalorder %s27, %s28
      %p42 = scmp.eq.s32.totalorder %s20, 5
      %p43 = por %p41, %p42
      %p45 = scmp.ne.s32.totalorder %s28, %s44
      %p46 = scmp.eq.s32.totalorder %s20, 0
      %p47 = por %p45, %p46
      %s48 = ssub.s32 %s14, %s21
      %p49 = scmp.eq.s32.totalorder %s48, 0
      %s51 = sadd.s32 %s50, 1
      %s52 = scalar_select %p49, %s50, %s51
      %p55 = pneg %p49
      %p56 = scmp.eq.s32.totalorder %s14, 5
      %p57 = por %p55, %p56
      %p58 = scmp.ne.s32.totalorder %s50, %s53
      %p59 = scmp.eq.s32.totalorder %s14, 0
      %p60 = por %p58, %p59
      %p61 = scmp.ne.s32.totalorder %s50, %s53
      %p62 = scmp.eq.s32.totalorder %s19, 5
      %p63 = por %p61, %p62
      %p64 = scmp.ne.s32.totalorder %s53, %s54
      %p65 = scmp.eq.s32.totalorder %s19, 0
      %p66 = por %p64, %p65
      %p67 = scmp.ne.s32.totalorder %s53, %s54
      %p68 = scmp.eq.s32.totalorder %s20, 5
      %p69 = por %p67, %p68
      %p71 = scmp.ne.s32.totalorder %s54, %s70
      %p72 = scmp.eq.s32.totalorder %s20, 0
      %p73 = por %p71, %p72
      %s74 = ssub.s32 %s14, %s21
      %p75 = scmp.eq.s32.totalorder %s74, 0
      %s77 = sadd.s32 %s76, 1
      %s78 = scalar_select %p75, %s76, %s77
      %p81 = pneg %p75
      %p82 = scmp.eq.s32.totalorder %s14, 5
      %p83 = por %p81, %p82
      %p84 = scmp.ne.s32.totalorder %s76, %s79
      %p85 = scmp.eq.s32.totalorder %s14, 0
      %p86 = por %p84, %p85
      %p87 = scmp.ne.s32.totalorder %s76, %s79
      %p88 = scmp.eq.s32.totalorder %s19, 5
      %p89 = por %p87, %p88
      %p90 = scmp.ne.s32.totalorder %s79, %s80
      %p91 = scmp.eq.s32.totalorder %s19, 0
      %p92 = por %p90, %p91
      %p93 = scmp.ne.s32.totalorder %s79, %s80
      %p94 = scmp.eq.s32.totalorder %s20, 5
      %p95 = por %p93, %p94
      %p97 = scmp.ne.s32.totalorder %s80, %s96
      %p98 = scmp.eq.s32.totalorder %s20, 0
      %p99 = por %p97, %p98
      %s101 = sadd.s32 %s100, 1
      %p104 = scmp.eq.s32.totalorder %s14, 5
      %p105 = scmp.ne.s32.totalorder %s100, %s102
      %p106 = scmp.eq.s32.totalorder %s14, 0
      %p107 = por %p105, %p106
      %p108 = scmp.ne.s32.totalorder %s100, %s102
      %p109 = scmp.eq.s32.totalorder %s19, 5
      %p110 = por %p108, %p109
      %p111 = scmp.ne.s32.totalorder %s102, %s103
      %p112 = scmp.eq.s32.totalorder %s19, 0
      %p113 = por %p111, %p112
      %p114 = scmp.ne.s32.totalorder %s102, %s103
      %p115 = scmp.eq.s32.totalorder %s20, 5
      %p116 = por %p114, %p115
      %p118 = scmp.ne.s32.totalorder %s103, %s117
      %p119 = scmp.eq.s32.totalorder %s20, 0
      %p120 = por %p118, %p119
      %s121 = ssub.s32 %s14, %s21
      %p122 = scmp.eq.s32.totalorder %s121, 0
      %s124 = sadd.s32 %s123, 1
      %s125 = scalar_select %p122, %s123, %s124
      %p128 = pneg %p122
      %p129 = scmp.eq.s32.totalorder %s14, 5
      %p130 = por %p128, %p129
      %p131 = scmp.ne.s32.totalorder %s123, %s126
      %p132 = scmp.eq.s32.totalorder %s14, 0
      %p133 = por %p131, %p132
      %p134 = scmp.ne.s32.totalorder %s123, %s126
      %p135 = scmp.eq.s32.totalorder %s19, 5
      %p136 = por %p134, %p135
      %p137 = scmp.ne.s32.totalorder %s126, %s127
      %p138 = scmp.eq.s32.totalorder %s19, 0
      %p139 = por %p137, %p138
      %p140 = scmp.ne.s32.totalorder %s126, %s127
      %p141 = scmp.eq.s32.totalorder %s20, 5
      %p142 = por %p140, %p141
      %p144 = scmp.ne.s32.totalorder %s127, %s143
      %p145 = scmp.eq.s32.totalorder %s20, 0
      %p146 = por %p144, %p145
      %p147 = scmp.le.s32.totalorder 1, %s14
      %p148 = scmp.lt.s32.totalorder %s14, 7
      %p149 = pnand %p147, %p148
      %p150 = pneg %p149
      // Predicated region
      $region9: #{psm_gnn_forward.16} parent=5 // pred_check
        _
      $region10: #{psm_gnn_forward.16} parent=5 // pred_check_branch
        %152 = sbr.rel (%p149) target = $region12
      $region11: #{psm_gnn_forward.16} parent=5 // pred_region
        %s153 = ssub.s32 %s14, 1
        // Predicated region
        $region13: #{psm_gnn_forward.16} parent=11 // pred_check
          %p154 = pneg %p113
        $region14: #{psm_gnn_forward.16} parent=11 // pred_check_branch
          %156 = sbr.rel (%p154) target = $region16
        $region15: #{psm_gnn_forward.16} parent=11 // pred_region
          %158 = vsyncadd [#allocation4], 0
          %s160 = sshll.u32 %s3, 4
          %s161 = int_to_ptr.hbm [resolvable:$true] %s160
          %163 = dma.hbm_to_smem %s161, 16, [#allocation5], [#allocation4]
        $region16: #{psm_gnn_forward.16} parent=11 // pred_fallthru
          _
      $region12: #{psm_gnn_forward.16} parent=5 // pred_fallthru
        _
      %p164 = scmp.lt.s32.totalorder %s14, 6
      // Predicated region
      $region17: #{psm_gnn_forward.16} parent=5 // pred_check
        %p165 = pneg %p164
      $region18: #{psm_gnn_forward.16} parent=5 // pred_check_branch
        %167 = sbr.rel (%p165) target = $region20
      $region19: #{psm_gnn_forward.16} parent=5 // pred_region
        // Predicated region
        $region21: #{psm_gnn_forward.16} parent=19 // pred_check
          %p168 = pneg %p34
        $region22: #{psm_gnn_forward.16} parent=19 // pred_check_branch
          %170 = sbr.rel (%p168) target = $region24
        $region23: #{psm_gnn_forward.16} parent=19 // pred_region
          %p171 = scmp.lt.s32.totalorder %s14, 5
          %s172 = scalar_select %p171, %s14, 5
          %s173 = smul.addr %s172, 4
          %s174 = scalar_lea.vmem %s0, %s173
        $region24: #{psm_gnn_forward.16} parent=19 // pred_fallthru
          _
        // Predicated region
        $region25: #{psm_gnn_forward.16} parent=19 // pred_check
          %p175 = pneg %p60
        $region26: #{psm_gnn_forward.16} parent=19 // pred_check_branch
          %177 = sbr.rel (%p175) target = $region28
        $region27: #{psm_gnn_forward.16} parent=19 // pred_region
          %s178 = sand.u32 %s50, 1
          %s179 = scalar_lea.sflag [#allocation3], %s178
          %s180 = sand.u32 %s50, 1
          %s181 = smul.addr %s180, 512
          %s182 = scalar_lea.vmem [#allocation2], %s181
          %184 = vsyncadd %s179, 0
          %s185 = smul.addr %s14, 64
          %s186 = smul.addr %s185, 8
          %s187 = scalar_lea.hbm %s1, %s186
          %s188 = sshll.u32 %s187, 4
          %s189 = int_to_ptr.hbm [resolvable:$true] %s188
          %s190 = sshll.u32 %s182, 4
          %s191 = int_to_ptr.vmem [resolvable:$true] %s190
          %196 = dma.hbm_to_vmem [thread:$0]  %s189, 8192, %s191, %s179, 512, 512, 32
        $region28: #{psm_gnn_forward.16} parent=19 // pred_fallthru
          _
        // Predicated region
        $region29: #{psm_gnn_forward.16} parent=19 // pred_check
          %p197 = pneg %p86
        $region30: #{psm_gnn_forward.16} parent=19 // pred_check_branch
          %199 = sbr.rel (%p197) target = $region32
        $region31: #{psm_gnn_forward.16} parent=19 // pred_region
          %p200 = scmp.lt.s32.totalorder %s14, 5
          %s201 = scalar_select %p200, %s14, 5
          %s202 = smul.addr %s201, 4
          %s203 = scalar_lea.vmem %s2, %s202
        $region32: #{psm_gnn_forward.16} parent=19 // pred_fallthru
          _
      $region20: #{psm_gnn_forward.16} parent=5 // pred_fallthru
        _
      %p204 = scmp.le.s32.totalorder 1, %s14
      %p205 = scmp.lt.s32.totalorder %s14, 7
      %p206 = pnand %p204, %p205
      %p207 = pneg %p206
      // Predicated region
      $region33: #{psm_gnn_forward.16} parent=5 // pred_check
        _
      $region34: #{psm_gnn_forward.16} parent=5 // pred_check_branch
        %209 = sbr.rel (%p206) target = $region36
      $region35: #{psm_gnn_forward.16} parent=5 // pred_region
        %s210 = ssub.s32 %s14, 1
        %s211 = sand.u32 %s53, 1
        %s212 = scalar_lea.sflag [#allocation3], %s211
        %s213 = sand.u32 %s53, 1
        %s214 = smul.addr %s213, 512
        %s215 = scalar_lea.vmem [#allocation2], %s214
        // Predicated region
        $region37: #{psm_gnn_forward.16} parent=35 // pred_check
          %p216 = pneg %p66
        $region38: #{psm_gnn_forward.16} parent=35 // pred_check_branch
          %218 = sbr.rel (%p216) target = $region40
        $region39: #{psm_gnn_forward.16} parent=35 // pred_region
          %220 = dma.done %s212, 8192
        $region40: #{psm_gnn_forward.16} parent=35 // pred_fallthru
          _
        // Predicated region
        $region41: #{psm_gnn_forward.16} parent=35 // pred_check
          %p221 = pneg %p113
        $region42: #{psm_gnn_forward.16} parent=35 // pred_check_branch
          %223 = sbr.rel (%p221) target = $region44
        $region43: #{psm_gnn_forward.16} parent=35 // pred_region
          %225 = dma.done [#allocation4], 16
        $region44: #{psm_gnn_forward.16} parent=35 // pred_fallthru
          _
        %226 = sfence
        %p227 = scmp.lt.s32.totalorder %s19, 5
        %s228 = scalar_select %p227, %s19, 5
        %s229 = smul.addr %s228, 4
        %s230 = scalar_lea.vmem %s0, %s229
        %p231 = pneg %p40
        %p232 = pneg %p37
        %s233 = sand.u32 %s53, 1
        %s234 = scalar_lea.sflag [#allocation3], %s233
        %s235 = sand.u32 %s53, 1
        %s236 = smul.addr %s235, 512
        %s237 = scalar_lea.vmem [#allocation2], %s236
        %p238 = pneg %p66
        %p239 = pneg %p63
        %p240 = scmp.lt.s32.totalorder %s19, 5
        %s241 = scalar_select %p240, %s19, 5
        %s242 = smul.addr %s241, 4
        %s243 = scalar_lea.vmem %s2, %s242
        %p244 = pneg %p92
        %p245 = pneg %p89
        %p246 = pneg %p113
        %p247 = pneg %p110
        %p248 = pneg %p139
        %p249 = pneg %p136
        %p250 = scmp.lt.s32.totalorder %s19, 5
        %s251 = scalar_select %p250, %s19, 5
        %s252 = smul.addr %s251, 4
        %s253 = smul.addr %s252, 2
        %s254 = scalar_lea.vmem %s4, %s253
        %p255 = scmp.lt.s32.totalorder %s19, 5
        %s256 = scalar_select %p255, %s19, 5
        %s257 = smul.addr %s256, 4
        %s258 = scalar_lea.vmem %s0, %s257
        %p259 = scmp.lt.s32.totalorder %s19, 5
        %s260 = scalar_select %p259, %s19, 5
        %s261 = smul.addr %s260, 4
        %s262 = scalar_lea.vmem %s2, %s261
        %p263 = scmp.lt.s32.totalorder %s19, 5
        %s264 = scalar_select %p263, %s19, 5
        %s265 = smul.addr %s264, 4
        %s266 = smul.addr %s265, 2
        %s267 = scalar_lea.vmem %s4, %s266
        %v268 = vld [vmem:[%s215] sm:$0xff]
        %v269 = vld [vmem:[%s215 + $0x8] sm:$0xff]
        %v270 = vld [vmem:[%s215 + $0x10] sm:$0xff]
        %v271 = vld [vmem:[%s215 + $0x18] sm:$0xff]
        %v272 = vld [vmem:[%s215 + $0x20] sm:$0xff]
        %v273 = vld [vmem:[%s215 + $0x28] sm:$0xff]
        %v274 = vld [vmem:[%s215 + $0x30] sm:$0xff]
        %v275 = vld [vmem:[%s215 + $0x38] sm:$0xff]
        %v276 = vld [vmem:[%s215 + $0x40] sm:$0xff]
        %v277 = vld [vmem:[%s215 + $0x48] sm:$0xff]
        %v278 = vld [vmem:[%s215 + $0x50] sm:$0xff]
        %v279 = vld [vmem:[%s215 + $0x58] sm:$0xff]
        %v280 = vld [vmem:[%s215 + $0x60] sm:$0xff]
        %v281 = vld [vmem:[%s215 + $0x68] sm:$0xff]
        %v282 = vld [vmem:[%s215 + $0x70] sm:$0xff]
        %v283 = vld [vmem:[%s215 + $0x78] sm:$0xff]
        %v284 = vld [vmem:[%s215 + $0x80] sm:$0xff]
        %v285 = vld [vmem:[%s215 + $0x88] sm:$0xff]
        %v286 = vld [vmem:[%s215 + $0x90] sm:$0xff]
        %v287 = vld [vmem:[%s215 + $0x98] sm:$0xff]
        %v288 = vld [vmem:[%s215 + $0xa0] sm:$0xff]
        %v289 = vld [vmem:[%s215 + $0xa8] sm:$0xff]
        %v290 = vld [vmem:[%s215 + $0xb0] sm:$0xff]
        %v291 = vld [vmem:[%s215 + $0xb8] sm:$0xff]
        %v292 = vld [vmem:[%s215 + $0xc0] sm:$0xff]
        %v293 = vld [vmem:[%s215 + $0xc8] sm:$0xff]
        %v294 = vld [vmem:[%s215 + $0xd0] sm:$0xff]
        %v295 = vld [vmem:[%s215 + $0xd8] sm:$0xff]
        %v296 = vld [vmem:[%s215 + $0xe0] sm:$0xff]
        %v297 = vld [vmem:[%s215 + $0xe8] sm:$0xff]
        %v298 = vld [vmem:[%s215 + $0xf0] sm:$0xff]
        %v299 = vld [vmem:[%s215 + $0xf8] sm:$0xff]
        %v300 = vld [vmem:[%s215 + $0x100] sm:$0xff]
        %v301 = vld [vmem:[%s215 + $0x108] sm:$0xff]
        %v302 = vld [vmem:[%s215 + $0x110] sm:$0xff]
        %v303 = vld [vmem:[%s215 + $0x118] sm:$0xff]
        %v304 = vld [vmem:[%s215 + $0x120] sm:$0xff]
        %v305 = vld [vmem:[%s215 + $0x128] sm:$0xff]
        %v306 = vld [vmem:[%s215 + $0x130] sm:$0xff]
        %v307 = vld [vmem:[%s215 + $0x138] sm:$0xff]
        %v308 = vld [vmem:[%s215 + $0x140] sm:$0xff]
        %v309 = vld [vmem:[%s215 + $0x148] sm:$0xff]
        %v310 = vld [vmem:[%s215 + $0x150] sm:$0xff]
        %v311 = vld [vmem:[%s215 + $0x158] sm:$0xff]
        %v312 = vld [vmem:[%s215 + $0x160] sm:$0xff]
        %v313 = vld [vmem:[%s215 + $0x168] sm:$0xff]
        %v314 = vld [vmem:[%s215 + $0x170] sm:$0xff]
        %v315 = vld [vmem:[%s215 + $0x178] sm:$0xff]
        %v316 = vld [vmem:[%s215 + $0x180] sm:$0xff]
        %v317 = vld [vmem:[%s215 + $0x188] sm:$0xff]
        %v318 = vld [vmem:[%s215 + $0x190] sm:$0xff]
        %v319 = vld [vmem:[%s215 + $0x198] sm:$0xff]
        %v320 = vld [vmem:[%s215 + $0x1a0] sm:$0xff]
        %v321 = vld [vmem:[%s215 + $0x1a8] sm:$0xff]
        %v322 = vld [vmem:[%s215 + $0x1b0] sm:$0xff]
        %v323 = vld [vmem:[%s215 + $0x1b8] sm:$0xff]
        %v324 = vld [vmem:[%s215 + $0x1c0] sm:$0xff]
        %v325 = vld [vmem:[%s215 + $0x1c8] sm:$0xff]
        %v326 = vld [vmem:[%s215 + $0x1d0] sm:$0xff]
        %v327 = vld [vmem:[%s215 + $0x1d8] sm:$0xff]
        %v328 = vld [vmem:[%s215 + $0x1e0] sm:$0xff]
        %v329 = vld [vmem:[%s215 + $0x1e8] sm:$0xff]
        %v330 = vld [vmem:[%s215 + $0x1f0] sm:$0xff]
        %v331 = vld [vmem:[%s215 + $0x1f8] sm:$0xff]
        %v332 = vunpack.c.0.s8 %v268
        %v333 = vunpack.c.0.s8 %v269
        %v334 = vunpack.c.0.s8 %v270
        %v335 = vunpack.c.0.s8 %v271
        %v336 = vunpack.c.1.s8 %v268
        %v337 = vunpack.c.1.s8 %v269
        %v338 = vunpack.c.1.s8 %v270
        %v339 = vunpack.c.1.s8 %v271
        %v340 = vunpack.c.2.s8 %v268
        %v341 = vunpack.c.2.s8 %v269
        %v342 = vunpack.c.2.s8 %v270
        %v343 = vunpack.c.2.s8 %v271
        %v344 = vunpack.c.3.s8 %v268
        %v345 = vunpack.c.3.s8 %v269
        %v346 = vunpack.c.3.s8 %v270
        %v347 = vunpack.c.3.s8 %v271
        %v348 = vunpack.c.0.s8 %v272
        %v349 = vunpack.c.0.s8 %v273
        %v350 = vunpack.c.0.s8 %v274
        %v351 = vunpack.c.0.s8 %v275
        %v352 = vunpack.c.1.s8 %v272
        %v353 = vunpack.c.1.s8 %v273
        %v354 = vunpack.c.1.s8 %v274
        %v355 = vunpack.c.1.s8 %v275
        %v356 = vunpack.c.2.s8 %v272
        %v357 = vunpack.c.2.s8 %v273
        %v358 = vunpack.c.2.s8 %v274
        %v359 = vunpack.c.2.s8 %v275
        %v360 = vunpack.c.3.s8 %v272
        %v361 = vunpack.c.3.s8 %v273
        %v362 = vunpack.c.3.s8 %v274
        %v363 = vunpack.c.3.s8 %v275
        %v364 = vunpack.c.0.s8 %v276
        %v365 = vunpack.c.0.s8 %v277
        %v366 = vunpack.c.0.s8 %v278
        %v367 = vunpack.c.0.s8 %v279
        %v368 = vunpack.c.1.s8 %v276
        %v369 = vunpack.c.1.s8 %v277
        %v370 = vunpack.c.1.s8 %v278
        %v371 = vunpack.c.1.s8 %v279
        %v372 = vunpack.c.2.s8 %v276
        %v373 = vunpack.c.2.s8 %v277
        %v374 = vunpack.c.2.s8 %v278
        %v375 = vunpack.c.2.s8 %v279
        %v376 = vunpack.c.3.s8 %v276
        %v377 = vunpack.c.3.s8 %v277
        %v378 = vunpack.c.3.s8 %v278
        %v379 = vunpack.c.3.s8 %v279
        %v380 = vunpack.c.0.s8 %v280
        %v381 = vunpack.c.0.s8 %v281
        %v382 = vunpack.c.0.s8 %v282
        %v383 = vunpack.c.0.s8 %v283
        %v384 = vunpack.c.1.s8 %v280
        %v385 = vunpack.c.1.s8 %v281
        %v386 = vunpack.c.1.s8 %v282
        %v387 = vunpack.c.1.s8 %v283
        %v388 = vunpack.c.2.s8 %v280
        %v389 = vunpack.c.2.s8 %v281
        %v390 = vunpack.c.2.s8 %v282
        %v391 = vunpack.c.2.s8 %v283
        %v392 = vunpack.c.3.s8 %v280
        %v393 = vunpack.c.3.s8 %v281
        %v394 = vunpack.c.3.s8 %v282
        %v395 = vunpack.c.3.s8 %v283
        %v396 = vunpack.c.0.s8 %v284
        %v397 = vunpack.c.0.s8 %v285
        %v398 = vunpack.c.0.s8 %v286
        %v399 = vunpack.c.0.s8 %v287
        %v400 = vunpack.c.1.s8 %v284
        %v401 = vunpack.c.1.s8 %v285
        %v402 = vunpack.c.1.s8 %v286
        %v403 = vunpack.c.1.s8 %v287
        %v404 = vunpack.c.2.s8 %v284
        %v405 = vunpack.c.2.s8 %v285
        %v406 = vunpack.c.2.s8 %v286
        %v407 = vunpack.c.2.s8 %v287
        %v408 = vunpack.c.3.s8 %v284
        %v409 = vunpack.c.3.s8 %v285
        %v410 = vunpack.c.3.s8 %v286
        %v411 = vunpack.c.3.s8 %v287
        %v412 = vunpack.c.0.s8 %v288
        %v413 = vunpack.c.0.s8 %v289
        %v414 = vunpack.c.0.s8 %v290
        %v415 = vunpack.c.0.s8 %v291
        %v416 = vunpack.c.1.s8 %v288
        %v417 = vunpack.c.1.s8 %v289
        %v418 = vunpack.c.1.s8 %v290
        %v419 = vunpack.c.1.s8 %v291
        %v420 = vunpack.c.2.s8 %v288
        %v421 = vunpack.c.2.s8 %v289
        %v422 = vunpack.c.2.s8 %v290
        %v423 = vunpack.c.2.s8 %v291
        %v424 = vunpack.c.3.s8 %v288
        %v425 = vunpack.c.3.s8 %v289
        %v426 = vunpack.c.3.s8 %v290
        %v427 = vunpack.c.3.s8 %v291
        %v428 = vunpack.c.0.s8 %v292
        %v429 = vunpack.c.0.s8 %v293
        %v430 = vunpack.c.0.s8 %v294
        %v431 = vunpack.c.0.s8 %v295
        %v432 = vunpack.c.1.s8 %v292
        %v433 = vunpack.c.1.s8 %v293
        %v434 = vunpack.c.1.s8 %v294
        %v435 = vunpack.c.1.s8 %v295
        %v436 = vunpack.c.2.s8 %v292
        %v437 = vunpack.c.2.s8 %v293
        %v438 = vunpack.c.2.s8 %v294
        %v439 = vunpack.c.2.s8 %v295
        %v440 = vunpack.c.3.s8 %v292
        %v441 = vunpack.c.3.s8 %v293
        %v442 = vunpack.c.3.s8 %v294
        %v443 = vunpack.c.3.s8 %v295
        %v444 = vunpack.c.0.s8 %v296
        %v445 = vunpack.c.0.s8 %v297
        %v446 = vunpack.c.0.s8 %v298
        %v447 = vunpack.c.0.s8 %v299
        %v448 = vunpack.c.1.s8 %v296
        %v449 = vunpack.c.1.s8 %v297
        %v450 = vunpack.c.1.s8 %v298
        %v451 = vunpack.c.1.s8 %v299
        %v452 = vunpack.c.2.s8 %v296
        %v453 = vunpack.c.2.s8 %v297
        %v454 = vunpack.c.2.s8 %v298
        %v455 = vunpack.c.2.s8 %v299
        %v456 = vunpack.c.3.s8 %v296
        %v457 = vunpack.c.3.s8 %v297
        %v458 = vunpack.c.3.s8 %v298
        %v459 = vunpack.c.3.s8 %v299
        %v460 = vunpack.c.0.s8 %v300
        %v461 = vunpack.c.0.s8 %v301
        %v462 = vunpack.c.0.s8 %v302
        %v463 = vunpack.c.0.s8 %v303
        %v464 = vunpack.c.1.s8 %v300
        %v465 = vunpack.c.1.s8 %v301
        %v466 = vunpack.c.1.s8 %v302
        %v467 = vunpack.c.1.s8 %v303
        %v468 = vunpack.c.2.s8 %v300
        %v469 = vunpack.c.2.s8 %v301
        %v470 = vunpack.c.2.s8 %v302
        %v471 = vunpack.c.2.s8 %v303
        %v472 = vunpack.c.3.s8 %v300
        %v473 = vunpack.c.3.s8 %v301
        %v474 = vunpack.c.3.s8 %v302
        %v475 = vunpack.c.3.s8 %v303
        %v476 = vunpack.c.0.s8 %v304
        %v477 = vunpack.c.0.s8 %v305
        %v478 = vunpack.c.0.s8 %v306
        %v479 = vunpack.c.0.s8 %v307
        %v480 = vunpack.c.1.s8 %v304
        %v481 = vunpack.c.1.s8 %v305
        %v482 = vunpack.c.1.s8 %v306
        %v483 = vunpack.c.1.s8 %v307
        %v484 = vunpack.c.2.s8 %v304
        %v485 = vunpack.c.2.s8 %v305
        %v486 = vunpack.c.2.s8 %v306
        %v487 = vunpack.c.2.s8 %v307
        %v488 = vunpack.c.3.s8 %v304
        %v489 = vunpack.c.3.s8 %v305
        %v490 = vunpack.c.3.s8 %v306
        %v491 = vunpack.c.3.s8 %v307
        %v492 = vunpack.c.0.s8 %v308
        %v493 = vunpack.c.0.s8 %v309
        %v494 = vunpack.c.0.s8 %v310
        %v495 = vunpack.c.0.s8 %v311
        %v496 = vunpack.c.1.s8 %v308
        %v497 = vunpack.c.1.s8 %v309
        %v498 = vunpack.c.1.s8 %v310
        %v499 = vunpack.c.1.s8 %v311
        %v500 = vunpack.c.2.s8 %v308
        %v501 = vunpack.c.2.s8 %v309
        %v502 = vunpack.c.2.s8 %v310
        %v503 = vunpack.c.2.s8 %v311
        %v504 = vunpack.c.3.s8 %v308
        %v505 = vunpack.c.3.s8 %v309
        %v506 = vunpack.c.3.s8 %v310
        %v507 = vunpack.c.3.s8 %v311
        %v508 = vunpack.c.0.s8 %v312
        %v509 = vunpack.c.0.s8 %v313
        %v510 = vunpack.c.0.s8 %v314
        %v511 = vunpack.c.0.s8 %v315
        %v512 = vunpack.c.1.s8 %v312
        %v513 = vunpack.c.1.s8 %v313
        %v514 = vunpack.c.1.s8 %v314
        %v515 = vunpack.c.1.s8 %v315
        %v516 = vunpack.c.2.s8 %v312
        %v517 = vunpack.c.2.s8 %v313
        %v518 = vunpack.c.2.s8 %v314
        %v519 = vunpack.c.2.s8 %v315
        %v520 = vunpack.c.3.s8 %v312
        %v521 = vunpack.c.3.s8 %v313
        %v522 = vunpack.c.3.s8 %v314
        %v523 = vunpack.c.3.s8 %v315
        %v524 = vunpack.c.0.s8 %v316
        %v525 = vunpack.c.0.s8 %v317
        %v526 = vunpack.c.0.s8 %v318
        %v527 = vunpack.c.0.s8 %v319
        %v528 = vunpack.c.1.s8 %v316
        %v529 = vunpack.c.1.s8 %v317
        %v530 = vunpack.c.1.s8 %v318
        %v531 = vunpack.c.1.s8 %v319
        %v532 = vunpack.c.2.s8 %v316
        %v533 = vunpack.c.2.s8 %v317
        %v534 = vunpack.c.2.s8 %v318
        %v535 = vunpack.c.2.s8 %v319
        %v536 = vunpack.c.3.s8 %v316
        %v537 = vunpack.c.3.s8 %v317
        %v538 = vunpack.c.3.s8 %v318
        %v539 = vunpack.c.3.s8 %v319
        %v540 = vunpack.c.0.s8 %v320
        %v541 = vunpack.c.0.s8 %v321
        %v542 = vunpack.c.0.s8 %v322
        %v543 = vunpack.c.0.s8 %v323
        %v544 = vunpack.c.1.s8 %v320
        %v545 = vunpack.c.1.s8 %v321
        %v546 = vunpack.c.1.s8 %v322
        %v547 = vunpack.c.1.s8 %v323
        %v548 = vunpack.c.2.s8 %v320
        %v549 = vunpack.c.2.s8 %v321
        %v550 = vunpack.c.2.s8 %v322
        %v551 = vunpack.c.2.s8 %v323
        %v552 = vunpack.c.3.s8 %v320
        %v553 = vunpack.c.3.s8 %v321
        %v554 = vunpack.c.3.s8 %v322
        %v555 = vunpack.c.3.s8 %v323
        %v556 = vunpack.c.0.s8 %v324
        %v557 = vunpack.c.0.s8 %v325
        %v558 = vunpack.c.0.s8 %v326
        %v559 = vunpack.c.0.s8 %v327
        %v560 = vunpack.c.1.s8 %v324
        %v561 = vunpack.c.1.s8 %v325
        %v562 = vunpack.c.1.s8 %v326
        %v563 = vunpack.c.1.s8 %v327
        %v564 = vunpack.c.2.s8 %v324
        %v565 = vunpack.c.2.s8 %v325
        %v566 = vunpack.c.2.s8 %v326
        %v567 = vunpack.c.2.s8 %v327
        %v568 = vunpack.c.3.s8 %v324
        %v569 = vunpack.c.3.s8 %v325
        %v570 = vunpack.c.3.s8 %v326
        %v571 = vunpack.c.3.s8 %v327
        %v572 = vunpack.c.0.s8 %v328
        %v573 = vunpack.c.0.s8 %v329
        %v574 = vunpack.c.0.s8 %v330
        %v575 = vunpack.c.0.s8 %v331
        %v576 = vunpack.c.1.s8 %v328
        %v577 = vunpack.c.1.s8 %v329
        %v578 = vunpack.c.1.s8 %v330
        %v579 = vunpack.c.1.s8 %v331
        %v580 = vunpack.c.2.s8 %v328
        %v581 = vunpack.c.2.s8 %v329
        %v582 = vunpack.c.2.s8 %v330
        %v583 = vunpack.c.2.s8 %v331
        %v584 = vunpack.c.3.s8 %v328
        %v585 = vunpack.c.3.s8 %v329
        %v586 = vunpack.c.3.s8 %v330
        %v587 = vunpack.c.3.s8 %v331
        %v588 = vcvt.s32.f32 %v332
        %v589 = vcvt.s32.f32 %v333
        %v590 = vcvt.s32.f32 %v334
        %v591 = vcvt.s32.f32 %v335
        %v592 = vcvt.s32.f32 %v336
        %v593 = vcvt.s32.f32 %v337
        %v594 = vcvt.s32.f32 %v338
        %v595 = vcvt.s32.f32 %v339
        %v596 = vcvt.s32.f32 %v340
        %v597 = vcvt.s32.f32 %v341
        %v598 = vcvt.s32.f32 %v342
        %v599 = vcvt.s32.f32 %v343
        %v600 = vcvt.s32.f32 %v344
        %v601 = vcvt.s32.f32 %v345
        %v602 = vcvt.s32.f32 %v346
        %v603 = vcvt.s32.f32 %v347
        %v604 = vcvt.s32.f32 %v348
        %v605 = vcvt.s32.f32 %v349
        %v606 = vcvt.s32.f32 %v350
        %v607 = vcvt.s32.f32 %v351
        %v608 = vcvt.s32.f32 %v352
        %v609 = vcvt.s32.f32 %v353
        %v610 = vcvt.s32.f32 %v354
        %v611 = vcvt.s32.f32 %v355
        %v612 = vcvt.s32.f32 %v356
        %v613 = vcvt.s32.f32 %v357
        %v614 = vcvt.s32.f32 %v358
        %v615 = vcvt.s32.f32 %v359
        %v616 = vcvt.s32.f32 %v360
        %v617 = vcvt.s32.f32 %v361
        %v618 = vcvt.s32.f32 %v362
        %v619 = vcvt.s32.f32 %v363
        %v620 = vcvt.s32.f32 %v364
        %v621 = vcvt.s32.f32 %v365
        %v622 = vcvt.s32.f32 %v366
        %v623 = vcvt.s32.f32 %v367
        %v624 = vcvt.s32.f32 %v368
        %v625 = vcvt.s32.f32 %v369
        %v626 = vcvt.s32.f32 %v370
        %v627 = vcvt.s32.f32 %v371
        %v628 = vcvt.s32.f32 %v372
        %v629 = vcvt.s32.f32 %v373
        %v630 = vcvt.s32.f32 %v374
        %v631 = vcvt.s32.f32 %v375
        %v632 = vcvt.s32.f32 %v376
        %v633 = vcvt.s32.f32 %v377
        %v634 = vcvt.s32.f32 %v378
        %v635 = vcvt.s32.f32 %v379
        %v636 = vcvt.s32.f32 %v380
        %v637 = vcvt.s32.f32 %v381
        %v638 = vcvt.s32.f32 %v382
        %v639 = vcvt.s32.f32 %v383
        %v640 = vcvt.s32.f32 %v384
        %v641 = vcvt.s32.f32 %v385
        %v642 = vcvt.s32.f32 %v386
        %v643 = vcvt.s32.f32 %v387
        %v644 = vcvt.s32.f32 %v388
        %v645 = vcvt.s32.f32 %v389
        %v646 = vcvt.s32.f32 %v390
        %v647 = vcvt.s32.f32 %v391
        %v648 = vcvt.s32.f32 %v392
        %v649 = vcvt.s32.f32 %v393
        %v650 = vcvt.s32.f32 %v394
        %v651 = vcvt.s32.f32 %v395
        %v652 = vcvt.s32.f32 %v396
        %v653 = vcvt.s32.f32 %v397
        %v654 = vcvt.s32.f32 %v398
        %v655 = vcvt.s32.f32 %v399
        %v656 = vcvt.s32.f32 %v400
        %v657 = vcvt.s32.f32 %v401
        %v658 = vcvt.s32.f32 %v402
        %v659 = vcvt.s32.f32 %v403
        %v660 = vcvt.s32.f32 %v404
        %v661 = vcvt.s32.f32 %v405
        %v662 = vcvt.s32.f32 %v406
        %v663 = vcvt.s32.f32 %v407
        %v664 = vcvt.s32.f32 %v408
        %v665 = vcvt.s32.f32 %v409
        %v666 = vcvt.s32.f32 %v410
        %v667 = vcvt.s32.f32 %v411
        %v668 = vcvt.s32.f32 %v412
        %v669 = vcvt.s32.f32 %v413
        %v670 = vcvt.s32.f32 %v414
        %v671 = vcvt.s32.f32 %v415
        %v672 = vcvt.s32.f32 %v416
        %v673 = vcvt.s32.f32 %v417
        %v674 = vcvt.s32.f32 %v418
        %v675 = vcvt.s32.f32 %v419
        %v676 = vcvt.s32.f32 %v420
        %v677 = vcvt.s32.f32 %v421
        %v678 = vcvt.s32.f32 %v422
        %v679 = vcvt.s32.f32 %v423
        %v680 = vcvt.s32.f32 %v424
        %v681 = vcvt.s32.f32 %v425
        %v682 = vcvt.s32.f32 %v426
        %v683 = vcvt.s32.f32 %v427
        %v684 = vcvt.s32.f32 %v428
        %v685 = vcvt.s32.f32 %v429
        %v686 = vcvt.s32.f32 %v430
        %v687 = vcvt.s32.f32 %v431
        %v688 = vcvt.s32.f32 %v432
        %v689 = vcvt.s32.f32 %v433
        %v690 = vcvt.s32.f32 %v434
        %v691 = vcvt.s32.f32 %v435
        %v692 = vcvt.s32.f32 %v436
        %v693 = vcvt.s32.f32 %v437
        %v694 = vcvt.s32.f32 %v438
        %v695 = vcvt.s32.f32 %v439
        %v696 = vcvt.s32.f32 %v440
        %v697 = vcvt.s32.f32 %v441
        %v698 = vcvt.s32.f32 %v442
        %v699 = vcvt.s32.f32 %v443
        %v700 = vcvt.s32.f32 %v444
        %v701 = vcvt.s32.f32 %v445
        %v702 = vcvt.s32.f32 %v446
        %v703 = vcvt.s32.f32 %v447
        %v704 = vcvt.s32.f32 %v448
        %v705 = vcvt.s32.f32 %v449
        %v706 = vcvt.s32.f32 %v450
        %v707 = vcvt.s32.f32 %v451
        %v708 = vcvt.s32.f32 %v452
        %v709 = vcvt.s32.f32 %v453
        %v710 = vcvt.s32.f32 %v454
        %v711 = vcvt.s32.f32 %v455
        %v712 = vcvt.s32.f32 %v456
        %v713 = vcvt.s32.f32 %v457
        %v714 = vcvt.s32.f32 %v458
        %v715 = vcvt.s32.f32 %v459
        %v716 = vcvt.s32.f32 %v460
        %v717 = vcvt.s32.f32 %v461
        %v718 = vcvt.s32.f32 %v462
        %v719 = vcvt.s32.f32 %v463
        %v720 = vcvt.s32.f32 %v464
        %v721 = vcvt.s32.f32 %v465
        %v722 = vcvt.s32.f32 %v466
        %v723 = vcvt.s32.f32 %v467
        %v724 = vcvt.s32.f32 %v468
        %v725 = vcvt.s32.f32 %v469
        %v726 = vcvt.s32.f32 %v470
        %v727 = vcvt.s32.f32 %v471
        %v728 = vcvt.s32.f32 %v472
        %v729 = vcvt.s32.f32 %v473
        %v730 = vcvt.s32.f32 %v474
        %v731 = vcvt.s32.f32 %v475
        %v732 = vcvt.s32.f32 %v476
        %v733 = vcvt.s32.f32 %v477
        %v734 = vcvt.s32.f32 %v478
        %v735 = vcvt.s32.f32 %v479
        %v736 = vcvt.s32.f32 %v480
        %v737 = vcvt.s32.f32 %v481
        %v738 = vcvt.s32.f32 %v482
        %v739 = vcvt.s32.f32 %v483
        %v740 = vcvt.s32.f32 %v484
        %v741 = vcvt.s32.f32 %v485
        %v742 = vcvt.s32.f32 %v486
        %v743 = vcvt.s32.f32 %v487
        %v744 = vcvt.s32.f32 %v488
        %v745 = vcvt.s32.f32 %v489
        %v746 = vcvt.s32.f32 %v490
        %v747 = vcvt.s32.f32 %v491
        %v748 = vcvt.s32.f32 %v492
        %v749 = vcvt.s32.f32 %v493
        %v750 = vcvt.s32.f32 %v494
        %v751 = vcvt.s32.f32 %v495
        %v752 = vcvt.s32.f32 %v496
        %v753 = vcvt.s32.f32 %v497
        %v754 = vcvt.s32.f32 %v498
        %v755 = vcvt.s32.f32 %v499
        %v756 = vcvt.s32.f32 %v500
        %v757 = vcvt.s32.f32 %v501
        %v758 = vcvt.s32.f32 %v502
        %v759 = vcvt.s32.f32 %v503
        %v760 = vcvt.s32.f32 %v504
        %v761 = vcvt.s32.f32 %v505
        %v762 = vcvt.s32.f32 %v506
        %v763 = vcvt.s32.f32 %v507
        %v764 = vcvt.s32.f32 %v508
        %v765 = vcvt.s32.f32 %v509
        %v766 = vcvt.s32.f32 %v510
        %v767 = vcvt.s32.f32 %v511
        %v768 = vcvt.s32.f32 %v512
        %v769 = vcvt.s32.f32 %v513
        %v770 = vcvt.s32.f32 %v514
        %v771 = vcvt.s32.f32 %v515
        %v772 = vcvt.s32.f32 %v516
        %v773 = vcvt.s32.f32 %v517
        %v774 = vcvt.s32.f32 %v518
        %v775 = vcvt.s32.f32 %v519
        %v776 = vcvt.s32.f32 %v520
        %v777 = vcvt.s32.f32 %v521
        %v778 = vcvt.s32.f32 %v522
        %v779 = vcvt.s32.f32 %v523
        %v780 = vcvt.s32.f32 %v524
        %v781 = vcvt.s32.f32 %v525
        %v782 = vcvt.s32.f32 %v526
        %v783 = vcvt.s32.f32 %v527
        %v784 = vcvt.s32.f32 %v528
        %v785 = vcvt.s32.f32 %v529
        %v786 = vcvt.s32.f32 %v530
        %v787 = vcvt.s32.f32 %v531
        %v788 = vcvt.s32.f32 %v532
        %v789 = vcvt.s32.f32 %v533
        %v790 = vcvt.s32.f32 %v534
        %v791 = vcvt.s32.f32 %v535
        %v792 = vcvt.s32.f32 %v536
        %v793 = vcvt.s32.f32 %v537
        %v794 = vcvt.s32.f32 %v538
        %v795 = vcvt.s32.f32 %v539
        %v796 = vcvt.s32.f32 %v540
        %v797 = vcvt.s32.f32 %v541
        %v798 = vcvt.s32.f32 %v542
        %v799 = vcvt.s32.f32 %v543
        %v800 = vcvt.s32.f32 %v544
        %v801 = vcvt.s32.f32 %v545
        %v802 = vcvt.s32.f32 %v546
        %v803 = vcvt.s32.f32 %v547
        %v804 = vcvt.s32.f32 %v548
        %v805 = vcvt.s32.f32 %v549
        %v806 = vcvt.s32.f32 %v550
        %v807 = vcvt.s32.f32 %v551
        %v808 = vcvt.s32.f32 %v552
        %v809 = vcvt.s32.f32 %v553
        %v810 = vcvt.s32.f32 %v554
        %v811 = vcvt.s32.f32 %v555
        %v812 = vcvt.s32.f32 %v556
        %v813 = vcvt.s32.f32 %v557
        %v814 = vcvt.s32.f32 %v558
        %v815 = vcvt.s32.f32 %v559
        %v816 = vcvt.s32.f32 %v560
        %v817 = vcvt.s32.f32 %v561
        %v818 = vcvt.s32.f32 %v562
        %v819 = vcvt.s32.f32 %v563
        %v820 = vcvt.s32.f32 %v564
        %v821 = vcvt.s32.f32 %v565
        %v822 = vcvt.s32.f32 %v566
        %v823 = vcvt.s32.f32 %v567
        %v824 = vcvt.s32.f32 %v568
        %v825 = vcvt.s32.f32 %v569
        %v826 = vcvt.s32.f32 %v570
        %v827 = vcvt.s32.f32 %v571
        %v828 = vcvt.s32.f32 %v572
        %v829 = vcvt.s32.f32 %v573
        %v830 = vcvt.s32.f32 %v574
        %v831 = vcvt.s32.f32 %v575
        %v832 = vcvt.s32.f32 %v576
        %v833 = vcvt.s32.f32 %v577
        %v834 = vcvt.s32.f32 %v578
        %v835 = vcvt.s32.f32 %v579
        %v836 = vcvt.s32.f32 %v580
        %v837 = vcvt.s32.f32 %v581
        %v838 = vcvt.s32.f32 %v582
        %v839 = vcvt.s32.f32 %v583
        %v840 = vcvt.s32.f32 %v584
        %v841 = vcvt.s32.f32 %v585
        %v842 = vcvt.s32.f32 %v586
        %v843 = vcvt.s32.f32 %v587
        %v844 = vpack.c.bf16 %v592, %v588
        %v845 = vpack.c.bf16 %v593, %v589
        %v846 = vpack.c.bf16 %v594, %v590
        %v847 = vpack.c.bf16 %v595, %v591
        %v848 = vpack.c.bf16 %v600, %v596
        %v849 = vpack.c.bf16 %v601, %v597
        %v850 = vpack.c.bf16 %v602, %v598
        %v851 = vpack.c.bf16 %v603, %v599
        %v852 = vpack.c.bf16 %v608, %v604
        %v853 = vpack.c.bf16 %v609, %v605
        %v854 = vpack.c.bf16 %v610, %v606
        %v855 = vpack.c.bf16 %v611, %v607
        %v856 = vpack.c.bf16 %v616, %v612
        %v857 = vpack.c.bf16 %v617, %v613
        %v858 = vpack.c.bf16 %v618, %v614
        %v859 = vpack.c.bf16 %v619, %v615
        %v860 = vpack.c.bf16 %v624, %v620
        %v861 = vpack.c.bf16 %v625, %v621
        %v862 = vpack.c.bf16 %v626, %v622
        %v863 = vpack.c.bf16 %v627, %v623
        %v864 = vpack.c.bf16 %v632, %v628
        %v865 = vpack.c.bf16 %v633, %v629
        %v866 = vpack.c.bf16 %v634, %v630
        %v867 = vpack.c.bf16 %v635, %v631
        %v868 = vpack.c.bf16 %v640, %v636
        %v869 = vpack.c.bf16 %v641, %v637
        %v870 = vpack.c.bf16 %v642, %v638
        %v871 = vpack.c.bf16 %v643, %v639
        %v872 = vpack.c.bf16 %v648, %v644
        %v873 = vpack.c.bf16 %v649, %v645
        %v874 = vpack.c.bf16 %v650, %v646
        %v875 = vpack.c.bf16 %v651, %v647
        %v876 = vpack.c.bf16 %v656, %v652
        %v877 = vpack.c.bf16 %v657, %v653
        %v878 = vpack.c.bf16 %v658, %v654
        %v879 = vpack.c.bf16 %v659, %v655
        %v880 = vpack.c.bf16 %v664, %v660
        %v881 = vpack.c.bf16 %v665, %v661
        %v882 = vpack.c.bf16 %v666, %v662
        %v883 = vpack.c.bf16 %v667, %v663
        %v884 = vpack.c.bf16 %v672, %v668
        %v885 = vpack.c.bf16 %v673, %v669
        %v886 = vpack.c.bf16 %v674, %v670
        %v887 = vpack.c.bf16 %v675, %v671
        %v888 = vpack.c.bf16 %v680, %v676
        %v889 = vpack.c.bf16 %v681, %v677
        %v890 = vpack.c.bf16 %v682, %v678
        %v891 = vpack.c.bf16 %v683, %v679
        %v892 = vpack.c.bf16 %v688, %v684
        %v893 = vpack.c.bf16 %v689, %v685
        %v894 = vpack.c.bf16 %v690, %v686
        %v895 = vpack.c.bf16 %v691, %v687
        %v896 = vpack.c.bf16 %v696, %v692
        %v897 = vpack.c.bf16 %v697, %v693
        %v898 = vpack.c.bf16 %v698, %v694
        %v899 = vpack.c.bf16 %v699, %v695
        %v900 = vpack.c.bf16 %v704, %v700
        %v901 = vpack.c.bf16 %v705, %v701
        %v902 = vpack.c.bf16 %v706, %v702
        %v903 = vpack.c.bf16 %v707, %v703
        %v904 = vpack.c.bf16 %v712, %v708
        %v905 = vpack.c.bf16 %v713, %v709
        %v906 = vpack.c.bf16 %v714, %v710
        %v907 = vpack.c.bf16 %v715, %v711
        %v908 = vpack.c.bf16 %v720, %v716
        %v909 = vpack.c.bf16 %v721, %v717
        %v910 = vpack.c.bf16 %v722, %v718
        %v911 = vpack.c.bf16 %v723, %v719
        %v912 = vpack.c.bf16 %v728, %v724
        %v913 = vpack.c.bf16 %v729, %v725
        %v914 = vpack.c.bf16 %v730, %v726
        %v915 = vpack.c.bf16 %v731, %v727
        %v916 = vpack.c.bf16 %v736, %v732
        %v917 = vpack.c.bf16 %v737, %v733
        %v918 = vpack.c.bf16 %v738, %v734
        %v919 = vpack.c.bf16 %v739, %v735
        %v920 = vpack.c.bf16 %v744, %v740
        %v921 = vpack.c.bf16 %v745, %v741
        %v922 = vpack.c.bf16 %v746, %v742
        %v923 = vpack.c.bf16 %v747, %v743
        %v924 = vpack.c.bf16 %v752, %v748
        %v925 = vpack.c.bf16 %v753, %v749
        %v926 = vpack.c.bf16 %v754, %v750
        %v927 = vpack.c.bf16 %v755, %v751
        %v928 = vpack.c.bf16 %v760, %v756
        %v929 = vpack.c.bf16 %v761, %v757
        %v930 = vpack.c.bf16 %v762, %v758
        %v931 = vpack.c.bf16 %v763, %v759
        %v932 = vpack.c.bf16 %v768, %v764
        %v933 = vpack.c.bf16 %v769, %v765
        %v934 = vpack.c.bf16 %v770, %v766
        %v935 = vpack.c.bf16 %v771, %v767
        %v936 = vpack.c.bf16 %v776, %v772
        %v937 = vpack.c.bf16 %v777, %v773
        %v938 = vpack.c.bf16 %v778, %v774
        %v939 = vpack.c.bf16 %v779, %v775
        %v940 = vpack.c.bf16 %v784, %v780
        %v941 = vpack.c.bf16 %v785, %v781
        %v942 = vpack.c.bf16 %v786, %v782
        %v943 = vpack.c.bf16 %v787, %v783
        %v944 = vpack.c.bf16 %v792, %v788
        %v945 = vpack.c.bf16 %v793, %v789
        %v946 = vpack.c.bf16 %v794, %v790
        %v947 = vpack.c.bf16 %v795, %v791
        %v948 = vpack.c.bf16 %v800, %v796
        %v949 = vpack.c.bf16 %v801, %v797
        %v950 = vpack.c.bf16 %v802, %v798
        %v951 = vpack.c.bf16 %v803, %v799
        %v952 = vpack.c.bf16 %v808, %v804
        %v953 = vpack.c.bf16 %v809, %v805
        %v954 = vpack.c.bf16 %v810, %v806
        %v955 = vpack.c.bf16 %v811, %v807
        %v956 = vpack.c.bf16 %v816, %v812
        %v957 = vpack.c.bf16 %v817, %v813
        %v958 = vpack.c.bf16 %v818, %v814
        %v959 = vpack.c.bf16 %v819, %v815
        %v960 = vpack.c.bf16 %v824, %v820
        %v961 = vpack.c.bf16 %v825, %v821
        %v962 = vpack.c.bf16 %v826, %v822
        %v963 = vpack.c.bf16 %v827, %v823
        %v964 = vpack.c.bf16 %v832, %v828
        %v965 = vpack.c.bf16 %v833, %v829
        %v966 = vpack.c.bf16 %v834, %v830
        %v967 = vpack.c.bf16 %v835, %v831
        %v968 = vpack.c.bf16 %v840, %v836
        %v969 = vpack.c.bf16 %v841, %v837
        %v970 = vpack.c.bf16 %v842, %v838
        %v971 = vpack.c.bf16 %v843, %v839
        %v972 = vld [vmem:[%s258] sm:$0xf]
        %v973 = vld [vmem:[%s262] sm:$0xf]
        %v974 = vunpack.c.l.bf16 %v973
        %s975 = sld [smem:[#allocation5 + %s19]]
        %v976 = vstv %s975
        %978 = vst [vmem:[#allocation1] ss:$9 sm:$0xff] %v972
        %v979 = vld [vmem:[#allocation1] sm:$0xff]
        %v980 = vld [vmem:[#allocation1 + $0x9] sm:$0xff]
        %v981 = vld [vmem:[#allocation1 + $0x12] sm:$0xff]
        %v982 = vld [vmem:[#allocation1 + $0x1b] sm:$0xff]
        %987 = vmatpush.bf16.msra.mxu0 %v872
        %988 = vmatpush.bf16.msra.mxu0 %v868
        %989 = vmatpush.bf16.msra.mxu0 %v864
        %990 = vmatpush.bf16.msra.mxu0 %v860
        %991 = vmatpush.bf16.msra.mxu0 %v856
        %992 = vmatpush.bf16.msra.mxu0 %v852
        %993 = vmatpush.bf16.msra.mxu0 %v848
        %994 = vmatpush.bf16.msra.mxu0 %v844
        %995 = vmatmul.bf16.gmra.mxu0 %v979
        %v996 = vpop.f32.mrf.mxu0
        %v997 = vadd.f32 %v976, %v996
        %v998 = vpop.f32.mrf.mxu0
        %999 = vdwg.mxu0
        %1000 = vmatpush.bf16.msra.mxu0 %v904
        %1001 = vmatpush.bf16.msra.mxu0 %v900
        %1002 = vmatpush.bf16.msra.mxu0 %v896
        %1003 = vmatpush.bf16.msra.mxu0 %v892
        %1004 = vmatpush.bf16.msra.mxu0 %v888
        %1005 = vmatpush.bf16.msra.mxu0 %v884
        %1006 = vmatpush.bf16.msra.mxu0 %v880
        %1007 = vmatpush.bf16.msra.mxu0 %v876
        %1008 = vmatmul.bf16.gmra.mxu0 %v980
        %v1009 = vpop.f32.mrf.mxu0
        %v1010 = vadd.f32 %v997, %v1009
        %v1011 = vpop.f32.mrf.mxu0
        %1012 = vdwg.mxu0
        %1013 = vmatpush.bf16.msra.mxu0 %v936
        %1014 = vmatpush.bf16.msra.mxu0 %v932
        %1015 = vmatpush.bf16.msra.mxu0 %v928
        %1016 = vmatpush.bf16.msra.mxu0 %v924
        %1017 = vmatpush.bf16.msra.mxu0 %v920
        %1018 = vmatpush.bf16.msra.mxu0 %v916
        %1019 = vmatpush.bf16.msra.mxu0 %v912
        %1020 = vmatpush.bf16.msra.mxu0 %v908
        %1021 = vmatmul.bf16.gmra.mxu0 %v981
        %v1022 = vpop.f32.mrf.mxu0
        %v1023 = vadd.f32 %v1010, %v1022
        %v1024 = vpop.f32.mrf.mxu0
        %1025 = vdwg.mxu0
        %1026 = vmatpush.bf16.msra.mxu0 %v968
        %1027 = vmatpush.bf16.msra.mxu0 %v964
        %1028 = vmatpush.bf16.msra.mxu0 %v960
        %1029 = vmatpush.bf16.msra.mxu0 %v956
        %1030 = vmatpush.bf16.msra.mxu0 %v952
        %1031 = vmatpush.bf16.msra.mxu0 %v948
        %1032 = vmatpush.bf16.msra.mxu0 %v944
        %1033 = vmatpush.bf16.msra.mxu0 %v940
        %1034 = vmatmul.bf16.gmra.mxu0 %v982
        %v1035 = vpop.f32.mrf.mxu0
        %v1036 = vadd.f32 %v1023, %v1035
        %v1037 = vpop.f32.mrf.mxu0
        %1038 = vdwg.mxu0
        %1039 = vmatpush.bf16.msra.mxu0 %v873
        %1040 = vmatpush.bf16.msra.mxu0 %v869
        %1041 = vmatpush.bf16.msra.mxu0 %v865
        %1042 = vmatpush.bf16.msra.mxu0 %v861
        %1043 = vmatpush.bf16.msra.mxu0 %v857
        %1044 = vmatpush.bf16.msra.mxu0 %v853
        %1045 = vmatpush.bf16.msra.mxu0 %v849
        %1046 = vmatpush.bf16.msra.mxu0 %v845
        %1047 = vmatmul.bf16.gmra.mxu0 %v979
        %v1048 = vpop.f32.mrf.mxu0
        %v1049 = vadd.f32 %v976, %v1048
        %v1050 = vpop.f32.mrf.mxu0
        %1051 = vdwg.mxu0
        %1052 = vmatpush.bf16.msra.mxu0 %v905
        %1053 = vmatpush.bf16.msra.mxu0 %v901
        %1054 = vmatpush.bf16.msra.mxu0 %v897
        %1055 = vmatpush.bf16.msra.mxu0 %v893
        %1056 = vmatpush.bf16.msra.mxu0 %v889
        %1057 = vmatpush.bf16.msra.mxu0 %v885
        %1058 = vmatpush.bf16.msra.mxu0 %v881
        %1059 = vmatpush.bf16.msra.mxu0 %v877
        %1060 = vmatmul.bf16.gmra.mxu0 %v980
        %v1061 = vpop.f32.mrf.mxu0
        %v1062 = vadd.f32 %v1049, %v1061
        %v1063 = vpop.f32.mrf.mxu0
        %1064 = vdwg.mxu0
        %1065 = vmatpush.bf16.msra.mxu0 %v937
        %1066 = vmatpush.bf16.msra.mxu0 %v933
        %1067 = vmatpush.bf16.msra.mxu0 %v929
        %1068 = vmatpush.bf16.msra.mxu0 %v925
        %1069 = vmatpush.bf16.msra.mxu0 %v921
        %1070 = vmatpush.bf16.msra.mxu0 %v917
        %1071 = vmatpush.bf16.msra.mxu0 %v913
        %1072 = vmatpush.bf16.msra.mxu0 %v909
        %1073 = vmatmul.bf16.gmra.mxu0 %v981
        %v1074 = vpop.f32.mrf.mxu0
        %v1075 = vadd.f32 %v1062, %v1074
        %v1076 = vpop.f32.mrf.mxu0
        %1077 = vdwg.mxu0
        %1078 = vmatpush.bf16.msra.mxu0 %v969
        %1079 = vmatpush.bf16.msra.mxu0 %v965
        %1080 = vmatpush.bf16.msra.mxu0 %v961
        %1081 = vmatpush.bf16.msra.mxu0 %v957
        %1082 = vmatpush.bf16.msra.mxu0 %v953
        %1083 = vmatpush.bf16.msra.mxu0 %v949
        %1084 = vmatpush.bf16.msra.mxu0 %v945
        %1085 = vmatpush.bf16.msra.mxu0 %v941
        %1086 = vmatmul.bf16.gmra.mxu0 %v982
        %v1087 = vpop.f32.mrf.mxu0
        %v1088 = vadd.f32 %v1075, %v1087
        %v1089 = vpop.f32.mrf.mxu0
        %1090 = vdwg.mxu0
        %1091 = vmatpush.bf16.msra.mxu0 %v874
        %1092 = vmatpush.bf16.msra.mxu0 %v870
        %1093 = vmatpush.bf16.msra.mxu0 %v866
        %1094 = vmatpush.bf16.msra.mxu0 %v862
        %1095 = vmatpush.bf16.msra.mxu0 %v858
        %1096 = vmatpush.bf16.msra.mxu0 %v854
        %1097 = vmatpush.bf16.msra.mxu0 %v850
        %1098 = vmatpush.bf16.msra.mxu0 %v846
        %1099 = vmatmul.bf16.gmra.mxu0 %v979
        %v1100 = vpop.f32.mrf.mxu0
        %v1101 = vadd.f32 %v976, %v1100
        %v1102 = vpop.f32.mrf.mxu0
        %1103 = vdwg.mxu0
        %1104 = vmatpush.bf16.msra.mxu0 %v906
        %1105 = vmatpush.bf16.msra.mxu0 %v902
        %1106 = vmatpush.bf16.msra.mxu0 %v898
        %1107 = vmatpush.bf16.msra.mxu0 %v894
        %1108 = vmatpush.bf16.msra.mxu0 %v890
        %1109 = vmatpush.bf16.msra.mxu0 %v886
        %1110 = vmatpush.bf16.msra.mxu0 %v882
        %1111 = vmatpush.bf16.msra.mxu0 %v878
        %1112 = vmatmul.bf16.gmra.mxu0 %v980
        %v1113 = vpop.f32.mrf.mxu0
        %v1114 = vadd.f32 %v1101, %v1113
        %v1115 = vpop.f32.mrf.mxu0
        %1116 = vdwg.mxu0
        %1117 = vmatpush.bf16.msra.mxu0 %v938
        %1118 = vmatpush.bf16.msra.mxu0 %v934
        %1119 = vmatpush.bf16.msra.mxu0 %v930
        %1120 = vmatpush.bf16.msra.mxu0 %v926
        %1121 = vmatpush.bf16.msra.mxu0 %v922
        %1122 = vmatpush.bf16.msra.mxu0 %v918
        %1123 = vmatpush.bf16.msra.mxu0 %v914
        %1124 = vmatpush.bf16.msra.mxu0 %v910
        %1125 = vmatmul.bf16.gmra.mxu0 %v981
        %v1126 = vpop.f32.mrf.mxu0
        %v1127 = vadd.f32 %v1114, %v1126
        %v1128 = vpop.f32.mrf.mxu0
        %1129 = vdwg.mxu0
        %1130 = vmatpush.bf16.msra.mxu0 %v970
        %1131 = vmatpush.bf16.msra.mxu0 %v966
        %1132 = vmatpush.bf16.msra.mxu0 %v962
        %1133 = vmatpush.bf16.msra.mxu0 %v958
        %1134 = vmatpush.bf16.msra.mxu0 %v954
        %1135 = vmatpush.bf16.msra.mxu0 %v950
        %1136 = vmatpush.bf16.msra.mxu0 %v946
        %1137 = vmatpush.bf16.msra.mxu0 %v942
        %1138 = vmatmul.bf16.gmra.mxu0 %v982
        %v1139 = vpop.f32.mrf.mxu0
        %v1140 = vadd.f32 %v1127, %v1139
        %v1141 = vpop.f32.mrf.mxu0
        %1142 = vdwg.mxu0
        %1143 = vmatpush.bf16.msra.mxu0 %v875
        %1144 = vmatpush.bf16.msra.mxu0 %v871
        %1145 = vmatpush.bf16.msra.mxu0 %v867
        %1146 = vmatpush.bf16.msra.mxu0 %v863
        %1147 = vmatpush.bf16.msra.mxu0 %v859
        %1148 = vmatpush.bf16.msra.mxu0 %v855
        %1149 = vmatpush.bf16.msra.mxu0 %v851
        %1150 = vmatpush.bf16.msra.mxu0 %v847
        %1151 = vmatmul.bf16.gmra.mxu0 %v979
        %v1152 = vpop.f32.mrf.mxu0
        %v1153 = vadd.f32 %v976, %v1152
        %v1154 = vpop.f32.mrf.mxu0
        %1155 = vdwg.mxu0
        %1156 = vmatpush.bf16.msra.mxu0 %v907
        %1157 = vmatpush.bf16.msra.mxu0 %v903
        %1158 = vmatpush.bf16.msra.mxu0 %v899
        %1159 = vmatpush.bf16.msra.mxu0 %v895
        %1160 = vmatpush.bf16.msra.mxu0 %v891
        %1161 = vmatpush.bf16.msra.mxu0 %v887
        %1162 = vmatpush.bf16.msra.mxu0 %v883
        %1163 = vmatpush.bf16.msra.mxu0 %v879
        %1164 = vmatmul.bf16.gmra.mxu0 %v980
        %v1165 = vpop.f32.mrf.mxu0
        %v1166 = vadd.f32 %v1153, %v1165
        %v1167 = vpop.f32.mrf.mxu0
        %1168 = vdwg.mxu0
        %1169 = vmatpush.bf16.msra.mxu0 %v939
        %1170 = vmatpush.bf16.msra.mxu0 %v935
        %1171 = vmatpush.bf16.msra.mxu0 %v931
        %1172 = vmatpush.bf16.msra.mxu0 %v927
        %1173 = vmatpush.bf16.msra.mxu0 %v923
        %1174 = vmatpush.bf16.msra.mxu0 %v919
        %1175 = vmatpush.bf16.msra.mxu0 %v915
        %1176 = vmatpush.bf16.msra.mxu0 %v911
        %1177 = vmatmul.bf16.gmra.mxu0 %v981
        %v1178 = vpop.f32.mrf.mxu0
        %v1179 = vadd.f32 %v1166, %v1178
        %v1180 = vpop.f32.mrf.mxu0
        %1181 = vdwg.mxu0
        %1182 = vmatpush.bf16.msra.mxu0 %v971
        %1183 = vmatpush.bf16.msra.mxu0 %v967
        %1184 = vmatpush.bf16.msra.mxu0 %v963
        %1185 = vmatpush.bf16.msra.mxu0 %v959
        %1186 = vmatpush.bf16.msra.mxu0 %v955
        %1187 = vmatpush.bf16.msra.mxu0 %v951
        %1188 = vmatpush.bf16.msra.mxu0 %v947
        %1189 = vmatpush.bf16.msra.mxu0 %v943
        %1190 = vmatmul.bf16.gmra.mxu0 %v982
        %v1191 = vpop.f32.mrf.mxu0
        %v1192 = vadd.f32 %v1179, %v1191
        %v1193 = vpop.f32.mrf.mxu0
        %1194 = vdwg.mxu0
        %v1199 = vrot.slane %v1088, 6
        %v1200 = vrot.slane %v1140, 4
        %v1201 = vrot.slane %v1192, 2
        %vm1202 = vcmask 1041408
        %v1203 = vsel %vm1202, %v1036, %v1199
        %vm1204 = vcmask 1045508
        %v1205 = vsel %vm1204, %v1200, %v1201
        %vm1206 = vcmask 1043456
        %v1207 = vsel %vm1206, %v1203, %v1205
        %v1209 = vmul.f32 %v974, %v1207
        %1210 = vst [vmem:[%s267] sm:$0xff] %v1209
        %p1211 = scmp.lt.s32.totalorder %s19, 5
        %s1212 = scalar_select %p1211, %s19, 5
        %s1213 = smul.addr %s1212, 4
        %s1214 = smul.addr %s1213, 2
        %s1215 = scalar_lea.vmem %s4, %s1214
        // Predicated region
        $region45: #{psm_gnn_forward.16} parent=35 // pred_check
          %p1216 = pneg %p136
        $region46: #{psm_gnn_forward.16} parent=35 // pred_check_branch
          %1218 = sbr.rel (%p1216) target = $region48
        $region47: #{psm_gnn_forward.16} parent=35 // pred_region
          _
        $region48: #{psm_gnn_forward.16} parent=35 // pred_fallthru
          _
      $region36: #{psm_gnn_forward.16} parent=5 // pred_fallthru
        _
      %p1219 = scmp.le.s32.totalorder 2, %s14
      // Predicated region
      $region49: #{psm_gnn_forward.16} parent=5 // pred_check
        %p1220 = pneg %p1219
      $region50: #{psm_gnn_forward.16} parent=5 // pred_check_branch
        %1222 = sbr.rel (%p1220) target = $region52
      $region51: #{psm_gnn_forward.16} parent=5 // pred_region
        %s1223 = ssub.s32 %s14, 2
        // Predicated region
        $region53: #{psm_gnn_forward.16} parent=51 // pred_check
          %p1224 = pneg %p142
        $region54: #{psm_gnn_forward.16} parent=51 // pred_check_branch
          %1226 = sbr.rel (%p1224) target = $region56
        $region55: #{psm_gnn_forward.16} parent=51 // pred_region
          %p1227 = scmp.lt.s32.totalorder %s20, 5
          %s1228 = scalar_select %p1227, %s20, 5
          %s1229 = smul.addr %s1228, 4
          %s1230 = smul.addr %s1229, 2
          %s1231 = scalar_lea.vmem %s4, %s1230
        $region56: #{psm_gnn_forward.16} parent=51 // pred_fallthru
          _
      $region52: #{psm_gnn_forward.16} parent=5 // pred_fallthru
        _
    $region6: #{psm_gnn_forward.16} parent=1 // loop_footer
      %s18 = sadd.s32 1, %s14
    $region7: #{psm_gnn_forward.16} parent=1 // loop_footer_branch
      %13 = sbr.rel target = $region3
    $region8: #{psm_gnn_forward.16} parent=1 // loop_exit
      _
    %1232 = vsyncpa [#allocation3], 1
    %s1233 = scalar_lea.sflag [#allocation3], 1
    %1234 = vsyncpa %s1233, 1
    %1235 = vsyncpa [#allocation4], 1
    %s1236 = scalar_lea.sflag [#allocation4], 1
    %1237 = vsyncpa %s1236, 1

// kernel: psm_gnn_forward.18
$region0: #{psm_gnn_forward.18}
  #allocation0 [shape = 'u32[]', space=smem, size = 0x4, offset = 0x4, fixed_abs, tag = 'smem constant byte address 0x4 - core index']
  #allocation1 [shape = 'u32[72,128]{1,0:T(1,128)}', space=vmem, size = 0x9000, scoped, tag = 'internal scratch']
  %s0 = inlined_call_operand.vmem [shape: bf16[1024,189], index: 0, kind: input, shape index: {}]
  %s1 = inlined_call_operand.vmem [shape: bf16[189,7], index: 1, kind: input, shape index: {}]
  %s2 = inlined_call_operand.vmem [shape: f32[1,7], index: 2, kind: input, shape index: {}]
  %s3 = inlined_call_operand.vmem [shape: bf16[1024,7], index: 3, kind: output, shape index: {}]
  %s4 = sld [smem:[#allocation0]]
  $region45: #{psm_gnn_forward.18} parent=0
    _
  %s6 = ssub.s32 1, %s4
  %s7 = scalar_select 0, %s6, %s4
  loop: start=0, step=1, limit=4
  $region2: #{psm_gnn_forward.18} parent=0 // loop_pre_header
    _
  $region3: #{psm_gnn_forward.18} parent=0 // loop_header
    %s9 = sphi 0, %s13
    %p10 = scmp.ge.s32.totalorder %s9, 4
    %s19 = sphi 0, %s21
    %s22 = sphi 0, %s19
    %s23 = sphi 0, %s22
    %s39 = sphi 0, %s23
    %s43 = sphi 0, %s43
    %s45 = sphi 0, %s43
    %s46 = sphi 0, %s45
    %s60 = sphi 0, %s46
    %s64 = sphi 0, %s64
    %s66 = sphi 0, %s64
    %s67 = sphi 0, %s66
    %s81 = sphi 0, %s67
    %s87 = sphi 0, %s89
    %s90 = sphi 0, %s87
    %s91 = sphi 0, %s90
    %s107 = sphi 0, %s91
  $region4: #{psm_gnn_forward.18} parent=0 // loop_header_branch
    %12 = sbr.rel (%p10) target = $region8
  $region5: #{psm_gnn_forward.18} parent=0 // loop_body
    %s14 = ssub.s32 %s9, 1
    %s15 = ssub.s32 %s9, 2
    %s16 = sadd.s32 %s9, 1
    %s17 = ssub.s32 %s9, %s16
    %p18 = scmp.eq.s32.totalorder %s17, 0
    %s20 = sadd.s32 %s19, 1
    %s21 = scalar_select %p18, %s19, %s20
    %p24 = pneg %p18
    %p25 = scmp.eq.s32.totalorder %s9, 1
    %p26 = por %p24, %p25
    %p27 = scmp.ne.s32.totalorder %s19, %s22
    %p28 = scmp.eq.s32.totalorder %s9, 0
    %p29 = por %p27, %p28
    %p30 = scmp.ne.s32.totalorder %s19, %s22
    %p31 = scmp.eq.s32.totalorder %s14, 1
    %p32 = por %p30, %p31
    %p33 = scmp.ne.s32.totalorder %s22, %s23
    %p34 = scmp.eq.s32.totalorder %s14, 0
    %p35 = por %p33, %p34
    %p36 = scmp.ne.s32.totalorder %s22, %s23
    %p37 = scmp.eq.s32.totalorder %s15, 1
    %p38 = por %p36, %p37
    %p40 = scmp.ne.s32.totalorder %s23, %s39
    %p41 = scmp.eq.s32.totalorder %s15, 0
    %p42 = por %p40, %p41
    %s44 = sadd.s32 %s43, 1
    %p47 = scmp.eq.s32.totalorder %s9, 1
    %p48 = scmp.ne.s32.totalorder %s43, %s45
    %p49 = scmp.eq.s32.totalorder %s9, 0
    %p50 = por %p48, %p49
    %p51 = scmp.ne.s32.totalorder %s43, %s45
    %p52 = scmp.eq.s32.totalorder %s14, 1
    %p53 = por %p51, %p52
    %p54 = scmp.ne.s32.totalorder %s45, %s46
    %p55 = scmp.eq.s32.totalorder %s14, 0
    %p56 = por %p54, %p55
    %p57 = scmp.ne.s32.totalorder %s45, %s46
    %p58 = scmp.eq.s32.totalorder %s15, 1
    %p59 = por %p57, %p58
    %p61 = scmp.ne.s32.totalorder %s46, %s60
    %p62 = scmp.eq.s32.totalorder %s15, 0
    %p63 = por %p61, %p62
    %s65 = sadd.s32 %s64, 1
    %p68 = scmp.eq.s32.totalorder %s9, 1
    %p69 = scmp.ne.s32.totalorder %s64, %s66
    %p70 = scmp.eq.s32.totalorder %s9, 0
    %p71 = por %p69, %p70
    %p72 = scmp.ne.s32.totalorder %s64, %s66
    %p73 = scmp.eq.s32.totalorder %s14, 1
    %p74 = por %p72, %p73
    %p75 = scmp.ne.s32.totalorder %s66, %s67
    %p76 = scmp.eq.s32.totalorder %s14, 0
    %p77 = por %p75, %p76
    %p78 = scmp.ne.s32.totalorder %s66, %s67
    %p79 = scmp.eq.s32.totalorder %s15, 1
    %p80 = por %p78, %p79
    %p82 = scmp.ne.s32.totalorder %s67, %s81
    %p83 = scmp.eq.s32.totalorder %s15, 0
    %p84 = por %p82, %p83
    %s85 = ssub.s32 %s9, %s16
    %p86 = scmp.eq.s32.totalorder %s85, 0
    %s88 = sadd.s32 %s87, 1
    %s89 = scalar_select %p86, %s87, %s88
    %p92 = pneg %p86
    %p93 = scmp.eq.s32.totalorder %s9, 1
    %p94 = por %p92, %p93
    %p95 = scmp.ne.s32.totalorder %s87, %s90
    %p96 = scmp.eq.s32.totalorder %s9, 0
    %p97 = por %p95, %p96
    %p98 = scmp.ne.s32.totalorder %s87, %s90
    %p99 = scmp.eq.s32.totalorder %s14, 1
    %p100 = por %p98, %p99
    %p101 = scmp.ne.s32.totalorder %s90, %s91
    %p102 = scmp.eq.s32.totalorder %s14, 0
    %p103 = por %p101, %p102
    %p104 = scmp.ne.s32.totalorder %s90, %s91
    %p105 = scmp.eq.s32.totalorder %s15, 1
    %p106 = por %p104, %p105
    %p108 = scmp.ne.s32.totalorder %s91, %s107
    %p109 = scmp.eq.s32.totalorder %s15, 0
    %p110 = por %p108, %p109
    %p111 = scmp.le.s32.totalorder 1, %s9
    %p112 = scmp.lt.s32.totalorder %s9, 3
    %p113 = pnand %p111, %p112
    %p114 = pneg %p113
    // Predicated region
    $region9: #{psm_gnn_forward.18} parent=5 // pred_check
      _
    $region10: #{psm_gnn_forward.18} parent=5 // pred_check_branch
      %116 = sbr.rel (%p113) target = $region12
    $region11: #{psm_gnn_forward.18} parent=5 // pred_region
      %s117 = ssub.s32 %s9, 1
      // Predicated region
      $region13: #{psm_gnn_forward.18} parent=11 // pred_check
        %p118 = pneg %p56
      $region14: #{psm_gnn_forward.18} parent=11 // pred_check_branch
        %120 = sbr.rel (%p118) target = $region16
      $region15: #{psm_gnn_forward.18} parent=11 // pred_region
        _
      $region16: #{psm_gnn_forward.18} parent=11 // pred_fallthru
        _
      // Predicated region
      $region17: #{psm_gnn_forward.18} parent=11 // pred_check
        %p121 = pneg %p77
      $region18: #{psm_gnn_forward.18} parent=11 // pred_check_branch
        %123 = sbr.rel (%p121) target = $region20
      $region19: #{psm_gnn_forward.18} parent=11 // pred_region
        _
      $region20: #{psm_gnn_forward.18} parent=11 // pred_fallthru
        _
    $region12: #{psm_gnn_forward.18} parent=5 // pred_fallthru
      _
    %p124 = scmp.lt.s32.totalorder %s9, 2
    // Predicated region
    $region21: #{psm_gnn_forward.18} parent=5 // pred_check
      %p125 = pneg %p124
    $region22: #{psm_gnn_forward.18} parent=5 // pred_check_branch
      %127 = sbr.rel (%p125) target = $region24
    $region23: #{psm_gnn_forward.18} parent=5 // pred_region
      // Predicated region
      $region25: #{psm_gnn_forward.18} parent=23 // pred_check
        %p128 = pneg %p29
      $region26: #{psm_gnn_forward.18} parent=23 // pred_check_branch
        %130 = sbr.rel (%p128) target = $region28
      $region27: #{psm_gnn_forward.18} parent=23 // pred_region
        %s131 = smul.u32 64, %s9
        %p132 = scmp.lt.s32.totalorder %s131, 127
        %s133 = scalar_select %p132, %s131, 127
        %s134 = smul.addr %s133, 2
        %s135 = smul.addr %s134, 4
        %s136 = scalar_lea.vmem %s0, %s135
        %s137 = smul.u32 64, %s9
      $region28: #{psm_gnn_forward.18} parent=23 // pred_fallthru
        _
    $region24: #{psm_gnn_forward.18} parent=5 // pred_fallthru
      _
    %p138 = scmp.le.s32.totalorder 1, %s9
    %p139 = scmp.lt.s32.totalorder %s9, 3
    %p140 = pnand %p138, %p139
    %p141 = pneg %p140
    // Predicated region
    $region29: #{psm_gnn_forward.18} parent=5 // pred_check
      _
    $region30: #{psm_gnn_forward.18} parent=5 // pred_check_branch
      %143 = sbr.rel (%p140) target = $region32
    $region31: #{psm_gnn_forward.18} parent=5 // pred_region
      %s144 = ssub.s32 %s9, 1
      %s145 = smul.u32 64, %s14
      %p146 = scmp.lt.s32.totalorder %s145, 127
      %s147 = scalar_select %p146, %s145, 127
      %s148 = smul.addr %s147, 2
      %s149 = smul.addr %s148, 4
      %s150 = scalar_lea.vmem %s0, %s149
      %p151 = pneg %p35
      %p152 = pneg %p32
      %p153 = pneg %p56
      %p154 = pneg %p53
      %p155 = pneg %p77
      %p156 = pneg %p74
      %p157 = pneg %p103
      %p158 = pneg %p100
      %s159 = smul.u32 64, %s14
      %p160 = scmp.lt.s32.totalorder %s159, 127
      %s161 = scalar_select %p160, %s159, 127
      %s162 = smul.addr %s161, 4
      %s163 = scalar_lea.vmem %s3, %s162
      %s164 = smul.u32 64, %s14
      %p165 = scmp.lt.s32.totalorder %s164, 127
      %s166 = scalar_select %p165, %s164, 127
      %s167 = smul.addr %s166, 2
      %s168 = smul.addr %s167, 4
      %s169 = scalar_lea.vmem %s0, %s168
      %s170 = smul.u32 64, %s14
      %s171 = smul.u32 64, %s14
      %p172 = scmp.lt.s32.totalorder %s171, 127
      %s173 = scalar_select %p172, %s171, 127
      %s174 = smul.addr %s173, 4
      %s175 = scalar_lea.vmem %s3, %s174
      %s176 = smul.u32 64, %s14
      %v178 = vld [vmem:[%s169] sm:$0xff]
      %v179 = vld [vmem:[%s169 + $0x8] sm:$0xff]
      %v180 = vld [vmem:[%s169 + $0x10] sm:$0xff]
      %v181 = vld [vmem:[%s169 + $0x18] sm:$0xff]
      %v182 = vld [vmem:[%s169 + $0x20] sm:$0xff]
      %v183 = vld [vmem:[%s169 + $0x28] sm:$0xff]
      %v184 = vld [vmem:[%s169 + $0x30] sm:$0xff]
      %v185 = vld [vmem:[%s169 + $0x38] sm:$0xff]
      %v186 = vld [vmem:[%s169 + $0x40] sm:$0xff]
      %v187 = vld [vmem:[%s169 + $0x48] sm:$0xff]
      %v188 = vld [vmem:[%s169 + $0x50] sm:$0xff]
      %v189 = vld [vmem:[%s169 + $0x58] sm:$0xff]
      %v190 = vld [vmem:[%s169 + $0x60] sm:$0xff]
      %v191 = vld [vmem:[%s169 + $0x68] sm:$0xff]
      %v192 = vld [vmem:[%s169 + $0x70] sm:$0xff]
      %v193 = vld [vmem:[%s169 + $0x78] sm:$0xff]
      %v194 = vld [vmem:[%s169 + $0x80] sm:$0xff]
      %v195 = vld [vmem:[%s169 + $0x88] sm:$0xff]
      %v196 = vld [vmem:[%s169 + $0x90] sm:$0xff]
      %v197 = vld [vmem:[%s169 + $0x98] sm:$0xff]
      %v198 = vld [vmem:[%s169 + $0xa0] sm:$0xff]
      %v199 = vld [vmem:[%s169 + $0xa8] sm:$0xff]
      %v200 = vld [vmem:[%s169 + $0xb0] sm:$0xff]
      %v201 = vld [vmem:[%s169 + $0xb8] sm:$0xff]
      %v202 = vld [vmem:[%s169 + $0xc0] sm:$0xff]
      %v203 = vld [vmem:[%s169 + $0xc8] sm:$0xff]
      %v204 = vld [vmem:[%s169 + $0xd0] sm:$0xff]
      %v205 = vld [vmem:[%s169 + $0xd8] sm:$0xff]
      %v206 = vld [vmem:[%s169 + $0xe0] sm:$0xff]
      %v207 = vld [vmem:[%s169 + $0xe8] sm:$0xff]
      %v208 = vld [vmem:[%s169 + $0xf0] sm:$0xff]
      %v209 = vld [vmem:[%s169 + $0xf8] sm:$0xff]
      %v210 = vld [vmem:[%s169 + $0x100] sm:$0xff]
      %v211 = vld [vmem:[%s169 + $0x108] sm:$0xff]
      %v212 = vld [vmem:[%s169 + $0x110] sm:$0xff]
      %v213 = vld [vmem:[%s169 + $0x118] sm:$0xff]
      %v214 = vld [vmem:[%s169 + $0x120] sm:$0xff]
      %v215 = vld [vmem:[%s169 + $0x128] sm:$0xff]
      %v216 = vld [vmem:[%s169 + $0x130] sm:$0xff]
      %v217 = vld [vmem:[%s169 + $0x138] sm:$0xff]
      %v218 = vld [vmem:[%s169 + $0x140] sm:$0xff]
      %v219 = vld [vmem:[%s169 + $0x148] sm:$0xff]
      %v220 = vld [vmem:[%s169 + $0x150] sm:$0xff]
      %v221 = vld [vmem:[%s169 + $0x158] sm:$0xff]
      %v222 = vld [vmem:[%s169 + $0x160] sm:$0xff]
      %v223 = vld [vmem:[%s169 + $0x168] sm:$0xff]
      %v224 = vld [vmem:[%s169 + $0x170] sm:$0xff]
      %v225 = vld [vmem:[%s169 + $0x178] sm:$0xff]
      %v226 = vld [vmem:[%s169 + $0x180] sm:$0xff]
      %v227 = vld [vmem:[%s169 + $0x188] sm:$0xff]
      %v228 = vld [vmem:[%s169 + $0x190] sm:$0xff]
      %v229 = vld [vmem:[%s169 + $0x198] sm:$0xff]
      %v230 = vld [vmem:[%s169 + $0x1a0] sm:$0xff]
      %v231 = vld [vmem:[%s169 + $0x1a8] sm:$0xff]
      %v232 = vld [vmem:[%s169 + $0x1b0] sm:$0xff]
      %v233 = vld [vmem:[%s169 + $0x1b8] sm:$0xff]
      %v234 = vld [vmem:[%s169 + $0x1c0] sm:$0xff]
      %v235 = vld [vmem:[%s169 + $0x1c8] sm:$0xff]
      %v236 = vld [vmem:[%s169 + $0x1d0] sm:$0xff]
      %v237 = vld [vmem:[%s169 + $0x1d8] sm:$0xff]
      %v238 = vld [vmem:[%s169 + $0x1e0] sm:$0xff]
      %v239 = vld [vmem:[%s169 + $0x1e8] sm:$0xff]
      %v240 = vld [vmem:[%s169 + $0x1f0] sm:$0xff]
      %v241 = vld [vmem:[%s169 + $0x1f8] sm:$0xff]
      %v242 = vld [vmem:[%s1] sm:$0xf]
      %v243 = vld [vmem:[%s1 + $0x4] sm:$0xf]
      %v244 = vld [vmem:[%s1 + $0x8] sm:$0xf]
      %v245 = vld [vmem:[%s1 + $0xc] sm:$0xf]
      %v246 = vld [vmem:[%s1 + $0x10] sm:$0xf]
      %v247 = vld [vmem:[%s1 + $0x14] sm:$0xf]
      %v248 = vld [vmem:[%s1 + $0x18] sm:$0xf]
      %v249 = vld [vmem:[%s1 + $0x1c] sm:$0xf]
      %v250 = vld [vmem:[%s1 + $0x20] sm:$0xf]
      %v251 = vld [vmem:[%s1 + $0x24] sm:$0xf]
      %v252 = vld [vmem:[%s1 + $0x28] sm:$0xf]
      %v253 = vld [vmem:[%s1 + $0x2c] sm:$0xf]
      %v254 = vld [vmem:[%s1 + $0x30] sm:$0xf]
      %v255 = vld [vmem:[%s1 + $0x34] sm:$0xf]
      %v256 = vld [vmem:[%s1 + $0x38] sm:$0xf]
      %v257 = vld [vmem:[%s1 + $0x3c] sm:$0xf]
      %v258 = vld [vmem:[%s1 + $0x40] sm:$0xf]
      %v259 = vld [vmem:[%s1 + $0x44] sm:$0xf]
      %v260 = vld [vmem:[%s1 + $0x48] sm:$0xf]
      %v261 = vld [vmem:[%s1 + $0x4c] sm:$0xf]
      %v262 = vld [vmem:[%s1 + $0x50] sm:$0xf]
      %v263 = vld [vmem:[%s1 + $0x54] sm:$0xf]
      %v264 = vld [vmem:[%s1 + $0x58] sm:$0xf]
      %v265 = vld [vmem:[%s1 + $0x5c] sm:$0x7]
      %v266 = vld [vmem:[%s2] sm:$0x1]
      %v268 = vperm.slane %v266, 0
      %v334 = vunpack.c.l.b16 %v178
      %v335 = vunpack.c.h.b16 %v178
      %v336 = vunpack.c.l.b16 %v179
      %v337 = vunpack.c.h.b16 %v179
      %v338 = vunpack.c.l.b16 %v180
      %v339 = vunpack.c.h.b16 %v180
      %v340 = vunpack.c.l.b16 %v181
      %v341 = vunpack.c.h.b16 %v181
      %v342 = vunpack.c.l.b16 %v182
      %v343 = vunpack.c.h.b16 %v182
      %v344 = vunpack.c.l.b16 %v183
      %v345 = vunpack.c.h.b16 %v183
      %v346 = vunpack.c.l.b16 %v184
      %v347 = vunpack.c.h.b16 %v184
      %v348 = vunpack.c.l.b16 %v185
      %v349 = vunpack.c.h.b16 %v185
      %v350 = vunpack.c.l.b16 %v186
      %v351 = vunpack.c.h.b16 %v186
      %v352 = vunpack.c.l.b16 %v187
      %v353 = vunpack.c.h.b16 %v187
      %v354 = vunpack.c.l.b16 %v188
      %v355 = vunpack.c.h.b16 %v188
      %v356 = vunpack.c.l.b16 %v189
      %v357 = vunpack.c.h.b16 %v189
      %v358 = vunpack.c.l.b16 %v190
      %v359 = vunpack.c.h.b16 %v190
      %v360 = vunpack.c.l.b16 %v191
      %v361 = vunpack.c.h.b16 %v191
      %v362 = vunpack.c.l.b16 %v192
      %v363 = vunpack.c.h.b16 %v192
      %v364 = vunpack.c.l.b16 %v193
      %v365 = vunpack.c.h.b16 %v193
      %v366 = vunpack.c.l.b16 %v194
      %v367 = vunpack.c.h.b16 %v194
      %v368 = vunpack.c.l.b16 %v195
      %v369 = vunpack.c.h.b16 %v195
      %v370 = vunpack.c.l.b16 %v196
      %v371 = vunpack.c.h.b16 %v196
      %v372 = vunpack.c.l.b16 %v197
      %v373 = vunpack.c.h.b16 %v197
      %v374 = vunpack.c.l.b16 %v198
      %v375 = vunpack.c.h.b16 %v198
      %v376 = vunpack.c.l.b16 %v199
      %v377 = vunpack.c.h.b16 %v199
      %v378 = vunpack.c.l.b16 %v200
      %v379 = vunpack.c.h.b16 %v200
      %v380 = vunpack.c.l.b16 %v201
      %v381 = vunpack.c.h.b16 %v201
      %v382 = vunpack.c.l.b16 %v202
      %v383 = vunpack.c.h.b16 %v202
      %v384 = vunpack.c.l.b16 %v203
      %v385 = vunpack.c.h.b16 %v203
      %v386 = vunpack.c.l.b16 %v204
      %v387 = vunpack.c.h.b16 %v204
      %v388 = vunpack.c.l.b16 %v205
      %v389 = vunpack.c.h.b16 %v205
      %v390 = vunpack.c.l.b16 %v206
      %v391 = vunpack.c.h.b16 %v206
      %v392 = vunpack.c.l.b16 %v207
      %v393 = vunpack.c.h.b16 %v207
      %v394 = vunpack.c.l.b16 %v208
      %v395 = vunpack.c.h.b16 %v208
      %v396 = vunpack.c.l.b16 %v209
      %v397 = vunpack.c.h.b16 %v209
      %v398 = vunpack.c.l.b16 %v210
      %v399 = vunpack.c.h.b16 %v210
      %v400 = vunpack.c.l.b16 %v211
      %v401 = vunpack.c.h.b16 %v211
      %v402 = vunpack.c.l.b16 %v212
      %v403 = vunpack.c.h.b16 %v212
      %v404 = vunpack.c.l.b16 %v213
      %v405 = vunpack.c.h.b16 %v213
      %v406 = vunpack.c.l.b16 %v214
      %v407 = vunpack.c.h.b16 %v214
      %v408 = vunpack.c.l.b16 %v215
      %v409 = vunpack.c.h.b16 %v215
      %v410 = vunpack.c.l.b16 %v216
      %v411 = vunpack.c.h.b16 %v216
      %v412 = vunpack.c.l.b16 %v217
      %v413 = vunpack.c.h.b16 %v217
      %v414 = vunpack.c.l.b16 %v218
      %v415 = vunpack.c.h.b16 %v218
      %v416 = vunpack.c.l.b16 %v219
      %v417 = vunpack.c.h.b16 %v219
      %v418 = vunpack.c.l.b16 %v220
      %v419 = vunpack.c.h.b16 %v220
      %v420 = vunpack.c.l.b16 %v221
      %v421 = vunpack.c.h.b16 %v221
      %v422 = vunpack.c.l.b16 %v222
      %v423 = vunpack.c.h.b16 %v222
      %v424 = vunpack.c.l.b16 %v223
      %v425 = vunpack.c.h.b16 %v223
      %v426 = vunpack.c.l.b16 %v224
      %v427 = vunpack.c.h.b16 %v224
      %v428 = vunpack.c.l.b16 %v225
      %v429 = vunpack.c.h.b16 %v225
      %v430 = vunpack.c.l.b16 %v226
      %v431 = vunpack.c.h.b16 %v226
      %v432 = vunpack.c.l.b16 %v227
      %v433 = vunpack.c.h.b16 %v227
      %v434 = vunpack.c.l.b16 %v228
      %v435 = vunpack.c.h.b16 %v228
      %v436 = vunpack.c.l.b16 %v229
      %v437 = vunpack.c.h.b16 %v229
      %v438 = vunpack.c.l.b16 %v230
      %v439 = vunpack.c.h.b16 %v230
      %v440 = vunpack.c.l.b16 %v231
      %v441 = vunpack.c.h.b16 %v231
      %v442 = vunpack.c.l.b16 %v232
      %v443 = vunpack.c.h.b16 %v232
      %v444 = vunpack.c.l.b16 %v233
      %v445 = vunpack.c.h.b16 %v233
      %v446 = vunpack.c.l.b16 %v234
      %v447 = vunpack.c.h.b16 %v234
      %v448 = vunpack.c.l.b16 %v235
      %v449 = vunpack.c.h.b16 %v235
      %v450 = vunpack.c.l.b16 %v236
      %v451 = vunpack.c.h.b16 %v236
      %v452 = vunpack.c.l.b16 %v237
      %v453 = vunpack.c.h.b16 %v237
      %v454 = vunpack.c.l.b16 %v238
      %v455 = vunpack.c.h.b16 %v238
      %v456 = vunpack.c.l.b16 %v239
      %v457 = vunpack.c.h.b16 %v239
      %v458 = vunpack.c.l.b16 %v240
      %v459 = vunpack.c.h.b16 %v240
      %v460 = vunpack.c.l.b16 %v241
      %v461 = vunpack.c.h.b16 %v241
      %v462 = vpack.c.b16 %v336, %v334
      %v463 = vpack.c.b16 %v337, %v335
      %v464 = vpack.c.b16 %v340, %v338
      %v465 = vpack.c.b16 %v341, %v339
      %v466 = vpack.c.b16 %v344, %v342
      %v467 = vpack.c.b16 %v345, %v343
      %v468 = vpack.c.b16 %v348, %v346
      %v469 = vpack.c.b16 %v349, %v347
      %v470 = vpack.c.b16 %v352, %v350
      %v471 = vpack.c.b16 %v353, %v351
      %v472 = vpack.c.b16 %v356, %v354
      %v473 = vpack.c.b16 %v357, %v355
      %v474 = vpack.c.b16 %v360, %v358
      %v475 = vpack.c.b16 %v361, %v359
      %v476 = vpack.c.b16 %v364, %v362
      %v477 = vpack.c.b16 %v365, %v363
      %v478 = vpack.c.b16 %v368, %v366
      %v479 = vpack.c.b16 %v369, %v367
      %v480 = vpack.c.b16 %v372, %v370
      %v481 = vpack.c.b16 %v373, %v371
      %v482 = vpack.c.b16 %v376, %v374
      %v483 = vpack.c.b16 %v377, %v375
      %v484 = vpack.c.b16 %v380, %v378
      %v485 = vpack.c.b16 %v381, %v379
      %v486 = vpack.c.b16 %v384, %v382
      %v487 = vpack.c.b16 %v385, %v383
      %v488 = vpack.c.b16 %v388, %v386
      %v489 = vpack.c.b16 %v389, %v387
      %v490 = vpack.c.b16 %v392, %v390
      %v491 = vpack.c.b16 %v393, %v391
      %v492 = vpack.c.b16 %v396, %v394
      %v493 = vpack.c.b16 %v397, %v395
      %v494 = vpack.c.b16 %v400, %v398
      %v495 = vpack.c.b16 %v401, %v399
      %v496 = vpack.c.b16 %v404, %v402
      %v497 = vpack.c.b16 %v405, %v403
      %v498 = vpack.c.b16 %v408, %v406
      %v499 = vpack.c.b16 %v409, %v407
      %v500 = vpack.c.b16 %v412, %v410
      %v501 = vpack.c.b16 %v413, %v411
      %v502 = vpack.c.b16 %v416, %v414
      %v503 = vpack.c.b16 %v417, %v415
      %v504 = vpack.c.b16 %v420, %v418
      %v505 = vpack.c.b16 %v421, %v419
      %v506 = vpack.c.b16 %v424, %v422
      %v507 = vpack.c.b16 %v425, %v423
      %v508 = vpack.c.b16 %v428, %v426
      %v509 = vpack.c.b16 %v429, %v427
      %v510 = vpack.c.b16 %v432, %v430
      %v511 = vpack.c.b16 %v433, %v431
      %v512 = vpack.c.b16 %v436, %v434
      %v513 = vpack.c.b16 %v437, %v435
      %v514 = vpack.c.b16 %v440, %v438
      %v515 = vpack.c.b16 %v441, %v439
      %v516 = vpack.c.b16 %v444, %v442
      %v517 = vpack.c.b16 %v445, %v443
      %v518 = vpack.c.b16 %v448, %v446
      %v519 = vpack.c.b16 %v449, %v447
      %v520 = vpack.c.b16 %v452, %v450
      %v521 = vpack.c.b16 %v453, %v451
      %v522 = vpack.c.b16 %v456, %v454
      %v523 = vpack.c.b16 %v457, %v455
      %v524 = vpack.c.b16 %v460, %v458
      %v525 = vpack.c.b16 %v461, %v459
      %v582 = vunpack.c.l.b16 %v242
      %v583 = vunpack.c.l.b16 %v243
      %v584 = vunpack.c.l.b16 %v244
      %v585 = vunpack.c.l.b16 %v245
      %v586 = vunpack.c.l.b16 %v246
      %v587 = vunpack.c.l.b16 %v247
      %v588 = vunpack.c.l.b16 %v248
      %v589 = vunpack.c.l.b16 %v249
      %v590 = vunpack.c.l.b16 %v250
      %v591 = vunpack.c.l.b16 %v251
      %v592 = vunpack.c.l.b16 %v252
      %v593 = vunpack.c.l.b16 %v253
      %v594 = vunpack.c.l.b16 %v254
      %v595 = vunpack.c.l.b16 %v255
      %v596 = vunpack.c.l.b16 %v256
      %v597 = vunpack.c.l.b16 %v257
      %v598 = vunpack.c.l.b16 %v258
      %v599 = vunpack.c.l.b16 %v259
      %v600 = vunpack.c.l.b16 %v260
      %v601 = vunpack.c.l.b16 %v261
      %v602 = vunpack.c.l.b16 %v262
      %v603 = vunpack.c.l.b16 %v263
      %v604 = vunpack.c.l.b16 %v264
      %v605 = vunpack.c.l.b16 %v265
      %v606 = vpack.c.b16 %v583, %v582
      %v607 = vpack.c.b16 %v585, %v584
      %v608 = vpack.c.b16 %v587, %v586
      %v609 = vpack.c.b16 %v589, %v588
      %v610 = vpack.c.b16 %v591, %v590
      %v611 = vpack.c.b16 %v593, %v592
      %v612 = vpack.c.b16 %v595, %v594
      %v613 = vpack.c.b16 %v597, %v596
      %v614 = vpack.c.b16 %v599, %v598
      %v615 = vpack.c.b16 %v601, %v600
      %v616 = vpack.c.b16 %v603, %v602
      %v617 = vpack.c.b16 %v605, %v604
      %vm629 = vcmask 498688
      %v631 = vsel %vm629, %v463, 0
      %v634 = vsel %vm629, %v465, 0
      %v637 = vsel %vm629, %v467, 0
      %v640 = vsel %vm629, %v469, 0
      %v643 = vsel %vm629, %v471, 0
      %v646 = vsel %vm629, %v473, 0
      %v649 = vsel %vm629, %v475, 0
      %v652 = vsel %vm629, %v477, 0
      %v655 = vsel %vm629, %v479, 0
      %v658 = vsel %vm629, %v481, 0
      %v661 = vsel %vm629, %v483, 0
      %v664 = vsel %vm629, %v485, 0
      %v667 = vsel %vm629, %v487, 0
      %v670 = vsel %vm629, %v489, 0
      %v673 = vsel %vm629, %v491, 0
      %v676 = vsel %vm629, %v493, 0
      %v679 = vsel %vm629, %v495, 0
      %v682 = vsel %vm629, %v497, 0
      %v685 = vsel %vm629, %v499, 0
      %v688 = vsel %vm629, %v501, 0
      %v691 = vsel %vm629, %v503, 0
      %v694 = vsel %vm629, %v505, 0
      %v697 = vsel %vm629, %v507, 0
      %v700 = vsel %vm629, %v509, 0
      %v703 = vsel %vm629, %v511, 0
      %v706 = vsel %vm629, %v513, 0
      %v709 = vsel %vm629, %v515, 0
      %v712 = vsel %vm629, %v517, 0
      %v715 = vsel %vm629, %v519, 0
      %v718 = vsel %vm629, %v521, 0
      %v721 = vsel %vm629, %v523, 0
      %v724 = vsel %vm629, %v525, 0
      %vm726 = vcmask 1045504
      %vm727 = vcmask 1046528
      %v728 = vsel %vm726, 4294967295, 65535
      %v729 = vsel %vm727, %v728, 0
      %v731 = vand.u32 %v617, %v729
      %733 = vmatpush.bf16.msra.mxu0 %v613
      %734 = vmatpush.bf16.msra.mxu0 %v612
      %735 = vmatpush.bf16.msra.mxu0 %v611
      %736 = vmatpush.bf16.msra.mxu0 %v610
      %737 = vmatpush.bf16.msra.mxu0 %v609
      %738 = vmatpush.bf16.msra.mxu0 %v608
      %739 = vmatpush.bf16.msra.mxu0 %v607
      %740 = vmatpush.bf16.msra.mxu0 %v606
      %741 = vmatmul.bf16.gmra.mxu0 %v462
      %v742 = vpop.f32.mrf.mxu0
      %v743 = vadd.f32 %v268, %v742
      %v744 = vpop.f32.mrf.mxu0
      %v745 = vadd.f32 %v268, %v744
      %746 = vmatmul.bf16.gmra.mxu0 %v464
      %v747 = vpop.f32.mrf.mxu0
      %v748 = vadd.f32 %v268, %v747
      %v749 = vpop.f32.mrf.mxu0
      %v750 = vadd.f32 %v268, %v749
      %751 = vmatmul.bf16.gmra.mxu0 %v466
      %v752 = vpop.f32.mrf.mxu0
      %v753 = vadd.f32 %v268, %v752
      %v754 = vpop.f32.mrf.mxu0
      %v755 = vadd.f32 %v268, %v754
      %756 = vmatmul.bf16.gmra.mxu0 %v468
      %v757 = vpop.f32.mrf.mxu0
      %v758 = vadd.f32 %v268, %v757
      %v759 = vpop.f32.mrf.mxu0
      %v760 = vadd.f32 %v268, %v759
      %761 = vmatmul.bf16.gmra.mxu0 %v470
      %v762 = vpop.f32.mrf.mxu0
      %v763 = vadd.f32 %v268, %v762
      %v764 = vpop.f32.mrf.mxu0
      %v765 = vadd.f32 %v268, %v764
      %766 = vmatmul.bf16.gmra.mxu0 %v472
      %v767 = vpop.f32.mrf.mxu0
      %v768 = vadd.f32 %v268, %v767
      %v769 = vpop.f32.mrf.mxu0
      %v770 = vadd.f32 %v268, %v769
      %771 = vmatmul.bf16.gmra.mxu0 %v474
      %v772 = vpop.f32.mrf.mxu0
      %v773 = vadd.f32 %v268, %v772
      %v774 = vpop.f32.mrf.mxu0
      %v775 = vadd.f32 %v268, %v774
      %776 = vmatmul.bf16.gmra.mxu0 %v476
      %v777 = vpop.f32.mrf.mxu0
      %v778 = vadd.f32 %v268, %v777
      %v779 = vpop.f32.mrf.mxu0
      %v780 = vadd.f32 %v268, %v779
      %781 = vmatmul.bf16.gmra.mxu0 %v478
      %v782 = vpop.f32.mrf.mxu0
      %v783 = vadd.f32 %v268, %v782
      %v784 = vpop.f32.mrf.mxu0
      %v785 = vadd.f32 %v268, %v784
      %786 = vmatmul.bf16.gmra.mxu0 %v480
      %v787 = vpop.f32.mrf.mxu0
      %v788 = vadd.f32 %v268, %v787
      %v789 = vpop.f32.mrf.mxu0
      %v790 = vadd.f32 %v268, %v789
      %791 = vmatmul.bf16.gmra.mxu0 %v482
      %v792 = vpop.f32.mrf.mxu0
      %v793 = vadd.f32 %v268, %v792
      %v794 = vpop.f32.mrf.mxu0
      %v795 = vadd.f32 %v268, %v794
      %796 = vmatmul.bf16.gmra.mxu0 %v484
      %v797 = vpop.f32.mrf.mxu0
      %v798 = vadd.f32 %v268, %v797
      %v799 = vpop.f32.mrf.mxu0
      %v800 = vadd.f32 %v268, %v799
      %801 = vmatmul.bf16.gmra.mxu0 %v486
      %v802 = vpop.f32.mrf.mxu0
      %v803 = vadd.f32 %v268, %v802
      %v804 = vpop.f32.mrf.mxu0
      %v805 = vadd.f32 %v268, %v804
      %806 = vmatmul.bf16.gmra.mxu0 %v488
      %v807 = vpop.f32.mrf.mxu0
      %v808 = vadd.f32 %v268, %v807
      %v809 = vpop.f32.mrf.mxu0
      %v810 = vadd.f32 %v268, %v809
      %811 = vmatmul.bf16.gmra.mxu0 %v490
      %v812 = vpop.f32.mrf.mxu0
      %v813 = vadd.f32 %v268, %v812
      %v814 = vpop.f32.mrf.mxu0
      %v815 = vadd.f32 %v268, %v814
      %816 = vmatmul.bf16.gmra.mxu0 %v492
      %v817 = vpop.f32.mrf.mxu0
      %v818 = vadd.f32 %v268, %v817
      %v819 = vpop.f32.mrf.mxu0
      %v820 = vadd.f32 %v268, %v819
      %821 = vmatmul.bf16.gmra.mxu0 %v494
      %v822 = vpop.f32.mrf.mxu0
      %v823 = vadd.f32 %v268, %v822
      %v824 = vpop.f32.mrf.mxu0
      %v825 = vadd.f32 %v268, %v824
      %826 = vmatmul.bf16.gmra.mxu0 %v496
      %v827 = vpop.f32.mrf.mxu0
      %v828 = vadd.f32 %v268, %v827
      %v829 = vpop.f32.mrf.mxu0
      %v830 = vadd.f32 %v268, %v829
      %831 = vmatmul.bf16.gmra.mxu0 %v498
      %v832 = vpop.f32.mrf.mxu0
      %v833 = vadd.f32 %v268, %v832
      %v834 = vpop.f32.mrf.mxu0
      %v835 = vadd.f32 %v268, %v834
      %836 = vmatmul.bf16.gmra.mxu0 %v500
      %v837 = vpop.f32.mrf.mxu0
      %v838 = vadd.f32 %v268, %v837
      %v839 = vpop.f32.mrf.mxu0
      %v840 = vadd.f32 %v268, %v839
      %841 = vmatmul.bf16.gmra.mxu0 %v502
      %v842 = vpop.f32.mrf.mxu0
      %v843 = vadd.f32 %v268, %v842
      %v844 = vpop.f32.mrf.mxu0
      %v845 = vadd.f32 %v268, %v844
      %846 = vmatmul.bf16.gmra.mxu0 %v504
      %v847 = vpop.f32.mrf.mxu0
      %v848 = vadd.f32 %v268, %v847
      %v849 = vpop.f32.mrf.mxu0
      %v850 = vadd.f32 %v268, %v849
      %851 = vmatmul.bf16.gmra.mxu0 %v506
      %v852 = vpop.f32.mrf.mxu0
      %v853 = vadd.f32 %v268, %v852
      %v854 = vpop.f32.mrf.mxu0
      %v855 = vadd.f32 %v268, %v854
      %856 = vmatmul.bf16.gmra.mxu0 %v508
      %v857 = vpop.f32.mrf.mxu0
      %v858 = vadd.f32 %v268, %v857
      %v859 = vpop.f32.mrf.mxu0
      %v860 = vadd.f32 %v268, %v859
      %861 = vmatmul.bf16.gmra.mxu0 %v510
      %v862 = vpop.f32.mrf.mxu0
      %v863 = vadd.f32 %v268, %v862
      %v864 = vpop.f32.mrf.mxu0
      %v865 = vadd.f32 %v268, %v864
      %866 = vmatmul.bf16.gmra.mxu0 %v512
      %v867 = vpop.f32.mrf.mxu0
      %v868 = vadd.f32 %v268, %v867
      %v869 = vpop.f32.mrf.mxu0
      %v870 = vadd.f32 %v268, %v869
      %871 = vmatmul.bf16.gmra.mxu0 %v514
      %v872 = vpop.f32.mrf.mxu0
      %v873 = vadd.f32 %v268, %v872
      %v874 = vpop.f32.mrf.mxu0
      %v875 = vadd.f32 %v268, %v874
      %876 = vmatmul.bf16.gmra.mxu0 %v516
      %v877 = vpop.f32.mrf.mxu0
      %v878 = vadd.f32 %v268, %v877
      %v879 = vpop.f32.mrf.mxu0
      %v880 = vadd.f32 %v268, %v879
      %881 = vmatmul.bf16.gmra.mxu0 %v518
      %v882 = vpop.f32.mrf.mxu0
      %v883 = vadd.f32 %v268, %v882
      %v884 = vpop.f32.mrf.mxu0
      %v885 = vadd.f32 %v268, %v884
      %886 = vmatmul.bf16.gmra.mxu0 %v520
      %v887 = vpop.f32.mrf.mxu0
      %v888 = vadd.f32 %v268, %v887
      %v889 = vpop.f32.mrf.mxu0
      %v890 = vadd.f32 %v268, %v889
      %891 = vmatmul.bf16.gmra.mxu0 %v522
      %v892 = vpop.f32.mrf.mxu0
      %v893 = vadd.f32 %v268, %v892
      %v894 = vpop.f32.mrf.mxu0
      %v895 = vadd.f32 %v268, %v894
      %896 = vmatmul.bf16.gmra.mxu0 %v524
      %v897 = vpop.f32.mrf.mxu0
      %v898 = vadd.f32 %v268, %v897
      %v899 = vpop.f32.mrf.mxu0
      %v900 = vadd.f32 %v268, %v899
      %901 = vdwg.mxu0
      %902 = vmatpush.bf16.msra.mxu0 0
      %903 = vmatpush.bf16.msra.mxu0 0
      %904 = vmatpush.bf16.msra.mxu0 0
      %905 = vmatpush.bf16.msra.mxu0 0
      %906 = vmatpush.bf16.msra.mxu0 %v731
      %907 = vmatpush.bf16.msra.mxu0 %v616
      %908 = vmatpush.bf16.msra.mxu0 %v615
      %909 = vmatpush.bf16.msra.mxu0 %v614
      %910 = vmatmul.bf16.gmra.mxu0 %v631
      %v911 = vpop.f32.mrf.mxu0
      %v912 = vadd.f32 %v743, %v911
      %v913 = vpop.f32.mrf.mxu0
      %v914 = vadd.f32 %v745, %v913
      %915 = vmatmul.bf16.gmra.mxu0 %v634
      %v916 = vpop.f32.mrf.mxu0
      %v917 = vadd.f32 %v748, %v916
      %v918 = vpop.f32.mrf.mxu0
      %v919 = vadd.f32 %v750, %v918
      %920 = vmatmul.bf16.gmra.mxu0 %v637
      %v921 = vpop.f32.mrf.mxu0
      %v922 = vadd.f32 %v753, %v921
      %v923 = vpop.f32.mrf.mxu0
      %v924 = vadd.f32 %v755, %v923
      %925 = vmatmul.bf16.gmra.mxu0 %v640
      %v926 = vpop.f32.mrf.mxu0
      %v927 = vadd.f32 %v758, %v926
      %v928 = vpop.f32.mrf.mxu0
      %v929 = vadd.f32 %v760, %v928
      %930 = vmatmul.bf16.gmra.mxu0 %v643
      %v931 = vpop.f32.mrf.mxu0
      %v932 = vadd.f32 %v763, %v931
      %v933 = vpop.f32.mrf.mxu0
      %v934 = vadd.f32 %v765, %v933
      %935 = vmatmul.bf16.gmra.mxu0 %v646
      %v936 = vpop.f32.mrf.mxu0
      %v937 = vadd.f32 %v768, %v936
      %v938 = vpop.f32.mrf.mxu0
      %v939 = vadd.f32 %v770, %v938
      %940 = vmatmul.bf16.gmra.mxu0 %v649
      %v941 = vpop.f32.mrf.mxu0
      %v942 = vadd.f32 %v773, %v941
      %v943 = vpop.f32.mrf.mxu0
      %v944 = vadd.f32 %v775, %v943
      %945 = vmatmul.bf16.gmra.mxu0 %v652
      %v946 = vpop.f32.mrf.mxu0
      %v947 = vadd.f32 %v778, %v946
      %v948 = vpop.f32.mrf.mxu0
      %v949 = vadd.f32 %v780, %v948
      %950 = vmatmul.bf16.gmra.mxu0 %v655
      %v951 = vpop.f32.mrf.mxu0
      %v952 = vadd.f32 %v783, %v951
      %v953 = vpop.f32.mrf.mxu0
      %v954 = vadd.f32 %v785, %v953
      %955 = vmatmul.bf16.gmra.mxu0 %v658
      %v956 = vpop.f32.mrf.mxu0
      %v957 = vadd.f32 %v788, %v956
      %v958 = vpop.f32.mrf.mxu0
      %v959 = vadd.f32 %v790, %v958
      %960 = vmatmul.bf16.gmra.mxu0 %v661
      %v961 = vpop.f32.mrf.mxu0
      %v962 = vadd.f32 %v793, %v961
      %v963 = vpop.f32.mrf.mxu0
      %v964 = vadd.f32 %v795, %v963
      %965 = vmatmul.bf16.gmra.mxu0 %v664
      %v966 = vpop.f32.mrf.mxu0
      %v967 = vadd.f32 %v798, %v966
      %v968 = vpop.f32.mrf.mxu0
      %v969 = vadd.f32 %v800, %v968
      %970 = vmatmul.bf16.gmra.mxu0 %v667
      %v971 = vpop.f32.mrf.mxu0
      %v972 = vadd.f32 %v803, %v971
      %v973 = vpop.f32.mrf.mxu0
      %v974 = vadd.f32 %v805, %v973
      %975 = vmatmul.bf16.gmra.mxu0 %v670
      %v976 = vpop.f32.mrf.mxu0
      %v977 = vadd.f32 %v808, %v976
      %v978 = vpop.f32.mrf.mxu0
      %v979 = vadd.f32 %v810, %v978
      %980 = vmatmul.bf16.gmra.mxu0 %v673
      %v981 = vpop.f32.mrf.mxu0
      %v982 = vadd.f32 %v813, %v981
      %v983 = vpop.f32.mrf.mxu0
      %v984 = vadd.f32 %v815, %v983
      %985 = vmatmul.bf16.gmra.mxu0 %v676
      %v986 = vpop.f32.mrf.mxu0
      %v987 = vadd.f32 %v818, %v986
      %v988 = vpop.f32.mrf.mxu0
      %v989 = vadd.f32 %v820, %v988
      %990 = vmatmul.bf16.gmra.mxu0 %v679
      %v991 = vpop.f32.mrf.mxu0
      %v992 = vadd.f32 %v823, %v991
      %v993 = vpop.f32.mrf.mxu0
      %v994 = vadd.f32 %v825, %v993
      %995 = vmatmul.bf16.gmra.mxu0 %v682
      %v996 = vpop.f32.mrf.mxu0
      %v997 = vadd.f32 %v828, %v996
      %v998 = vpop.f32.mrf.mxu0
      %v999 = vadd.f32 %v830, %v998
      %1000 = vmatmul.bf16.gmra.mxu0 %v685
      %v1001 = vpop.f32.mrf.mxu0
      %v1002 = vadd.f32 %v833, %v1001
      %v1003 = vpop.f32.mrf.mxu0
      %v1004 = vadd.f32 %v835, %v1003
      %1005 = vmatmul.bf16.gmra.mxu0 %v688
      %v1006 = vpop.f32.mrf.mxu0
      %v1007 = vadd.f32 %v838, %v1006
      %v1008 = vpop.f32.mrf.mxu0
      %v1009 = vadd.f32 %v840, %v1008
      %1010 = vmatmul.bf16.gmra.mxu0 %v691
      %v1011 = vpop.f32.mrf.mxu0
      %v1012 = vadd.f32 %v843, %v1011
      %v1013 = vpop.f32.mrf.mxu0
      %v1014 = vadd.f32 %v845, %v1013
      %1015 = vmatmul.bf16.gmra.mxu0 %v694
      %v1016 = vpop.f32.mrf.mxu0
      %v1017 = vadd.f32 %v848, %v1016
      %v1018 = vpop.f32.mrf.mxu0
      %v1019 = vadd.f32 %v850, %v1018
      %1020 = vmatmul.bf16.gmra.mxu0 %v697
      %v1021 = vpop.f32.mrf.mxu0
      %v1022 = vadd.f32 %v853, %v1021
      %v1023 = vpop.f32.mrf.mxu0
      %v1024 = vadd.f32 %v855, %v1023
      %1025 = vmatmul.bf16.gmra.mxu0 %v700
      %v1026 = vpop.f32.mrf.mxu0
      %v1027 = vadd.f32 %v858, %v1026
      %v1028 = vpop.f32.mrf.mxu0
      %v1029 = vadd.f32 %v860, %v1028
      %1030 = vmatmul.bf16.gmra.mxu0 %v703
      %v1031 = vpop.f32.mrf.mxu0
      %v1032 = vadd.f32 %v863, %v1031
      %v1033 = vpop.f32.mrf.mxu0
      %v1034 = vadd.f32 %v865, %v1033
      %1035 = vmatmul.bf16.gmra.mxu0 %v706
      %v1036 = vpop.f32.mrf.mxu0
      %v1037 = vadd.f32 %v868, %v1036
      %v1038 = vpop.f32.mrf.mxu0
      %v1039 = vadd.f32 %v870, %v1038
      %1040 = vmatmul.bf16.gmra.mxu0 %v709
      %v1041 = vpop.f32.mrf.mxu0
      %v1042 = vadd.f32 %v873, %v1041
      %v1043 = vpop.f32.mrf.mxu0
      %v1044 = vadd.f32 %v875, %v1043
      %1045 = vmatmul.bf16.gmra.mxu0 %v712
      %v1046 = vpop.f32.mrf.mxu0
      %v1047 = vadd.f32 %v878, %v1046
      %v1048 = vpop.f32.mrf.mxu0
      %v1049 = vadd.f32 %v880, %v1048
      %1050 = vmatmul.bf16.gmra.mxu0 %v715
      %v1051 = vpop.f32.mrf.mxu0
      %v1052 = vadd.f32 %v883, %v1051
      %v1053 = vpop.f32.mrf.mxu0
      %v1054 = vadd.f32 %v885, %v1053
      %1055 = vmatmul.bf16.gmra.mxu0 %v718
      %v1056 = vpop.f32.mrf.mxu0
      %v1057 = vadd.f32 %v888, %v1056
      %v1058 = vpop.f32.mrf.mxu0
      %v1059 = vadd.f32 %v890, %v1058
      %1060 = vmatmul.bf16.gmra.mxu0 %v721
      %v1061 = vpop.f32.mrf.mxu0
      %v1062 = vadd.f32 %v893, %v1061
      %v1063 = vpop.f32.mrf.mxu0
      %v1064 = vadd.f32 %v895, %v1063
      %1065 = vmatmul.bf16.gmra.mxu0 %v724
      %v1066 = vpop.f32.mrf.mxu0
      %v1067 = vadd.f32 %v898, %v1066
      %v1068 = vpop.f32.mrf.mxu0
      %v1069 = vadd.f32 %v900, %v1068
      %1070 = vdwg.mxu0
      %v1071 = vmax.f32 %v912, 0.0
      %v1072 = vmax.f32 %v914, 0.0
      %v1073 = vmax.f32 %v917, 0.0
      %v1074 = vmax.f32 %v919, 0.0
      %v1075 = vmax.f32 %v922, 0.0
      %v1076 = vmax.f32 %v924, 0.0
      %v1077 = vmax.f32 %v927, 0.0
      %v1078 = vmax.f32 %v929, 0.0
      %v1079 = vmax.f32 %v932, 0.0
      %v1080 = vmax.f32 %v934, 0.0
      %v1081 = vmax.f32 %v937, 0.0
      %v1082 = vmax.f32 %v939, 0.0
      %v1083 = vmax.f32 %v942, 0.0
      %v1084 = vmax.f32 %v944, 0.0
      %v1085 = vmax.f32 %v947, 0.0
      %v1086 = vmax.f32 %v949, 0.0
      %v1087 = vmax.f32 %v952, 0.0
      %v1088 = vmax.f32 %v954, 0.0
      %v1089 = vmax.f32 %v957, 0.0
      %v1090 = vmax.f32 %v959, 0.0
      %v1091 = vmax.f32 %v962, 0.0
      %v1092 = vmax.f32 %v964, 0.0
      %v1093 = vmax.f32 %v967, 0.0
      %v1094 = vmax.f32 %v969, 0.0
      %v1095 = vmax.f32 %v972, 0.0
      %v1096 = vmax.f32 %v974, 0.0
      %v1097 = vmax.f32 %v977, 0.0
      %v1098 = vmax.f32 %v979, 0.0
      %v1099 = vmax.f32 %v982, 0.0
      %v1100 = vmax.f32 %v984, 0.0
      %v1101 = vmax.f32 %v987, 0.0
      %v1102 = vmax.f32 %v989, 0.0
      %v1103 = vmax.f32 %v992, 0.0
      %v1104 = vmax.f32 %v994, 0.0
      %v1105 = vmax.f32 %v997, 0.0
      %v1106 = vmax.f32 %v999, 0.0
      %v1107 = vmax.f32 %v1002, 0.0
      %v1108 = vmax.f32 %v1004, 0.0
      %v1109 = vmax.f32 %v1007, 0.0
      %v1110 = vmax.f32 %v1009, 0.0
      %v1111 = vmax.f32 %v1012, 0.0
      %v1112 = vmax.f32 %v1014, 0.0
      %v1113 = vmax.f32 %v1017, 0.0
      %v1114 = vmax.f32 %v1019, 0.0
      %v1115 = vmax.f32 %v1022, 0.0
      %v1116 = vmax.f32 %v1024, 0.0
      %v1117 = vmax.f32 %v1027, 0.0
      %v1118 = vmax.f32 %v1029, 0.0
      %v1119 = vmax.f32 %v1032, 0.0
      %v1120 = vmax.f32 %v1034, 0.0
      %v1121 = vmax.f32 %v1037, 0.0
      %v1122 = vmax.f32 %v1039, 0.0
      %v1123 = vmax.f32 %v1042, 0.0
      %v1124 = vmax.f32 %v1044, 0.0
      %v1125 = vmax.f32 %v1047, 0.0
      %v1126 = vmax.f32 %v1049, 0.0
      %v1127 = vmax.f32 %v1052, 0.0
      %v1128 = vmax.f32 %v1054, 0.0
      %v1129 = vmax.f32 %v1057, 0.0
      %v1130 = vmax.f32 %v1059, 0.0
      %v1131 = vmax.f32 %v1062, 0.0
      %v1132 = vmax.f32 %v1064, 0.0
      %v1133 = vmax.f32 %v1067, 0.0
      %v1134 = vmax.f32 %v1069, 0.0
      %v1135 = vpack.c.bf16 %v1071, %v1071
      %v1136 = vpack.c.bf16 %v1072, %v1072
      %v1137 = vpack.c.bf16 %v1073, %v1073
      %v1138 = vpack.c.bf16 %v1074, %v1074
      %v1139 = vpack.c.bf16 %v1075, %v1075
      %v1140 = vpack.c.bf16 %v1076, %v1076
      %v1141 = vpack.c.bf16 %v1077, %v1077
      %v1142 = vpack.c.bf16 %v1078, %v1078
      %v1143 = vpack.c.bf16 %v1079, %v1079
      %v1144 = vpack.c.bf16 %v1080, %v1080
      %v1145 = vpack.c.bf16 %v1081, %v1081
      %v1146 = vpack.c.bf16 %v1082, %v1082
      %v1147 = vpack.c.bf16 %v1083, %v1083
      %v1148 = vpack.c.bf16 %v1084, %v1084
      %v1149 = vpack.c.bf16 %v1085, %v1085
      %v1150 = vpack.c.bf16 %v1086, %v1086
      %v1151 = vpack.c.bf16 %v1087, %v1087
      %v1152 = vpack.c.bf16 %v1088, %v1088
      %v1153 = vpack.c.bf16 %v1089, %v1089
      %v1154 = vpack.c.bf16 %v1090, %v1090
      %v1155 = vpack.c.bf16 %v1091, %v1091
      %v1156 = vpack.c.bf16 %v1092, %v1092
      %v1157 = vpack.c.bf16 %v1093, %v1093
      %v1158 = vpack.c.bf16 %v1094, %v1094
      %v1159 = vpack.c.bf16 %v1095, %v1095
      %v1160 = vpack.c.bf16 %v1096, %v1096
      %v1161 = vpack.c.bf16 %v1097, %v1097
      %v1162 = vpack.c.bf16 %v1098, %v1098
      %v1163 = vpack.c.bf16 %v1099, %v1099
      %v1164 = vpack.c.bf16 %v1100, %v1100
      %v1165 = vpack.c.bf16 %v1101, %v1101
      %v1166 = vpack.c.bf16 %v1102, %v1102
      %v1167 = vpack.c.bf16 %v1103, %v1103
      %v1168 = vpack.c.bf16 %v1104, %v1104
      %v1169 = vpack.c.bf16 %v1105, %v1105
      %v1170 = vpack.c.bf16 %v1106, %v1106
      %v1171 = vpack.c.bf16 %v1107, %v1107
      %v1172 = vpack.c.bf16 %v1108, %v1108
      %v1173 = vpack.c.bf16 %v1109, %v1109
      %v1174 = vpack.c.bf16 %v1110, %v1110
      %v1175 = vpack.c.bf16 %v1111, %v1111
      %v1176 = vpack.c.bf16 %v1112, %v1112
      %v1177 = vpack.c.bf16 %v1113, %v1113
      %v1178 = vpack.c.bf16 %v1114, %v1114
      %v1179 = vpack.c.bf16 %v1115, %v1115
      %v1180 = vpack.c.bf16 %v1116, %v1116
      %v1181 = vpack.c.bf16 %v1117, %v1117
      %v1182 = vpack.c.bf16 %v1118, %v1118
      %v1183 = vpack.c.bf16 %v1119, %v1119
      %v1184 = vpack.c.bf16 %v1120, %v1120
      %v1185 = vpack.c.bf16 %v1121, %v1121
      %v1186 = vpack.c.bf16 %v1122, %v1122
      %v1187 = vpack.c.bf16 %v1123, %v1123
      %v1188 = vpack.c.bf16 %v1124, %v1124
      %v1189 = vpack.c.bf16 %v1125, %v1125
      %v1190 = vpack.c.bf16 %v1126, %v1126
      %v1191 = vpack.c.bf16 %v1127, %v1127
      %v1192 = vpack.c.bf16 %v1128, %v1128
      %v1193 = vpack.c.bf16 %v1129, %v1129
      %v1194 = vpack.c.bf16 %v1130, %v1130
      %v1195 = vpack.c.bf16 %v1131, %v1131
      %v1196 = vpack.c.bf16 %v1132, %v1132
      %v1197 = vpack.c.bf16 %v1133, %v1133
      %v1198 = vpack.c.bf16 %v1134, %v1134
      %vm1199 = vcmask 52224
      %1200 = vst.msk [vmem:[%s175] sm:$0xf] %vm1199, %v1135
      %1201 = vst.msk [vmem:[%s175 + $0x4] sm:$0xf] %vm1199, %v1136
      %1202 = vst.msk [vmem:[%s175 + $0x8] sm:$0xf] %vm1199, %v1137
      %1203 = vst.msk [vmem:[%s175 + $0xc] sm:$0xf] %vm1199, %v1138
      %1204 = vst.msk [vmem:[%s175 + $0x10] sm:$0xf] %vm1199, %v1139
      %1205 = vst.msk [vmem:[%s175 + $0x14] sm:$0xf] %vm1199, %v1140
      %1206 = vst.msk [vmem:[%s175 + $0x18] sm:$0xf] %vm1199, %v1141
      %1207 = vst.msk [vmem:[%s175 + $0x1c] sm:$0xf] %vm1199, %v1142
      %1208 = vst.msk [vmem:[%s175 + $0x20] sm:$0xf] %vm1199, %v1143
      %1209 = vst.msk [vmem:[%s175 + $0x24] sm:$0xf] %vm1199, %v1144
      %1210 = vst.msk [vmem:[%s175 + $0x28] sm:$0xf] %vm1199, %v1145
      %1211 = vst.msk [vmem:[%s175 + $0x2c] sm:$0xf] %vm1199, %v1146
      %1212 = vst.msk [vmem:[%s175 + $0x30] sm:$0xf] %vm1199, %v1147
      %1213 = vst.msk [vmem:[%s175 + $0x34] sm:$0xf] %vm1199, %v1148
      %1214 = vst.msk [vmem:[%s175 + $0x38] sm:$0xf] %vm1199, %v1149
      %1215 = vst.msk [vmem:[%s175 + $0x3c] sm:$0xf] %vm1199, %v1150
      %1216 = vst.msk [vmem:[%s175 + $0x40] sm:$0xf] %vm1199, %v1151
      %1217 = vst.msk [vmem:[%s175 + $0x44] sm:$0xf] %vm1199, %v1152
      %1218 = vst.msk [vmem:[%s175 + $0x48] sm:$0xf] %vm1199, %v1153
      %1219 = vst.msk [vmem:[%s175 + $0x4c] sm:$0xf] %vm1199, %v1154
      %1220 = vst.msk [vmem:[%s175 + $0x50] sm:$0xf] %vm1199, %v1155
      %1221 = vst.msk [vmem:[%s175 + $0x54] sm:$0xf] %vm1199, %v1156
      %1222 = vst.msk [vmem:[%s175 + $0x58] sm:$0xf] %vm1199, %v1157
      %1223 = vst.msk [vmem:[%s175 + $0x5c] sm:$0xf] %vm1199, %v1158
      %1224 = vst.msk [vmem:[%s175 + $0x60] sm:$0xf] %vm1199, %v1159
      %1225 = vst.msk [vmem:[%s175 + $0x64] sm:$0xf] %vm1199, %v1160
      %1226 = vst.msk [vmem:[%s175 + $0x68] sm:$0xf] %vm1199, %v1161
      %1227 = vst.msk [vmem:[%s175 + $0x6c] sm:$0xf] %vm1199, %v1162
      %1228 = vst.msk [vmem:[%s175 + $0x70] sm:$0xf] %vm1199, %v1163
      %1229 = vst.msk [vmem:[%s175 + $0x74] sm:$0xf] %vm1199, %v1164
      %1230 = vst.msk [vmem:[%s175 + $0x78] sm:$0xf] %vm1199, %v1165
      %1231 = vst.msk [vmem:[%s175 + $0x7c] sm:$0xf] %vm1199, %v1166
      %1232 = vst.msk [vmem:[%s175 + $0x80] sm:$0xf] %vm1199, %v1167
      %1233 = vst.msk [vmem:[%s175 + $0x84] sm:$0xf] %vm1199, %v1168
      %1234 = vst.msk [vmem:[%s175 + $0x88] sm:$0xf] %vm1199, %v1169
      %1235 = vst.msk [vmem:[%s175 + $0x8c] sm:$0xf] %vm1199, %v1170
      %1236 = vst.msk [vmem:[%s175 + $0x90] sm:$0xf] %vm1199, %v1171
      %1237 = vst.msk [vmem:[%s175 + $0x94] sm:$0xf] %vm1199, %v1172
      %1238 = vst.msk [vmem:[%s175 + $0x98] sm:$0xf] %vm1199, %v1173
      %1239 = vst.msk [vmem:[%s175 + $0x9c] sm:$0xf] %vm1199, %v1174
      %1240 = vst.msk [vmem:[%s175 + $0xa0] sm:$0xf] %vm1199, %v1175
      %1241 = vst.msk [vmem:[%s175 + $0xa4] sm:$0xf] %vm1199, %v1176
      %1242 = vst.msk [vmem:[%s175 + $0xa8] sm:$0xf] %vm1199, %v1177
      %1243 = vst.msk [vmem:[%s175 + $0xac] sm:$0xf] %vm1199, %v1178
      %1244 = vst.msk [vmem:[%s175 + $0xb0] sm:$0xf] %vm1199, %v1179
      %1245 = vst.msk [vmem:[%s175 + $0xb4] sm:$0xf] %vm1199, %v1180
      %1246 = vst.msk [vmem:[%s175 + $0xb8] sm:$0xf] %vm1199, %v1181
      %1247 = vst.msk [vmem:[%s175 + $0xbc] sm:$0xf] %vm1199, %v1182
      %1248 = vst.msk [vmem:[%s175 + $0xc0] sm:$0xf] %vm1199, %v1183
      %1249 = vst.msk [vmem:[%s175 + $0xc4] sm:$0xf] %vm1199, %v1184
      %1250 = vst.msk [vmem:[%s175 + $0xc8] sm:$0xf] %vm1199, %v1185
      %1251 = vst.msk [vmem:[%s175 + $0xcc] sm:$0xf] %vm1199, %v1186
      %1252 = vst.msk [vmem:[%s175 + $0xd0] sm:$0xf] %vm1199, %v1187
      %1253 = vst.msk [vmem:[%s175 + $0xd4] sm:$0xf] %vm1199, %v1188
      %1254 = vst.msk [vmem:[%s175 + $0xd8] sm:$0xf] %vm1199, %v1189
      %1255 = vst.msk [vmem:[%s175 + $0xdc] sm:$0xf] %vm1199, %v1190
      %1256 = vst.msk [vmem:[%s175 + $0xe0] sm:$0xf] %vm1199, %v1191
      %1257 = vst.msk [vmem:[%s175 + $0xe4] sm:$0xf] %vm1199, %v1192
      %1258 = vst.msk [vmem:[%s175 + $0xe8] sm:$0xf] %vm1199, %v1193
      %1259 = vst.msk [vmem:[%s175 + $0xec] sm:$0xf] %vm1199, %v1194
      %1260 = vst.msk [vmem:[%s175 + $0xf0] sm:$0xf] %vm1199, %v1195
      %1261 = vst.msk [vmem:[%s175 + $0xf4] sm:$0xf] %vm1199, %v1196
      %1262 = vst.msk [vmem:[%s175 + $0xf8] sm:$0xf] %vm1199, %v1197
      %1263 = vst.msk [vmem:[%s175 + $0xfc] sm:$0xf] %vm1199, %v1198
      %s1264 = smul.u32 64, %s14
      %p1265 = scmp.lt.s32.totalorder %s1264, 127
      %s1266 = scalar_select %p1265, %s1264, 127
      %s1267 = smul.addr %s1266, 4
      %s1268 = scalar_lea.vmem %s3, %s1267
      // Predicated region
      $region33: #{psm_gnn_forward.18} parent=31 // pred_check
        %p1269 = pneg %p100
      $region34: #{psm_gnn_forward.18} parent=31 // pred_check_branch
        %1271 = sbr.rel (%p1269) target = $region36
      $region35: #{psm_gnn_forward.18} parent=31 // pred_region
        %s1272 = smul.u32 64, %s14
      $region36: #{psm_gnn_forward.18} parent=31 // pred_fallthru
        _
    $region32: #{psm_gnn_forward.18} parent=5 // pred_fallthru
      _
    %p1273 = scmp.le.s32.totalorder 2, %s9
    // Predicated region
    $region37: #{psm_gnn_forward.18} parent=5 // pred_check
      %p1274 = pneg %p1273
    $region38: #{psm_gnn_forward.18} parent=5 // pred_check_branch
      %1276 = sbr.rel (%p1274) target = $region40
    $region39: #{psm_gnn_forward.18} parent=5 // pred_region
      %s1277 = ssub.s32 %s9, 2
      // Predicated region
      $region41: #{psm_gnn_forward.18} parent=39 // pred_check
        %p1278 = pneg %p106
      $region42: #{psm_gnn_forward.18} parent=39 // pred_check_branch
        %1280 = sbr.rel (%p1278) target = $region44
      $region43: #{psm_gnn_forward.18} parent=39 // pred_region
        %s1281 = smul.u32 64, %s15
        %p1282 = scmp.lt.s32.totalorder %s1281, 127
        %s1283 = scalar_select %p1282, %s1281, 127
        %s1284 = smul.addr %s1283, 4
        %s1285 = scalar_lea.vmem %s3, %s1284
      $region44: #{psm_gnn_forward.18} parent=39 // pred_fallthru
        _
    $region40: #{psm_gnn_forward.18} parent=5 // pred_fallthru
      _
  $region6: #{psm_gnn_forward.18} parent=0 // loop_footer
    %s13 = sadd.s32 1, %s9
  $region7: #{psm_gnn_forward.18} parent=0 // loop_footer_branch
    %8 = sbr.rel target = $region3
  $region8: #{psm_gnn_forward.18} parent=0 // loop_exit
    _

// kernel: psm_gnn_forward.19
$region0: #{psm_gnn_forward.19}
  #allocation0 [shape = 'u32[]', space=smem, size = 0x4, offset = 0x4, fixed_abs, tag = 'smem constant byte address 0x4 - core index']
  #allocation1 [shape = 'u32[72,128]{1,0:T(1,128)}', space=vmem, size = 0x9000, scoped, tag = 'internal scratch']
  %s0 = inlined_call_operand.vmem [shape: bf16[1024,189], index: 0, kind: input, shape index: {}]
  %s1 = inlined_call_operand.vmem [shape: bf16[189,7], index: 1, kind: input, shape index: {}]
  %s2 = inlined_call_operand.vmem [shape: f32[1,7], index: 2, kind: input, shape index: {}]
  %s3 = inlined_call_operand.vmem [shape: f32[1024,7], index: 3, kind: input, shape index: {}]
  %s4 = inlined_call_operand.vmem [shape: bf16[1024,7], index: 4, kind: output, shape index: {}]
  %s5 = sld [smem:[#allocation0]]
  $region49: #{psm_gnn_forward.19} parent=0
    _
  %s7 = ssub.s32 1, %s5
  %s8 = scalar_select 0, %s7, %s5
  loop: start=0, step=1, limit=4
  $region2: #{psm_gnn_forward.19} parent=0 // loop_pre_header
    _
  $region3: #{psm_gnn_forward.19} parent=0 // loop_header
    %s10 = sphi 0, %s14
    %p11 = scmp.ge.s32.totalorder %s10, 4
    %s20 = sphi 0, %s22
    %s23 = sphi 0, %s20
    %s24 = sphi 0, %s23
    %s40 = sphi 0, %s24
    %s44 = sphi 0, %s44
    %s46 = sphi 0, %s44
    %s47 = sphi 0, %s46
    %s61 = sphi 0, %s47
    %s65 = sphi 0, %s65
    %s67 = sphi 0, %s65
    %s68 = sphi 0, %s67
    %s82 = sphi 0, %s68
    %s88 = sphi 0, %s90
    %s91 = sphi 0, %s88
    %s92 = sphi 0, %s91
    %s108 = sphi 0, %s92
    %s114 = sphi 0, %s116
    %s117 = sphi 0, %s114
    %s118 = sphi 0, %s117
    %s134 = sphi 0, %s118
  $region4: #{psm_gnn_forward.19} parent=0 // loop_header_branch
    %13 = sbr.rel (%p11) target = $region8
  $region5: #{psm_gnn_forward.19} parent=0 // loop_body
    %s15 = ssub.s32 %s10, 1
    %s16 = ssub.s32 %s10, 2
    %s17 = sadd.s32 %s10, 1
    %s18 = ssub.s32 %s10, %s17
    %p19 = scmp.eq.s32.totalorder %s18, 0
    %s21 = sadd.s32 %s20, 1
    %s22 = scalar_select %p19, %s20, %s21
    %p25 = pneg %p19
    %p26 = scmp.eq.s32.totalorder %s10, 1
    %p27 = por %p25, %p26
    %p28 = scmp.ne.s32.totalorder %s20, %s23
    %p29 = scmp.eq.s32.totalorder %s10, 0
    %p30 = por %p28, %p29
    %p31 = scmp.ne.s32.totalorder %s20, %s23
    %p32 = scmp.eq.s32.totalorder %s15, 1
    %p33 = por %p31, %p32
    %p34 = scmp.ne.s32.totalorder %s23, %s24
    %p35 = scmp.eq.s32.totalorder %s15, 0
    %p36 = por %p34, %p35
    %p37 = scmp.ne.s32.totalorder %s23, %s24
    %p38 = scmp.eq.s32.totalorder %s16, 1
    %p39 = por %p37, %p38
    %p41 = scmp.ne.s32.totalorder %s24, %s40
    %p42 = scmp.eq.s32.totalorder %s16, 0
    %p43 = por %p41, %p42
    %s45 = sadd.s32 %s44, 1
    %p48 = scmp.eq.s32.totalorder %s10, 1
    %p49 = scmp.ne.s32.totalorder %s44, %s46
    %p50 = scmp.eq.s32.totalorder %s10, 0
    %p51 = por %p49, %p50
    %p52 = scmp.ne.s32.totalorder %s44, %s46
    %p53 = scmp.eq.s32.totalorder %s15, 1
    %p54 = por %p52, %p53
    %p55 = scmp.ne.s32.totalorder %s46, %s47
    %p56 = scmp.eq.s32.totalorder %s15, 0
    %p57 = por %p55, %p56
    %p58 = scmp.ne.s32.totalorder %s46, %s47
    %p59 = scmp.eq.s32.totalorder %s16, 1
    %p60 = por %p58, %p59
    %p62 = scmp.ne.s32.totalorder %s47, %s61
    %p63 = scmp.eq.s32.totalorder %s16, 0
    %p64 = por %p62, %p63
    %s66 = sadd.s32 %s65, 1
    %p69 = scmp.eq.s32.totalorder %s10, 1
    %p70 = scmp.ne.s32.totalorder %s65, %s67
    %p71 = scmp.eq.s32.totalorder %s10, 0
    %p72 = por %p70, %p71
    %p73 = scmp.ne.s32.totalorder %s65, %s67
    %p74 = scmp.eq.s32.totalorder %s15, 1
    %p75 = por %p73, %p74
    %p76 = scmp.ne.s32.totalorder %s67, %s68
    %p77 = scmp.eq.s32.totalorder %s15, 0
    %p78 = por %p76, %p77
    %p79 = scmp.ne.s32.totalorder %s67, %s68
    %p80 = scmp.eq.s32.totalorder %s16, 1
    %p81 = por %p79, %p80
    %p83 = scmp.ne.s32.totalorder %s68, %s82
    %p84 = scmp.eq.s32.totalorder %s16, 0
    %p85 = por %p83, %p84
    %s86 = ssub.s32 %s10, %s17
    %p87 = scmp.eq.s32.totalorder %s86, 0
    %s89 = sadd.s32 %s88, 1
    %s90 = scalar_select %p87, %s88, %s89
    %p93 = pneg %p87
    %p94 = scmp.eq.s32.totalorder %s10, 1
    %p95 = por %p93, %p94
    %p96 = scmp.ne.s32.totalorder %s88, %s91
    %p97 = scmp.eq.s32.totalorder %s10, 0
    %p98 = por %p96, %p97
    %p99 = scmp.ne.s32.totalorder %s88, %s91
    %p100 = scmp.eq.s32.totalorder %s15, 1
    %p101 = por %p99, %p100
    %p102 = scmp.ne.s32.totalorder %s91, %s92
    %p103 = scmp.eq.s32.totalorder %s15, 0
    %p104 = por %p102, %p103
    %p105 = scmp.ne.s32.totalorder %s91, %s92
    %p106 = scmp.eq.s32.totalorder %s16, 1
    %p107 = por %p105, %p106
    %p109 = scmp.ne.s32.totalorder %s92, %s108
    %p110 = scmp.eq.s32.totalorder %s16, 0
    %p111 = por %p109, %p110
    %s112 = ssub.s32 %s10, %s17
    %p113 = scmp.eq.s32.totalorder %s112, 0
    %s115 = sadd.s32 %s114, 1
    %s116 = scalar_select %p113, %s114, %s115
    %p119 = pneg %p113
    %p120 = scmp.eq.s32.totalorder %s10, 1
    %p121 = por %p119, %p120
    %p122 = scmp.ne.s32.totalorder %s114, %s117
    %p123 = scmp.eq.s32.totalorder %s10, 0
    %p124 = por %p122, %p123
    %p125 = scmp.ne.s32.totalorder %s114, %s117
    %p126 = scmp.eq.s32.totalorder %s15, 1
    %p127 = por %p125, %p126
    %p128 = scmp.ne.s32.totalorder %s117, %s118
    %p129 = scmp.eq.s32.totalorder %s15, 0
    %p130 = por %p128, %p129
    %p131 = scmp.ne.s32.totalorder %s117, %s118
    %p132 = scmp.eq.s32.totalorder %s16, 1
    %p133 = por %p131, %p132
    %p135 = scmp.ne.s32.totalorder %s118, %s134
    %p136 = scmp.eq.s32.totalorder %s16, 0
    %p137 = por %p135, %p136
    %p138 = scmp.le.s32.totalorder 1, %s10
    %p139 = scmp.lt.s32.totalorder %s10, 3
    %p140 = pnand %p138, %p139
    %p141 = pneg %p140
    // Predicated region
    $region9: #{psm_gnn_forward.19} parent=5 // pred_check
      _
    $region10: #{psm_gnn_forward.19} parent=5 // pred_check_branch
      %143 = sbr.rel (%p140) target = $region12
    $region11: #{psm_gnn_forward.19} parent=5 // pred_region
      %s144 = ssub.s32 %s10, 1
      // Predicated region
      $region13: #{psm_gnn_forward.19} parent=11 // pred_check
        %p145 = pneg %p57
      $region14: #{psm_gnn_forward.19} parent=11 // pred_check_branch
        %147 = sbr.rel (%p145) target = $region16
      $region15: #{psm_gnn_forward.19} parent=11 // pred_region
        _
      $region16: #{psm_gnn_forward.19} parent=11 // pred_fallthru
        _
      // Predicated region
      $region17: #{psm_gnn_forward.19} parent=11 // pred_check
        %p148 = pneg %p78
      $region18: #{psm_gnn_forward.19} parent=11 // pred_check_branch
        %150 = sbr.rel (%p148) target = $region20
      $region19: #{psm_gnn_forward.19} parent=11 // pred_region
        _
      $region20: #{psm_gnn_forward.19} parent=11 // pred_fallthru
        _
    $region12: #{psm_gnn_forward.19} parent=5 // pred_fallthru
      _
    %p151 = scmp.lt.s32.totalorder %s10, 2
    // Predicated region
    $region21: #{psm_gnn_forward.19} parent=5 // pred_check
      %p152 = pneg %p151
    $region22: #{psm_gnn_forward.19} parent=5 // pred_check_branch
      %154 = sbr.rel (%p152) target = $region24
    $region23: #{psm_gnn_forward.19} parent=5 // pred_region
      // Predicated region
      $region25: #{psm_gnn_forward.19} parent=23 // pred_check
        %p155 = pneg %p30
      $region26: #{psm_gnn_forward.19} parent=23 // pred_check_branch
        %157 = sbr.rel (%p155) target = $region28
      $region27: #{psm_gnn_forward.19} parent=23 // pred_region
        %s158 = smul.u32 64, %s10
        %p159 = scmp.lt.s32.totalorder %s158, 127
        %s160 = scalar_select %p159, %s158, 127
        %s161 = smul.addr %s160, 2
        %s162 = smul.addr %s161, 4
        %s163 = scalar_lea.vmem %s0, %s162
        %s164 = smul.u32 64, %s10
      $region28: #{psm_gnn_forward.19} parent=23 // pred_fallthru
        _
      // Predicated region
      $region29: #{psm_gnn_forward.19} parent=23 // pred_check
        %p165 = pneg %p98
      $region30: #{psm_gnn_forward.19} parent=23 // pred_check_branch
        %167 = sbr.rel (%p165) target = $region32
      $region31: #{psm_gnn_forward.19} parent=23 // pred_region
        %s168 = smul.u32 64, %s10
        %p169 = scmp.lt.s32.totalorder %s168, 127
        %s170 = scalar_select %p169, %s168, 127
        %s171 = smul.addr %s170, 8
        %s172 = scalar_lea.vmem %s3, %s171
        %s173 = smul.u32 64, %s10
      $region32: #{psm_gnn_forward.19} parent=23 // pred_fallthru
        _
    $region24: #{psm_gnn_forward.19} parent=5 // pred_fallthru
      _
    %p174 = scmp.le.s32.totalorder 1, %s10
    %p175 = scmp.lt.s32.totalorder %s10, 3
    %p176 = pnand %p174, %p175
    %p177 = pneg %p176
    // Predicated region
    $region33: #{psm_gnn_forward.19} parent=5 // pred_check
      _
    $region34: #{psm_gnn_forward.19} parent=5 // pred_check_branch
      %179 = sbr.rel (%p176) target = $region36
    $region35: #{psm_gnn_forward.19} parent=5 // pred_region
      %s180 = ssub.s32 %s10, 1
      %s181 = smul.u32 64, %s15
      %p182 = scmp.lt.s32.totalorder %s181, 127
      %s183 = scalar_select %p182, %s181, 127
      %s184 = smul.addr %s183, 2
      %s185 = smul.addr %s184, 4
      %s186 = scalar_lea.vmem %s0, %s185
      %p187 = pneg %p36
      %p188 = pneg %p33
      %p189 = pneg %p57
      %p190 = pneg %p54
      %p191 = pneg %p78
      %p192 = pneg %p75
      %s193 = smul.u32 64, %s15
      %p194 = scmp.lt.s32.totalorder %s193, 127
      %s195 = scalar_select %p194, %s193, 127
      %s196 = smul.addr %s195, 8
      %s197 = scalar_lea.vmem %s3, %s196
      %p198 = pneg %p104
      %p199 = pneg %p101
      %p200 = pneg %p130
      %p201 = pneg %p127
      %s202 = smul.u32 64, %s15
      %p203 = scmp.lt.s32.totalorder %s202, 127
      %s204 = scalar_select %p203, %s202, 127
      %s205 = smul.addr %s204, 4
      %s206 = scalar_lea.vmem %s4, %s205
      %s207 = smul.u32 64, %s15
      %p208 = scmp.lt.s32.totalorder %s207, 127
      %s209 = scalar_select %p208, %s207, 127
      %s210 = smul.addr %s209, 2
      %s211 = smul.addr %s210, 4
      %s212 = scalar_lea.vmem %s0, %s211
      %s213 = smul.u32 64, %s15
      %s214 = smul.u32 64, %s15
      %p215 = scmp.lt.s32.totalorder %s214, 127
      %s216 = scalar_select %p215, %s214, 127
      %s217 = smul.addr %s216, 8
      %s218 = scalar_lea.vmem %s3, %s217
      %s219 = smul.u32 64, %s15
      %s220 = smul.u32 64, %s15
      %p221 = scmp.lt.s32.totalorder %s220, 127
      %s222 = scalar_select %p221, %s220, 127
      %s223 = smul.addr %s222, 4
      %s224 = scalar_lea.vmem %s4, %s223
      %s225 = smul.u32 64, %s15
      %v227 = vld [vmem:[%s212] sm:$0xff]
      %v228 = vld [vmem:[%s212 + $0x8] sm:$0xff]
      %v229 = vld [vmem:[%s212 + $0x10] sm:$0xff]
      %v230 = vld [vmem:[%s212 + $0x18] sm:$0xff]
      %v231 = vld [vmem:[%s212 + $0x20] sm:$0xff]
      %v232 = vld [vmem:[%s212 + $0x28] sm:$0xff]
      %v233 = vld [vmem:[%s212 + $0x30] sm:$0xff]
      %v234 = vld [vmem:[%s212 + $0x38] sm:$0xff]
      %v235 = vld [vmem:[%s212 + $0x40] sm:$0xff]
      %v236 = vld [vmem:[%s212 + $0x48] sm:$0xff]
      %v237 = vld [vmem:[%s212 + $0x50] sm:$0xff]
      %v238 = vld [vmem:[%s212 + $0x58] sm:$0xff]
      %v239 = vld [vmem:[%s212 + $0x60] sm:$0xff]
      %v240 = vld [vmem:[%s212 + $0x68] sm:$0xff]
      %v241 = vld [vmem:[%s212 + $0x70] sm:$0xff]
      %v242 = vld [vmem:[%s212 + $0x78] sm:$0xff]
      %v243 = vld [vmem:[%s212 + $0x80] sm:$0xff]
      %v244 = vld [vmem:[%s212 + $0x88] sm:$0xff]
      %v245 = vld [vmem:[%s212 + $0x90] sm:$0xff]
      %v246 = vld [vmem:[%s212 + $0x98] sm:$0xff]
      %v247 = vld [vmem:[%s212 + $0xa0] sm:$0xff]
      %v248 = vld [vmem:[%s212 + $0xa8] sm:$0xff]
      %v249 = vld [vmem:[%s212 + $0xb0] sm:$0xff]
      %v250 = vld [vmem:[%s212 + $0xb8] sm:$0xff]
      %v251 = vld [vmem:[%s212 + $0xc0] sm:$0xff]
      %v252 = vld [vmem:[%s212 + $0xc8] sm:$0xff]
      %v253 = vld [vmem:[%s212 + $0xd0] sm:$0xff]
      %v254 = vld [vmem:[%s212 + $0xd8] sm:$0xff]
      %v255 = vld [vmem:[%s212 + $0xe0] sm:$0xff]
      %v256 = vld [vmem:[%s212 + $0xe8] sm:$0xff]
      %v257 = vld [vmem:[%s212 + $0xf0] sm:$0xff]
      %v258 = vld [vmem:[%s212 + $0xf8] sm:$0xff]
      %v259 = vld [vmem:[%s212 + $0x100] sm:$0xff]
      %v260 = vld [vmem:[%s212 + $0x108] sm:$0xff]
      %v261 = vld [vmem:[%s212 + $0x110] sm:$0xff]
      %v262 = vld [vmem:[%s212 + $0x118] sm:$0xff]
      %v263 = vld [vmem:[%s212 + $0x120] sm:$0xff]
      %v264 = vld [vmem:[%s212 + $0x128] sm:$0xff]
      %v265 = vld [vmem:[%s212 + $0x130] sm:$0xff]
      %v266 = vld [vmem:[%s212 + $0x138] sm:$0xff]
      %v267 = vld [vmem:[%s212 + $0x140] sm:$0xff]
      %v268 = vld [vmem:[%s212 + $0x148] sm:$0xff]
      %v269 = vld [vmem:[%s212 + $0x150] sm:$0xff]
      %v270 = vld [vmem:[%s212 + $0x158] sm:$0xff]
      %v271 = vld [vmem:[%s212 + $0x160] sm:$0xff]
      %v272 = vld [vmem:[%s212 + $0x168] sm:$0xff]
      %v273 = vld [vmem:[%s212 + $0x170] sm:$0xff]
      %v274 = vld [vmem:[%s212 + $0x178] sm:$0xff]
      %v275 = vld [vmem:[%s212 + $0x180] sm:$0xff]
      %v276 = vld [vmem:[%s212 + $0x188] sm:$0xff]
      %v277 = vld [vmem:[%s212 + $0x190] sm:$0xff]
      %v278 = vld [vmem:[%s212 + $0x198] sm:$0xff]
      %v279 = vld [vmem:[%s212 + $0x1a0] sm:$0xff]
      %v280 = vld [vmem:[%s212 + $0x1a8] sm:$0xff]
      %v281 = vld [vmem:[%s212 + $0x1b0] sm:$0xff]
      %v282 = vld [vmem:[%s212 + $0x1b8] sm:$0xff]
      %v283 = vld [vmem:[%s212 + $0x1c0] sm:$0xff]
      %v284 = vld [vmem:[%s212 + $0x1c8] sm:$0xff]
      %v285 = vld [vmem:[%s212 + $0x1d0] sm:$0xff]
      %v286 = vld [vmem:[%s212 + $0x1d8] sm:$0xff]
      %v287 = vld [vmem:[%s212 + $0x1e0] sm:$0xff]
      %v288 = vld [vmem:[%s212 + $0x1e8] sm:$0xff]
      %v289 = vld [vmem:[%s212 + $0x1f0] sm:$0xff]
      %v290 = vld [vmem:[%s212 + $0x1f8] sm:$0xff]
      %v291 = vld [vmem:[%s1] sm:$0xf]
      %v292 = vld [vmem:[%s1 + $0x4] sm:$0xf]
      %v293 = vld [vmem:[%s1 + $0x8] sm:$0xf]
      %v294 = vld [vmem:[%s1 + $0xc] sm:$0xf]
      %v295 = vld [vmem:[%s1 + $0x10] sm:$0xf]
      %v296 = vld [vmem:[%s1 + $0x14] sm:$0xf]
      %v297 = vld [vmem:[%s1 + $0x18] sm:$0xf]
      %v298 = vld [vmem:[%s1 + $0x1c] sm:$0xf]
      %v299 = vld [vmem:[%s1 + $0x20] sm:$0xf]
      %v300 = vld [vmem:[%s1 + $0x24] sm:$0xf]
      %v301 = vld [vmem:[%s1 + $0x28] sm:$0xf]
      %v302 = vld [vmem:[%s1 + $0x2c] sm:$0xf]
      %v303 = vld [vmem:[%s1 + $0x30] sm:$0xf]
      %v304 = vld [vmem:[%s1 + $0x34] sm:$0xf]
      %v305 = vld [vmem:[%s1 + $0x38] sm:$0xf]
      %v306 = vld [vmem:[%s1 + $0x3c] sm:$0xf]
      %v307 = vld [vmem:[%s1 + $0x40] sm:$0xf]
      %v308 = vld [vmem:[%s1 + $0x44] sm:$0xf]
      %v309 = vld [vmem:[%s1 + $0x48] sm:$0xf]
      %v310 = vld [vmem:[%s1 + $0x4c] sm:$0xf]
      %v311 = vld [vmem:[%s1 + $0x50] sm:$0xf]
      %v312 = vld [vmem:[%s1 + $0x54] sm:$0xf]
      %v313 = vld [vmem:[%s1 + $0x58] sm:$0xf]
      %v314 = vld [vmem:[%s1 + $0x5c] sm:$0x7]
      %v315 = vld [vmem:[%s2] sm:$0x1]
      %v317 = vperm.slane %v315, 0
      %v383 = vunpack.c.l.b16 %v227
      %v384 = vunpack.c.h.b16 %v227
      %v385 = vunpack.c.l.b16 %v228
      %v386 = vunpack.c.h.b16 %v228
      %v387 = vunpack.c.l.b16 %v229
      %v388 = vunpack.c.h.b16 %v229
      %v389 = vunpack.c.l.b16 %v230
      %v390 = vunpack.c.h.b16 %v230
      %v391 = vunpack.c.l.b16 %v231
      %v392 = vunpack.c.h.b16 %v231
      %v393 = vunpack.c.l.b16 %v232
      %v394 = vunpack.c.h.b16 %v232
      %v395 = vunpack.c.l.b16 %v233
      %v396 = vunpack.c.h.b16 %v233
      %v397 = vunpack.c.l.b16 %v234
      %v398 = vunpack.c.h.b16 %v234
      %v399 = vunpack.c.l.b16 %v235
      %v400 = vunpack.c.h.b16 %v235
      %v401 = vunpack.c.l.b16 %v236
      %v402 = vunpack.c.h.b16 %v236
      %v403 = vunpack.c.l.b16 %v237
      %v404 = vunpack.c.h.b16 %v237
      %v405 = vunpack.c.l.b16 %v238
      %v406 = vunpack.c.h.b16 %v238
      %v407 = vunpack.c.l.b16 %v239
      %v408 = vunpack.c.h.b16 %v239
      %v409 = vunpack.c.l.b16 %v240
      %v410 = vunpack.c.h.b16 %v240
      %v411 = vunpack.c.l.b16 %v241
      %v412 = vunpack.c.h.b16 %v241
      %v413 = vunpack.c.l.b16 %v242
      %v414 = vunpack.c.h.b16 %v242
      %v415 = vunpack.c.l.b16 %v243
      %v416 = vunpack.c.h.b16 %v243
      %v417 = vunpack.c.l.b16 %v244
      %v418 = vunpack.c.h.b16 %v244
      %v419 = vunpack.c.l.b16 %v245
      %v420 = vunpack.c.h.b16 %v245
      %v421 = vunpack.c.l.b16 %v246
      %v422 = vunpack.c.h.b16 %v246
      %v423 = vunpack.c.l.b16 %v247
      %v424 = vunpack.c.h.b16 %v247
      %v425 = vunpack.c.l.b16 %v248
      %v426 = vunpack.c.h.b16 %v248
      %v427 = vunpack.c.l.b16 %v249
      %v428 = vunpack.c.h.b16 %v249
      %v429 = vunpack.c.l.b16 %v250
      %v430 = vunpack.c.h.b16 %v250
      %v431 = vunpack.c.l.b16 %v251
      %v432 = vunpack.c.h.b16 %v251
      %v433 = vunpack.c.l.b16 %v252
      %v434 = vunpack.c.h.b16 %v252
      %v435 = vunpack.c.l.b16 %v253
      %v436 = vunpack.c.h.b16 %v253
      %v437 = vunpack.c.l.b16 %v254
      %v438 = vunpack.c.h.b16 %v254
      %v439 = vunpack.c.l.b16 %v255
      %v440 = vunpack.c.h.b16 %v255
      %v441 = vunpack.c.l.b16 %v256
      %v442 = vunpack.c.h.b16 %v256
      %v443 = vunpack.c.l.b16 %v257
      %v444 = vunpack.c.h.b16 %v257
      %v445 = vunpack.c.l.b16 %v258
      %v446 = vunpack.c.h.b16 %v258
      %v447 = vunpack.c.l.b16 %v259
      %v448 = vunpack.c.h.b16 %v259
      %v449 = vunpack.c.l.b16 %v260
      %v450 = vunpack.c.h.b16 %v260
      %v451 = vunpack.c.l.b16 %v261
      %v452 = vunpack.c.h.b16 %v261
      %v453 = vunpack.c.l.b16 %v262
      %v454 = vunpack.c.h.b16 %v262
      %v455 = vunpack.c.l.b16 %v263
      %v456 = vunpack.c.h.b16 %v263
      %v457 = vunpack.c.l.b16 %v264
      %v458 = vunpack.c.h.b16 %v264
      %v459 = vunpack.c.l.b16 %v265
      %v460 = vunpack.c.h.b16 %v265
      %v461 = vunpack.c.l.b16 %v266
      %v462 = vunpack.c.h.b16 %v266
      %v463 = vunpack.c.l.b16 %v267
      %v464 = vunpack.c.h.b16 %v267
      %v465 = vunpack.c.l.b16 %v268
      %v466 = vunpack.c.h.b16 %v268
      %v467 = vunpack.c.l.b16 %v269
      %v468 = vunpack.c.h.b16 %v269
      %v469 = vunpack.c.l.b16 %v270
      %v470 = vunpack.c.h.b16 %v270
      %v471 = vunpack.c.l.b16 %v271
      %v472 = vunpack.c.h.b16 %v271
      %v473 = vunpack.c.l.b16 %v272
      %v474 = vunpack.c.h.b16 %v272
      %v475 = vunpack.c.l.b16 %v273
      %v476 = vunpack.c.h.b16 %v273
      %v477 = vunpack.c.l.b16 %v274
      %v478 = vunpack.c.h.b16 %v274
      %v479 = vunpack.c.l.b16 %v275
      %v480 = vunpack.c.h.b16 %v275
      %v481 = vunpack.c.l.b16 %v276
      %v482 = vunpack.c.h.b16 %v276
      %v483 = vunpack.c.l.b16 %v277
      %v484 = vunpack.c.h.b16 %v277
      %v485 = vunpack.c.l.b16 %v278
      %v486 = vunpack.c.h.b16 %v278
      %v487 = vunpack.c.l.b16 %v279
      %v488 = vunpack.c.h.b16 %v279
      %v489 = vunpack.c.l.b16 %v280
      %v490 = vunpack.c.h.b16 %v280
      %v491 = vunpack.c.l.b16 %v281
      %v492 = vunpack.c.h.b16 %v281
      %v493 = vunpack.c.l.b16 %v282
      %v494 = vunpack.c.h.b16 %v282
      %v495 = vunpack.c.l.b16 %v283
      %v496 = vunpack.c.h.b16 %v283
      %v497 = vunpack.c.l.b16 %v284
      %v498 = vunpack.c.h.b16 %v284
      %v499 = vunpack.c.l.b16 %v285
      %v500 = vunpack.c.h.b16 %v285
      %v501 = vunpack.c.l.b16 %v286
      %v502 = vunpack.c.h.b16 %v286
      %v503 = vunpack.c.l.b16 %v287
      %v504 = vunpack.c.h.b16 %v287
      %v505 = vunpack.c.l.b16 %v288
      %v506 = vunpack.c.h.b16 %v288
      %v507 = vunpack.c.l.b16 %v289
      %v508 = vunpack.c.h.b16 %v289
      %v509 = vunpack.c.l.b16 %v290
      %v510 = vunpack.c.h.b16 %v290
      %v511 = vpack.c.b16 %v385, %v383
      %v512 = vpack.c.b16 %v386, %v384
      %v513 = vpack.c.b16 %v389, %v387
      %v514 = vpack.c.b16 %v390, %v388
      %v515 = vpack.c.b16 %v393, %v391
      %v516 = vpack.c.b16 %v394, %v392
      %v517 = vpack.c.b16 %v397, %v395
      %v518 = vpack.c.b16 %v398, %v396
      %v519 = vpack.c.b16 %v401, %v399
      %v520 = vpack.c.b16 %v402, %v400
      %v521 = vpack.c.b16 %v405, %v403
      %v522 = vpack.c.b16 %v406, %v404
      %v523 = vpack.c.b16 %v409, %v407
      %v524 = vpack.c.b16 %v410, %v408
      %v525 = vpack.c.b16 %v413, %v411
      %v526 = vpack.c.b16 %v414, %v412
      %v527 = vpack.c.b16 %v417, %v415
      %v528 = vpack.c.b16 %v418, %v416
      %v529 = vpack.c.b16 %v421, %v419
      %v530 = vpack.c.b16 %v422, %v420
      %v531 = vpack.c.b16 %v425, %v423
      %v532 = vpack.c.b16 %v426, %v424
      %v533 = vpack.c.b16 %v429, %v427
      %v534 = vpack.c.b16 %v430, %v428
      %v535 = vpack.c.b16 %v433, %v431
      %v536 = vpack.c.b16 %v434, %v432
      %v537 = vpack.c.b16 %v437, %v435
      %v538 = vpack.c.b16 %v438, %v436
      %v539 = vpack.c.b16 %v441, %v439
      %v540 = vpack.c.b16 %v442, %v440
      %v541 = vpack.c.b16 %v445, %v443
      %v542 = vpack.c.b16 %v446, %v444
      %v543 = vpack.c.b16 %v449, %v447
      %v544 = vpack.c.b16 %v450, %v448
      %v545 = vpack.c.b16 %v453, %v451
      %v546 = vpack.c.b16 %v454, %v452
      %v547 = vpack.c.b16 %v457, %v455
      %v548 = vpack.c.b16 %v458, %v456
      %v549 = vpack.c.b16 %v461, %v459
      %v550 = vpack.c.b16 %v462, %v460
      %v551 = vpack.c.b16 %v465, %v463
      %v552 = vpack.c.b16 %v466, %v464
      %v553 = vpack.c.b16 %v469, %v467
      %v554 = vpack.c.b16 %v470, %v468
      %v555 = vpack.c.b16 %v473, %v471
      %v556 = vpack.c.b16 %v474, %v472
      %v557 = vpack.c.b16 %v477, %v475
      %v558 = vpack.c.b16 %v478, %v476
      %v559 = vpack.c.b16 %v481, %v479
      %v560 = vpack.c.b16 %v482, %v480
      %v561 = vpack.c.b16 %v485, %v483
      %v562 = vpack.c.b16 %v486, %v484
      %v563 = vpack.c.b16 %v489, %v487
      %v564 = vpack.c.b16 %v490, %v488
      %v565 = vpack.c.b16 %v493, %v491
      %v566 = vpack.c.b16 %v494, %v492
      %v567 = vpack.c.b16 %v497, %v495
      %v568 = vpack.c.b16 %v498, %v496
      %v569 = vpack.c.b16 %v501, %v499
      %v570 = vpack.c.b16 %v502, %v500
      %v571 = vpack.c.b16 %v505, %v503
      %v572 = vpack.c.b16 %v506, %v504
      %v573 = vpack.c.b16 %v509, %v507
      %v574 = vpack.c.b16 %v510, %v508
      %v631 = vunpack.c.l.b16 %v291
      %v632 = vunpack.c.l.b16 %v292
      %v633 = vunpack.c.l.b16 %v293
      %v634 = vunpack.c.l.b16 %v294
      %v635 = vunpack.c.l.b16 %v295
      %v636 = vunpack.c.l.b16 %v296
      %v637 = vunpack.c.l.b16 %v297
      %v638 = vunpack.c.l.b16 %v298
      %v639 = vunpack.c.l.b16 %v299
      %v640 = vunpack.c.l.b16 %v300
      %v641 = vunpack.c.l.b16 %v301
      %v642 = vunpack.c.l.b16 %v302
      %v643 = vunpack.c.l.b16 %v303
      %v644 = vunpack.c.l.b16 %v304
      %v645 = vunpack.c.l.b16 %v305
      %v646 = vunpack.c.l.b16 %v306
      %v647 = vunpack.c.l.b16 %v307
      %v648 = vunpack.c.l.b16 %v308
      %v649 = vunpack.c.l.b16 %v309
      %v650 = vunpack.c.l.b16 %v310
      %v651 = vunpack.c.l.b16 %v311
      %v652 = vunpack.c.l.b16 %v312
      %v653 = vunpack.c.l.b16 %v313
      %v654 = vunpack.c.l.b16 %v314
      %v655 = vpack.c.b16 %v632, %v631
      %v656 = vpack.c.b16 %v634, %v633
      %v657 = vpack.c.b16 %v636, %v635
      %v658 = vpack.c.b16 %v638, %v637
      %v659 = vpack.c.b16 %v640, %v639
      %v660 = vpack.c.b16 %v642, %v641
      %v661 = vpack.c.b16 %v644, %v643
      %v662 = vpack.c.b16 %v646, %v645
      %v663 = vpack.c.b16 %v648, %v647
      %v664 = vpack.c.b16 %v650, %v649
      %v665 = vpack.c.b16 %v652, %v651
      %v666 = vpack.c.b16 %v654, %v653
      %vm678 = vcmask 498688
      %v680 = vsel %vm678, %v512, 0
      %v683 = vsel %vm678, %v514, 0
      %v686 = vsel %vm678, %v516, 0
      %v689 = vsel %vm678, %v518, 0
      %v692 = vsel %vm678, %v520, 0
      %v695 = vsel %vm678, %v522, 0
      %v698 = vsel %vm678, %v524, 0
      %v701 = vsel %vm678, %v526, 0
      %v704 = vsel %vm678, %v528, 0
      %v707 = vsel %vm678, %v530, 0
      %v710 = vsel %vm678, %v532, 0
      %v713 = vsel %vm678, %v534, 0
      %v716 = vsel %vm678, %v536, 0
      %v719 = vsel %vm678, %v538, 0
      %v722 = vsel %vm678, %v540, 0
      %v725 = vsel %vm678, %v542, 0
      %v728 = vsel %vm678, %v544, 0
      %v731 = vsel %vm678, %v546, 0
      %v734 = vsel %vm678, %v548, 0
      %v737 = vsel %vm678, %v550, 0
      %v740 = vsel %vm678, %v552, 0
      %v743 = vsel %vm678, %v554, 0
      %v746 = vsel %vm678, %v556, 0
      %v749 = vsel %vm678, %v558, 0
      %v752 = vsel %vm678, %v560, 0
      %v755 = vsel %vm678, %v562, 0
      %v758 = vsel %vm678, %v564, 0
      %v761 = vsel %vm678, %v566, 0
      %v764 = vsel %vm678, %v568, 0
      %v767 = vsel %vm678, %v570, 0
      %v770 = vsel %vm678, %v572, 0
      %v773 = vsel %vm678, %v574, 0
      %vm775 = vcmask 1045504
      %vm776 = vcmask 1046528
      %v777 = vsel %vm775, 4294967295, 65535
      %v778 = vsel %vm776, %v777, 0
      %v780 = vand.u32 %v666, %v778
      %782 = vmatpush.bf16.msra.mxu0 %v662
      %783 = vmatpush.bf16.msra.mxu0 %v661
      %784 = vmatpush.bf16.msra.mxu0 %v660
      %785 = vmatpush.bf16.msra.mxu0 %v659
      %786 = vmatpush.bf16.msra.mxu0 %v658
      %787 = vmatpush.bf16.msra.mxu0 %v657
      %788 = vmatpush.bf16.msra.mxu0 %v656
      %789 = vmatpush.bf16.msra.mxu0 %v655
      %790 = vmatmul.bf16.gmra.mxu0 %v511
      %v791 = vpop.f32.mrf.mxu0
      %v792 = vadd.f32 %v317, %v791
      %v793 = vpop.f32.mrf.mxu0
      %v794 = vadd.f32 %v317, %v793
      %795 = vmatmul.bf16.gmra.mxu0 %v513
      %v796 = vpop.f32.mrf.mxu0
      %v797 = vadd.f32 %v317, %v796
      %v798 = vpop.f32.mrf.mxu0
      %v799 = vadd.f32 %v317, %v798
      %800 = vmatmul.bf16.gmra.mxu0 %v515
      %v801 = vpop.f32.mrf.mxu0
      %v802 = vadd.f32 %v317, %v801
      %v803 = vpop.f32.mrf.mxu0
      %v804 = vadd.f32 %v317, %v803
      %805 = vmatmul.bf16.gmra.mxu0 %v517
      %v806 = vpop.f32.mrf.mxu0
      %v807 = vadd.f32 %v317, %v806
      %v808 = vpop.f32.mrf.mxu0
      %v809 = vadd.f32 %v317, %v808
      %810 = vmatmul.bf16.gmra.mxu0 %v519
      %v811 = vpop.f32.mrf.mxu0
      %v812 = vadd.f32 %v317, %v811
      %v813 = vpop.f32.mrf.mxu0
      %v814 = vadd.f32 %v317, %v813
      %815 = vmatmul.bf16.gmra.mxu0 %v521
      %v816 = vpop.f32.mrf.mxu0
      %v817 = vadd.f32 %v317, %v816
      %v818 = vpop.f32.mrf.mxu0
      %v819 = vadd.f32 %v317, %v818
      %820 = vmatmul.bf16.gmra.mxu0 %v523
      %v821 = vpop.f32.mrf.mxu0
      %v822 = vadd.f32 %v317, %v821
      %v823 = vpop.f32.mrf.mxu0
      %v824 = vadd.f32 %v317, %v823
      %825 = vmatmul.bf16.gmra.mxu0 %v525
      %v826 = vpop.f32.mrf.mxu0
      %v827 = vadd.f32 %v317, %v826
      %v828 = vpop.f32.mrf.mxu0
      %v829 = vadd.f32 %v317, %v828
      %830 = vmatmul.bf16.gmra.mxu0 %v527
      %v831 = vpop.f32.mrf.mxu0
      %v832 = vadd.f32 %v317, %v831
      %v833 = vpop.f32.mrf.mxu0
      %v834 = vadd.f32 %v317, %v833
      %835 = vmatmul.bf16.gmra.mxu0 %v529
      %v836 = vpop.f32.mrf.mxu0
      %v837 = vadd.f32 %v317, %v836
      %v838 = vpop.f32.mrf.mxu0
      %v839 = vadd.f32 %v317, %v838
      %840 = vmatmul.bf16.gmra.mxu0 %v531
      %v841 = vpop.f32.mrf.mxu0
      %v842 = vadd.f32 %v317, %v841
      %v843 = vpop.f32.mrf.mxu0
      %v844 = vadd.f32 %v317, %v843
      %845 = vmatmul.bf16.gmra.mxu0 %v533
      %v846 = vpop.f32.mrf.mxu0
      %v847 = vadd.f32 %v317, %v846
      %v848 = vpop.f32.mrf.mxu0
      %v849 = vadd.f32 %v317, %v848
      %850 = vmatmul.bf16.gmra.mxu0 %v535
      %v851 = vpop.f32.mrf.mxu0
      %v852 = vadd.f32 %v317, %v851
      %v853 = vpop.f32.mrf.mxu0
      %v854 = vadd.f32 %v317, %v853
      %855 = vmatmul.bf16.gmra.mxu0 %v537
      %v856 = vpop.f32.mrf.mxu0
      %v857 = vadd.f32 %v317, %v856
      %v858 = vpop.f32.mrf.mxu0
      %v859 = vadd.f32 %v317, %v858
      %860 = vmatmul.bf16.gmra.mxu0 %v539
      %v861 = vpop.f32.mrf.mxu0
      %v862 = vadd.f32 %v317, %v861
      %v863 = vpop.f32.mrf.mxu0
      %v864 = vadd.f32 %v317, %v863
      %865 = vmatmul.bf16.gmra.mxu0 %v541
      %v866 = vpop.f32.mrf.mxu0
      %v867 = vadd.f32 %v317, %v866
      %v868 = vpop.f32.mrf.mxu0
      %v869 = vadd.f32 %v317, %v868
      %870 = vmatmul.bf16.gmra.mxu0 %v543
      %v871 = vpop.f32.mrf.mxu0
      %v872 = vadd.f32 %v317, %v871
      %v873 = vpop.f32.mrf.mxu0
      %v874 = vadd.f32 %v317, %v873
      %875 = vmatmul.bf16.gmra.mxu0 %v545
      %v876 = vpop.f32.mrf.mxu0
      %v877 = vadd.f32 %v317, %v876
      %v878 = vpop.f32.mrf.mxu0
      %v879 = vadd.f32 %v317, %v878
      %880 = vmatmul.bf16.gmra.mxu0 %v547
      %v881 = vpop.f32.mrf.mxu0
      %v882 = vadd.f32 %v317, %v881
      %v883 = vpop.f32.mrf.mxu0
      %v884 = vadd.f32 %v317, %v883
      %885 = vmatmul.bf16.gmra.mxu0 %v549
      %v886 = vpop.f32.mrf.mxu0
      %v887 = vadd.f32 %v317, %v886
      %v888 = vpop.f32.mrf.mxu0
      %v889 = vadd.f32 %v317, %v888
      %890 = vmatmul.bf16.gmra.mxu0 %v551
      %v891 = vpop.f32.mrf.mxu0
      %v892 = vadd.f32 %v317, %v891
      %v893 = vpop.f32.mrf.mxu0
      %v894 = vadd.f32 %v317, %v893
      %895 = vmatmul.bf16.gmra.mxu0 %v553
      %v896 = vpop.f32.mrf.mxu0
      %v897 = vadd.f32 %v317, %v896
      %v898 = vpop.f32.mrf.mxu0
      %v899 = vadd.f32 %v317, %v898
      %900 = vmatmul.bf16.gmra.mxu0 %v555
      %v901 = vpop.f32.mrf.mxu0
      %v902 = vadd.f32 %v317, %v901
      %v903 = vpop.f32.mrf.mxu0
      %v904 = vadd.f32 %v317, %v903
      %905 = vmatmul.bf16.gmra.mxu0 %v557
      %v906 = vpop.f32.mrf.mxu0
      %v907 = vadd.f32 %v317, %v906
      %v908 = vpop.f32.mrf.mxu0
      %v909 = vadd.f32 %v317, %v908
      %910 = vmatmul.bf16.gmra.mxu0 %v559
      %v911 = vpop.f32.mrf.mxu0
      %v912 = vadd.f32 %v317, %v911
      %v913 = vpop.f32.mrf.mxu0
      %v914 = vadd.f32 %v317, %v913
      %915 = vmatmul.bf16.gmra.mxu0 %v561
      %v916 = vpop.f32.mrf.mxu0
      %v917 = vadd.f32 %v317, %v916
      %v918 = vpop.f32.mrf.mxu0
      %v919 = vadd.f32 %v317, %v918
      %920 = vmatmul.bf16.gmra.mxu0 %v563
      %v921 = vpop.f32.mrf.mxu0
      %v922 = vadd.f32 %v317, %v921
      %v923 = vpop.f32.mrf.mxu0
      %v924 = vadd.f32 %v317, %v923
      %925 = vmatmul.bf16.gmra.mxu0 %v565
      %v926 = vpop.f32.mrf.mxu0
      %v927 = vadd.f32 %v317, %v926
      %v928 = vpop.f32.mrf.mxu0
      %v929 = vadd.f32 %v317, %v928
      %930 = vmatmul.bf16.gmra.mxu0 %v567
      %v931 = vpop.f32.mrf.mxu0
      %v932 = vadd.f32 %v317, %v931
      %v933 = vpop.f32.mrf.mxu0
      %v934 = vadd.f32 %v317, %v933
      %935 = vmatmul.bf16.gmra.mxu0 %v569
      %v936 = vpop.f32.mrf.mxu0
      %v937 = vadd.f32 %v317, %v936
      %v938 = vpop.f32.mrf.mxu0
      %v939 = vadd.f32 %v317, %v938
      %940 = vmatmul.bf16.gmra.mxu0 %v571
      %v941 = vpop.f32.mrf.mxu0
      %v942 = vadd.f32 %v317, %v941
      %v943 = vpop.f32.mrf.mxu0
      %v944 = vadd.f32 %v317, %v943
      %945 = vmatmul.bf16.gmra.mxu0 %v573
      %v946 = vpop.f32.mrf.mxu0
      %v947 = vadd.f32 %v317, %v946
      %v948 = vpop.f32.mrf.mxu0
      %v949 = vadd.f32 %v317, %v948
      %950 = vdwg.mxu0
      %951 = vmatpush.bf16.msra.mxu0 0
      %952 = vmatpush.bf16.msra.mxu0 0
      %953 = vmatpush.bf16.msra.mxu0 0
      %954 = vmatpush.bf16.msra.mxu0 0
      %955 = vmatpush.bf16.msra.mxu0 %v780
      %956 = vmatpush.bf16.msra.mxu0 %v665
      %957 = vmatpush.bf16.msra.mxu0 %v664
      %958 = vmatpush.bf16.msra.mxu0 %v663
      %959 = vmatmul.bf16.gmra.mxu0 %v680
      %v960 = vpop.f32.mrf.mxu0
      %v961 = vadd.f32 %v792, %v960
      %v962 = vpop.f32.mrf.mxu0
      %v963 = vadd.f32 %v794, %v962
      %964 = vmatmul.bf16.gmra.mxu0 %v683
      %v965 = vpop.f32.mrf.mxu0
      %v966 = vadd.f32 %v797, %v965
      %v967 = vpop.f32.mrf.mxu0
      %v968 = vadd.f32 %v799, %v967
      %969 = vmatmul.bf16.gmra.mxu0 %v686
      %v970 = vpop.f32.mrf.mxu0
      %v971 = vadd.f32 %v802, %v970
      %v972 = vpop.f32.mrf.mxu0
      %v973 = vadd.f32 %v804, %v972
      %974 = vmatmul.bf16.gmra.mxu0 %v689
      %v975 = vpop.f32.mrf.mxu0
      %v976 = vadd.f32 %v807, %v975
      %v977 = vpop.f32.mrf.mxu0
      %v978 = vadd.f32 %v809, %v977
      %979 = vmatmul.bf16.gmra.mxu0 %v692
      %v980 = vpop.f32.mrf.mxu0
      %v981 = vadd.f32 %v812, %v980
      %v982 = vpop.f32.mrf.mxu0
      %v983 = vadd.f32 %v814, %v982
      %984 = vmatmul.bf16.gmra.mxu0 %v695
      %v985 = vpop.f32.mrf.mxu0
      %v986 = vadd.f32 %v817, %v985
      %v987 = vpop.f32.mrf.mxu0
      %v988 = vadd.f32 %v819, %v987
      %989 = vmatmul.bf16.gmra.mxu0 %v698
      %v990 = vpop.f32.mrf.mxu0
      %v991 = vadd.f32 %v822, %v990
      %v992 = vpop.f32.mrf.mxu0
      %v993 = vadd.f32 %v824, %v992
      %994 = vmatmul.bf16.gmra.mxu0 %v701
      %v995 = vpop.f32.mrf.mxu0
      %v996 = vadd.f32 %v827, %v995
      %v997 = vpop.f32.mrf.mxu0
      %v998 = vadd.f32 %v829, %v997
      %999 = vmatmul.bf16.gmra.mxu0 %v704
      %v1000 = vpop.f32.mrf.mxu0
      %v1001 = vadd.f32 %v832, %v1000
      %v1002 = vpop.f32.mrf.mxu0
      %v1003 = vadd.f32 %v834, %v1002
      %1004 = vmatmul.bf16.gmra.mxu0 %v707
      %v1005 = vpop.f32.mrf.mxu0
      %v1006 = vadd.f32 %v837, %v1005
      %v1007 = vpop.f32.mrf.mxu0
      %v1008 = vadd.f32 %v839, %v1007
      %1009 = vmatmul.bf16.gmra.mxu0 %v710
      %v1010 = vpop.f32.mrf.mxu0
      %v1011 = vadd.f32 %v842, %v1010
      %v1012 = vpop.f32.mrf.mxu0
      %v1013 = vadd.f32 %v844, %v1012
      %1014 = vmatmul.bf16.gmra.mxu0 %v713
      %v1015 = vpop.f32.mrf.mxu0
      %v1016 = vadd.f32 %v847, %v1015
      %v1017 = vpop.f32.mrf.mxu0
      %v1018 = vadd.f32 %v849, %v1017
      %1019 = vmatmul.bf16.gmra.mxu0 %v716
      %v1020 = vpop.f32.mrf.mxu0
      %v1021 = vadd.f32 %v852, %v1020
      %v1022 = vpop.f32.mrf.mxu0
      %v1023 = vadd.f32 %v854, %v1022
      %1024 = vmatmul.bf16.gmra.mxu0 %v719
      %v1025 = vpop.f32.mrf.mxu0
      %v1026 = vadd.f32 %v857, %v1025
      %v1027 = vpop.f32.mrf.mxu0
      %v1028 = vadd.f32 %v859, %v1027
      %1029 = vmatmul.bf16.gmra.mxu0 %v722
      %v1030 = vpop.f32.mrf.mxu0
      %v1031 = vadd.f32 %v862, %v1030
      %v1032 = vpop.f32.mrf.mxu0
      %v1033 = vadd.f32 %v864, %v1032
      %1034 = vmatmul.bf16.gmra.mxu0 %v725
      %v1035 = vpop.f32.mrf.mxu0
      %v1036 = vadd.f32 %v867, %v1035
      %v1037 = vpop.f32.mrf.mxu0
      %v1038 = vadd.f32 %v869, %v1037
      %1039 = vmatmul.bf16.gmra.mxu0 %v728
      %v1040 = vpop.f32.mrf.mxu0
      %v1041 = vadd.f32 %v872, %v1040
      %v1042 = vpop.f32.mrf.mxu0
      %v1043 = vadd.f32 %v874, %v1042
      %1044 = vmatmul.bf16.gmra.mxu0 %v731
      %v1045 = vpop.f32.mrf.mxu0
      %v1046 = vadd.f32 %v877, %v1045
      %v1047 = vpop.f32.mrf.mxu0
      %v1048 = vadd.f32 %v879, %v1047
      %1049 = vmatmul.bf16.gmra.mxu0 %v734
      %v1050 = vpop.f32.mrf.mxu0
      %v1051 = vadd.f32 %v882, %v1050
      %v1052 = vpop.f32.mrf.mxu0
      %v1053 = vadd.f32 %v884, %v1052
      %1054 = vmatmul.bf16.gmra.mxu0 %v737
      %v1055 = vpop.f32.mrf.mxu0
      %v1056 = vadd.f32 %v887, %v1055
      %v1057 = vpop.f32.mrf.mxu0
      %v1058 = vadd.f32 %v889, %v1057
      %1059 = vmatmul.bf16.gmra.mxu0 %v740
      %v1060 = vpop.f32.mrf.mxu0
      %v1061 = vadd.f32 %v892, %v1060
      %v1062 = vpop.f32.mrf.mxu0
      %v1063 = vadd.f32 %v894, %v1062
      %1064 = vmatmul.bf16.gmra.mxu0 %v743
      %v1065 = vpop.f32.mrf.mxu0
      %v1066 = vadd.f32 %v897, %v1065
      %v1067 = vpop.f32.mrf.mxu0
      %v1068 = vadd.f32 %v899, %v1067
      %1069 = vmatmul.bf16.gmra.mxu0 %v746
      %v1070 = vpop.f32.mrf.mxu0
      %v1071 = vadd.f32 %v902, %v1070
      %v1072 = vpop.f32.mrf.mxu0
      %v1073 = vadd.f32 %v904, %v1072
      %1074 = vmatmul.bf16.gmra.mxu0 %v749
      %v1075 = vpop.f32.mrf.mxu0
      %v1076 = vadd.f32 %v907, %v1075
      %v1077 = vpop.f32.mrf.mxu0
      %v1078 = vadd.f32 %v909, %v1077
      %1079 = vmatmul.bf16.gmra.mxu0 %v752
      %v1080 = vpop.f32.mrf.mxu0
      %v1081 = vadd.f32 %v912, %v1080
      %v1082 = vpop.f32.mrf.mxu0
      %v1083 = vadd.f32 %v914, %v1082
      %1084 = vmatmul.bf16.gmra.mxu0 %v755
      %v1085 = vpop.f32.mrf.mxu0
      %v1086 = vadd.f32 %v917, %v1085
      %v1087 = vpop.f32.mrf.mxu0
      %v1088 = vadd.f32 %v919, %v1087
      %1089 = vmatmul.bf16.gmra.mxu0 %v758
      %v1090 = vpop.f32.mrf.mxu0
      %v1091 = vadd.f32 %v922, %v1090
      %v1092 = vpop.f32.mrf.mxu0
      %v1093 = vadd.f32 %v924, %v1092
      %1094 = vmatmul.bf16.gmra.mxu0 %v761
      %v1095 = vpop.f32.mrf.mxu0
      %v1096 = vadd.f32 %v927, %v1095
      %v1097 = vpop.f32.mrf.mxu0
      %v1098 = vadd.f32 %v929, %v1097
      %1099 = vmatmul.bf16.gmra.mxu0 %v764
      %v1100 = vpop.f32.mrf.mxu0
      %v1101 = vadd.f32 %v932, %v1100
      %v1102 = vpop.f32.mrf.mxu0
      %v1103 = vadd.f32 %v934, %v1102
      %1104 = vmatmul.bf16.gmra.mxu0 %v767
      %v1105 = vpop.f32.mrf.mxu0
      %v1106 = vadd.f32 %v937, %v1105
      %v1107 = vpop.f32.mrf.mxu0
      %v1108 = vadd.f32 %v939, %v1107
      %1109 = vmatmul.bf16.gmra.mxu0 %v770
      %v1110 = vpop.f32.mrf.mxu0
      %v1111 = vadd.f32 %v942, %v1110
      %v1112 = vpop.f32.mrf.mxu0
      %v1113 = vadd.f32 %v944, %v1112
      %1114 = vmatmul.bf16.gmra.mxu0 %v773
      %v1115 = vpop.f32.mrf.mxu0
      %v1116 = vadd.f32 %v947, %v1115
      %v1117 = vpop.f32.mrf.mxu0
      %v1118 = vadd.f32 %v949, %v1117
      %1119 = vdwg.mxu0
      %v1120 = vld [vmem:[%s218] sm:$0xff]
      %v1121 = vld [vmem:[%s218 + $0x8] sm:$0xff]
      %v1122 = vld [vmem:[%s218 + $0x10] sm:$0xff]
      %v1123 = vld [vmem:[%s218 + $0x18] sm:$0xff]
      %v1124 = vld [vmem:[%s218 + $0x20] sm:$0xff]
      %v1125 = vld [vmem:[%s218 + $0x28] sm:$0xff]
      %v1126 = vld [vmem:[%s218 + $0x30] sm:$0xff]
      %v1127 = vld [vmem:[%s218 + $0x38] sm:$0xff]
      %v1128 = vld [vmem:[%s218 + $0x40] sm:$0xff]
      %v1129 = vld [vmem:[%s218 + $0x48] sm:$0xff]
      %v1130 = vld [vmem:[%s218 + $0x50] sm:$0xff]
      %v1131 = vld [vmem:[%s218 + $0x58] sm:$0xff]
      %v1132 = vld [vmem:[%s218 + $0x60] sm:$0xff]
      %v1133 = vld [vmem:[%s218 + $0x68] sm:$0xff]
      %v1134 = vld [vmem:[%s218 + $0x70] sm:$0xff]
      %v1135 = vld [vmem:[%s218 + $0x78] sm:$0xff]
      %v1136 = vld [vmem:[%s218 + $0x80] sm:$0xff]
      %v1137 = vld [vmem:[%s218 + $0x88] sm:$0xff]
      %v1138 = vld [vmem:[%s218 + $0x90] sm:$0xff]
      %v1139 = vld [vmem:[%s218 + $0x98] sm:$0xff]
      %v1140 = vld [vmem:[%s218 + $0xa0] sm:$0xff]
      %v1141 = vld [vmem:[%s218 + $0xa8] sm:$0xff]
      %v1142 = vld [vmem:[%s218 + $0xb0] sm:$0xff]
      %v1143 = vld [vmem:[%s218 + $0xb8] sm:$0xff]
      %v1144 = vld [vmem:[%s218 + $0xc0] sm:$0xff]
      %v1145 = vld [vmem:[%s218 + $0xc8] sm:$0xff]
      %v1146 = vld [vmem:[%s218 + $0xd0] sm:$0xff]
      %v1147 = vld [vmem:[%s218 + $0xd8] sm:$0xff]
      %v1148 = vld [vmem:[%s218 + $0xe0] sm:$0xff]
      %v1149 = vld [vmem:[%s218 + $0xe8] sm:$0xff]
      %v1150 = vld [vmem:[%s218 + $0xf0] sm:$0xff]
      %v1151 = vld [vmem:[%s218 + $0xf8] sm:$0xff]
      %v1152 = vld [vmem:[%s218 + $0x100] sm:$0xff]
      %v1153 = vld [vmem:[%s218 + $0x108] sm:$0xff]
      %v1154 = vld [vmem:[%s218 + $0x110] sm:$0xff]
      %v1155 = vld [vmem:[%s218 + $0x118] sm:$0xff]
      %v1156 = vld [vmem:[%s218 + $0x120] sm:$0xff]
      %v1157 = vld [vmem:[%s218 + $0x128] sm:$0xff]
      %v1158 = vld [vmem:[%s218 + $0x130] sm:$0xff]
      %v1159 = vld [vmem:[%s218 + $0x138] sm:$0xff]
      %v1160 = vld [vmem:[%s218 + $0x140] sm:$0xff]
      %v1161 = vld [vmem:[%s218 + $0x148] sm:$0xff]
      %v1162 = vld [vmem:[%s218 + $0x150] sm:$0xff]
      %v1163 = vld [vmem:[%s218 + $0x158] sm:$0xff]
      %v1164 = vld [vmem:[%s218 + $0x160] sm:$0xff]
      %v1165 = vld [vmem:[%s218 + $0x168] sm:$0xff]
      %v1166 = vld [vmem:[%s218 + $0x170] sm:$0xff]
      %v1167 = vld [vmem:[%s218 + $0x178] sm:$0xff]
      %v1168 = vld [vmem:[%s218 + $0x180] sm:$0xff]
      %v1169 = vld [vmem:[%s218 + $0x188] sm:$0xff]
      %v1170 = vld [vmem:[%s218 + $0x190] sm:$0xff]
      %v1171 = vld [vmem:[%s218 + $0x198] sm:$0xff]
      %v1172 = vld [vmem:[%s218 + $0x1a0] sm:$0xff]
      %v1173 = vld [vmem:[%s218 + $0x1a8] sm:$0xff]
      %v1174 = vld [vmem:[%s218 + $0x1b0] sm:$0xff]
      %v1175 = vld [vmem:[%s218 + $0x1b8] sm:$0xff]
      %v1176 = vld [vmem:[%s218 + $0x1c0] sm:$0xff]
      %v1177 = vld [vmem:[%s218 + $0x1c8] sm:$0xff]
      %v1178 = vld [vmem:[%s218 + $0x1d0] sm:$0xff]
      %v1179 = vld [vmem:[%s218 + $0x1d8] sm:$0xff]
      %v1180 = vld [vmem:[%s218 + $0x1e0] sm:$0xff]
      %v1181 = vld [vmem:[%s218 + $0x1e8] sm:$0xff]
      %v1182 = vld [vmem:[%s218 + $0x1f0] sm:$0xff]
      %v1183 = vld [vmem:[%s218 + $0x1f8] sm:$0xff]
      %v1184 = vadd.f32 %v961, %v1120
      %v1185 = vadd.f32 %v963, %v1121
      %v1186 = vadd.f32 %v966, %v1122
      %v1187 = vadd.f32 %v968, %v1123
      %v1188 = vadd.f32 %v971, %v1124
      %v1189 = vadd.f32 %v973, %v1125
      %v1190 = vadd.f32 %v976, %v1126
      %v1191 = vadd.f32 %v978, %v1127
      %v1192 = vadd.f32 %v981, %v1128
      %v1193 = vadd.f32 %v983, %v1129
      %v1194 = vadd.f32 %v986, %v1130
      %v1195 = vadd.f32 %v988, %v1131
      %v1196 = vadd.f32 %v991, %v1132
      %v1197 = vadd.f32 %v993, %v1133
      %v1198 = vadd.f32 %v996, %v1134
      %v1199 = vadd.f32 %v998, %v1135
      %v1200 = vadd.f32 %v1001, %v1136
      %v1201 = vadd.f32 %v1003, %v1137
      %v1202 = vadd.f32 %v1006, %v1138
      %v1203 = vadd.f32 %v1008, %v1139
      %v1204 = vadd.f32 %v1011, %v1140
      %v1205 = vadd.f32 %v1013, %v1141
      %v1206 = vadd.f32 %v1016, %v1142
      %v1207 = vadd.f32 %v1018, %v1143
      %v1208 = vadd.f32 %v1021, %v1144
      %v1209 = vadd.f32 %v1023, %v1145
      %v1210 = vadd.f32 %v1026, %v1146
      %v1211 = vadd.f32 %v1028, %v1147
      %v1212 = vadd.f32 %v1031, %v1148
      %v1213 = vadd.f32 %v1033, %v1149
      %v1214 = vadd.f32 %v1036, %v1150
      %v1215 = vadd.f32 %v1038, %v1151
      %v1216 = vadd.f32 %v1041, %v1152
      %v1217 = vadd.f32 %v1043, %v1153
      %v1218 = vadd.f32 %v1046, %v1154
      %v1219 = vadd.f32 %v1048, %v1155
      %v1220 = vadd.f32 %v1051, %v1156
      %v1221 = vadd.f32 %v1053, %v1157
      %v1222 = vadd.f32 %v1056, %v1158
      %v1223 = vadd.f32 %v1058, %v1159
      %v1224 = vadd.f32 %v1061, %v1160
      %v1225 = vadd.f32 %v1063, %v1161
      %v1226 = vadd.f32 %v1066, %v1162
      %v1227 = vadd.f32 %v1068, %v1163
      %v1228 = vadd.f32 %v1071, %v1164
      %v1229 = vadd.f32 %v1073, %v1165
      %v1230 = vadd.f32 %v1076, %v1166
      %v1231 = vadd.f32 %v1078, %v1167
      %v1232 = vadd.f32 %v1081, %v1168
      %v1233 = vadd.f32 %v1083, %v1169
      %v1234 = vadd.f32 %v1086, %v1170
      %v1235 = vadd.f32 %v1088, %v1171
      %v1236 = vadd.f32 %v1091, %v1172
      %v1237 = vadd.f32 %v1093, %v1173
      %v1238 = vadd.f32 %v1096, %v1174
      %v1239 = vadd.f32 %v1098, %v1175
      %v1240 = vadd.f32 %v1101, %v1176
      %v1241 = vadd.f32 %v1103, %v1177
      %v1242 = vadd.f32 %v1106, %v1178
      %v1243 = vadd.f32 %v1108, %v1179
      %v1244 = vadd.f32 %v1111, %v1180
      %v1245 = vadd.f32 %v1113, %v1181
      %v1246 = vadd.f32 %v1116, %v1182
      %v1247 = vadd.f32 %v1118, %v1183
      %v1248 = vmax.f32 %v1184, 0.0
      %v1249 = vmax.f32 %v1185, 0.0
      %v1250 = vmax.f32 %v1186, 0.0
      %v1251 = vmax.f32 %v1187, 0.0
      %v1252 = vmax.f32 %v1188, 0.0
      %v1253 = vmax.f32 %v1189, 0.0
      %v1254 = vmax.f32 %v1190, 0.0
      %v1255 = vmax.f32 %v1191, 0.0
      %v1256 = vmax.f32 %v1192, 0.0
      %v1257 = vmax.f32 %v1193, 0.0
      %v1258 = vmax.f32 %v1194, 0.0
      %v1259 = vmax.f32 %v1195, 0.0
      %v1260 = vmax.f32 %v1196, 0.0
      %v1261 = vmax.f32 %v1197, 0.0
      %v1262 = vmax.f32 %v1198, 0.0
      %v1263 = vmax.f32 %v1199, 0.0
      %v1264 = vmax.f32 %v1200, 0.0
      %v1265 = vmax.f32 %v1201, 0.0
      %v1266 = vmax.f32 %v1202, 0.0
      %v1267 = vmax.f32 %v1203, 0.0
      %v1268 = vmax.f32 %v1204, 0.0
      %v1269 = vmax.f32 %v1205, 0.0
      %v1270 = vmax.f32 %v1206, 0.0
      %v1271 = vmax.f32 %v1207, 0.0
      %v1272 = vmax.f32 %v1208, 0.0
      %v1273 = vmax.f32 %v1209, 0.0
      %v1274 = vmax.f32 %v1210, 0.0
      %v1275 = vmax.f32 %v1211, 0.0
      %v1276 = vmax.f32 %v1212, 0.0
      %v1277 = vmax.f32 %v1213, 0.0
      %v1278 = vmax.f32 %v1214, 0.0
      %v1279 = vmax.f32 %v1215, 0.0
      %v1280 = vmax.f32 %v1216, 0.0
      %v1281 = vmax.f32 %v1217, 0.0
      %v1282 = vmax.f32 %v1218, 0.0
      %v1283 = vmax.f32 %v1219, 0.0
      %v1284 = vmax.f32 %v1220, 0.0
      %v1285 = vmax.f32 %v1221, 0.0
      %v1286 = vmax.f32 %v1222, 0.0
      %v1287 = vmax.f32 %v1223, 0.0
      %v1288 = vmax.f32 %v1224, 0.0
      %v1289 = vmax.f32 %v1225, 0.0
      %v1290 = vmax.f32 %v1226, 0.0
      %v1291 = vmax.f32 %v1227, 0.0
      %v1292 = vmax.f32 %v1228, 0.0
      %v1293 = vmax.f32 %v1229, 0.0
      %v1294 = vmax.f32 %v1230, 0.0
      %v1295 = vmax.f32 %v1231, 0.0
      %v1296 = vmax.f32 %v1232, 0.0
      %v1297 = vmax.f32 %v1233, 0.0
      %v1298 = vmax.f32 %v1234, 0.0
      %v1299 = vmax.f32 %v1235, 0.0
      %v1300 = vmax.f32 %v1236, 0.0
      %v1301 = vmax.f32 %v1237, 0.0
      %v1302 = vmax.f32 %v1238, 0.0
      %v1303 = vmax.f32 %v1239, 0.0
      %v1304 = vmax.f32 %v1240, 0.0
      %v1305 = vmax.f32 %v1241, 0.0
      %v1306 = vmax.f32 %v1242, 0.0
      %v1307 = vmax.f32 %v1243, 0.0
      %v1308 = vmax.f32 %v1244, 0.0
      %v1309 = vmax.f32 %v1245, 0.0
      %v1310 = vmax.f32 %v1246, 0.0
      %v1311 = vmax.f32 %v1247, 0.0
      %v1312 = vpack.c.bf16 %v1248, %v1248
      %v1313 = vpack.c.bf16 %v1249, %v1249
      %v1314 = vpack.c.bf16 %v1250, %v1250
      %v1315 = vpack.c.bf16 %v1251, %v1251
      %v1316 = vpack.c.bf16 %v1252, %v1252
      %v1317 = vpack.c.bf16 %v1253, %v1253
      %v1318 = vpack.c.bf16 %v1254, %v1254
      %v1319 = vpack.c.bf16 %v1255, %v1255
      %v1320 = vpack.c.bf16 %v1256, %v1256
      %v1321 = vpack.c.bf16 %v1257, %v1257
      %v1322 = vpack.c.bf16 %v1258, %v1258
      %v1323 = vpack.c.bf16 %v1259, %v1259
      %v1324 = vpack.c.bf16 %v1260, %v1260
      %v1325 = vpack.c.bf16 %v1261, %v1261
      %v1326 = vpack.c.bf16 %v1262, %v1262
      %v1327 = vpack.c.bf16 %v1263, %v1263
      %v1328 = vpack.c.bf16 %v1264, %v1264
      %v1329 = vpack.c.bf16 %v1265, %v1265
      %v1330 = vpack.c.bf16 %v1266, %v1266
      %v1331 = vpack.c.bf16 %v1267, %v1267
      %v1332 = vpack.c.bf16 %v1268, %v1268
      %v1333 = vpack.c.bf16 %v1269, %v1269
      %v1334 = vpack.c.bf16 %v1270, %v1270
      %v1335 = vpack.c.bf16 %v1271, %v1271
      %v1336 = vpack.c.bf16 %v1272, %v1272
      %v1337 = vpack.c.bf16 %v1273, %v1273
      %v1338 = vpack.c.bf16 %v1274, %v1274
      %v1339 = vpack.c.bf16 %v1275, %v1275
      %v1340 = vpack.c.bf16 %v1276, %v1276
      %v1341 = vpack.c.bf16 %v1277, %v1277
      %v1342 = vpack.c.bf16 %v1278, %v1278
      %v1343 = vpack.c.bf16 %v1279, %v1279
      %v1344 = vpack.c.bf16 %v1280, %v1280
      %v1345 = vpack.c.bf16 %v1281, %v1281
      %v1346 = vpack.c.bf16 %v1282, %v1282
      %v1347 = vpack.c.bf16 %v1283, %v1283
      %v1348 = vpack.c.bf16 %v1284, %v1284
      %v1349 = vpack.c.bf16 %v1285, %v1285
      %v1350 = vpack.c.bf16 %v1286, %v1286
      %v1351 = vpack.c.bf16 %v1287, %v1287
      %v1352 = vpack.c.bf16 %v1288, %v1288
      %v1353 = vpack.c.bf16 %v1289, %v1289
      %v1354 = vpack.c.bf16 %v1290, %v1290
      %v1355 = vpack.c.bf16 %v1291, %v1291
      %v1356 = vpack.c.bf16 %v1292, %v1292
      %v1357 = vpack.c.bf16 %v1293, %v1293
      %v1358 = vpack.c.bf16 %v1294, %v1294
      %v1359 = vpack.c.bf16 %v1295, %v1295
      %v1360 = vpack.c.bf16 %v1296, %v1296
      %v1361 = vpack.c.bf16 %v1297, %v1297
      %v1362 = vpack.c.bf16 %v1298, %v1298
      %v1363 = vpack.c.bf16 %v1299, %v1299
      %v1364 = vpack.c.bf16 %v1300, %v1300
      %v1365 = vpack.c.bf16 %v1301, %v1301
      %v1366 = vpack.c.bf16 %v1302, %v1302
      %v1367 = vpack.c.bf16 %v1303, %v1303
      %v1368 = vpack.c.bf16 %v1304, %v1304
      %v1369 = vpack.c.bf16 %v1305, %v1305
      %v1370 = vpack.c.bf16 %v1306, %v1306
      %v1371 = vpack.c.bf16 %v1307, %v1307
      %v1372 = vpack.c.bf16 %v1308, %v1308
      %v1373 = vpack.c.bf16 %v1309, %v1309
      %v1374 = vpack.c.bf16 %v1310, %v1310
      %v1375 = vpack.c.bf16 %v1311, %v1311
      %vm1376 = vcmask 52224
      %1377 = vst.msk [vmem:[%s224] sm:$0xf] %vm1376, %v1312
      %1378 = vst.msk [vmem:[%s224 + $0x4] sm:$0xf] %vm1376, %v1313
      %1379 = vst.msk [vmem:[%s224 + $0x8] sm:$0xf] %vm1376, %v1314
      %1380 = vst.msk [vmem:[%s224 + $0xc] sm:$0xf] %vm1376, %v1315
      %1381 = vst.msk [vmem:[%s224 + $0x10] sm:$0xf] %vm1376, %v1316
      %1382 = vst.msk [vmem:[%s224 + $0x14] sm:$0xf] %vm1376, %v1317
      %1383 = vst.msk [vmem:[%s224 + $0x18] sm:$0xf] %vm1376, %v1318
      %1384 = vst.msk [vmem:[%s224 + $0x1c] sm:$0xf] %vm1376, %v1319
      %1385 = vst.msk [vmem:[%s224 + $0x20] sm:$0xf] %vm1376, %v1320
      %1386 = vst.msk [vmem:[%s224 + $0x24] sm:$0xf] %vm1376, %v1321
      %1387 = vst.msk [vmem:[%s224 + $0x28] sm:$0xf] %vm1376, %v1322
      %1388 = vst.msk [vmem:[%s224 + $0x2c] sm:$0xf] %vm1376, %v1323
      %1389 = vst.msk [vmem:[%s224 + $0x30] sm:$0xf] %vm1376, %v1324
      %1390 = vst.msk [vmem:[%s224 + $0x34] sm:$0xf] %vm1376, %v1325
      %1391 = vst.msk [vmem:[%s224 + $0x38] sm:$0xf] %vm1376, %v1326
      %1392 = vst.msk [vmem:[%s224 + $0x3c] sm:$0xf] %vm1376, %v1327
      %1393 = vst.msk [vmem:[%s224 + $0x40] sm:$0xf] %vm1376, %v1328
      %1394 = vst.msk [vmem:[%s224 + $0x44] sm:$0xf] %vm1376, %v1329
      %1395 = vst.msk [vmem:[%s224 + $0x48] sm:$0xf] %vm1376, %v1330
      %1396 = vst.msk [vmem:[%s224 + $0x4c] sm:$0xf] %vm1376, %v1331
      %1397 = vst.msk [vmem:[%s224 + $0x50] sm:$0xf] %vm1376, %v1332
      %1398 = vst.msk [vmem:[%s224 + $0x54] sm:$0xf] %vm1376, %v1333
      %1399 = vst.msk [vmem:[%s224 + $0x58] sm:$0xf] %vm1376, %v1334
      %1400 = vst.msk [vmem:[%s224 + $0x5c] sm:$0xf] %vm1376, %v1335
      %1401 = vst.msk [vmem:[%s224 + $0x60] sm:$0xf] %vm1376, %v1336
      %1402 = vst.msk [vmem:[%s224 + $0x64] sm:$0xf] %vm1376, %v1337
      %1403 = vst.msk [vmem:[%s224 + $0x68] sm:$0xf] %vm1376, %v1338
      %1404 = vst.msk [vmem:[%s224 + $0x6c] sm:$0xf] %vm1376, %v1339
      %1405 = vst.msk [vmem:[%s224 + $0x70] sm:$0xf] %vm1376, %v1340
      %1406 = vst.msk [vmem:[%s224 + $0x74] sm:$0xf] %vm1376, %v1341
      %1407 = vst.msk [vmem:[%s224 + $0x78] sm:$0xf] %vm1376, %v1342
      %1408 = vst.msk [vmem:[%s224 + $0x7c] sm:$0xf] %vm1376, %v1343
      %1409 = vst.msk [vmem:[%s224 + $0x80] sm:$0xf] %vm1376, %v1344
      %1410 = vst.msk [vmem:[%s224 + $0x84] sm:$0xf] %vm1376, %v1345
      %1411 = vst.msk [vmem:[%s224 + $0x88] sm:$0xf] %vm1376, %v1346
      %1412 = vst.msk [vmem:[%s224 + $0x8c] sm:$0xf] %vm1376, %v1347
      %1413 = vst.msk [vmem:[%s224 + $0x90] sm:$0xf] %vm1376, %v1348
      %1414 = vst.msk [vmem:[%s224 + $0x94] sm:$0xf] %vm1376, %v1349
      %1415 = vst.msk [vmem:[%s224 + $0x98] sm:$0xf] %vm1376, %v1350
      %1416 = vst.msk [vmem:[%s224 + $0x9c] sm:$0xf] %vm1376, %v1351
      %1417 = vst.msk [vmem:[%s224 + $0xa0] sm:$0xf] %vm1376, %v1352
      %1418 = vst.msk [vmem:[%s224 + $0xa4] sm:$0xf] %vm1376, %v1353
      %1419 = vst.msk [vmem:[%s224 + $0xa8] sm:$0xf] %vm1376, %v1354
      %1420 = vst.msk [vmem:[%s224 + $0xac] sm:$0xf] %vm1376, %v1355
      %1421 = vst.msk [vmem:[%s224 + $0xb0] sm:$0xf] %vm1376, %v1356
      %1422 = vst.msk [vmem:[%s224 + $0xb4] sm:$0xf] %vm1376, %v1357
      %1423 = vst.msk [vmem:[%s224 + $0xb8] sm:$0xf] %vm1376, %v1358
      %1424 = vst.msk [vmem:[%s224 + $0xbc] sm:$0xf] %vm1376, %v1359
      %1425 = vst.msk [vmem:[%s224 + $0xc0] sm:$0xf] %vm1376, %v1360
      %1426 = vst.msk [vmem:[%s224 + $0xc4] sm:$0xf] %vm1376, %v1361
      %1427 = vst.msk [vmem:[%s224 + $0xc8] sm:$0xf] %vm1376, %v1362
      %1428 = vst.msk [vmem:[%s224 + $0xcc] sm:$0xf] %vm1376, %v1363
      %1429 = vst.msk [vmem:[%s224 + $0xd0] sm:$0xf] %vm1376, %v1364
      %1430 = vst.msk [vmem:[%s224 + $0xd4] sm:$0xf] %vm1376, %v1365
      %1431 = vst.msk [vmem:[%s224 + $0xd8] sm:$0xf] %vm1376, %v1366
      %1432 = vst.msk [vmem:[%s224 + $0xdc] sm:$0xf] %vm1376, %v1367
      %1433 = vst.msk [vmem:[%s224 + $0xe0] sm:$0xf] %vm1376, %v1368
      %1434 = vst.msk [vmem:[%s224 + $0xe4] sm:$0xf] %vm1376, %v1369
      %1435 = vst.msk [vmem:[%s224 + $0xe8] sm:$0xf] %vm1376, %v1370
      %1436 = vst.msk [vmem:[%s224 + $0xec] sm:$0xf] %vm1376, %v1371
      %1437 = vst.msk [vmem:[%s224 + $0xf0] sm:$0xf] %vm1376, %v1372
      %1438 = vst.msk [vmem:[%s224 + $0xf4] sm:$0xf] %vm1376, %v1373
      %1439 = vst.msk [vmem:[%s224 + $0xf8] sm:$0xf] %vm1376, %v1374
      %1440 = vst.msk [vmem:[%s224 + $0xfc] sm:$0xf] %vm1376, %v1375
      %s1441 = smul.u32 64, %s15
      %p1442 = scmp.lt.s32.totalorder %s1441, 127
      %s1443 = scalar_select %p1442, %s1441, 127
      %s1444 = smul.addr %s1443, 4
      %s1445 = scalar_lea.vmem %s4, %s1444
      // Predicated region
      $region37: #{psm_gnn_forward.19} parent=35 // pred_check
        %p1446 = pneg %p127
      $region38: #{psm_gnn_forward.19} parent=35 // pred_check_branch
        %1448 = sbr.rel (%p1446) target = $region40
      $region39: #{psm_gnn_forward.19} parent=35 // pred_region
        %s1449 = smul.u32 64, %s15
      $region40: #{psm_gnn_forward.19} parent=35 // pred_fallthru
        _
    $region36: #{psm_gnn_forward.19} parent=5 // pred_fallthru
      _
    %p1450 = scmp.le.s32.totalorder 2, %s10
    // Predicated region
    $region41: #{psm_gnn_forward.19} parent=5 // pred_check
      %p1451 = pneg %p1450
    $region42: #{psm_gnn_forward.19} parent=5 // pred_check_branch
      %1453 = sbr.rel (%p1451) target = $region44
    $region43: #{psm_gnn_forward.19} parent=5 // pred_region
      %s1454 = ssub.s32 %s10, 2
      // Predicated region
      $region45: #{psm_gnn_forward.19} parent=43 // pred_check
        %p1455 = pneg %p133
      $region46: #{psm_gnn_forward.19} parent=43 // pred_check_branch
        %1457 = sbr.rel (%p1455) target = $region48
      $region47: #{psm_gnn_forward.19} parent=43 // pred_region
        %s1458 = smul.u32 64, %s16
        %p1459 = scmp.lt.s32.totalorder %s1458, 127
        %s1460 = scalar_select %p1459, %s1458, 127
        %s1461 = smul.addr %s1460, 4
        %s1462 = scalar_lea.vmem %s4, %s1461
      $region48: #{psm_gnn_forward.19} parent=43 // pred_fallthru
        _
    $region44: #{psm_gnn_forward.19} parent=5 // pred_fallthru
      _
  $region6: #{psm_gnn_forward.19} parent=0 // loop_footer
    %s14 = sadd.s32 1, %s10
  $region7: #{psm_gnn_forward.19} parent=0 // loop_footer_branch
    %9 = sbr.rel target = $region3
  $region8: #{psm_gnn_forward.19} parent=0 // loop_exit
    _

// kernel: psm_gnn_forward.20
$region0: #{psm_gnn_forward.20}
  #allocation0 [shape = 'u32[]', space=smem, size = 0x4, offset = 0x4, fixed_abs, tag = 'smem constant byte address 0x4 - core index']
  #allocation1 [shape = 'u32[72,128]{1,0:T(1,128)}', space=vmem, size = 0x9000, scoped, tag = 'internal scratch']
  %s0 = inlined_call_operand.vmem [shape: bf16[128,189], index: 0, kind: input, shape index: {}]
  %s1 = inlined_call_operand.vmem [shape: bf16[189,64], index: 1, kind: input, shape index: {}]
  %s2 = inlined_call_operand.vmem [shape: f32[1,64], index: 2, kind: input, shape index: {}]
  %s3 = inlined_call_operand.vmem [shape: bf16[128,64], index: 3, kind: output, shape index: {}]
  %s4 = sld [smem:[#allocation0]]
  $region45: #{psm_gnn_forward.20} parent=0
    _
  %s6 = ssub.s32 1, %s4
  %s7 = scalar_select 0, %s6, %s4
  loop: start=0, step=1, limit=4
  $region2: #{psm_gnn_forward.20} parent=0 // loop_pre_header
    _
  $region3: #{psm_gnn_forward.20} parent=0 // loop_header
    %s9 = sphi 0, %s13
    %p10 = scmp.ge.s32.totalorder %s9, 4
    %s19 = sphi 0, %s21
    %s22 = sphi 0, %s19
    %s23 = sphi 0, %s22
    %s39 = sphi 0, %s23
    %s43 = sphi 0, %s43
    %s45 = sphi 0, %s43
    %s46 = sphi 0, %s45
    %s60 = sphi 0, %s46
    %s64 = sphi 0, %s64
    %s66 = sphi 0, %s64
    %s67 = sphi 0, %s66
    %s81 = sphi 0, %s67
    %s87 = sphi 0, %s89
    %s90 = sphi 0, %s87
    %s91 = sphi 0, %s90
    %s107 = sphi 0, %s91
  $region4: #{psm_gnn_forward.20} parent=0 // loop_header_branch
    %12 = sbr.rel (%p10) target = $region8
  $region5: #{psm_gnn_forward.20} parent=0 // loop_body
    %s14 = ssub.s32 %s9, 1
    %s15 = ssub.s32 %s9, 2
    %s16 = sadd.s32 %s9, 1
    %s17 = ssub.s32 %s9, %s16
    %p18 = scmp.eq.s32.totalorder %s17, 0
    %s20 = sadd.s32 %s19, 1
    %s21 = scalar_select %p18, %s19, %s20
    %p24 = pneg %p18
    %p25 = scmp.eq.s32.totalorder %s9, 1
    %p26 = por %p24, %p25
    %p27 = scmp.ne.s32.totalorder %s19, %s22
    %p28 = scmp.eq.s32.totalorder %s9, 0
    %p29 = por %p27, %p28
    %p30 = scmp.ne.s32.totalorder %s19, %s22
    %p31 = scmp.eq.s32.totalorder %s14, 1
    %p32 = por %p30, %p31
    %p33 = scmp.ne.s32.totalorder %s22, %s23
    %p34 = scmp.eq.s32.totalorder %s14, 0
    %p35 = por %p33, %p34
    %p36 = scmp.ne.s32.totalorder %s22, %s23
    %p37 = scmp.eq.s32.totalorder %s15, 1
    %p38 = por %p36, %p37
    %p40 = scmp.ne.s32.totalorder %s23, %s39
    %p41 = scmp.eq.s32.totalorder %s15, 0
    %p42 = por %p40, %p41
    %s44 = sadd.s32 %s43, 1
    %p47 = scmp.eq.s32.totalorder %s9, 1
    %p48 = scmp.ne.s32.totalorder %s43, %s45
    %p49 = scmp.eq.s32.totalorder %s9, 0
    %p50 = por %p48, %p49
    %p51 = scmp.ne.s32.totalorder %s43, %s45
    %p52 = scmp.eq.s32.totalorder %s14, 1
    %p53 = por %p51, %p52
    %p54 = scmp.ne.s32.totalorder %s45, %s46
    %p55 = scmp.eq.s32.totalorder %s14, 0
    %p56 = por %p54, %p55
    %p57 = scmp.ne.s32.totalorder %s45, %s46
    %p58 = scmp.eq.s32.totalorder %s15, 1
    %p59 = por %p57, %p58
    %p61 = scmp.ne.s32.totalorder %s46, %s60
    %p62 = scmp.eq.s32.totalorder %s15, 0
    %p63 = por %p61, %p62
    %s65 = sadd.s32 %s64, 1
    %p68 = scmp.eq.s32.totalorder %s9, 1
    %p69 = scmp.ne.s32.totalorder %s64, %s66
    %p70 = scmp.eq.s32.totalorder %s9, 0
    %p71 = por %p69, %p70
    %p72 = scmp.ne.s32.totalorder %s64, %s66
    %p73 = scmp.eq.s32.totalorder %s14, 1
    %p74 = por %p72, %p73
    %p75 = scmp.ne.s32.totalorder %s66, %s67
    %p76 = scmp.eq.s32.totalorder %s14, 0
    %p77 = por %p75, %p76
    %p78 = scmp.ne.s32.totalorder %s66, %s67
    %p79 = scmp.eq.s32.totalorder %s15, 1
    %p80 = por %p78, %p79
    %p82 = scmp.ne.s32.totalorder %s67, %s81
    %p83 = scmp.eq.s32.totalorder %s15, 0
    %p84 = por %p82, %p83
    %s85 = ssub.s32 %s9, %s16
    %p86 = scmp.eq.s32.totalorder %s85, 0
    %s88 = sadd.s32 %s87, 1
    %s89 = scalar_select %p86, %s87, %s88
    %p92 = pneg %p86
    %p93 = scmp.eq.s32.totalorder %s9, 1
    %p94 = por %p92, %p93
    %p95 = scmp.ne.s32.totalorder %s87, %s90
    %p96 = scmp.eq.s32.totalorder %s9, 0
    %p97 = por %p95, %p96
    %p98 = scmp.ne.s32.totalorder %s87, %s90
    %p99 = scmp.eq.s32.totalorder %s14, 1
    %p100 = por %p98, %p99
    %p101 = scmp.ne.s32.totalorder %s90, %s91
    %p102 = scmp.eq.s32.totalorder %s14, 0
    %p103 = por %p101, %p102
    %p104 = scmp.ne.s32.totalorder %s90, %s91
    %p105 = scmp.eq.s32.totalorder %s15, 1
    %p106 = por %p104, %p105
    %p108 = scmp.ne.s32.totalorder %s91, %s107
    %p109 = scmp.eq.s32.totalorder %s15, 0
    %p110 = por %p108, %p109
    %p111 = scmp.le.s32.totalorder 1, %s9
    %p112 = scmp.lt.s32.totalorder %s9, 3
    %p113 = pnand %p111, %p112
    %p114 = pneg %p113
    // Predicated region
    $region9: #{psm_gnn_forward.20} parent=5 // pred_check
      _
    $region10: #{psm_gnn_forward.20} parent=5 // pred_check_branch
      %116 = sbr.rel (%p113) target = $region12
    $region11: #{psm_gnn_forward.20} parent=5 // pred_region
      %s117 = ssub.s32 %s9, 1
      // Predicated region
      $region13: #{psm_gnn_forward.20} parent=11 // pred_check
        %p118 = pneg %p56
      $region14: #{psm_gnn_forward.20} parent=11 // pred_check_branch
        %120 = sbr.rel (%p118) target = $region16
      $region15: #{psm_gnn_forward.20} parent=11 // pred_region
        _
      $region16: #{psm_gnn_forward.20} parent=11 // pred_fallthru
        _
      // Predicated region
      $region17: #{psm_gnn_forward.20} parent=11 // pred_check
        %p121 = pneg %p77
      $region18: #{psm_gnn_forward.20} parent=11 // pred_check_branch
        %123 = sbr.rel (%p121) target = $region20
      $region19: #{psm_gnn_forward.20} parent=11 // pred_region
        _
      $region20: #{psm_gnn_forward.20} parent=11 // pred_fallthru
        _
    $region12: #{psm_gnn_forward.20} parent=5 // pred_fallthru
      _
    %p124 = scmp.lt.s32.totalorder %s9, 2
    // Predicated region
    $region21: #{psm_gnn_forward.20} parent=5 // pred_check
      %p125 = pneg %p124
    $region22: #{psm_gnn_forward.20} parent=5 // pred_check_branch
      %127 = sbr.rel (%p125) target = $region24
    $region23: #{psm_gnn_forward.20} parent=5 // pred_region
      // Predicated region
      $region25: #{psm_gnn_forward.20} parent=23 // pred_check
        %p128 = pneg %p29
      $region26: #{psm_gnn_forward.20} parent=23 // pred_check_branch
        %130 = sbr.rel (%p128) target = $region28
      $region27: #{psm_gnn_forward.20} parent=23 // pred_region
        %s131 = smul.u32 8, %s9
        %p132 = scmp.lt.s32.totalorder %s131, 15
        %s133 = scalar_select %p132, %s131, 15
        %s134 = smul.addr %s133, 2
        %s135 = smul.addr %s134, 4
        %s136 = scalar_lea.vmem %s0, %s135
        %s137 = smul.u32 8, %s9
      $region28: #{psm_gnn_forward.20} parent=23 // pred_fallthru
        _
    $region24: #{psm_gnn_forward.20} parent=5 // pred_fallthru
      _
    %p138 = scmp.le.s32.totalorder 1, %s9
    %p139 = scmp.lt.s32.totalorder %s9, 3
    %p140 = pnand %p138, %p139
    %p141 = pneg %p140
    // Predicated region
    $region29: #{psm_gnn_forward.20} parent=5 // pred_check
      _
    $region30: #{psm_gnn_forward.20} parent=5 // pred_check_branch
      %143 = sbr.rel (%p140) target = $region32
    $region31: #{psm_gnn_forward.20} parent=5 // pred_region
      %s144 = ssub.s32 %s9, 1
      %s145 = smul.u32 8, %s14
      %p146 = scmp.lt.s32.totalorder %s145, 15
      %s147 = scalar_select %p146, %s145, 15
      %s148 = smul.addr %s147, 2
      %s149 = smul.addr %s148, 4
      %s150 = scalar_lea.vmem %s0, %s149
      %p151 = pneg %p35
      %p152 = pneg %p32
      %p153 = pneg %p56
      %p154 = pneg %p53
      %p155 = pneg %p77
      %p156 = pneg %p74
      %p157 = pneg %p103
      %p158 = pneg %p100
      %s159 = smul.u32 8, %s14
      %p160 = scmp.lt.s32.totalorder %s159, 15
      %s161 = scalar_select %p160, %s159, 15
      %s162 = smul.addr %s161, 4
      %s163 = scalar_lea.vmem %s3, %s162
      %s164 = smul.u32 8, %s14
      %p165 = scmp.lt.s32.totalorder %s164, 15
      %s166 = scalar_select %p165, %s164, 15
      %s167 = smul.addr %s166, 2
      %s168 = smul.addr %s167, 4
      %s169 = scalar_lea.vmem %s0, %s168
      %s170 = smul.u32 8, %s14
      %s171 = smul.u32 8, %s14
      %p172 = scmp.lt.s32.totalorder %s171, 15
      %s173 = scalar_select %p172, %s171, 15
      %s174 = smul.addr %s173, 4
      %s175 = scalar_lea.vmem %s3, %s174
      %s176 = smul.u32 8, %s14
      %v178 = vld [vmem:[%s169] sm:$0xff]
      %v179 = vld [vmem:[%s169 + $0x8] sm:$0xff]
      %v180 = vld [vmem:[%s169 + $0x10] sm:$0xff]
      %v181 = vld [vmem:[%s169 + $0x18] sm:$0xff]
      %v182 = vld [vmem:[%s169 + $0x20] sm:$0xff]
      %v183 = vld [vmem:[%s169 + $0x28] sm:$0xff]
      %v184 = vld [vmem:[%s169 + $0x30] sm:$0xff]
      %v185 = vld [vmem:[%s169 + $0x38] sm:$0xff]
      %v186 = vld [vmem:[%s1] sm:$0xf]
      %v187 = vld [vmem:[%s1 + $0x4] sm:$0xf]
      %v188 = vld [vmem:[%s1 + $0x8] sm:$0xf]
      %v189 = vld [vmem:[%s1 + $0xc] sm:$0xf]
      %v190 = vld [vmem:[%s1 + $0x10] sm:$0xf]
      %v191 = vld [vmem:[%s1 + $0x14] sm:$0xf]
      %v192 = vld [vmem:[%s1 + $0x18] sm:$0xf]
      %v193 = vld [vmem:[%s1 + $0x1c] sm:$0xf]
      %v194 = vld [vmem:[%s1 + $0x20] sm:$0xf]
      %v195 = vld [vmem:[%s1 + $0x24] sm:$0xf]
      %v196 = vld [vmem:[%s1 + $0x28] sm:$0xf]
      %v197 = vld [vmem:[%s1 + $0x2c] sm:$0xf]
      %v198 = vld [vmem:[%s1 + $0x30] sm:$0xf]
      %v199 = vld [vmem:[%s1 + $0x34] sm:$0xf]
      %v200 = vld [vmem:[%s1 + $0x38] sm:$0xf]
      %v201 = vld [vmem:[%s1 + $0x3c] sm:$0xf]
      %v202 = vld [vmem:[%s1 + $0x40] sm:$0xf]
      %v203 = vld [vmem:[%s1 + $0x44] sm:$0xf]
      %v204 = vld [vmem:[%s1 + $0x48] sm:$0xf]
      %v205 = vld [vmem:[%s1 + $0x4c] sm:$0xf]
      %v206 = vld [vmem:[%s1 + $0x50] sm:$0xf]
      %v207 = vld [vmem:[%s1 + $0x54] sm:$0xf]
      %v208 = vld [vmem:[%s1 + $0x58] sm:$0xf]
      %v209 = vld [vmem:[%s1 + $0x5c] sm:$0x7]
      %v210 = vld [vmem:[%s2] sm:$0x1]
      %v212 = vperm.slane %v210, 0
      %v222 = vunpack.c.l.b16 %v178
      %v223 = vunpack.c.h.b16 %v178
      %v224 = vunpack.c.l.b16 %v179
      %v225 = vunpack.c.h.b16 %v179
      %v226 = vunpack.c.l.b16 %v180
      %v227 = vunpack.c.h.b16 %v180
      %v228 = vunpack.c.l.b16 %v181
      %v229 = vunpack.c.h.b16 %v181
      %v230 = vunpack.c.l.b16 %v182
      %v231 = vunpack.c.h.b16 %v182
      %v232 = vunpack.c.l.b16 %v183
      %v233 = vunpack.c.h.b16 %v183
      %v234 = vunpack.c.l.b16 %v184
      %v235 = vunpack.c.h.b16 %v184
      %v236 = vunpack.c.l.b16 %v185
      %v237 = vunpack.c.h.b16 %v185
      %v238 = vpack.c.b16 %v224, %v222
      %v239 = vpack.c.b16 %v225, %v223
      %v240 = vpack.c.b16 %v228, %v226
      %v241 = vpack.c.b16 %v229, %v227
      %v242 = vpack.c.b16 %v232, %v230
      %v243 = vpack.c.b16 %v233, %v231
      %v244 = vpack.c.b16 %v236, %v234
      %v245 = vpack.c.b16 %v237, %v235
      %v274 = vunpack.c.l.b16 %v186
      %v275 = vunpack.c.l.b16 %v187
      %v276 = vunpack.c.l.b16 %v188
      %v277 = vunpack.c.l.b16 %v189
      %v278 = vunpack.c.l.b16 %v190
      %v279 = vunpack.c.l.b16 %v191
      %v280 = vunpack.c.l.b16 %v192
      %v281 = vunpack.c.l.b16 %v193
      %v282 = vunpack.c.l.b16 %v194
      %v283 = vunpack.c.l.b16 %v195
      %v284 = vunpack.c.l.b16 %v196
      %v285 = vunpack.c.l.b16 %v197
      %v286 = vunpack.c.l.b16 %v198
      %v287 = vunpack.c.l.b16 %v199
      %v288 = vunpack.c.l.b16 %v200
      %v289 = vunpack.c.l.b16 %v201
      %v290 = vunpack.c.l.b16 %v202
      %v291 = vunpack.c.l.b16 %v203
      %v292 = vunpack.c.l.b16 %v204
      %v293 = vunpack.c.l.b16 %v205
      %v294 = vunpack.c.l.b16 %v206
      %v295 = vunpack.c.l.b16 %v207
      %v296 = vunpack.c.l.b16 %v208
      %v297 = vunpack.c.l.b16 %v209
      %v298 = vpack.c.b16 %v275, %v274
      %v299 = vpack.c.b16 %v277, %v276
      %v300 = vpack.c.b16 %v279, %v278
      %v301 = vpack.c.b16 %v281, %v280
      %v302 = vpack.c.b16 %v283, %v282
      %v303 = vpack.c.b16 %v285, %v284
      %v304 = vpack.c.b16 %v287, %v286
      %v305 = vpack.c.b16 %v289, %v288
      %v306 = vpack.c.b16 %v291, %v290
      %v307 = vpack.c.b16 %v293, %v292
      %v308 = vpack.c.b16 %v295, %v294
      %v309 = vpack.c.b16 %v297, %v296
      %vm321 = vcmask 498688
      %v323 = vsel %vm321, %v239, 0
      %v326 = vsel %vm321, %v241, 0
      %v329 = vsel %vm321, %v243, 0
      %v332 = vsel %vm321, %v245, 0
      %vm334 = vcmask 1045504
      %vm335 = vcmask 1046528
      %v336 = vsel %vm334, 4294967295, 65535
      %v337 = vsel %vm335, %v336, 0
      %v339 = vand.u32 %v309, %v337
      %341 = vmatpush.bf16.msra.mxu0 %v305
      %342 = vmatpush.bf16.msra.mxu0 %v304
      %343 = vmatpush.bf16.msra.mxu0 %v303
      %344 = vmatpush.bf16.msra.mxu0 %v302
      %345 = vmatpush.bf16.msra.mxu0 %v301
      %346 = vmatpush.bf16.msra.mxu0 %v300
      %347 = vmatpush.bf16.msra.mxu0 %v299
      %348 = vmatpush.bf16.msra.mxu0 %v298
      %349 = vmatmul.bf16.gmra.mxu0 %v238
      %v350 = vpop.f32.mrf.mxu0
      %v351 = vadd.f32 %v212, %v350
      %v352 = vpop.f32.mrf.mxu0
      %v353 = vadd.f32 %v212, %v352
      %354 = vmatmul.bf16.gmra.mxu0 %v240
      %v355 = vpop.f32.mrf.mxu0
      %v356 = vadd.f32 %v212, %v355
      %v357 = vpop.f32.mrf.mxu0
      %v358 = vadd.f32 %v212, %v357
      %359 = vmatmul.bf16.gmra.mxu0 %v242
      %v360 = vpop.f32.mrf.mxu0
      %v361 = vadd.f32 %v212, %v360
      %v362 = vpop.f32.mrf.mxu0
      %v363 = vadd.f32 %v212, %v362
      %364 = vmatmul.bf16.gmra.mxu0 %v244
      %v365 = vpop.f32.mrf.mxu0
      %v366 = vadd.f32 %v212, %v365
      %v367 = vpop.f32.mrf.mxu0
      %v368 = vadd.f32 %v212, %v367
      %369 = vdwg.mxu0
      %370 = vmatpush.bf16.msra.mxu0 0
      %371 = vmatpush.bf16.msra.mxu0 0
      %372 = vmatpush.bf16.msra.mxu0 0
      %373 = vmatpush.bf16.msra.mxu0 0
      %374 = vmatpush.bf16.msra.mxu0 %v339
      %375 = vmatpush.bf16.msra.mxu0 %v308
      %376 = vmatpush.bf16.msra.mxu0 %v307
      %377 = vmatpush.bf16.msra.mxu0 %v306
      %378 = vmatmul.bf16.gmra.mxu0 %v323
      %v379 = vpop.f32.mrf.mxu0
      %v380 = vadd.f32 %v351, %v379
      %v381 = vpop.f32.mrf.mxu0
      %v382 = vadd.f32 %v353, %v381
      %383 = vmatmul.bf16.gmra.mxu0 %v326
      %v384 = vpop.f32.mrf.mxu0
      %v385 = vadd.f32 %v356, %v384
      %v386 = vpop.f32.mrf.mxu0
      %v387 = vadd.f32 %v358, %v386
      %388 = vmatmul.bf16.gmra.mxu0 %v329
      %v389 = vpop.f32.mrf.mxu0
      %v390 = vadd.f32 %v361, %v389
      %v391 = vpop.f32.mrf.mxu0
      %v392 = vadd.f32 %v363, %v391
      %393 = vmatmul.bf16.gmra.mxu0 %v332
      %v394 = vpop.f32.mrf.mxu0
      %v395 = vadd.f32 %v366, %v394
      %v396 = vpop.f32.mrf.mxu0
      %v397 = vadd.f32 %v368, %v396
      %398 = vdwg.mxu0
      %v399 = vlaneseq
      %v400 = vand.u32 %v399, 127
      %vm401 = vcmp.lt.s32.totalorder %v400, 32
      %v402 = vmax.f32 %v380, 0.0
      %v403 = vmax.f32 %v382, 0.0
      %v404 = vmax.f32 %v385, 0.0
      %v405 = vmax.f32 %v387, 0.0
      %v406 = vmax.f32 %v390, 0.0
      %v407 = vmax.f32 %v392, 0.0
      %v408 = vmax.f32 %v395, 0.0
      %v409 = vmax.f32 %v397, 0.0
      %v410 = vsel %vm401, %v402, %v380
      %v411 = vsel %vm401, %v403, %v382
      %v412 = vsel %vm401, %v404, %v385
      %v413 = vsel %vm401, %v405, %v387
      %v414 = vsel %vm401, %v406, %v390
      %v415 = vsel %vm401, %v407, %v392
      %v416 = vsel %vm401, %v408, %v395
      %v417 = vsel %vm401, %v409, %v397
      %v418 = vpack.c.bf16 %v410, %v410
      %v419 = vpack.c.bf16 %v411, %v411
      %v420 = vpack.c.bf16 %v412, %v412
      %v421 = vpack.c.bf16 %v413, %v413
      %v422 = vpack.c.bf16 %v414, %v414
      %v423 = vpack.c.bf16 %v415, %v415
      %v424 = vpack.c.bf16 %v416, %v416
      %v425 = vpack.c.bf16 %v417, %v417
      %vm426 = vcmask 519168
      %427 = vst.msk [vmem:[%s175] sm:$0xf] %vm426, %v418
      %428 = vst.msk [vmem:[%s175 + $0x4] sm:$0xf] %vm426, %v419
      %429 = vst.msk [vmem:[%s175 + $0x8] sm:$0xf] %vm426, %v420
      %430 = vst.msk [vmem:[%s175 + $0xc] sm:$0xf] %vm426, %v421
      %431 = vst.msk [vmem:[%s175 + $0x10] sm:$0xf] %vm426, %v422
      %432 = vst.msk [vmem:[%s175 + $0x14] sm:$0xf] %vm426, %v423
      %433 = vst.msk [vmem:[%s175 + $0x18] sm:$0xf] %vm426, %v424
      %434 = vst.msk [vmem:[%s175 + $0x1c] sm:$0xf] %vm426, %v425
      %s435 = smul.u32 8, %s14
      %p436 = scmp.lt.s32.totalorder %s435, 15
      %s437 = scalar_select %p436, %s435, 15
      %s438 = smul.addr %s437, 4
      %s439 = scalar_lea.vmem %s3, %s438
      // Predicated region
      $region33: #{psm_gnn_forward.20} parent=31 // pred_check
        %p440 = pneg %p100
      $region34: #{psm_gnn_forward.20} parent=31 // pred_check_branch
        %442 = sbr.rel (%p440) target = $region36
      $region35: #{psm_gnn_forward.20} parent=31 // pred_region
        %s443 = smul.u32 8, %s14
      $region36: #{psm_gnn_forward.20} parent=31 // pred_fallthru
        _
    $region32: #{psm_gnn_forward.20} parent=5 // pred_fallthru
      _
    %p444 = scmp.le.s32.totalorder 2, %s9
    // Predicated region
    $region37: #{psm_gnn_forward.20} parent=5 // pred_check
      %p445 = pneg %p444
    $region38: #{psm_gnn_forward.20} parent=5 // pred_check_branch
      %447 = sbr.rel (%p445) target = $region40
    $region39: #{psm_gnn_forward.20} parent=5 // pred_region
      %s448 = ssub.s32 %s9, 2
      // Predicated region
      $region41: #{psm_gnn_forward.20} parent=39 // pred_check
        %p449 = pneg %p106
      $region42: #{psm_gnn_forward.20} parent=39 // pred_check_branch
        %451 = sbr.rel (%p449) target = $region44
      $region43: #{psm_gnn_forward.20} parent=39 // pred_region
        %s452 = smul.u32 8, %s15
        %p453 = scmp.lt.s32.totalorder %s452, 15
        %s454 = scalar_select %p453, %s452, 15
        %s455 = smul.addr %s454, 4
        %s456 = scalar_lea.vmem %s3, %s455
      $region44: #{psm_gnn_forward.20} parent=39 // pred_fallthru
        _
    $region40: #{psm_gnn_forward.20} parent=5 // pred_fallthru
      _
  $region6: #{psm_gnn_forward.20} parent=0 // loop_footer
    %s13 = sadd.s32 1, %s9
  $region7: #{psm_gnn_forward.20} parent=0 // loop_footer_branch
    %8 = sbr.rel target = $region3
  $region8: #{psm_gnn_forward.20} parent=0 // loop_exit
    _

// kernel: psm_gnn_forward.22
$region0: #{psm_gnn_forward.22}
  #allocation0 [shape = 'u32[]', space=smem, size = 0x4, offset = 0x4, fixed_abs, tag = 'smem constant byte address 0x4 - core index']
  #allocation1 [shape = 'u32[72,128]{1,0:T(1,128)}', space=vmem, size = 0x9000, scoped, tag = 'internal scratch']
  %s0 = inlined_call_operand.vmem [shape: bf16[128,864], index: 0, kind: input, shape index: {}]
  %s1 = inlined_call_operand.vmem [shape: bf16[864,32], index: 1, kind: input, shape index: {}]
  %s2 = inlined_call_operand.vmem [shape: f32[1,32], index: 2, kind: input, shape index: {}]
  %s3 = inlined_call_operand.vmem [shape: bf16[128,32], index: 3, kind: output, shape index: {}]
  %s4 = sld [smem:[#allocation0]]
  $region45: #{psm_gnn_forward.22} parent=0
    _
  %s6 = ssub.s32 1, %s4
  %s7 = scalar_select 0, %s6, %s4
  loop: start=0, step=1, limit=4
  $region2: #{psm_gnn_forward.22} parent=0 // loop_pre_header
    _
  $region3: #{psm_gnn_forward.22} parent=0 // loop_header
    %s9 = sphi 0, %s13
    %p10 = scmp.ge.s32.totalorder %s9, 4
    %s19 = sphi 0, %s21
    %s22 = sphi 0, %s19
    %s23 = sphi 0, %s22
    %s39 = sphi 0, %s23
    %s43 = sphi 0, %s43
    %s45 = sphi 0, %s43
    %s46 = sphi 0, %s45
    %s60 = sphi 0, %s46
    %s64 = sphi 0, %s64
    %s66 = sphi 0, %s64
    %s67 = sphi 0, %s66
    %s81 = sphi 0, %s67
    %s87 = sphi 0, %s89
    %s90 = sphi 0, %s87
    %s91 = sphi 0, %s90
    %s107 = sphi 0, %s91
  $region4: #{psm_gnn_forward.22} parent=0 // loop_header_branch
    %12 = sbr.rel (%p10) target = $region8
  $region5: #{psm_gnn_forward.22} parent=0 // loop_body
    %s14 = ssub.s32 %s9, 1
    %s15 = ssub.s32 %s9, 2
    %s16 = sadd.s32 %s9, 1
    %s17 = ssub.s32 %s9, %s16
    %p18 = scmp.eq.s32.totalorder %s17, 0
    %s20 = sadd.s32 %s19, 1
    %s21 = scalar_select %p18, %s19, %s20
    %p24 = pneg %p18
    %p25 = scmp.eq.s32.totalorder %s9, 1
    %p26 = por %p24, %p25
    %p27 = scmp.ne.s32.totalorder %s19, %s22
    %p28 = scmp.eq.s32.totalorder %s9, 0
    %p29 = por %p27, %p28
    %p30 = scmp.ne.s32.totalorder %s19, %s22
    %p31 = scmp.eq.s32.totalorder %s14, 1
    %p32 = por %p30, %p31
    %p33 = scmp.ne.s32.totalorder %s22, %s23
    %p34 = scmp.eq.s32.totalorder %s14, 0
    %p35 = por %p33, %p34
    %p36 = scmp.ne.s32.totalorder %s22, %s23
    %p37 = scmp.eq.s32.totalorder %s15, 1
    %p38 = por %p36, %p37
    %p40 = scmp.ne.s32.totalorder %s23, %s39
    %p41 = scmp.eq.s32.totalorder %s15, 0
    %p42 = por %p40, %p41
    %s44 = sadd.s32 %s43, 1
    %p47 = scmp.eq.s32.totalorder %s9, 1
    %p48 = scmp.ne.s32.totalorder %s43, %s45
    %p49 = scmp.eq.s32.totalorder %s9, 0
    %p50 = por %p48, %p49
    %p51 = scmp.ne.s32.totalorder %s43, %s45
    %p52 = scmp.eq.s32.totalorder %s14, 1
    %p53 = por %p51, %p52
    %p54 = scmp.ne.s32.totalorder %s45, %s46
    %p55 = scmp.eq.s32.totalorder %s14, 0
    %p56 = por %p54, %p55
    %p57 = scmp.ne.s32.totalorder %s45, %s46
    %p58 = scmp.eq.s32.totalorder %s15, 1
    %p59 = por %p57, %p58
    %p61 = scmp.ne.s32.totalorder %s46, %s60
    %p62 = scmp.eq.s32.totalorder %s15, 0
    %p63 = por %p61, %p62
    %s65 = sadd.s32 %s64, 1
    %p68 = scmp.eq.s32.totalorder %s9, 1
    %p69 = scmp.ne.s32.totalorder %s64, %s66
    %p70 = scmp.eq.s32.totalorder %s9, 0
    %p71 = por %p69, %p70
    %p72 = scmp.ne.s32.totalorder %s64, %s66
    %p73 = scmp.eq.s32.totalorder %s14, 1
    %p74 = por %p72, %p73
    %p75 = scmp.ne.s32.totalorder %s66, %s67
    %p76 = scmp.eq.s32.totalorder %s14, 0
    %p77 = por %p75, %p76
    %p78 = scmp.ne.s32.totalorder %s66, %s67
    %p79 = scmp.eq.s32.totalorder %s15, 1
    %p80 = por %p78, %p79
    %p82 = scmp.ne.s32.totalorder %s67, %s81
    %p83 = scmp.eq.s32.totalorder %s15, 0
    %p84 = por %p82, %p83
    %s85 = ssub.s32 %s9, %s16
    %p86 = scmp.eq.s32.totalorder %s85, 0
    %s88 = sadd.s32 %s87, 1
    %s89 = scalar_select %p86, %s87, %s88
    %p92 = pneg %p86
    %p93 = scmp.eq.s32.totalorder %s9, 1
    %p94 = por %p92, %p93
    %p95 = scmp.ne.s32.totalorder %s87, %s90
    %p96 = scmp.eq.s32.totalorder %s9, 0
    %p97 = por %p95, %p96
    %p98 = scmp.ne.s32.totalorder %s87, %s90
    %p99 = scmp.eq.s32.totalorder %s14, 1
    %p100 = por %p98, %p99
    %p101 = scmp.ne.s32.totalorder %s90, %s91
    %p102 = scmp.eq.s32.totalorder %s14, 0
    %p103 = por %p101, %p102
    %p104 = scmp.ne.s32.totalorder %s90, %s91
    %p105 = scmp.eq.s32.totalorder %s15, 1
    %p106 = por %p104, %p105
    %p108 = scmp.ne.s32.totalorder %s91, %s107
    %p109 = scmp.eq.s32.totalorder %s15, 0
    %p110 = por %p108, %p109
    %p111 = scmp.le.s32.totalorder 1, %s9
    %p112 = scmp.lt.s32.totalorder %s9, 3
    %p113 = pnand %p111, %p112
    %p114 = pneg %p113
    // Predicated region
    $region9: #{psm_gnn_forward.22} parent=5 // pred_check
      _
    $region10: #{psm_gnn_forward.22} parent=5 // pred_check_branch
      %116 = sbr.rel (%p113) target = $region12
    $region11: #{psm_gnn_forward.22} parent=5 // pred_region
      %s117 = ssub.s32 %s9, 1
      // Predicated region
      $region13: #{psm_gnn_forward.22} parent=11 // pred_check
        %p118 = pneg %p56
      $region14: #{psm_gnn_forward.22} parent=11 // pred_check_branch
        %120 = sbr.rel (%p118) target = $region16
      $region15: #{psm_gnn_forward.22} parent=11 // pred_region
        _
      $region16: #{psm_gnn_forward.22} parent=11 // pred_fallthru
        _
      // Predicated region
      $region17: #{psm_gnn_forward.22} parent=11 // pred_check
        %p121 = pneg %p77
      $region18: #{psm_gnn_forward.22} parent=11 // pred_check_branch
        %123 = sbr.rel (%p121) target = $region20
      $region19: #{psm_gnn_forward.22} parent=11 // pred_region
        _
      $region20: #{psm_gnn_forward.22} parent=11 // pred_fallthru
        _
    $region12: #{psm_gnn_forward.22} parent=5 // pred_fallthru
      _
    %p124 = scmp.lt.s32.totalorder %s9, 2
    // Predicated region
    $region21: #{psm_gnn_forward.22} parent=5 // pred_check
      %p125 = pneg %p124
    $region22: #{psm_gnn_forward.22} parent=5 // pred_check_branch
      %127 = sbr.rel (%p125) target = $region24
    $region23: #{psm_gnn_forward.22} parent=5 // pred_region
      // Predicated region
      $region25: #{psm_gnn_forward.22} parent=23 // pred_check
        %p128 = pneg %p29
      $region26: #{psm_gnn_forward.22} parent=23 // pred_check_branch
        %130 = sbr.rel (%p128) target = $region28
      $region27: #{psm_gnn_forward.22} parent=23 // pred_region
        %s131 = smul.u32 8, %s9
        %p132 = scmp.lt.s32.totalorder %s131, 15
        %s133 = scalar_select %p132, %s131, 15
        %s134 = smul.addr %s133, 7
        %s135 = smul.addr %s134, 4
        %s136 = scalar_lea.vmem %s0, %s135
        %s137 = smul.u32 8, %s9
      $region28: #{psm_gnn_forward.22} parent=23 // pred_fallthru
        _
    $region24: #{psm_gnn_forward.22} parent=5 // pred_fallthru
      _
    %p138 = scmp.le.s32.totalorder 1, %s9
    %p139 = scmp.lt.s32.totalorder %s9, 3
    %p140 = pnand %p138, %p139
    %p141 = pneg %p140
    // Predicated region
    $region29: #{psm_gnn_forward.22} parent=5 // pred_check
      _
    $region30: #{psm_gnn_forward.22} parent=5 // pred_check_branch
      %143 = sbr.rel (%p140) target = $region32
    $region31: #{psm_gnn_forward.22} parent=5 // pred_region
      %s144 = ssub.s32 %s9, 1
      %s145 = smul.u32 8, %s14
      %p146 = scmp.lt.s32.totalorder %s145, 15
      %s147 = scalar_select %p146, %s145, 15
      %s148 = smul.addr %s147, 7
      %s149 = smul.addr %s148, 4
      %s150 = scalar_lea.vmem %s0, %s149
      %p151 = pneg %p35
      %p152 = pneg %p32
      %p153 = pneg %p56
      %p154 = pneg %p53
      %p155 = pneg %p77
      %p156 = pneg %p74
      %p157 = pneg %p103
      %p158 = pneg %p100
      %s159 = smul.u32 8, %s14
      %p160 = scmp.lt.s32.totalorder %s159, 15
      %s161 = scalar_select %p160, %s159, 15
      %s162 = smul.addr %s161, 4
      %s163 = scalar_lea.vmem %s3, %s162
      %s164 = smul.u32 8, %s14
      %p165 = scmp.lt.s32.totalorder %s164, 15
      %s166 = scalar_select %p165, %s164, 15
      %s167 = smul.addr %s166, 7
      %s168 = smul.addr %s167, 4
      %s169 = scalar_lea.vmem %s0, %s168
      %s170 = smul.u32 8, %s14
      %s171 = smul.u32 8, %s14
      %p172 = scmp.lt.s32.totalorder %s171, 15
      %s173 = scalar_select %p172, %s171, 15
      %s174 = smul.addr %s173, 4
      %s175 = scalar_lea.vmem %s3, %s174
      %s176 = smul.u32 8, %s14
      %v178 = vld [vmem:[%s169] sm:$0xff]
      %v179 = vld [vmem:[%s169 + $0x8] sm:$0xff]
      %v180 = vld [vmem:[%s169 + $0x10] sm:$0xff]
      %v181 = vld [vmem:[%s169 + $0x18] sm:$0xf]
      %v182 = vld [vmem:[%s169 + $0x1c] sm:$0xff]
      %v183 = vld [vmem:[%s169 + $0x24] sm:$0xff]
      %v184 = vld [vmem:[%s169 + $0x2c] sm:$0xff]
      %v185 = vld [vmem:[%s169 + $0x34] sm:$0xf]
      %v186 = vld [vmem:[%s169 + $0x38] sm:$0xff]
      %v187 = vld [vmem:[%s169 + $0x40] sm:$0xff]
      %v188 = vld [vmem:[%s169 + $0x48] sm:$0xff]
      %v189 = vld [vmem:[%s169 + $0x50] sm:$0xf]
      %v190 = vld [vmem:[%s169 + $0x54] sm:$0xff]
      %v191 = vld [vmem:[%s169 + $0x5c] sm:$0xff]
      %v192 = vld [vmem:[%s169 + $0x64] sm:$0xff]
      %v193 = vld [vmem:[%s169 + $0x6c] sm:$0xf]
      %v194 = vld [vmem:[%s169 + $0x70] sm:$0xff]
      %v195 = vld [vmem:[%s169 + $0x78] sm:$0xff]
      %v196 = vld [vmem:[%s169 + $0x80] sm:$0xff]
      %v197 = vld [vmem:[%s169 + $0x88] sm:$0xf]
      %v198 = vld [vmem:[%s169 + $0x8c] sm:$0xff]
      %v199 = vld [vmem:[%s169 + $0x94] sm:$0xff]
      %v200 = vld [vmem:[%s169 + $0x9c] sm:$0xff]
      %v201 = vld [vmem:[%s169 + $0xa4] sm:$0xf]
      %v202 = vld [vmem:[%s169 + $0xa8] sm:$0xff]
      %v203 = vld [vmem:[%s169 + $0xb0] sm:$0xff]
      %v204 = vld [vmem:[%s169 + $0xb8] sm:$0xff]
      %v205 = vld [vmem:[%s169 + $0xc0] sm:$0xf]
      %v206 = vld [vmem:[%s169 + $0xc4] sm:$0xff]
      %v207 = vld [vmem:[%s169 + $0xcc] sm:$0xff]
      %v208 = vld [vmem:[%s169 + $0xd4] sm:$0xff]
      %v209 = vld [vmem:[%s169 + $0xdc] sm:$0xf]
      %v210 = vld [vmem:[%s1] sm:$0xf]
      %v211 = vld [vmem:[%s1 + $0x4] sm:$0xf]
      %v212 = vld [vmem:[%s1 + $0x8] sm:$0xf]
      %v213 = vld [vmem:[%s1 + $0xc] sm:$0xf]
      %v214 = vld [vmem:[%s1 + $0x10] sm:$0xf]
      %v215 = vld [vmem:[%s1 + $0x14] sm:$0xf]
      %v216 = vld [vmem:[%s1 + $0x18] sm:$0xf]
      %v217 = vld [vmem:[%s1 + $0x1c] sm:$0xf]
      %v218 = vld [vmem:[%s1 + $0x20] sm:$0xf]
      %v219 = vld [vmem:[%s1 + $0x24] sm:$0xf]
      %v220 = vld [vmem:[%s1 + $0x28] sm:$0xf]
      %v221 = vld [vmem:[%s1 + $0x2c] sm:$0xf]
      %v222 = vld [vmem:[%s1 + $0x30] sm:$0xf]
      %v223 = vld [vmem:[%s1 + $0x34] sm:$0xf]
      %v224 = vld [vmem:[%s1 + $0x38] sm:$0xf]
      %v225 = vld [vmem:[%s1 + $0x3c] sm:$0xf]
      %v226 = vld [vmem:[%s1 + $0x40] sm:$0xf]
      %v227 = vld [vmem:[%s1 + $0x44] sm:$0xf]
      %v228 = vld [vmem:[%s1 + $0x48] sm:$0xf]
      %v229 = vld [vmem:[%s1 + $0x4c] sm:$0xf]
      %v230 = vld [vmem:[%s1 + $0x50] sm:$0xf]
      %v231 = vld [vmem:[%s1 + $0x54] sm:$0xf]
      %v232 = vld [vmem:[%s1 + $0x58] sm:$0xf]
      %v233 = vld [vmem:[%s1 + $0x5c] sm:$0xf]
      %v234 = vld [vmem:[%s1 + $0x60] sm:$0xf]
      %v235 = vld [vmem:[%s1 + $0x64] sm:$0xf]
      %v236 = vld [vmem:[%s1 + $0x68] sm:$0xf]
      %v237 = vld [vmem:[%s1 + $0x6c] sm:$0xf]
      %v238 = vld [vmem:[%s1 + $0x70] sm:$0xf]
      %v239 = vld [vmem:[%s1 + $0x74] sm:$0xf]
      %v240 = vld [vmem:[%s1 + $0x78] sm:$0xf]
      %v241 = vld [vmem:[%s1 + $0x7c] sm:$0xf]
      %v242 = vld [vmem:[%s1 + $0x80] sm:$0xf]
      %v243 = vld [vmem:[%s1 + $0x84] sm:$0xf]
      %v244 = vld [vmem:[%s1 + $0x88] sm:$0xf]
      %v245 = vld [vmem:[%s1 + $0x8c] sm:$0xf]
      %v246 = vld [vmem:[%s1 + $0x90] sm:$0xf]
      %v247 = vld [vmem:[%s1 + $0x94] sm:$0xf]
      %v248 = vld [vmem:[%s1 + $0x98] sm:$0xf]
      %v249 = vld [vmem:[%s1 + $0x9c] sm:$0xf]
      %v250 = vld [vmem:[%s1 + $0xa0] sm:$0xf]
      %v251 = vld [vmem:[%s1 + $0xa4] sm:$0xf]
      %v252 = vld [vmem:[%s1 + $0xa8] sm:$0xf]
      %v253 = vld [vmem:[%s1 + $0xac] sm:$0xf]
      %v254 = vld [vmem:[%s1 + $0xb0] sm:$0xf]
      %v255 = vld [vmem:[%s1 + $0xb4] sm:$0xf]
      %v256 = vld [vmem:[%s1 + $0xb8] sm:$0xf]
      %v257 = vld [vmem:[%s1 + $0xbc] sm:$0xf]
      %v258 = vld [vmem:[%s1 + $0xc0] sm:$0xf]
      %v259 = vld [vmem:[%s1 + $0xc4] sm:$0xf]
      %v260 = vld [vmem:[%s1 + $0xc8] sm:$0xf]
      %v261 = vld [vmem:[%s1 + $0xcc] sm:$0xf]
      %v262 = vld [vmem:[%s1 + $0xd0] sm:$0xf]
      %v263 = vld [vmem:[%s1 + $0xd4] sm:$0xf]
      %v264 = vld [vmem:[%s1 + $0xd8] sm:$0xf]
      %v265 = vld [vmem:[%s1 + $0xdc] sm:$0xf]
      %v266 = vld [vmem:[%s1 + $0xe0] sm:$0xf]
      %v267 = vld [vmem:[%s1 + $0xe4] sm:$0xf]
      %v268 = vld [vmem:[%s1 + $0xe8] sm:$0xf]
      %v269 = vld [vmem:[%s1 + $0xec] sm:$0xf]
      %v270 = vld [vmem:[%s1 + $0xf0] sm:$0xf]
      %v271 = vld [vmem:[%s1 + $0xf4] sm:$0xf]
      %v272 = vld [vmem:[%s1 + $0xf8] sm:$0xf]
      %v273 = vld [vmem:[%s1 + $0xfc] sm:$0xf]
      %v274 = vld [vmem:[%s1 + $0x100] sm:$0xf]
      %v275 = vld [vmem:[%s1 + $0x104] sm:$0xf]
      %v276 = vld [vmem:[%s1 + $0x108] sm:$0xf]
      %v277 = vld [vmem:[%s1 + $0x10c] sm:$0xf]
      %v278 = vld [vmem:[%s1 + $0x110] sm:$0xf]
      %v279 = vld [vmem:[%s1 + $0x114] sm:$0xf]
      %v280 = vld [vmem:[%s1 + $0x118] sm:$0xf]
      %v281 = vld [vmem:[%s1 + $0x11c] sm:$0xf]
      %v282 = vld [vmem:[%s1 + $0x120] sm:$0xf]
      %v283 = vld [vmem:[%s1 + $0x124] sm:$0xf]
      %v284 = vld [vmem:[%s1 + $0x128] sm:$0xf]
      %v285 = vld [vmem:[%s1 + $0x12c] sm:$0xf]
      %v286 = vld [vmem:[%s1 + $0x130] sm:$0xf]
      %v287 = vld [vmem:[%s1 + $0x134] sm:$0xf]
      %v288 = vld [vmem:[%s1 + $0x138] sm:$0xf]
      %v289 = vld [vmem:[%s1 + $0x13c] sm:$0xf]
      %v290 = vld [vmem:[%s1 + $0x140] sm:$0xf]
      %v291 = vld [vmem:[%s1 + $0x144] sm:$0xf]
      %v292 = vld [vmem:[%s1 + $0x148] sm:$0xf]
      %v293 = vld [vmem:[%s1 + $0x14c] sm:$0xf]
      %v294 = vld [vmem:[%s1 + $0x150] sm:$0xf]
      %v295 = vld [vmem:[%s1 + $0x154] sm:$0xf]
      %v296 = vld [vmem:[%s1 + $0x158] sm:$0xf]
      %v297 = vld [vmem:[%s1 + $0x15c] sm:$0xf]
      %v298 = vld [vmem:[%s1 + $0x160] sm:$0xf]
      %v299 = vld [vmem:[%s1 + $0x164] sm:$0xf]
      %v300 = vld [vmem:[%s1 + $0x168] sm:$0xf]
      %v301 = vld [vmem:[%s1 + $0x16c] sm:$0xf]
      %v302 = vld [vmem:[%s1 + $0x170] sm:$0xf]
      %v303 = vld [vmem:[%s1 + $0x174] sm:$0xf]
      %v304 = vld [vmem:[%s1 + $0x178] sm:$0xf]
      %v305 = vld [vmem:[%s1 + $0x17c] sm:$0xf]
      %v306 = vld [vmem:[%s1 + $0x180] sm:$0xf]
      %v307 = vld [vmem:[%s1 + $0x184] sm:$0xf]
      %v308 = vld [vmem:[%s1 + $0x188] sm:$0xf]
      %v309 = vld [vmem:[%s1 + $0x18c] sm:$0xf]
      %v310 = vld [vmem:[%s1 + $0x190] sm:$0xf]
      %v311 = vld [vmem:[%s1 + $0x194] sm:$0xf]
      %v312 = vld [vmem:[%s1 + $0x198] sm:$0xf]
      %v313 = vld [vmem:[%s1 + $0x19c] sm:$0xf]
      %v314 = vld [vmem:[%s1 + $0x1a0] sm:$0xf]
      %v315 = vld [vmem:[%s1 + $0x1a4] sm:$0xf]
      %v316 = vld [vmem:[%s1 + $0x1a8] sm:$0xf]
      %v317 = vld [vmem:[%s1 + $0x1ac] sm:$0xf]
      %v318 = vld [vmem:[%s2] sm:$0x1]
      %v320 = vperm.slane %v318, 0
      %v354 = vunpack.c.l.b16 %v178
      %v355 = vunpack.c.h.b16 %v178
      %v356 = vunpack.c.l.b16 %v179
      %v357 = vunpack.c.h.b16 %v179
      %v358 = vunpack.c.l.b16 %v180
      %v359 = vunpack.c.h.b16 %v180
      %v360 = vunpack.c.l.b16 %v181
      %v361 = vunpack.c.l.b16 %v182
      %v362 = vunpack.c.h.b16 %v182
      %v363 = vunpack.c.l.b16 %v183
      %v364 = vunpack.c.h.b16 %v183
      %v365 = vunpack.c.l.b16 %v184
      %v366 = vunpack.c.h.b16 %v184
      %v367 = vunpack.c.l.b16 %v185
      %v368 = vunpack.c.l.b16 %v186
      %v369 = vunpack.c.h.b16 %v186
      %v370 = vunpack.c.l.b16 %v187
      %v371 = vunpack.c.h.b16 %v187
      %v372 = vunpack.c.l.b16 %v188
      %v373 = vunpack.c.h.b16 %v188
      %v374 = vunpack.c.l.b16 %v189
      %v375 = vunpack.c.l.b16 %v190
      %v376 = vunpack.c.h.b16 %v190
      %v377 = vunpack.c.l.b16 %v191
      %v378 = vunpack.c.h.b16 %v191
      %v379 = vunpack.c.l.b16 %v192
      %v380 = vunpack.c.h.b16 %v192
      %v381 = vunpack.c.l.b16 %v193
      %v382 = vunpack.c.l.b16 %v194
      %v383 = vunpack.c.h.b16 %v194
      %v384 = vunpack.c.l.b16 %v195
      %v385 = vunpack.c.h.b16 %v195
      %v386 = vunpack.c.l.b16 %v196
      %v387 = vunpack.c.h.b16 %v196
      %v388 = vunpack.c.l.b16 %v197
      %v389 = vunpack.c.l.b16 %v198
      %v390 = vunpack.c.h.b16 %v198
      %v391 = vunpack.c.l.b16 %v199
      %v392 = vunpack.c.h.b16 %v199
      %v393 = vunpack.c.l.b16 %v200
      %v394 = vunpack.c.h.b16 %v200
      %v395 = vunpack.c.l.b16 %v201
      %v396 = vunpack.c.l.b16 %v202
      %v397 = vunpack.c.h.b16 %v202
      %v398 = vunpack.c.l.b16 %v203
      %v399 = vunpack.c.h.b16 %v203
      %v400 = vunpack.c.l.b16 %v204
      %v401 = vunpack.c.h.b16 %v204
      %v402 = vunpack.c.l.b16 %v205
      %v403 = vunpack.c.l.b16 %v206
      %v404 = vunpack.c.h.b16 %v206
      %v405 = vunpack.c.l.b16 %v207
      %v406 = vunpack.c.h.b16 %v207
      %v407 = vunpack.c.l.b16 %v208
      %v408 = vunpack.c.h.b16 %v208
      %v409 = vunpack.c.l.b16 %v209
      %v410 = vpack.c.b16 %v361, %v354
      %v411 = vpack.c.b16 %v362, %v355
      %v412 = vpack.c.b16 %v363, %v356
      %v413 = vpack.c.b16 %v364, %v357
      %v414 = vpack.c.b16 %v365, %v358
      %v415 = vpack.c.b16 %v366, %v359
      %v416 = vpack.c.b16 %v367, %v360
      %v417 = vpack.c.b16 %v375, %v368
      %v418 = vpack.c.b16 %v376, %v369
      %v419 = vpack.c.b16 %v377, %v370
      %v420 = vpack.c.b16 %v378, %v371
      %v421 = vpack.c.b16 %v379, %v372
      %v422 = vpack.c.b16 %v380, %v373
      %v423 = vpack.c.b16 %v381, %v374
      %v424 = vpack.c.b16 %v389, %v382
      %v425 = vpack.c.b16 %v390, %v383
      %v426 = vpack.c.b16 %v391, %v384
      %v427 = vpack.c.b16 %v392, %v385
      %v428 = vpack.c.b16 %v393, %v386
      %v429 = vpack.c.b16 %v394, %v387
      %v430 = vpack.c.b16 %v395, %v388
      %v431 = vpack.c.b16 %v403, %v396
      %v432 = vpack.c.b16 %v404, %v397
      %v433 = vpack.c.b16 %v405, %v398
      %v434 = vpack.c.b16 %v406, %v399
      %v435 = vpack.c.b16 %v407, %v400
      %v436 = vpack.c.b16 %v408, %v401
      %v437 = vpack.c.b16 %v409, %v402
      %v570 = vunpack.c.l.b16 %v210
      %v571 = vunpack.c.l.b16 %v211
      %v572 = vunpack.c.l.b16 %v212
      %v573 = vunpack.c.l.b16 %v213
      %v574 = vunpack.c.l.b16 %v214
      %v575 = vunpack.c.l.b16 %v215
      %v576 = vunpack.c.l.b16 %v216
      %v577 = vunpack.c.l.b16 %v217
      %v578 = vunpack.c.l.b16 %v218
      %v579 = vunpack.c.l.b16 %v219
      %v580 = vunpack.c.l.b16 %v220
      %v581 = vunpack.c.l.b16 %v221
      %v582 = vunpack.c.l.b16 %v222
      %v583 = vunpack.c.l.b16 %v223
      %v584 = vunpack.c.l.b16 %v224
      %v585 = vunpack.c.l.b16 %v225
      %v586 = vunpack.c.l.b16 %v226
      %v587 = vunpack.c.l.b16 %v227
      %v588 = vunpack.c.l.b16 %v228
      %v589 = vunpack.c.l.b16 %v229
      %v590 = vunpack.c.l.b16 %v230
      %v591 = vunpack.c.l.b16 %v231
      %v592 = vunpack.c.l.b16 %v232
      %v593 = vunpack.c.l.b16 %v233
      %v594 = vunpack.c.l.b16 %v234
      %v595 = vunpack.c.l.b16 %v235
      %v596 = vunpack.c.l.b16 %v236
      %v597 = vunpack.c.l.b16 %v237
      %v598 = vunpack.c.l.b16 %v238
      %v599 = vunpack.c.l.b16 %v239
      %v600 = vunpack.c.l.b16 %v240
      %v601 = vunpack.c.l.b16 %v241
      %v602 = vunpack.c.l.b16 %v242
      %v603 = vunpack.c.l.b16 %v243
      %v604 = vunpack.c.l.b16 %v244
      %v605 = vunpack.c.l.b16 %v245
      %v606 = vunpack.c.l.b16 %v246
      %v607 = vunpack.c.l.b16 %v247
      %v608 = vunpack.c.l.b16 %v248
      %v609 = vunpack.c.l.b16 %v249
      %v610 = vunpack.c.l.b16 %v250
      %v611 = vunpack.c.l.b16 %v251
      %v612 = vunpack.c.l.b16 %v252
      %v613 = vunpack.c.l.b16 %v253
      %v614 = vunpack.c.l.b16 %v254
      %v615 = vunpack.c.l.b16 %v255
      %v616 = vunpack.c.l.b16 %v256
      %v617 = vunpack.c.l.b16 %v257
      %v618 = vunpack.c.l.b16 %v258
      %v619 = vunpack.c.l.b16 %v259
      %v620 = vunpack.c.l.b16 %v260
      %v621 = vunpack.c.l.b16 %v261
      %v622 = vunpack.c.l.b16 %v262
      %v623 = vunpack.c.l.b16 %v263
      %v624 = vunpack.c.l.b16 %v264
      %v625 = vunpack.c.l.b16 %v265
      %v626 = vunpack.c.l.b16 %v266
      %v627 = vunpack.c.l.b16 %v267
      %v628 = vunpack.c.l.b16 %v268
      %v629 = vunpack.c.l.b16 %v269
      %v630 = vunpack.c.l.b16 %v270
      %v631 = vunpack.c.l.b16 %v271
      %v632 = vunpack.c.l.b16 %v272
      %v633 = vunpack.c.l.b16 %v273
      %v634 = vunpack.c.l.b16 %v274
      %v635 = vunpack.c.l.b16 %v275
      %v636 = vunpack.c.l.b16 %v276
      %v637 = vunpack.c.l.b16 %v277
      %v638 = vunpack.c.l.b16 %v278
      %v639 = vunpack.c.l.b16 %v279
      %v640 = vunpack.c.l.b16 %v280
      %v641 = vunpack.c.l.b16 %v281
      %v642 = vunpack.c.l.b16 %v282
      %v643 = vunpack.c.l.b16 %v283
      %v644 = vunpack.c.l.b16 %v284
      %v645 = vunpack.c.l.b16 %v285
      %v646 = vunpack.c.l.b16 %v286
      %v647 = vunpack.c.l.b16 %v287
      %v648 = vunpack.c.l.b16 %v288
      %v649 = vunpack.c.l.b16 %v289
      %v650 = vunpack.c.l.b16 %v290
      %v651 = vunpack.c.l.b16 %v291
      %v652 = vunpack.c.l.b16 %v292
      %v653 = vunpack.c.l.b16 %v293
      %v654 = vunpack.c.l.b16 %v294
      %v655 = vunpack.c.l.b16 %v295
      %v656 = vunpack.c.l.b16 %v296
      %v657 = vunpack.c.l.b16 %v297
      %v658 = vunpack.c.l.b16 %v298
      %v659 = vunpack.c.l.b16 %v299
      %v660 = vunpack.c.l.b16 %v300
      %v661 = vunpack.c.l.b16 %v301
      %v662 = vunpack.c.l.b16 %v302
      %v663 = vunpack.c.l.b16 %v303
      %v664 = vunpack.c.l.b16 %v304
      %v665 = vunpack.c.l.b16 %v305
      %v666 = vunpack.c.l.b16 %v306
      %v667 = vunpack.c.l.b16 %v307
      %v668 = vunpack.c.l.b16 %v308
      %v669 = vunpack.c.l.b16 %v309
      %v670 = vunpack.c.l.b16 %v310
      %v671 = vunpack.c.l.b16 %v311
      %v672 = vunpack.c.l.b16 %v312
      %v673 = vunpack.c.l.b16 %v313
      %v674 = vunpack.c.l.b16 %v314
      %v675 = vunpack.c.l.b16 %v315
      %v676 = vunpack.c.l.b16 %v316
      %v677 = vunpack.c.l.b16 %v317
      %v678 = vpack.c.b16 %v571, %v570
      %v679 = vpack.c.b16 %v573, %v572
      %v680 = vpack.c.b16 %v575, %v574
      %v681 = vpack.c.b16 %v577, %v576
      %v682 = vpack.c.b16 %v579, %v578
      %v683 = vpack.c.b16 %v581, %v580
      %v684 = vpack.c.b16 %v583, %v582
      %v685 = vpack.c.b16 %v585, %v584
      %v686 = vpack.c.b16 %v587, %v586
      %v687 = vpack.c.b16 %v589, %v588
      %v688 = vpack.c.b16 %v591, %v590
      %v689 = vpack.c.b16 %v593, %v592
      %v690 = vpack.c.b16 %v595, %v594
      %v691 = vpack.c.b16 %v597, %v596
      %v692 = vpack.c.b16 %v599, %v598
      %v693 = vpack.c.b16 %v601, %v600
      %v694 = vpack.c.b16 %v603, %v602
      %v695 = vpack.c.b16 %v605, %v604
      %v696 = vpack.c.b16 %v607, %v606
      %v697 = vpack.c.b16 %v609, %v608
      %v698 = vpack.c.b16 %v611, %v610
      %v699 = vpack.c.b16 %v613, %v612
      %v700 = vpack.c.b16 %v615, %v614
      %v701 = vpack.c.b16 %v617, %v616
      %v702 = vpack.c.b16 %v619, %v618
      %v703 = vpack.c.b16 %v621, %v620
      %v704 = vpack.c.b16 %v623, %v622
      %v705 = vpack.c.b16 %v625, %v624
      %v706 = vpack.c.b16 %v627, %v626
      %v707 = vpack.c.b16 %v629, %v628
      %v708 = vpack.c.b16 %v631, %v630
      %v709 = vpack.c.b16 %v633, %v632
      %v710 = vpack.c.b16 %v635, %v634
      %v711 = vpack.c.b16 %v637, %v636
      %v712 = vpack.c.b16 %v639, %v638
      %v713 = vpack.c.b16 %v641, %v640
      %v714 = vpack.c.b16 %v643, %v642
      %v715 = vpack.c.b16 %v645, %v644
      %v716 = vpack.c.b16 %v647, %v646
      %v717 = vpack.c.b16 %v649, %v648
      %v718 = vpack.c.b16 %v651, %v650
      %v719 = vpack.c.b16 %v653, %v652
      %v720 = vpack.c.b16 %v655, %v654
      %v721 = vpack.c.b16 %v657, %v656
      %v722 = vpack.c.b16 %v659, %v658
      %v723 = vpack.c.b16 %v661, %v660
      %v724 = vpack.c.b16 %v663, %v662
      %v725 = vpack.c.b16 %v665, %v664
      %v726 = vpack.c.b16 %v667, %v666
      %v727 = vpack.c.b16 %v669, %v668
      %v728 = vpack.c.b16 %v671, %v670
      %v729 = vpack.c.b16 %v673, %v672
      %v730 = vpack.c.b16 %v675, %v674
      %v731 = vpack.c.b16 %v677, %v676
      %vm786 = vcmask 785408
      %v788 = vsel %vm786, %v416, 0
      %v791 = vsel %vm786, %v423, 0
      %v794 = vsel %vm786, %v430, 0
      %v797 = vsel %vm786, %v437, 0
      %799 = vmatpush.bf16.msra.mxu0 %v685
      %800 = vmatpush.bf16.msra.mxu0 %v684
      %801 = vmatpush.bf16.msra.mxu0 %v683
      %802 = vmatpush.bf16.msra.mxu0 %v682
      %803 = vmatpush.bf16.msra.mxu0 %v681
      %804 = vmatpush.bf16.msra.mxu0 %v680
      %805 = vmatpush.bf16.msra.mxu0 %v679
      %806 = vmatpush.bf16.msra.mxu0 %v678
      %807 = vmatmul.bf16.gmra.mxu0 %v410
      %v808 = vpop.f32.mrf.mxu0
      %v809 = vadd.f32 %v320, %v808
      %v810 = vpop.f32.mrf.mxu0
      %v811 = vadd.f32 %v320, %v810
      %812 = vmatmul.bf16.gmra.mxu0 %v417
      %v813 = vpop.f32.mrf.mxu0
      %v814 = vadd.f32 %v320, %v813
      %v815 = vpop.f32.mrf.mxu0
      %v816 = vadd.f32 %v320, %v815
      %817 = vmatmul.bf16.gmra.mxu0 %v424
      %v818 = vpop.f32.mrf.mxu0
      %v819 = vadd.f32 %v320, %v818
      %v820 = vpop.f32.mrf.mxu0
      %v821 = vadd.f32 %v320, %v820
      %822 = vmatmul.bf16.gmra.mxu0 %v431
      %v823 = vpop.f32.mrf.mxu0
      %v824 = vadd.f32 %v320, %v823
      %v825 = vpop.f32.mrf.mxu0
      %v826 = vadd.f32 %v320, %v825
      %827 = vdwg.mxu0
      %828 = vmatpush.bf16.msra.mxu0 %v693
      %829 = vmatpush.bf16.msra.mxu0 %v692
      %830 = vmatpush.bf16.msra.mxu0 %v691
      %831 = vmatpush.bf16.msra.mxu0 %v690
      %832 = vmatpush.bf16.msra.mxu0 %v689
      %833 = vmatpush.bf16.msra.mxu0 %v688
      %834 = vmatpush.bf16.msra.mxu0 %v687
      %835 = vmatpush.bf16.msra.mxu0 %v686
      %836 = vmatmul.bf16.gmra.mxu0 %v411
      %v837 = vpop.f32.mrf.mxu0
      %v838 = vadd.f32 %v809, %v837
      %v839 = vpop.f32.mrf.mxu0
      %v840 = vadd.f32 %v811, %v839
      %841 = vmatmul.bf16.gmra.mxu0 %v418
      %v842 = vpop.f32.mrf.mxu0
      %v843 = vadd.f32 %v814, %v842
      %v844 = vpop.f32.mrf.mxu0
      %v845 = vadd.f32 %v816, %v844
      %846 = vmatmul.bf16.gmra.mxu0 %v425
      %v847 = vpop.f32.mrf.mxu0
      %v848 = vadd.f32 %v819, %v847
      %v849 = vpop.f32.mrf.mxu0
      %v850 = vadd.f32 %v821, %v849
      %851 = vmatmul.bf16.gmra.mxu0 %v432
      %v852 = vpop.f32.mrf.mxu0
      %v853 = vadd.f32 %v824, %v852
      %v854 = vpop.f32.mrf.mxu0
      %v855 = vadd.f32 %v826, %v854
      %856 = vdwg.mxu0
      %857 = vmatpush.bf16.msra.mxu0 %v701
      %858 = vmatpush.bf16.msra.mxu0 %v700
      %859 = vmatpush.bf16.msra.mxu0 %v699
      %860 = vmatpush.bf16.msra.mxu0 %v698
      %861 = vmatpush.bf16.msra.mxu0 %v697
      %862 = vmatpush.bf16.msra.mxu0 %v696
      %863 = vmatpush.bf16.msra.mxu0 %v695
      %864 = vmatpush.bf16.msra.mxu0 %v694
      %865 = vmatmul.bf16.gmra.mxu0 %v412
      %v866 = vpop.f32.mrf.mxu0
      %v867 = vadd.f32 %v838, %v866
      %v868 = vpop.f32.mrf.mxu0
      %v869 = vadd.f32 %v840, %v868
      %870 = vmatmul.bf16.gmra.mxu0 %v419
      %v871 = vpop.f32.mrf.mxu0
      %v872 = vadd.f32 %v843, %v871
      %v873 = vpop.f32.mrf.mxu0
      %v874 = vadd.f32 %v845, %v873
      %875 = vmatmul.bf16.gmra.mxu0 %v426
      %v876 = vpop.f32.mrf.mxu0
      %v877 = vadd.f32 %v848, %v876
      %v878 = vpop.f32.mrf.mxu0
      %v879 = vadd.f32 %v850, %v878
      %880 = vmatmul.bf16.gmra.mxu0 %v433
      %v881 = vpop.f32.mrf.mxu0
      %v882 = vadd.f32 %v853, %v881
      %v883 = vpop.f32.mrf.mxu0
      %v884 = vadd.f32 %v855, %v883
      %885 = vdwg.mxu0
      %886 = vmatpush.bf16.msra.mxu0 %v709
      %887 = vmatpush.bf16.msra.mxu0 %v708
      %888 = vmatpush.bf16.msra.mxu0 %v707
      %889 = vmatpush.bf16.msra.mxu0 %v706
      %890 = vmatpush.bf16.msra.mxu0 %v705
      %891 = vmatpush.bf16.msra.mxu0 %v704
      %892 = vmatpush.bf16.msra.mxu0 %v703
      %893 = vmatpush.bf16.msra.mxu0 %v702
      %894 = vmatmul.bf16.gmra.mxu0 %v413
      %v895 = vpop.f32.mrf.mxu0
      %v896 = vadd.f32 %v867, %v895
      %v897 = vpop.f32.mrf.mxu0
      %v898 = vadd.f32 %v869, %v897
      %899 = vmatmul.bf16.gmra.mxu0 %v420
      %v900 = vpop.f32.mrf.mxu0
      %v901 = vadd.f32 %v872, %v900
      %v902 = vpop.f32.mrf.mxu0
      %v903 = vadd.f32 %v874, %v902
      %904 = vmatmul.bf16.gmra.mxu0 %v427
      %v905 = vpop.f32.mrf.mxu0
      %v906 = vadd.f32 %v877, %v905
      %v907 = vpop.f32.mrf.mxu0
      %v908 = vadd.f32 %v879, %v907
      %909 = vmatmul.bf16.gmra.mxu0 %v434
      %v910 = vpop.f32.mrf.mxu0
      %v911 = vadd.f32 %v882, %v910
      %v912 = vpop.f32.mrf.mxu0
      %v913 = vadd.f32 %v884, %v912
      %914 = vdwg.mxu0
      %915 = vmatpush.bf16.msra.mxu0 %v717
      %916 = vmatpush.bf16.msra.mxu0 %v716
      %917 = vmatpush.bf16.msra.mxu0 %v715
      %918 = vmatpush.bf16.msra.mxu0 %v714
      %919 = vmatpush.bf16.msra.mxu0 %v713
      %920 = vmatpush.bf16.msra.mxu0 %v712
      %921 = vmatpush.bf16.msra.mxu0 %v711
      %922 = vmatpush.bf16.msra.mxu0 %v710
      %923 = vmatmul.bf16.gmra.mxu0 %v414
      %v924 = vpop.f32.mrf.mxu0
      %v925 = vadd.f32 %v896, %v924
      %v926 = vpop.f32.mrf.mxu0
      %v927 = vadd.f32 %v898, %v926
      %928 = vmatmul.bf16.gmra.mxu0 %v421
      %v929 = vpop.f32.mrf.mxu0
      %v930 = vadd.f32 %v901, %v929
      %v931 = vpop.f32.mrf.mxu0
      %v932 = vadd.f32 %v903, %v931
      %933 = vmatmul.bf16.gmra.mxu0 %v428
      %v934 = vpop.f32.mrf.mxu0
      %v935 = vadd.f32 %v906, %v934
      %v936 = vpop.f32.mrf.mxu0
      %v937 = vadd.f32 %v908, %v936
      %938 = vmatmul.bf16.gmra.mxu0 %v435
      %v939 = vpop.f32.mrf.mxu0
      %v940 = vadd.f32 %v911, %v939
      %v941 = vpop.f32.mrf.mxu0
      %v942 = vadd.f32 %v913, %v941
      %943 = vdwg.mxu0
      %944 = vmatpush.bf16.msra.mxu0 %v725
      %945 = vmatpush.bf16.msra.mxu0 %v724
      %946 = vmatpush.bf16.msra.mxu0 %v723
      %947 = vmatpush.bf16.msra.mxu0 %v722
      %948 = vmatpush.bf16.msra.mxu0 %v721
      %949 = vmatpush.bf16.msra.mxu0 %v720
      %950 = vmatpush.bf16.msra.mxu0 %v719
      %951 = vmatpush.bf16.msra.mxu0 %v718
      %952 = vmatmul.bf16.gmra.mxu0 %v415
      %v953 = vpop.f32.mrf.mxu0
      %v954 = vadd.f32 %v925, %v953
      %v955 = vpop.f32.mrf.mxu0
      %v956 = vadd.f32 %v927, %v955
      %957 = vmatmul.bf16.gmra.mxu0 %v422
      %v958 = vpop.f32.mrf.mxu0
      %v959 = vadd.f32 %v930, %v958
      %v960 = vpop.f32.mrf.mxu0
      %v961 = vadd.f32 %v932, %v960
      %962 = vmatmul.bf16.gmra.mxu0 %v429
      %v963 = vpop.f32.mrf.mxu0
      %v964 = vadd.f32 %v935, %v963
      %v965 = vpop.f32.mrf.mxu0
      %v966 = vadd.f32 %v937, %v965
      %967 = vmatmul.bf16.gmra.mxu0 %v436
      %v968 = vpop.f32.mrf.mxu0
      %v969 = vadd.f32 %v940, %v968
      %v970 = vpop.f32.mrf.mxu0
      %v971 = vadd.f32 %v942, %v970
      %972 = vdwg.mxu0
      %973 = vmatpush.bf16.msra.mxu0 0
      %974 = vmatpush.bf16.msra.mxu0 0
      %975 = vmatpush.bf16.msra.mxu0 %v731
      %976 = vmatpush.bf16.msra.mxu0 %v730
      %977 = vmatpush.bf16.msra.mxu0 %v729
      %978 = vmatpush.bf16.msra.mxu0 %v728
      %979 = vmatpush.bf16.msra.mxu0 %v727
      %980 = vmatpush.bf16.msra.mxu0 %v726
      %981 = vmatmul.bf16.gmra.mxu0 %v788
      %v982 = vpop.f32.mrf.mxu0
      %v983 = vadd.f32 %v954, %v982
      %v984 = vpop.f32.mrf.mxu0
      %v985 = vadd.f32 %v956, %v984
      %986 = vmatmul.bf16.gmra.mxu0 %v791
      %v987 = vpop.f32.mrf.mxu0
      %v988 = vadd.f32 %v959, %v987
      %v989 = vpop.f32.mrf.mxu0
      %v990 = vadd.f32 %v961, %v989
      %991 = vmatmul.bf16.gmra.mxu0 %v794
      %v992 = vpop.f32.mrf.mxu0
      %v993 = vadd.f32 %v964, %v992
      %v994 = vpop.f32.mrf.mxu0
      %v995 = vadd.f32 %v966, %v994
      %996 = vmatmul.bf16.gmra.mxu0 %v797
      %v997 = vpop.f32.mrf.mxu0
      %v998 = vadd.f32 %v969, %v997
      %v999 = vpop.f32.mrf.mxu0
      %v1000 = vadd.f32 %v971, %v999
      %1001 = vdwg.mxu0
      %v1002 = vmax.f32 %v983, 0.0
      %v1003 = vmax.f32 %v985, 0.0
      %v1004 = vmax.f32 %v988, 0.0
      %v1005 = vmax.f32 %v990, 0.0
      %v1006 = vmax.f32 %v993, 0.0
      %v1007 = vmax.f32 %v995, 0.0
      %v1008 = vmax.f32 %v998, 0.0
      %v1009 = vmax.f32 %v1000, 0.0
      %v1010 = vpack.c.bf16 %v1002, %v1002
      %v1011 = vpack.c.bf16 %v1003, %v1003
      %v1012 = vpack.c.bf16 %v1004, %v1004
      %v1013 = vpack.c.bf16 %v1005, %v1005
      %v1014 = vpack.c.bf16 %v1006, %v1006
      %v1015 = vpack.c.bf16 %v1007, %v1007
      %v1016 = vpack.c.bf16 %v1008, %v1008
      %v1017 = vpack.c.bf16 %v1009, %v1009
      %vm1018 = vcmask 257024
      %1019 = vst.msk [vmem:[%s175] sm:$0xf] %vm1018, %v1010
      %1020 = vst.msk [vmem:[%s175 + $0x4] sm:$0xf] %vm1018, %v1011
      %1021 = vst.msk [vmem:[%s175 + $0x8] sm:$0xf] %vm1018, %v1012
      %1022 = vst.msk [vmem:[%s175 + $0xc] sm:$0xf] %vm1018, %v1013
      %1023 = vst.msk [vmem:[%s175 + $0x10] sm:$0xf] %vm1018, %v1014
      %1024 = vst.msk [vmem:[%s175 + $0x14] sm:$0xf] %vm1018, %v1015
      %1025 = vst.msk [vmem:[%s175 + $0x18] sm:$0xf] %vm1018, %v1016
      %1026 = vst.msk [vmem:[%s175 + $0x1c] sm:$0xf] %vm1018, %v1017
      %s1027 = smul.u32 8, %s14
      %p1028 = scmp.lt.s32.totalorder %s1027, 15
      %s1029 = scalar_select %p1028, %s1027, 15
      %s1030 = smul.addr %s1029, 4
      %s1031 = scalar_lea.vmem %s3, %s1030
      // Predicated region
      $region33: #{psm_gnn_forward.22} parent=31 // pred_check
        %p1032 = pneg %p100
      $region34: #{psm_gnn_forward.22} parent=31 // pred_check_branch
        %1034 = sbr.rel (%p1032) target = $region36
      $region35: #{psm_gnn_forward.22} parent=31 // pred_region
        %s1035 = smul.u32 8, %s14
      $region36: #{psm_gnn_forward.22} parent=31 // pred_fallthru
        _
    $region32: #{psm_gnn_forward.22} parent=5 // pred_fallthru
      _
    %p1036 = scmp.le.s32.totalorder 2, %s9
    // Predicated region
    $region37: #{psm_gnn_forward.22} parent=5 // pred_check
      %p1037 = pneg %p1036
    $region38: #{psm_gnn_forward.22} parent=5 // pred_check_branch
      %1039 = sbr.rel (%p1037) target = $region40
    $region39: #{psm_gnn_forward.22} parent=5 // pred_region
      %s1040 = ssub.s32 %s9, 2
      // Predicated region
      $region41: #{psm_gnn_forward.22} parent=39 // pred_check
        %p1041 = pneg %p106
      $region42: #{psm_gnn_forward.22} parent=39 // pred_check_branch
        %1043 = sbr.rel (%p1041) target = $region44
      $region43: #{psm_gnn_forward.22} parent=39 // pred_region
        %s1044 = smul.u32 8, %s15
        %p1045 = scmp.lt.s32.totalorder %s1044, 15
        %s1046 = scalar_select %p1045, %s1044, 15
        %s1047 = smul.addr %s1046, 4
        %s1048 = scalar_lea.vmem %s3, %s1047
      $region44: #{psm_gnn_forward.22} parent=39 // pred_fallthru
        _
    $region40: #{psm_gnn_forward.22} parent=5 // pred_fallthru
      _
  $region6: #{psm_gnn_forward.22} parent=0 // loop_footer
    %s13 = sadd.s32 1, %s9
  $region7: #{psm_gnn_forward.22} parent=0 // loop_footer_branch
    %8 = sbr.rel target = $region3
  $region8: #{psm_gnn_forward.22} parent=0 // loop_exit
    _

// kernel: psm_gnn_forward.21
$region0: #{psm_gnn_forward.21}
  #allocation0 [shape = 'u32[]', space=smem, size = 0x4, offset = 0x4, fixed_abs, tag = 'smem constant byte address 0x4 - core index']
  #allocation1 [shape = 'u32[72,128]{1,0:T(1,128)}', space=vmem, size = 0x9000, scoped, tag = 'internal scratch']
  %s0 = inlined_call_operand.vmem [shape: bf16[128,864], index: 0, kind: input, shape index: {}]
  %s1 = inlined_call_operand.vmem [shape: bf16[864,32], index: 1, kind: input, shape index: {}]
  %s2 = inlined_call_operand.vmem [shape: f32[1,32], index: 2, kind: input, shape index: {}]
  %s3 = inlined_call_operand.vmem [shape: bf16[128,32], index: 3, kind: input, shape index: {}]
  %s4 = inlined_call_operand.vmem [shape: bf16[128,32], index: 4, kind: output, shape index: {}]
  %s5 = sld [smem:[#allocation0]]
  $region49: #{psm_gnn_forward.21} parent=0
    _
  %s7 = ssub.s32 1, %s5
  %s8 = scalar_select 0, %s7, %s5
  loop: start=0, step=1, limit=4
  $region2: #{psm_gnn_forward.21} parent=0 // loop_pre_header
    _
  $region3: #{psm_gnn_forward.21} parent=0 // loop_header
    %s10 = sphi 0, %s14
    %p11 = scmp.ge.s32.totalorder %s10, 4
    %s20 = sphi 0, %s22
    %s23 = sphi 0, %s20
    %s24 = sphi 0, %s23
    %s40 = sphi 0, %s24
    %s44 = sphi 0, %s44
    %s46 = sphi 0, %s44
    %s47 = sphi 0, %s46
    %s61 = sphi 0, %s47
    %s65 = sphi 0, %s65
    %s67 = sphi 0, %s65
    %s68 = sphi 0, %s67
    %s82 = sphi 0, %s68
    %s88 = sphi 0, %s90
    %s91 = sphi 0, %s88
    %s92 = sphi 0, %s91
    %s108 = sphi 0, %s92
    %s114 = sphi 0, %s116
    %s117 = sphi 0, %s114
    %s118 = sphi 0, %s117
    %s134 = sphi 0, %s118
  $region4: #{psm_gnn_forward.21} parent=0 // loop_header_branch
    %13 = sbr.rel (%p11) target = $region8
  $region5: #{psm_gnn_forward.21} parent=0 // loop_body
    %s15 = ssub.s32 %s10, 1
    %s16 = ssub.s32 %s10, 2
    %s17 = sadd.s32 %s10, 1
    %s18 = ssub.s32 %s10, %s17
    %p19 = scmp.eq.s32.totalorder %s18, 0
    %s21 = sadd.s32 %s20, 1
    %s22 = scalar_select %p19, %s20, %s21
    %p25 = pneg %p19
    %p26 = scmp.eq.s32.totalorder %s10, 1
    %p27 = por %p25, %p26
    %p28 = scmp.ne.s32.totalorder %s20, %s23
    %p29 = scmp.eq.s32.totalorder %s10, 0
    %p30 = por %p28, %p29
    %p31 = scmp.ne.s32.totalorder %s20, %s23
    %p32 = scmp.eq.s32.totalorder %s15, 1
    %p33 = por %p31, %p32
    %p34 = scmp.ne.s32.totalorder %s23, %s24
    %p35 = scmp.eq.s32.totalorder %s15, 0
    %p36 = por %p34, %p35
    %p37 = scmp.ne.s32.totalorder %s23, %s24
    %p38 = scmp.eq.s32.totalorder %s16, 1
    %p39 = por %p37, %p38
    %p41 = scmp.ne.s32.totalorder %s24, %s40
    %p42 = scmp.eq.s32.totalorder %s16, 0
    %p43 = por %p41, %p42
    %s45 = sadd.s32 %s44, 1
    %p48 = scmp.eq.s32.totalorder %s10, 1
    %p49 = scmp.ne.s32.totalorder %s44, %s46
    %p50 = scmp.eq.s32.totalorder %s10, 0
    %p51 = por %p49, %p50
    %p52 = scmp.ne.s32.totalorder %s44, %s46
    %p53 = scmp.eq.s32.totalorder %s15, 1
    %p54 = por %p52, %p53
    %p55 = scmp.ne.s32.totalorder %s46, %s47
    %p56 = scmp.eq.s32.totalorder %s15, 0
    %p57 = por %p55, %p56
    %p58 = scmp.ne.s32.totalorder %s46, %s47
    %p59 = scmp.eq.s32.totalorder %s16, 1
    %p60 = por %p58, %p59
    %p62 = scmp.ne.s32.totalorder %s47, %s61
    %p63 = scmp.eq.s32.totalorder %s16, 0
    %p64 = por %p62, %p63
    %s66 = sadd.s32 %s65, 1
    %p69 = scmp.eq.s32.totalorder %s10, 1
    %p70 = scmp.ne.s32.totalorder %s65, %s67
    %p71 = scmp.eq.s32.totalorder %s10, 0
    %p72 = por %p70, %p71
    %p73 = scmp.ne.s32.totalorder %s65, %s67
    %p74 = scmp.eq.s32.totalorder %s15, 1
    %p75 = por %p73, %p74
    %p76 = scmp.ne.s32.totalorder %s67, %s68
    %p77 = scmp.eq.s32.totalorder %s15, 0
    %p78 = por %p76, %p77
    %p79 = scmp.ne.s32.totalorder %s67, %s68
    %p80 = scmp.eq.s32.totalorder %s16, 1
    %p81 = por %p79, %p80
    %p83 = scmp.ne.s32.totalorder %s68, %s82
    %p84 = scmp.eq.s32.totalorder %s16, 0
    %p85 = por %p83, %p84
    %s86 = ssub.s32 %s10, %s17
    %p87 = scmp.eq.s32.totalorder %s86, 0
    %s89 = sadd.s32 %s88, 1
    %s90 = scalar_select %p87, %s88, %s89
    %p93 = pneg %p87
    %p94 = scmp.eq.s32.totalorder %s10, 1
    %p95 = por %p93, %p94
    %p96 = scmp.ne.s32.totalorder %s88, %s91
    %p97 = scmp.eq.s32.totalorder %s10, 0
    %p98 = por %p96, %p97
    %p99 = scmp.ne.s32.totalorder %s88, %s91
    %p100 = scmp.eq.s32.totalorder %s15, 1
    %p101 = por %p99, %p100
    %p102 = scmp.ne.s32.totalorder %s91, %s92
    %p103 = scmp.eq.s32.totalorder %s15, 0
    %p104 = por %p102, %p103
    %p105 = scmp.ne.s32.totalorder %s91, %s92
    %p106 = scmp.eq.s32.totalorder %s16, 1
    %p107 = por %p105, %p106
    %p109 = scmp.ne.s32.totalorder %s92, %s108
    %p110 = scmp.eq.s32.totalorder %s16, 0
    %p111 = por %p109, %p110
    %s112 = ssub.s32 %s10, %s17
    %p113 = scmp.eq.s32.totalorder %s112, 0
    %s115 = sadd.s32 %s114, 1
    %s116 = scalar_select %p113, %s114, %s115
    %p119 = pneg %p113
    %p120 = scmp.eq.s32.totalorder %s10, 1
    %p121 = por %p119, %p120
    %p122 = scmp.ne.s32.totalorder %s114, %s117
    %p123 = scmp.eq.s32.totalorder %s10, 0
    %p124 = por %p122, %p123
    %p125 = scmp.ne.s32.totalorder %s114, %s117
    %p126 = scmp.eq.s32.totalorder %s15, 1
    %p127 = por %p125, %p126
    %p128 = scmp.ne.s32.totalorder %s117, %s118
    %p129 = scmp.eq.s32.totalorder %s15, 0
    %p130 = por %p128, %p129
    %p131 = scmp.ne.s32.totalorder %s117, %s118
    %p132 = scmp.eq.s32.totalorder %s16, 1
    %p133 = por %p131, %p132
    %p135 = scmp.ne.s32.totalorder %s118, %s134
    %p136 = scmp.eq.s32.totalorder %s16, 0
    %p137 = por %p135, %p136
    %p138 = scmp.le.s32.totalorder 1, %s10
    %p139 = scmp.lt.s32.totalorder %s10, 3
    %p140 = pnand %p138, %p139
    %p141 = pneg %p140
    // Predicated region
    $region9: #{psm_gnn_forward.21} parent=5 // pred_check
      _
    $region10: #{psm_gnn_forward.21} parent=5 // pred_check_branch
      %143 = sbr.rel (%p140) target = $region12
    $region11: #{psm_gnn_forward.21} parent=5 // pred_region
      %s144 = ssub.s32 %s10, 1
      // Predicated region
      $region13: #{psm_gnn_forward.21} parent=11 // pred_check
        %p145 = pneg %p57
      $region14: #{psm_gnn_forward.21} parent=11 // pred_check_branch
        %147 = sbr.rel (%p145) target = $region16
      $region15: #{psm_gnn_forward.21} parent=11 // pred_region
        _
      $region16: #{psm_gnn_forward.21} parent=11 // pred_fallthru
        _
      // Predicated region
      $region17: #{psm_gnn_forward.21} parent=11 // pred_check
        %p148 = pneg %p78
      $region18: #{psm_gnn_forward.21} parent=11 // pred_check_branch
        %150 = sbr.rel (%p148) target = $region20
      $region19: #{psm_gnn_forward.21} parent=11 // pred_region
        _
      $region20: #{psm_gnn_forward.21} parent=11 // pred_fallthru
        _
    $region12: #{psm_gnn_forward.21} parent=5 // pred_fallthru
      _
    %p151 = scmp.lt.s32.totalorder %s10, 2
    // Predicated region
    $region21: #{psm_gnn_forward.21} parent=5 // pred_check
      %p152 = pneg %p151
    $region22: #{psm_gnn_forward.21} parent=5 // pred_check_branch
      %154 = sbr.rel (%p152) target = $region24
    $region23: #{psm_gnn_forward.21} parent=5 // pred_region
      // Predicated region
      $region25: #{psm_gnn_forward.21} parent=23 // pred_check
        %p155 = pneg %p30
      $region26: #{psm_gnn_forward.21} parent=23 // pred_check_branch
        %157 = sbr.rel (%p155) target = $region28
      $region27: #{psm_gnn_forward.21} parent=23 // pred_region
        %s158 = smul.u32 8, %s10
        %p159 = scmp.lt.s32.totalorder %s158, 15
        %s160 = scalar_select %p159, %s158, 15
        %s161 = smul.addr %s160, 7
        %s162 = smul.addr %s161, 4
        %s163 = scalar_lea.vmem %s0, %s162
        %s164 = smul.u32 8, %s10
      $region28: #{psm_gnn_forward.21} parent=23 // pred_fallthru
        _
      // Predicated region
      $region29: #{psm_gnn_forward.21} parent=23 // pred_check
        %p165 = pneg %p98
      $region30: #{psm_gnn_forward.21} parent=23 // pred_check_branch
        %167 = sbr.rel (%p165) target = $region32
      $region31: #{psm_gnn_forward.21} parent=23 // pred_region
        %s168 = smul.u32 8, %s10
        %p169 = scmp.lt.s32.totalorder %s168, 15
        %s170 = scalar_select %p169, %s168, 15
        %s171 = smul.addr %s170, 4
        %s172 = scalar_lea.vmem %s3, %s171
        %s173 = smul.u32 8, %s10
      $region32: #{psm_gnn_forward.21} parent=23 // pred_fallthru
        _
    $region24: #{psm_gnn_forward.21} parent=5 // pred_fallthru
      _
    %p174 = scmp.le.s32.totalorder 1, %s10
    %p175 = scmp.lt.s32.totalorder %s10, 3
    %p176 = pnand %p174, %p175
    %p177 = pneg %p176
    // Predicated region
    $region33: #{psm_gnn_forward.21} parent=5 // pred_check
      _
    $region34: #{psm_gnn_forward.21} parent=5 // pred_check_branch
      %179 = sbr.rel (%p176) target = $region36
    $region35: #{psm_gnn_forward.21} parent=5 // pred_region
      %s180 = ssub.s32 %s10, 1
      %s181 = smul.u32 8, %s15
      %p182 = scmp.lt.s32.totalorder %s181, 15
      %s183 = scalar_select %p182, %s181, 15
      %s184 = smul.addr %s183, 7
      %s185 = smul.addr %s184, 4
      %s186 = scalar_lea.vmem %s0, %s185
      %p187 = pneg %p36
      %p188 = pneg %p33
      %p189 = pneg %p57
      %p190 = pneg %p54
      %p191 = pneg %p78
      %p192 = pneg %p75
      %s193 = smul.u32 8, %s15
      %p194 = scmp.lt.s32.totalorder %s193, 15
      %s195 = scalar_select %p194, %s193, 15
      %s196 = smul.addr %s195, 4
      %s197 = scalar_lea.vmem %s3, %s196
      %p198 = pneg %p104
      %p199 = pneg %p101
      %p200 = pneg %p130
      %p201 = pneg %p127
      %s202 = smul.u32 8, %s15
      %p203 = scmp.lt.s32.totalorder %s202, 15
      %s204 = scalar_select %p203, %s202, 15
      %s205 = smul.addr %s204, 4
      %s206 = scalar_lea.vmem %s4, %s205
      %s207 = smul.u32 8, %s15
      %p208 = scmp.lt.s32.totalorder %s207, 15
      %s209 = scalar_select %p208, %s207, 15
      %s210 = smul.addr %s209, 7
      %s211 = smul.addr %s210, 4
      %s212 = scalar_lea.vmem %s0, %s211
      %s213 = smul.u32 8, %s15
      %s214 = smul.u32 8, %s15
      %p215 = scmp.lt.s32.totalorder %s214, 15
      %s216 = scalar_select %p215, %s214, 15
      %s217 = smul.addr %s216, 4
      %s218 = scalar_lea.vmem %s3, %s217
      %s219 = smul.u32 8, %s15
      %s220 = smul.u32 8, %s15
      %p221 = scmp.lt.s32.totalorder %s220, 15
      %s222 = scalar_select %p221, %s220, 15
      %s223 = smul.addr %s222, 4
      %s224 = scalar_lea.vmem %s4, %s223
      %s225 = smul.u32 8, %s15
      %v227 = vld [vmem:[%s212] sm:$0xff]
      %v228 = vld [vmem:[%s212 + $0x8] sm:$0xff]
      %v229 = vld [vmem:[%s212 + $0x10] sm:$0xff]
      %v230 = vld [vmem:[%s212 + $0x18] sm:$0xf]
      %v231 = vld [vmem:[%s212 + $0x1c] sm:$0xff]
      %v232 = vld [vmem:[%s212 + $0x24] sm:$0xff]
      %v233 = vld [vmem:[%s212 + $0x2c] sm:$0xff]
      %v234 = vld [vmem:[%s212 + $0x34] sm:$0xf]
      %v235 = vld [vmem:[%s212 + $0x38] sm:$0xff]
      %v236 = vld [vmem:[%s212 + $0x40] sm:$0xff]
      %v237 = vld [vmem:[%s212 + $0x48] sm:$0xff]
      %v238 = vld [vmem:[%s212 + $0x50] sm:$0xf]
      %v239 = vld [vmem:[%s212 + $0x54] sm:$0xff]
      %v240 = vld [vmem:[%s212 + $0x5c] sm:$0xff]
      %v241 = vld [vmem:[%s212 + $0x64] sm:$0xff]
      %v242 = vld [vmem:[%s212 + $0x6c] sm:$0xf]
      %v243 = vld [vmem:[%s212 + $0x70] sm:$0xff]
      %v244 = vld [vmem:[%s212 + $0x78] sm:$0xff]
      %v245 = vld [vmem:[%s212 + $0x80] sm:$0xff]
      %v246 = vld [vmem:[%s212 + $0x88] sm:$0xf]
      %v247 = vld [vmem:[%s212 + $0x8c] sm:$0xff]
      %v248 = vld [vmem:[%s212 + $0x94] sm:$0xff]
      %v249 = vld [vmem:[%s212 + $0x9c] sm:$0xff]
      %v250 = vld [vmem:[%s212 + $0xa4] sm:$0xf]
      %v251 = vld [vmem:[%s212 + $0xa8] sm:$0xff]
      %v252 = vld [vmem:[%s212 + $0xb0] sm:$0xff]
      %v253 = vld [vmem:[%s212 + $0xb8] sm:$0xff]
      %v254 = vld [vmem:[%s212 + $0xc0] sm:$0xf]
      %v255 = vld [vmem:[%s212 + $0xc4] sm:$0xff]
      %v256 = vld [vmem:[%s212 + $0xcc] sm:$0xff]
      %v257 = vld [vmem:[%s212 + $0xd4] sm:$0xff]
      %v258 = vld [vmem:[%s212 + $0xdc] sm:$0xf]
      %v259 = vld [vmem:[%s1] sm:$0xf]
      %v260 = vld [vmem:[%s1 + $0x4] sm:$0xf]
      %v261 = vld [vmem:[%s1 + $0x8] sm:$0xf]
      %v262 = vld [vmem:[%s1 + $0xc] sm:$0xf]
      %v263 = vld [vmem:[%s1 + $0x10] sm:$0xf]
      %v264 = vld [vmem:[%s1 + $0x14] sm:$0xf]
      %v265 = vld [vmem:[%s1 + $0x18] sm:$0xf]
      %v266 = vld [vmem:[%s1 + $0x1c] sm:$0xf]
      %v267 = vld [vmem:[%s1 + $0x20] sm:$0xf]
      %v268 = vld [vmem:[%s1 + $0x24] sm:$0xf]
      %v269 = vld [vmem:[%s1 + $0x28] sm:$0xf]
      %v270 = vld [vmem:[%s1 + $0x2c] sm:$0xf]
      %v271 = vld [vmem:[%s1 + $0x30] sm:$0xf]
      %v272 = vld [vmem:[%s1 + $0x34] sm:$0xf]
      %v273 = vld [vmem:[%s1 + $0x38] sm:$0xf]
      %v274 = vld [vmem:[%s1 + $0x3c] sm:$0xf]
      %v275 = vld [vmem:[%s1 + $0x40] sm:$0xf]
      %v276 = vld [vmem:[%s1 + $0x44] sm:$0xf]
      %v277 = vld [vmem:[%s1 + $0x48] sm:$0xf]
      %v278 = vld [vmem:[%s1 + $0x4c] sm:$0xf]
      %v279 = vld [vmem:[%s1 + $0x50] sm:$0xf]
      %v280 = vld [vmem:[%s1 + $0x54] sm:$0xf]
      %v281 = vld [vmem:[%s1 + $0x58] sm:$0xf]
      %v282 = vld [vmem:[%s1 + $0x5c] sm:$0xf]
      %v283 = vld [vmem:[%s1 + $0x60] sm:$0xf]
      %v284 = vld [vmem:[%s1 + $0x64] sm:$0xf]
      %v285 = vld [vmem:[%s1 + $0x68] sm:$0xf]
      %v286 = vld [vmem:[%s1 + $0x6c] sm:$0xf]
      %v287 = vld [vmem:[%s1 + $0x70] sm:$0xf]
      %v288 = vld [vmem:[%s1 + $0x74] sm:$0xf]
      %v289 = vld [vmem:[%s1 + $0x78] sm:$0xf]
      %v290 = vld [vmem:[%s1 + $0x7c] sm:$0xf]
      %v291 = vld [vmem:[%s1 + $0x80] sm:$0xf]
      %v292 = vld [vmem:[%s1 + $0x84] sm:$0xf]
      %v293 = vld [vmem:[%s1 + $0x88] sm:$0xf]
      %v294 = vld [vmem:[%s1 + $0x8c] sm:$0xf]
      %v295 = vld [vmem:[%s1 + $0x90] sm:$0xf]
      %v296 = vld [vmem:[%s1 + $0x94] sm:$0xf]
      %v297 = vld [vmem:[%s1 + $0x98] sm:$0xf]
      %v298 = vld [vmem:[%s1 + $0x9c] sm:$0xf]
      %v299 = vld [vmem:[%s1 + $0xa0] sm:$0xf]
      %v300 = vld [vmem:[%s1 + $0xa4] sm:$0xf]
      %v301 = vld [vmem:[%s1 + $0xa8] sm:$0xf]
      %v302 = vld [vmem:[%s1 + $0xac] sm:$0xf]
      %v303 = vld [vmem:[%s1 + $0xb0] sm:$0xf]
      %v304 = vld [vmem:[%s1 + $0xb4] sm:$0xf]
      %v305 = vld [vmem:[%s1 + $0xb8] sm:$0xf]
      %v306 = vld [vmem:[%s1 + $0xbc] sm:$0xf]
      %v307 = vld [vmem:[%s1 + $0xc0] sm:$0xf]
      %v308 = vld [vmem:[%s1 + $0xc4] sm:$0xf]
      %v309 = vld [vmem:[%s1 + $0xc8] sm:$0xf]
      %v310 = vld [vmem:[%s1 + $0xcc] sm:$0xf]
      %v311 = vld [vmem:[%s1 + $0xd0] sm:$0xf]
      %v312 = vld [vmem:[%s1 + $0xd4] sm:$0xf]
      %v313 = vld [vmem:[%s1 + $0xd8] sm:$0xf]
      %v314 = vld [vmem:[%s1 + $0xdc] sm:$0xf]
      %v315 = vld [vmem:[%s1 + $0xe0] sm:$0xf]
      %v316 = vld [vmem:[%s1 + $0xe4] sm:$0xf]
      %v317 = vld [vmem:[%s1 + $0xe8] sm:$0xf]
      %v318 = vld [vmem:[%s1 + $0xec] sm:$0xf]
      %v319 = vld [vmem:[%s1 + $0xf0] sm:$0xf]
      %v320 = vld [vmem:[%s1 + $0xf4] sm:$0xf]
      %v321 = vld [vmem:[%s1 + $0xf8] sm:$0xf]
      %v322 = vld [vmem:[%s1 + $0xfc] sm:$0xf]
      %v323 = vld [vmem:[%s1 + $0x100] sm:$0xf]
      %v324 = vld [vmem:[%s1 + $0x104] sm:$0xf]
      %v325 = vld [vmem:[%s1 + $0x108] sm:$0xf]
      %v326 = vld [vmem:[%s1 + $0x10c] sm:$0xf]
      %v327 = vld [vmem:[%s1 + $0x110] sm:$0xf]
      %v328 = vld [vmem:[%s1 + $0x114] sm:$0xf]
      %v329 = vld [vmem:[%s1 + $0x118] sm:$0xf]
      %v330 = vld [vmem:[%s1 + $0x11c] sm:$0xf]
      %v331 = vld [vmem:[%s1 + $0x120] sm:$0xf]
      %v332 = vld [vmem:[%s1 + $0x124] sm:$0xf]
      %v333 = vld [vmem:[%s1 + $0x128] sm:$0xf]
      %v334 = vld [vmem:[%s1 + $0x12c] sm:$0xf]
      %v335 = vld [vmem:[%s1 + $0x130] sm:$0xf]
      %v336 = vld [vmem:[%s1 + $0x134] sm:$0xf]
      %v337 = vld [vmem:[%s1 + $0x138] sm:$0xf]
      %v338 = vld [vmem:[%s1 + $0x13c] sm:$0xf]
      %v339 = vld [vmem:[%s1 + $0x140] sm:$0xf]
      %v340 = vld [vmem:[%s1 + $0x144] sm:$0xf]
      %v341 = vld [vmem:[%s1 + $0x148] sm:$0xf]
      %v342 = vld [vmem:[%s1 + $0x14c] sm:$0xf]
      %v343 = vld [vmem:[%s1 + $0x150] sm:$0xf]
      %v344 = vld [vmem:[%s1 + $0x154] sm:$0xf]
      %v345 = vld [vmem:[%s1 + $0x158] sm:$0xf]
      %v346 = vld [vmem:[%s1 + $0x15c] sm:$0xf]
      %v347 = vld [vmem:[%s1 + $0x160] sm:$0xf]
      %v348 = vld [vmem:[%s1 + $0x164] sm:$0xf]
      %v349 = vld [vmem:[%s1 + $0x168] sm:$0xf]
      %v350 = vld [vmem:[%s1 + $0x16c] sm:$0xf]
      %v351 = vld [vmem:[%s1 + $0x170] sm:$0xf]
      %v352 = vld [vmem:[%s1 + $0x174] sm:$0xf]
      %v353 = vld [vmem:[%s1 + $0x178] sm:$0xf]
      %v354 = vld [vmem:[%s1 + $0x17c] sm:$0xf]
      %v355 = vld [vmem:[%s1 + $0x180] sm:$0xf]
      %v356 = vld [vmem:[%s1 + $0x184] sm:$0xf]
      %v357 = vld [vmem:[%s1 + $0x188] sm:$0xf]
      %v358 = vld [vmem:[%s1 + $0x18c] sm:$0xf]
      %v359 = vld [vmem:[%s1 + $0x190] sm:$0xf]
      %v360 = vld [vmem:[%s1 + $0x194] sm:$0xf]
      %v361 = vld [vmem:[%s1 + $0x198] sm:$0xf]
      %v362 = vld [vmem:[%s1 + $0x19c] sm:$0xf]
      %v363 = vld [vmem:[%s1 + $0x1a0] sm:$0xf]
      %v364 = vld [vmem:[%s1 + $0x1a4] sm:$0xf]
      %v365 = vld [vmem:[%s1 + $0x1a8] sm:$0xf]
      %v366 = vld [vmem:[%s1 + $0x1ac] sm:$0xf]
      %v367 = vld [vmem:[%s2] sm:$0x1]
      %v369 = vperm.slane %v367, 0
      %v403 = vunpack.c.l.b16 %v227
      %v404 = vunpack.c.h.b16 %v227
      %v405 = vunpack.c.l.b16 %v228
      %v406 = vunpack.c.h.b16 %v228
      %v407 = vunpack.c.l.b16 %v229
      %v408 = vunpack.c.h.b16 %v229
      %v409 = vunpack.c.l.b16 %v230
      %v410 = vunpack.c.l.b16 %v231
      %v411 = vunpack.c.h.b16 %v231
      %v412 = vunpack.c.l.b16 %v232
      %v413 = vunpack.c.h.b16 %v232
      %v414 = vunpack.c.l.b16 %v233
      %v415 = vunpack.c.h.b16 %v233
      %v416 = vunpack.c.l.b16 %v234
      %v417 = vunpack.c.l.b16 %v235
      %v418 = vunpack.c.h.b16 %v235
      %v419 = vunpack.c.l.b16 %v236
      %v420 = vunpack.c.h.b16 %v236
      %v421 = vunpack.c.l.b16 %v237
      %v422 = vunpack.c.h.b16 %v237
      %v423 = vunpack.c.l.b16 %v238
      %v424 = vunpack.c.l.b16 %v239
      %v425 = vunpack.c.h.b16 %v239
      %v426 = vunpack.c.l.b16 %v240
      %v427 = vunpack.c.h.b16 %v240
      %v428 = vunpack.c.l.b16 %v241
      %v429 = vunpack.c.h.b16 %v241
      %v430 = vunpack.c.l.b16 %v242
      %v431 = vunpack.c.l.b16 %v243
      %v432 = vunpack.c.h.b16 %v243
      %v433 = vunpack.c.l.b16 %v244
      %v434 = vunpack.c.h.b16 %v244
      %v435 = vunpack.c.l.b16 %v245
      %v436 = vunpack.c.h.b16 %v245
      %v437 = vunpack.c.l.b16 %v246
      %v438 = vunpack.c.l.b16 %v247
      %v439 = vunpack.c.h.b16 %v247
      %v440 = vunpack.c.l.b16 %v248
      %v441 = vunpack.c.h.b16 %v248
      %v442 = vunpack.c.l.b16 %v249
      %v443 = vunpack.c.h.b16 %v249
      %v444 = vunpack.c.l.b16 %v250
      %v445 = vunpack.c.l.b16 %v251
      %v446 = vunpack.c.h.b16 %v251
      %v447 = vunpack.c.l.b16 %v252
      %v448 = vunpack.c.h.b16 %v252
      %v449 = vunpack.c.l.b16 %v253
      %v450 = vunpack.c.h.b16 %v253
      %v451 = vunpack.c.l.b16 %v254
      %v452 = vunpack.c.l.b16 %v255
      %v453 = vunpack.c.h.b16 %v255
      %v454 = vunpack.c.l.b16 %v256
      %v455 = vunpack.c.h.b16 %v256
      %v456 = vunpack.c.l.b16 %v257
      %v457 = vunpack.c.h.b16 %v257
      %v458 = vunpack.c.l.b16 %v258
      %v459 = vpack.c.b16 %v410, %v403
      %v460 = vpack.c.b16 %v411, %v404
      %v461 = vpack.c.b16 %v412, %v405
      %v462 = vpack.c.b16 %v413, %v406
      %v463 = vpack.c.b16 %v414, %v407
      %v464 = vpack.c.b16 %v415, %v408
      %v465 = vpack.c.b16 %v416, %v409
      %v466 = vpack.c.b16 %v424, %v417
      %v467 = vpack.c.b16 %v425, %v418
      %v468 = vpack.c.b16 %v426, %v419
      %v469 = vpack.c.b16 %v427, %v420
      %v470 = vpack.c.b16 %v428, %v421
      %v471 = vpack.c.b16 %v429, %v422
      %v472 = vpack.c.b16 %v430, %v423
      %v473 = vpack.c.b16 %v438, %v431
      %v474 = vpack.c.b16 %v439, %v432
      %v475 = vpack.c.b16 %v440, %v433
      %v476 = vpack.c.b16 %v441, %v434
      %v477 = vpack.c.b16 %v442, %v435
      %v478 = vpack.c.b16 %v443, %v436
      %v479 = vpack.c.b16 %v444, %v437
      %v480 = vpack.c.b16 %v452, %v445
      %v481 = vpack.c.b16 %v453, %v446
      %v482 = vpack.c.b16 %v454, %v447
      %v483 = vpack.c.b16 %v455, %v448
      %v484 = vpack.c.b16 %v456, %v449
      %v485 = vpack.c.b16 %v457, %v450
      %v486 = vpack.c.b16 %v458, %v451
      %v619 = vunpack.c.l.b16 %v259
      %v620 = vunpack.c.l.b16 %v260
      %v621 = vunpack.c.l.b16 %v261
      %v622 = vunpack.c.l.b16 %v262
      %v623 = vunpack.c.l.b16 %v263
      %v624 = vunpack.c.l.b16 %v264
      %v625 = vunpack.c.l.b16 %v265
      %v626 = vunpack.c.l.b16 %v266
      %v627 = vunpack.c.l.b16 %v267
      %v628 = vunpack.c.l.b16 %v268
      %v629 = vunpack.c.l.b16 %v269
      %v630 = vunpack.c.l.b16 %v270
      %v631 = vunpack.c.l.b16 %v271
      %v632 = vunpack.c.l.b16 %v272
      %v633 = vunpack.c.l.b16 %v273
      %v634 = vunpack.c.l.b16 %v274
      %v635 = vunpack.c.l.b16 %v275
      %v636 = vunpack.c.l.b16 %v276
      %v637 = vunpack.c.l.b16 %v277
      %v638 = vunpack.c.l.b16 %v278
      %v639 = vunpack.c.l.b16 %v279
      %v640 = vunpack.c.l.b16 %v280
      %v641 = vunpack.c.l.b16 %v281
      %v642 = vunpack.c.l.b16 %v282
      %v643 = vunpack.c.l.b16 %v283
      %v644 = vunpack.c.l.b16 %v284
      %v645 = vunpack.c.l.b16 %v285
      %v646 = vunpack.c.l.b16 %v286
      %v647 = vunpack.c.l.b16 %v287
      %v648 = vunpack.c.l.b16 %v288
      %v649 = vunpack.c.l.b16 %v289
      %v650 = vunpack.c.l.b16 %v290
      %v651 = vunpack.c.l.b16 %v291
      %v652 = vunpack.c.l.b16 %v292
      %v653 = vunpack.c.l.b16 %v293
      %v654 = vunpack.c.l.b16 %v294
      %v655 = vunpack.c.l.b16 %v295
      %v656 = vunpack.c.l.b16 %v296
      %v657 = vunpack.c.l.b16 %v297
      %v658 = vunpack.c.l.b16 %v298
      %v659 = vunpack.c.l.b16 %v299
      %v660 = vunpack.c.l.b16 %v300
      %v661 = vunpack.c.l.b16 %v301
      %v662 = vunpack.c.l.b16 %v302
      %v663 = vunpack.c.l.b16 %v303
      %v664 = vunpack.c.l.b16 %v304
      %v665 = vunpack.c.l.b16 %v305
      %v666 = vunpack.c.l.b16 %v306
      %v667 = vunpack.c.l.b16 %v307
      %v668 = vunpack.c.l.b16 %v308
      %v669 = vunpack.c.l.b16 %v309
      %v670 = vunpack.c.l.b16 %v310
      %v671 = vunpack.c.l.b16 %v311
      %v672 = vunpack.c.l.b16 %v312
      %v673 = vunpack.c.l.b16 %v313
      %v674 = vunpack.c.l.b16 %v314
      %v675 = vunpack.c.l.b16 %v315
      %v676 = vunpack.c.l.b16 %v316
      %v677 = vunpack.c.l.b16 %v317
      %v678 = vunpack.c.l.b16 %v318
      %v679 = vunpack.c.l.b16 %v319
      %v680 = vunpack.c.l.b16 %v320
      %v681 = vunpack.c.l.b16 %v321
      %v682 = vunpack.c.l.b16 %v322
      %v683 = vunpack.c.l.b16 %v323
      %v684 = vunpack.c.l.b16 %v324
      %v685 = vunpack.c.l.b16 %v325
      %v686 = vunpack.c.l.b16 %v326
      %v687 = vunpack.c.l.b16 %v327
      %v688 = vunpack.c.l.b16 %v328
      %v689 = vunpack.c.l.b16 %v329
      %v690 = vunpack.c.l.b16 %v330
      %v691 = vunpack.c.l.b16 %v331
      %v692 = vunpack.c.l.b16 %v332
      %v693 = vunpack.c.l.b16 %v333
      %v694 = vunpack.c.l.b16 %v334
      %v695 = vunpack.c.l.b16 %v335
      %v696 = vunpack.c.l.b16 %v336
      %v697 = vunpack.c.l.b16 %v337
      %v698 = vunpack.c.l.b16 %v338
      %v699 = vunpack.c.l.b16 %v339
      %v700 = vunpack.c.l.b16 %v340
      %v701 = vunpack.c.l.b16 %v341
      %v702 = vunpack.c.l.b16 %v342
      %v703 = vunpack.c.l.b16 %v343
      %v704 = vunpack.c.l.b16 %v344
      %v705 = vunpack.c.l.b16 %v345
      %v706 = vunpack.c.l.b16 %v346
      %v707 = vunpack.c.l.b16 %v347
      %v708 = vunpack.c.l.b16 %v348
      %v709 = vunpack.c.l.b16 %v349
      %v710 = vunpack.c.l.b16 %v350
      %v711 = vunpack.c.l.b16 %v351
      %v712 = vunpack.c.l.b16 %v352
      %v713 = vunpack.c.l.b16 %v353
      %v714 = vunpack.c.l.b16 %v354
      %v715 = vunpack.c.l.b16 %v355
      %v716 = vunpack.c.l.b16 %v356
      %v717 = vunpack.c.l.b16 %v357
      %v718 = vunpack.c.l.b16 %v358
      %v719 = vunpack.c.l.b16 %v359
      %v720 = vunpack.c.l.b16 %v360
      %v721 = vunpack.c.l.b16 %v361
      %v722 = vunpack.c.l.b16 %v362
      %v723 = vunpack.c.l.b16 %v363
      %v724 = vunpack.c.l.b16 %v364
      %v725 = vunpack.c.l.b16 %v365
      %v726 = vunpack.c.l.b16 %v366
      %v727 = vpack.c.b16 %v620, %v619
      %v728 = vpack.c.b16 %v622, %v621
      %v729 = vpack.c.b16 %v624, %v623
      %v730 = vpack.c.b16 %v626, %v625
      %v731 = vpack.c.b16 %v628, %v627
      %v732 = vpack.c.b16 %v630, %v629
      %v733 = vpack.c.b16 %v632, %v631
      %v734 = vpack.c.b16 %v634, %v633
      %v735 = vpack.c.b16 %v636, %v635
      %v736 = vpack.c.b16 %v638, %v637
      %v737 = vpack.c.b16 %v640, %v639
      %v738 = vpack.c.b16 %v642, %v641
      %v739 = vpack.c.b16 %v644, %v643
      %v740 = vpack.c.b16 %v646, %v645
      %v741 = vpack.c.b16 %v648, %v647
      %v742 = vpack.c.b16 %v650, %v649
      %v743 = vpack.c.b16 %v652, %v651
      %v744 = vpack.c.b16 %v654, %v653
      %v745 = vpack.c.b16 %v656, %v655
      %v746 = vpack.c.b16 %v658, %v657
      %v747 = vpack.c.b16 %v660, %v659
      %v748 = vpack.c.b16 %v662, %v661
      %v749 = vpack.c.b16 %v664, %v663
      %v750 = vpack.c.b16 %v666, %v665
      %v751 = vpack.c.b16 %v668, %v667
      %v752 = vpack.c.b16 %v670, %v669
      %v753 = vpack.c.b16 %v672, %v671
      %v754 = vpack.c.b16 %v674, %v673
      %v755 = vpack.c.b16 %v676, %v675
      %v756 = vpack.c.b16 %v678, %v677
      %v757 = vpack.c.b16 %v680, %v679
      %v758 = vpack.c.b16 %v682, %v681
      %v759 = vpack.c.b16 %v684, %v683
      %v760 = vpack.c.b16 %v686, %v685
      %v761 = vpack.c.b16 %v688, %v687
      %v762 = vpack.c.b16 %v690, %v689
      %v763 = vpack.c.b16 %v692, %v691
      %v764 = vpack.c.b16 %v694, %v693
      %v765 = vpack.c.b16 %v696, %v695
      %v766 = vpack.c.b16 %v698, %v697
      %v767 = vpack.c.b16 %v700, %v699
      %v768 = vpack.c.b16 %v702, %v701
      %v769 = vpack.c.b16 %v704, %v703
      %v770 = vpack.c.b16 %v706, %v705
      %v771 = vpack.c.b16 %v708, %v707
      %v772 = vpack.c.b16 %v710, %v709
      %v773 = vpack.c.b16 %v712, %v711
      %v774 = vpack.c.b16 %v714, %v713
      %v775 = vpack.c.b16 %v716, %v715
      %v776 = vpack.c.b16 %v718, %v717
      %v777 = vpack.c.b16 %v720, %v719
      %v778 = vpack.c.b16 %v722, %v721
      %v779 = vpack.c.b16 %v724, %v723
      %v780 = vpack.c.b16 %v726, %v725
      %vm835 = vcmask 785408
      %v837 = vsel %vm835, %v465, 0
      %v840 = vsel %vm835, %v472, 0
      %v843 = vsel %vm835, %v479, 0
      %v846 = vsel %vm835, %v486, 0
      %848 = vmatpush.bf16.msra.mxu0 %v734
      %849 = vmatpush.bf16.msra.mxu0 %v733
      %850 = vmatpush.bf16.msra.mxu0 %v732
      %851 = vmatpush.bf16.msra.mxu0 %v731
      %852 = vmatpush.bf16.msra.mxu0 %v730
      %853 = vmatpush.bf16.msra.mxu0 %v729
      %854 = vmatpush.bf16.msra.mxu0 %v728
      %855 = vmatpush.bf16.msra.mxu0 %v727
      %856 = vmatmul.bf16.gmra.mxu0 %v459
      %v857 = vpop.f32.mrf.mxu0
      %v858 = vadd.f32 %v369, %v857
      %v859 = vpop.f32.mrf.mxu0
      %v860 = vadd.f32 %v369, %v859
      %861 = vmatmul.bf16.gmra.mxu0 %v466
      %v862 = vpop.f32.mrf.mxu0
      %v863 = vadd.f32 %v369, %v862
      %v864 = vpop.f32.mrf.mxu0
      %v865 = vadd.f32 %v369, %v864
      %866 = vmatmul.bf16.gmra.mxu0 %v473
      %v867 = vpop.f32.mrf.mxu0
      %v868 = vadd.f32 %v369, %v867
      %v869 = vpop.f32.mrf.mxu0
      %v870 = vadd.f32 %v369, %v869
      %871 = vmatmul.bf16.gmra.mxu0 %v480
      %v872 = vpop.f32.mrf.mxu0
      %v873 = vadd.f32 %v369, %v872
      %v874 = vpop.f32.mrf.mxu0
      %v875 = vadd.f32 %v369, %v874
      %876 = vdwg.mxu0
      %877 = vmatpush.bf16.msra.mxu0 %v742
      %878 = vmatpush.bf16.msra.mxu0 %v741
      %879 = vmatpush.bf16.msra.mxu0 %v740
      %880 = vmatpush.bf16.msra.mxu0 %v739
      %881 = vmatpush.bf16.msra.mxu0 %v738
      %882 = vmatpush.bf16.msra.mxu0 %v737
      %883 = vmatpush.bf16.msra.mxu0 %v736
      %884 = vmatpush.bf16.msra.mxu0 %v735
      %885 = vmatmul.bf16.gmra.mxu0 %v460
      %v886 = vpop.f32.mrf.mxu0
      %v887 = vadd.f32 %v858, %v886
      %v888 = vpop.f32.mrf.mxu0
      %v889 = vadd.f32 %v860, %v888
      %890 = vmatmul.bf16.gmra.mxu0 %v467
      %v891 = vpop.f32.mrf.mxu0
      %v892 = vadd.f32 %v863, %v891
      %v893 = vpop.f32.mrf.mxu0
      %v894 = vadd.f32 %v865, %v893
      %895 = vmatmul.bf16.gmra.mxu0 %v474
      %v896 = vpop.f32.mrf.mxu0
      %v897 = vadd.f32 %v868, %v896
      %v898 = vpop.f32.mrf.mxu0
      %v899 = vadd.f32 %v870, %v898
      %900 = vmatmul.bf16.gmra.mxu0 %v481
      %v901 = vpop.f32.mrf.mxu0
      %v902 = vadd.f32 %v873, %v901
      %v903 = vpop.f32.mrf.mxu0
      %v904 = vadd.f32 %v875, %v903
      %905 = vdwg.mxu0
      %906 = vmatpush.bf16.msra.mxu0 %v750
      %907 = vmatpush.bf16.msra.mxu0 %v749
      %908 = vmatpush.bf16.msra.mxu0 %v748
      %909 = vmatpush.bf16.msra.mxu0 %v747
      %910 = vmatpush.bf16.msra.mxu0 %v746
      %911 = vmatpush.bf16.msra.mxu0 %v745
      %912 = vmatpush.bf16.msra.mxu0 %v744
      %913 = vmatpush.bf16.msra.mxu0 %v743
      %914 = vmatmul.bf16.gmra.mxu0 %v461
      %v915 = vpop.f32.mrf.mxu0
      %v916 = vadd.f32 %v887, %v915
      %v917 = vpop.f32.mrf.mxu0
      %v918 = vadd.f32 %v889, %v917
      %919 = vmatmul.bf16.gmra.mxu0 %v468
      %v920 = vpop.f32.mrf.mxu0
      %v921 = vadd.f32 %v892, %v920
      %v922 = vpop.f32.mrf.mxu0
      %v923 = vadd.f32 %v894, %v922
      %924 = vmatmul.bf16.gmra.mxu0 %v475
      %v925 = vpop.f32.mrf.mxu0
      %v926 = vadd.f32 %v897, %v925
      %v927 = vpop.f32.mrf.mxu0
      %v928 = vadd.f32 %v899, %v927
      %929 = vmatmul.bf16.gmra.mxu0 %v482
      %v930 = vpop.f32.mrf.mxu0
      %v931 = vadd.f32 %v902, %v930
      %v932 = vpop.f32.mrf.mxu0
      %v933 = vadd.f32 %v904, %v932
      %934 = vdwg.mxu0
      %935 = vmatpush.bf16.msra.mxu0 %v758
      %936 = vmatpush.bf16.msra.mxu0 %v757
      %937 = vmatpush.bf16.msra.mxu0 %v756
      %938 = vmatpush.bf16.msra.mxu0 %v755
      %939 = vmatpush.bf16.msra.mxu0 %v754
      %940 = vmatpush.bf16.msra.mxu0 %v753
      %941 = vmatpush.bf16.msra.mxu0 %v752
      %942 = vmatpush.bf16.msra.mxu0 %v751
      %943 = vmatmul.bf16.gmra.mxu0 %v462
      %v944 = vpop.f32.mrf.mxu0
      %v945 = vadd.f32 %v916, %v944
      %v946 = vpop.f32.mrf.mxu0
      %v947 = vadd.f32 %v918, %v946
      %948 = vmatmul.bf16.gmra.mxu0 %v469
      %v949 = vpop.f32.mrf.mxu0
      %v950 = vadd.f32 %v921, %v949
      %v951 = vpop.f32.mrf.mxu0
      %v952 = vadd.f32 %v923, %v951
      %953 = vmatmul.bf16.gmra.mxu0 %v476
      %v954 = vpop.f32.mrf.mxu0
      %v955 = vadd.f32 %v926, %v954
      %v956 = vpop.f32.mrf.mxu0
      %v957 = vadd.f32 %v928, %v956
      %958 = vmatmul.bf16.gmra.mxu0 %v483
      %v959 = vpop.f32.mrf.mxu0
      %v960 = vadd.f32 %v931, %v959
      %v961 = vpop.f32.mrf.mxu0
      %v962 = vadd.f32 %v933, %v961
      %963 = vdwg.mxu0
      %964 = vmatpush.bf16.msra.mxu0 %v766
      %965 = vmatpush.bf16.msra.mxu0 %v765
      %966 = vmatpush.bf16.msra.mxu0 %v764
      %967 = vmatpush.bf16.msra.mxu0 %v763
      %968 = vmatpush.bf16.msra.mxu0 %v762
      %969 = vmatpush.bf16.msra.mxu0 %v761
      %970 = vmatpush.bf16.msra.mxu0 %v760
      %971 = vmatpush.bf16.msra.mxu0 %v759
      %972 = vmatmul.bf16.gmra.mxu0 %v463
      %v973 = vpop.f32.mrf.mxu0
      %v974 = vadd.f32 %v945, %v973
      %v975 = vpop.f32.mrf.mxu0
      %v976 = vadd.f32 %v947, %v975
      %977 = vmatmul.bf16.gmra.mxu0 %v470
      %v978 = vpop.f32.mrf.mxu0
      %v979 = vadd.f32 %v950, %v978
      %v980 = vpop.f32.mrf.mxu0
      %v981 = vadd.f32 %v952, %v980
      %982 = vmatmul.bf16.gmra.mxu0 %v477
      %v983 = vpop.f32.mrf.mxu0
      %v984 = vadd.f32 %v955, %v983
      %v985 = vpop.f32.mrf.mxu0
      %v986 = vadd.f32 %v957, %v985
      %987 = vmatmul.bf16.gmra.mxu0 %v484
      %v988 = vpop.f32.mrf.mxu0
      %v989 = vadd.f32 %v960, %v988
      %v990 = vpop.f32.mrf.mxu0
      %v991 = vadd.f32 %v962, %v990
      %992 = vdwg.mxu0
      %993 = vmatpush.bf16.msra.mxu0 %v774
      %994 = vmatpush.bf16.msra.mxu0 %v773
      %995 = vmatpush.bf16.msra.mxu0 %v772
      %996 = vmatpush.bf16.msra.mxu0 %v771
      %997 = vmatpush.bf16.msra.mxu0 %v770
      %998 = vmatpush.bf16.msra.mxu0 %v769
      %999 = vmatpush.bf16.msra.mxu0 %v768
      %1000 = vmatpush.bf16.msra.mxu0 %v767
      %1001 = vmatmul.bf16.gmra.mxu0 %v464
      %v1002 = vpop.f32.mrf.mxu0
      %v1003 = vadd.f32 %v974, %v1002
      %v1004 = vpop.f32.mrf.mxu0
      %v1005 = vadd.f32 %v976, %v1004
      %1006 = vmatmul.bf16.gmra.mxu0 %v471
      %v1007 = vpop.f32.mrf.mxu0
      %v1008 = vadd.f32 %v979, %v1007
      %v1009 = vpop.f32.mrf.mxu0
      %v1010 = vadd.f32 %v981, %v1009
      %1011 = vmatmul.bf16.gmra.mxu0 %v478
      %v1012 = vpop.f32.mrf.mxu0
      %v1013 = vadd.f32 %v984, %v1012
      %v1014 = vpop.f32.mrf.mxu0
      %v1015 = vadd.f32 %v986, %v1014
      %1016 = vmatmul.bf16.gmra.mxu0 %v485
      %v1017 = vpop.f32.mrf.mxu0
      %v1018 = vadd.f32 %v989, %v1017
      %v1019 = vpop.f32.mrf.mxu0
      %v1020 = vadd.f32 %v991, %v1019
      %1021 = vdwg.mxu0
      %1022 = vmatpush.bf16.msra.mxu0 0
      %1023 = vmatpush.bf16.msra.mxu0 0
      %1024 = vmatpush.bf16.msra.mxu0 %v780
      %1025 = vmatpush.bf16.msra.mxu0 %v779
      %1026 = vmatpush.bf16.msra.mxu0 %v778
      %1027 = vmatpush.bf16.msra.mxu0 %v777
      %1028 = vmatpush.bf16.msra.mxu0 %v776
      %1029 = vmatpush.bf16.msra.mxu0 %v775
      %1030 = vmatmul.bf16.gmra.mxu0 %v837
      %v1031 = vpop.f32.mrf.mxu0
      %v1032 = vadd.f32 %v1003, %v1031
      %v1033 = vpop.f32.mrf.mxu0
      %v1034 = vadd.f32 %v1005, %v1033
      %1035 = vmatmul.bf16.gmra.mxu0 %v840
      %v1036 = vpop.f32.mrf.mxu0
      %v1037 = vadd.f32 %v1008, %v1036
      %v1038 = vpop.f32.mrf.mxu0
      %v1039 = vadd.f32 %v1010, %v1038
      %1040 = vmatmul.bf16.gmra.mxu0 %v843
      %v1041 = vpop.f32.mrf.mxu0
      %v1042 = vadd.f32 %v1013, %v1041
      %v1043 = vpop.f32.mrf.mxu0
      %v1044 = vadd.f32 %v1015, %v1043
      %1045 = vmatmul.bf16.gmra.mxu0 %v846
      %v1046 = vpop.f32.mrf.mxu0
      %v1047 = vadd.f32 %v1018, %v1046
      %v1048 = vpop.f32.mrf.mxu0
      %v1049 = vadd.f32 %v1020, %v1048
      %1050 = vdwg.mxu0
      %v1051 = vld [vmem:[%s218] sm:$0xf]
      %v1052 = vld [vmem:[%s218 + $0x4] sm:$0xf]
      %v1053 = vld [vmem:[%s218 + $0x8] sm:$0xf]
      %v1054 = vld [vmem:[%s218 + $0xc] sm:$0xf]
      %v1055 = vld [vmem:[%s218 + $0x10] sm:$0xf]
      %v1056 = vld [vmem:[%s218 + $0x14] sm:$0xf]
      %v1057 = vld [vmem:[%s218 + $0x18] sm:$0xf]
      %v1058 = vld [vmem:[%s218 + $0x1c] sm:$0xf]
      %v1059 = vunpack.c.l.bf16 %v1051
      %v1060 = vunpack.c.l.bf16 %v1052
      %v1061 = vunpack.c.l.bf16 %v1053
      %v1062 = vunpack.c.l.bf16 %v1054
      %v1063 = vunpack.c.l.bf16 %v1055
      %v1064 = vunpack.c.l.bf16 %v1056
      %v1065 = vunpack.c.l.bf16 %v1057
      %v1066 = vunpack.c.l.bf16 %v1058
      %v1067 = vadd.f32 %v1032, %v1059
      %v1068 = vadd.f32 %v1034, %v1060
      %v1069 = vadd.f32 %v1037, %v1061
      %v1070 = vadd.f32 %v1039, %v1062
      %v1071 = vadd.f32 %v1042, %v1063
      %v1072 = vadd.f32 %v1044, %v1064
      %v1073 = vadd.f32 %v1047, %v1065
      %v1074 = vadd.f32 %v1049, %v1066
      %v1075 = vmax.f32 %v1067, 0.0
      %v1076 = vmax.f32 %v1068, 0.0
      %v1077 = vmax.f32 %v1069, 0.0
      %v1078 = vmax.f32 %v1070, 0.0
      %v1079 = vmax.f32 %v1071, 0.0
      %v1080 = vmax.f32 %v1072, 0.0
      %v1081 = vmax.f32 %v1073, 0.0
      %v1082 = vmax.f32 %v1074, 0.0
      %v1083 = vpack.c.bf16 %v1075, %v1075
      %v1084 = vpack.c.bf16 %v1076, %v1076
      %v1085 = vpack.c.bf16 %v1077, %v1077
      %v1086 = vpack.c.bf16 %v1078, %v1078
      %v1087 = vpack.c.bf16 %v1079, %v1079
      %v1088 = vpack.c.bf16 %v1080, %v1080
      %v1089 = vpack.c.bf16 %v1081, %v1081
      %v1090 = vpack.c.bf16 %v1082, %v1082
      %vm1091 = vcmask 257024
      %1092 = vst.msk [vmem:[%s224] sm:$0xf] %vm1091, %v1083
      %1093 = vst.msk [vmem:[%s224 + $0x4] sm:$0xf] %vm1091, %v1084
      %1094 = vst.msk [vmem:[%s224 + $0x8] sm:$0xf] %vm1091, %v1085
      %1095 = vst.msk [vmem:[%s224 + $0xc] sm:$0xf] %vm1091, %v1086
      %1096 = vst.msk [vmem:[%s224 + $0x10] sm:$0xf] %vm1091, %v1087
      %1097 = vst.msk [vmem:[%s224 + $0x14] sm:$0xf] %vm1091, %v1088
      %1098 = vst.msk [vmem:[%s224 + $0x18] sm:$0xf] %vm1091, %v1089
      %1099 = vst.msk [vmem:[%s224 + $0x1c] sm:$0xf] %vm1091, %v1090
      %s1100 = smul.u32 8, %s15
      %p1101 = scmp.lt.s32.totalorder %s1100, 15
      %s1102 = scalar_select %p1101, %s1100, 15
      %s1103 = smul.addr %s1102, 4
      %s1104 = scalar_lea.vmem %s4, %s1103
      // Predicated region
      $region37: #{psm_gnn_forward.21} parent=35 // pred_check
        %p1105 = pneg %p127
      $region38: #{psm_gnn_forward.21} parent=35 // pred_check_branch
        %1107 = sbr.rel (%p1105) target = $region40
      $region39: #{psm_gnn_forward.21} parent=35 // pred_region
        %s1108 = smul.u32 8, %s15
      $region40: #{psm_gnn_forward.21} parent=35 // pred_fallthru
        _
    $region36: #{psm_gnn_forward.21} parent=5 // pred_fallthru
      _
    %p1109 = scmp.le.s32.totalorder 2, %s10
    // Predicated region
    $region41: #{psm_gnn_forward.21} parent=5 // pred_check
      %p1110 = pneg %p1109
    $region42: #{psm_gnn_forward.21} parent=5 // pred_check_branch
      %1112 = sbr.rel (%p1110) target = $region44
    $region43: #{psm_gnn_forward.21} parent=5 // pred_region
      %s1113 = ssub.s32 %s10, 2
      // Predicated region
      $region45: #{psm_gnn_forward.21} parent=43 // pred_check
        %p1114 = pneg %p133
      $region46: #{psm_gnn_forward.21} parent=43 // pred_check_branch
        %1116 = sbr.rel (%p1114) target = $region48
      $region47: #{psm_gnn_forward.21} parent=43 // pred_region
        %s1117 = smul.u32 8, %s16
        %p1118 = scmp.lt.s32.totalorder %s1117, 15
        %s1119 = scalar_select %p1118, %s1117, 15
        %s1120 = smul.addr %s1119, 4
        %s1121 = scalar_lea.vmem %s4, %s1120
      $region48: #{psm_gnn_forward.21} parent=43 // pred_fallthru
        _
    $region44: #{psm_gnn_forward.21} parent=5 // pred_fallthru
      _
  $region6: #{psm_gnn_forward.21} parent=0 // loop_footer
    %s14 = sadd.s32 1, %s10
  $region7: #{psm_gnn_forward.21} parent=0 // loop_footer_branch
    %9 = sbr.rel target = $region3
  $region8: #{psm_gnn_forward.21} parent=0 // loop_exit
    _

// kernel: psm_gnn_forward.24
$region0: #{psm_gnn_forward.24}
  #allocation0 [shape = 'u32[]', space=smem, size = 0x4, offset = 0x4, fixed_abs, tag = 'smem constant byte address 0x4 - core index']
  #allocation1 [shape = 'u32[72,128]{1,0:T(1,128)}', space=vmem, size = 0x9000, scoped, tag = 'internal scratch']
  %s0 = inlined_call_operand.vmem [shape: bf16[16,864], index: 0, kind: input, shape index: {}]
  %s1 = inlined_call_operand.vmem [shape: bf16[864,128], index: 1, kind: input, shape index: {}]
  %s2 = inlined_call_operand.vmem [shape: f32[1,128], index: 2, kind: input, shape index: {}]
  %s3 = inlined_call_operand.vmem [shape: bf16[16,128], index: 3, kind: output, shape index: {}]
  %s4 = sld [smem:[#allocation0]]
  $region45: #{psm_gnn_forward.24} parent=0
    _
  %s6 = ssub.s32 1, %s4
  %s7 = scalar_select 0, %s6, %s4
  loop: start=0, step=1, limit=4
  $region2: #{psm_gnn_forward.24} parent=0 // loop_pre_header
    _
  $region3: #{psm_gnn_forward.24} parent=0 // loop_header
    %s9 = sphi 0, %s13
    %p10 = scmp.ge.s32.totalorder %s9, 4
    %s19 = sphi 0, %s21
    %s22 = sphi 0, %s19
    %s23 = sphi 0, %s22
    %s39 = sphi 0, %s23
    %s43 = sphi 0, %s43
    %s45 = sphi 0, %s43
    %s46 = sphi 0, %s45
    %s60 = sphi 0, %s46
    %s64 = sphi 0, %s64
    %s66 = sphi 0, %s64
    %s67 = sphi 0, %s66
    %s81 = sphi 0, %s67
    %s87 = sphi 0, %s89
    %s90 = sphi 0, %s87
    %s91 = sphi 0, %s90
    %s107 = sphi 0, %s91
  $region4: #{psm_gnn_forward.24} parent=0 // loop_header_branch
    %12 = sbr.rel (%p10) target = $region8
  $region5: #{psm_gnn_forward.24} parent=0 // loop_body
    %s14 = ssub.s32 %s9, 1
    %s15 = ssub.s32 %s9, 2
    %s16 = sadd.s32 %s9, 1
    %s17 = ssub.s32 %s9, %s16
    %p18 = scmp.eq.s32.totalorder %s17, 0
    %s20 = sadd.s32 %s19, 1
    %s21 = scalar_select %p18, %s19, %s20
    %p24 = pneg %p18
    %p25 = scmp.eq.s32.totalorder %s9, 1
    %p26 = por %p24, %p25
    %p27 = scmp.ne.s32.totalorder %s19, %s22
    %p28 = scmp.eq.s32.totalorder %s9, 0
    %p29 = por %p27, %p28
    %p30 = scmp.ne.s32.totalorder %s19, %s22
    %p31 = scmp.eq.s32.totalorder %s14, 1
    %p32 = por %p30, %p31
    %p33 = scmp.ne.s32.totalorder %s22, %s23
    %p34 = scmp.eq.s32.totalorder %s14, 0
    %p35 = por %p33, %p34
    %p36 = scmp.ne.s32.totalorder %s22, %s23
    %p37 = scmp.eq.s32.totalorder %s15, 1
    %p38 = por %p36, %p37
    %p40 = scmp.ne.s32.totalorder %s23, %s39
    %p41 = scmp.eq.s32.totalorder %s15, 0
    %p42 = por %p40, %p41
    %s44 = sadd.s32 %s43, 1
    %p47 = scmp.eq.s32.totalorder %s9, 1
    %p48 = scmp.ne.s32.totalorder %s43, %s45
    %p49 = scmp.eq.s32.totalorder %s9, 0
    %p50 = por %p48, %p49
    %p51 = scmp.ne.s32.totalorder %s43, %s45
    %p52 = scmp.eq.s32.totalorder %s14, 1
    %p53 = por %p51, %p52
    %p54 = scmp.ne.s32.totalorder %s45, %s46
    %p55 = scmp.eq.s32.totalorder %s14, 0
    %p56 = por %p54, %p55
    %p57 = scmp.ne.s32.totalorder %s45, %s46
    %p58 = scmp.eq.s32.totalorder %s15, 1
    %p59 = por %p57, %p58
    %p61 = scmp.ne.s32.totalorder %s46, %s60
    %p62 = scmp.eq.s32.totalorder %s15, 0
    %p63 = por %p61, %p62
    %s65 = sadd.s32 %s64, 1
    %p68 = scmp.eq.s32.totalorder %s9, 1
    %p69 = scmp.ne.s32.totalorder %s64, %s66
    %p70 = scmp.eq.s32.totalorder %s9, 0
    %p71 = por %p69, %p70
    %p72 = scmp.ne.s32.totalorder %s64, %s66
    %p73 = scmp.eq.s32.totalorder %s14, 1
    %p74 = por %p72, %p73
    %p75 = scmp.ne.s32.totalorder %s66, %s67
    %p76 = scmp.eq.s32.totalorder %s14, 0
    %p77 = por %p75, %p76
    %p78 = scmp.ne.s32.totalorder %s66, %s67
    %p79 = scmp.eq.s32.totalorder %s15, 1
    %p80 = por %p78, %p79
    %p82 = scmp.ne.s32.totalorder %s67, %s81
    %p83 = scmp.eq.s32.totalorder %s15, 0
    %p84 = por %p82, %p83
    %s85 = ssub.s32 %s9, %s16
    %p86 = scmp.eq.s32.totalorder %s85, 0
    %s88 = sadd.s32 %s87, 1
    %s89 = scalar_select %p86, %s87, %s88
    %p92 = pneg %p86
    %p93 = scmp.eq.s32.totalorder %s9, 1
    %p94 = por %p92, %p93
    %p95 = scmp.ne.s32.totalorder %s87, %s90
    %p96 = scmp.eq.s32.totalorder %s9, 0
    %p97 = por %p95, %p96
    %p98 = scmp.ne.s32.totalorder %s87, %s90
    %p99 = scmp.eq.s32.totalorder %s14, 1
    %p100 = por %p98, %p99
    %p101 = scmp.ne.s32.totalorder %s90, %s91
    %p102 = scmp.eq.s32.totalorder %s14, 0
    %p103 = por %p101, %p102
    %p104 = scmp.ne.s32.totalorder %s90, %s91
    %p105 = scmp.eq.s32.totalorder %s15, 1
    %p106 = por %p104, %p105
    %p108 = scmp.ne.s32.totalorder %s91, %s107
    %p109 = scmp.eq.s32.totalorder %s15, 0
    %p110 = por %p108, %p109
    %p111 = scmp.le.s32.totalorder 1, %s9
    %p112 = scmp.lt.s32.totalorder %s9, 3
    %p113 = pnand %p111, %p112
    %p114 = pneg %p113
    // Predicated region
    $region9: #{psm_gnn_forward.24} parent=5 // pred_check
      _
    $region10: #{psm_gnn_forward.24} parent=5 // pred_check_branch
      %116 = sbr.rel (%p113) target = $region12
    $region11: #{psm_gnn_forward.24} parent=5 // pred_region
      %s117 = ssub.s32 %s9, 1
      // Predicated region
      $region13: #{psm_gnn_forward.24} parent=11 // pred_check
        %p118 = pneg %p56
      $region14: #{psm_gnn_forward.24} parent=11 // pred_check_branch
        %120 = sbr.rel (%p118) target = $region16
      $region15: #{psm_gnn_forward.24} parent=11 // pred_region
        _
      $region16: #{psm_gnn_forward.24} parent=11 // pred_fallthru
        _
      // Predicated region
      $region17: #{psm_gnn_forward.24} parent=11 // pred_check
        %p121 = pneg %p77
      $region18: #{psm_gnn_forward.24} parent=11 // pred_check_branch
        %123 = sbr.rel (%p121) target = $region20
      $region19: #{psm_gnn_forward.24} parent=11 // pred_region
        _
      $region20: #{psm_gnn_forward.24} parent=11 // pred_fallthru
        _
    $region12: #{psm_gnn_forward.24} parent=5 // pred_fallthru
      _
    %p124 = scmp.lt.s32.totalorder %s9, 2
    // Predicated region
    $region21: #{psm_gnn_forward.24} parent=5 // pred_check
      %p125 = pneg %p124
    $region22: #{psm_gnn_forward.24} parent=5 // pred_check_branch
      %127 = sbr.rel (%p125) target = $region24
    $region23: #{psm_gnn_forward.24} parent=5 // pred_region
      // Predicated region
      $region25: #{psm_gnn_forward.24} parent=23 // pred_check
        %p128 = pneg %p29
      $region26: #{psm_gnn_forward.24} parent=23 // pred_check_branch
        %130 = sbr.rel (%p128) target = $region28
      $region27: #{psm_gnn_forward.24} parent=23 // pred_region
        %p131 = scmp.lt.s32.totalorder %s9, 1
        %s132 = scalar_select %p131, %s9, 1
        %s133 = smul.addr %s132, 7
        %s134 = smul.addr %s133, 4
        %s135 = scalar_lea.vmem %s0, %s134
      $region28: #{psm_gnn_forward.24} parent=23 // pred_fallthru
        _
    $region24: #{psm_gnn_forward.24} parent=5 // pred_fallthru
      _
    %p136 = scmp.le.s32.totalorder 1, %s9
    %p137 = scmp.lt.s32.totalorder %s9, 3
    %p138 = pnand %p136, %p137
    %p139 = pneg %p138
    // Predicated region
    $region29: #{psm_gnn_forward.24} parent=5 // pred_check
      _
    $region30: #{psm_gnn_forward.24} parent=5 // pred_check_branch
      %141 = sbr.rel (%p138) target = $region32
    $region31: #{psm_gnn_forward.24} parent=5 // pred_region
      %s142 = ssub.s32 %s9, 1
      %p143 = scmp.lt.s32.totalorder %s14, 1
      %s144 = scalar_select %p143, %s14, 1
      %s145 = smul.addr %s144, 7
      %s146 = smul.addr %s145, 4
      %s147 = scalar_lea.vmem %s0, %s146
      %p148 = pneg %p35
      %p149 = pneg %p32
      %p150 = pneg %p56
      %p151 = pneg %p53
      %p152 = pneg %p77
      %p153 = pneg %p74
      %p154 = pneg %p103
      %p155 = pneg %p100
      %p156 = scmp.lt.s32.totalorder %s14, 1
      %s157 = scalar_select %p156, %s14, 1
      %s158 = smul.addr %s157, 4
      %s159 = scalar_lea.vmem %s3, %s158
      %p160 = scmp.lt.s32.totalorder %s14, 1
      %s161 = scalar_select %p160, %s14, 1
      %s162 = smul.addr %s161, 7
      %s163 = smul.addr %s162, 4
      %s164 = scalar_lea.vmem %s0, %s163
      %p165 = scmp.lt.s32.totalorder %s14, 1
      %s166 = scalar_select %p165, %s14, 1
      %s167 = smul.addr %s166, 4
      %s168 = scalar_lea.vmem %s3, %s167
      %v170 = vld [vmem:[%s164] sm:$0xff]
      %v171 = vld [vmem:[%s164 + $0x8] sm:$0xff]
      %v172 = vld [vmem:[%s164 + $0x10] sm:$0xff]
      %v173 = vld [vmem:[%s164 + $0x18] sm:$0xf]
      %v174 = vld [vmem:[%s1] sm:$0xf]
      %v175 = vld [vmem:[%s1 + $0x4] sm:$0xf]
      %v176 = vld [vmem:[%s1 + $0x8] sm:$0xf]
      %v177 = vld [vmem:[%s1 + $0xc] sm:$0xf]
      %v178 = vld [vmem:[%s1 + $0x10] sm:$0xf]
      %v179 = vld [vmem:[%s1 + $0x14] sm:$0xf]
      %v180 = vld [vmem:[%s1 + $0x18] sm:$0xf]
      %v181 = vld [vmem:[%s1 + $0x1c] sm:$0xf]
      %v182 = vld [vmem:[%s1 + $0x20] sm:$0xf]
      %v183 = vld [vmem:[%s1 + $0x24] sm:$0xf]
      %v184 = vld [vmem:[%s1 + $0x28] sm:$0xf]
      %v185 = vld [vmem:[%s1 + $0x2c] sm:$0xf]
      %v186 = vld [vmem:[%s1 + $0x30] sm:$0xf]
      %v187 = vld [vmem:[%s1 + $0x34] sm:$0xf]
      %v188 = vld [vmem:[%s1 + $0x38] sm:$0xf]
      %v189 = vld [vmem:[%s1 + $0x3c] sm:$0xf]
      %v190 = vld [vmem:[%s1 + $0x40] sm:$0xf]
      %v191 = vld [vmem:[%s1 + $0x44] sm:$0xf]
      %v192 = vld [vmem:[%s1 + $0x48] sm:$0xf]
      %v193 = vld [vmem:[%s1 + $0x4c] sm:$0xf]
      %v194 = vld [vmem:[%s1 + $0x50] sm:$0xf]
      %v195 = vld [vmem:[%s1 + $0x54] sm:$0xf]
      %v196 = vld [vmem:[%s1 + $0x58] sm:$0xf]
      %v197 = vld [vmem:[%s1 + $0x5c] sm:$0xf]
      %v198 = vld [vmem:[%s1 + $0x60] sm:$0xf]
      %v199 = vld [vmem:[%s1 + $0x64] sm:$0xf]
      %v200 = vld [vmem:[%s1 + $0x68] sm:$0xf]
      %v201 = vld [vmem:[%s1 + $0x6c] sm:$0xf]
      %v202 = vld [vmem:[%s1 + $0x70] sm:$0xf]
      %v203 = vld [vmem:[%s1 + $0x74] sm:$0xf]
      %v204 = vld [vmem:[%s1 + $0x78] sm:$0xf]
      %v205 = vld [vmem:[%s1 + $0x7c] sm:$0xf]
      %v206 = vld [vmem:[%s1 + $0x80] sm:$0xf]
      %v207 = vld [vmem:[%s1 + $0x84] sm:$0xf]
      %v208 = vld [vmem:[%s1 + $0x88] sm:$0xf]
      %v209 = vld [vmem:[%s1 + $0x8c] sm:$0xf]
      %v210 = vld [vmem:[%s1 + $0x90] sm:$0xf]
      %v211 = vld [vmem:[%s1 + $0x94] sm:$0xf]
      %v212 = vld [vmem:[%s1 + $0x98] sm:$0xf]
      %v213 = vld [vmem:[%s1 + $0x9c] sm:$0xf]
      %v214 = vld [vmem:[%s1 + $0xa0] sm:$0xf]
      %v215 = vld [vmem:[%s1 + $0xa4] sm:$0xf]
      %v216 = vld [vmem:[%s1 + $0xa8] sm:$0xf]
      %v217 = vld [vmem:[%s1 + $0xac] sm:$0xf]
      %v218 = vld [vmem:[%s1 + $0xb0] sm:$0xf]
      %v219 = vld [vmem:[%s1 + $0xb4] sm:$0xf]
      %v220 = vld [vmem:[%s1 + $0xb8] sm:$0xf]
      %v221 = vld [vmem:[%s1 + $0xbc] sm:$0xf]
      %v222 = vld [vmem:[%s1 + $0xc0] sm:$0xf]
      %v223 = vld [vmem:[%s1 + $0xc4] sm:$0xf]
      %v224 = vld [vmem:[%s1 + $0xc8] sm:$0xf]
      %v225 = vld [vmem:[%s1 + $0xcc] sm:$0xf]
      %v226 = vld [vmem:[%s1 + $0xd0] sm:$0xf]
      %v227 = vld [vmem:[%s1 + $0xd4] sm:$0xf]
      %v228 = vld [vmem:[%s1 + $0xd8] sm:$0xf]
      %v229 = vld [vmem:[%s1 + $0xdc] sm:$0xf]
      %v230 = vld [vmem:[%s1 + $0xe0] sm:$0xf]
      %v231 = vld [vmem:[%s1 + $0xe4] sm:$0xf]
      %v232 = vld [vmem:[%s1 + $0xe8] sm:$0xf]
      %v233 = vld [vmem:[%s1 + $0xec] sm:$0xf]
      %v234 = vld [vmem:[%s1 + $0xf0] sm:$0xf]
      %v235 = vld [vmem:[%s1 + $0xf4] sm:$0xf]
      %v236 = vld [vmem:[%s1 + $0xf8] sm:$0xf]
      %v237 = vld [vmem:[%s1 + $0xfc] sm:$0xf]
      %v238 = vld [vmem:[%s1 + $0x100] sm:$0xf]
      %v239 = vld [vmem:[%s1 + $0x104] sm:$0xf]
      %v240 = vld [vmem:[%s1 + $0x108] sm:$0xf]
      %v241 = vld [vmem:[%s1 + $0x10c] sm:$0xf]
      %v242 = vld [vmem:[%s1 + $0x110] sm:$0xf]
      %v243 = vld [vmem:[%s1 + $0x114] sm:$0xf]
      %v244 = vld [vmem:[%s1 + $0x118] sm:$0xf]
      %v245 = vld [vmem:[%s1 + $0x11c] sm:$0xf]
      %v246 = vld [vmem:[%s1 + $0x120] sm:$0xf]
      %v247 = vld [vmem:[%s1 + $0x124] sm:$0xf]
      %v248 = vld [vmem:[%s1 + $0x128] sm:$0xf]
      %v249 = vld [vmem:[%s1 + $0x12c] sm:$0xf]
      %v250 = vld [vmem:[%s1 + $0x130] sm:$0xf]
      %v251 = vld [vmem:[%s1 + $0x134] sm:$0xf]
      %v252 = vld [vmem:[%s1 + $0x138] sm:$0xf]
      %v253 = vld [vmem:[%s1 + $0x13c] sm:$0xf]
      %v254 = vld [vmem:[%s1 + $0x140] sm:$0xf]
      %v255 = vld [vmem:[%s1 + $0x144] sm:$0xf]
      %v256 = vld [vmem:[%s1 + $0x148] sm:$0xf]
      %v257 = vld [vmem:[%s1 + $0x14c] sm:$0xf]
      %v258 = vld [vmem:[%s1 + $0x150] sm:$0xf]
      %v259 = vld [vmem:[%s1 + $0x154] sm:$0xf]
      %v260 = vld [vmem:[%s1 + $0x158] sm:$0xf]
      %v261 = vld [vmem:[%s1 + $0x15c] sm:$0xf]
      %v262 = vld [vmem:[%s1 + $0x160] sm:$0xf]
      %v263 = vld [vmem:[%s1 + $0x164] sm:$0xf]
      %v264 = vld [vmem:[%s1 + $0x168] sm:$0xf]
      %v265 = vld [vmem:[%s1 + $0x16c] sm:$0xf]
      %v266 = vld [vmem:[%s1 + $0x170] sm:$0xf]
      %v267 = vld [vmem:[%s1 + $0x174] sm:$0xf]
      %v268 = vld [vmem:[%s1 + $0x178] sm:$0xf]
      %v269 = vld [vmem:[%s1 + $0x17c] sm:$0xf]
      %v270 = vld [vmem:[%s1 + $0x180] sm:$0xf]
      %v271 = vld [vmem:[%s1 + $0x184] sm:$0xf]
      %v272 = vld [vmem:[%s1 + $0x188] sm:$0xf]
      %v273 = vld [vmem:[%s1 + $0x18c] sm:$0xf]
      %v274 = vld [vmem:[%s1 + $0x190] sm:$0xf]
      %v275 = vld [vmem:[%s1 + $0x194] sm:$0xf]
      %v276 = vld [vmem:[%s1 + $0x198] sm:$0xf]
      %v277 = vld [vmem:[%s1 + $0x19c] sm:$0xf]
      %v278 = vld [vmem:[%s1 + $0x1a0] sm:$0xf]
      %v279 = vld [vmem:[%s1 + $0x1a4] sm:$0xf]
      %v280 = vld [vmem:[%s1 + $0x1a8] sm:$0xf]
      %v281 = vld [vmem:[%s1 + $0x1ac] sm:$0xf]
      %v282 = vld [vmem:[%s2] sm:$0x1]
      %v284 = vperm.slane %v282, 0
      %v290 = vunpack.c.l.b16 %v170
      %v291 = vunpack.c.h.b16 %v170
      %v292 = vunpack.c.l.b16 %v171
      %v293 = vunpack.c.h.b16 %v171
      %v294 = vunpack.c.l.b16 %v172
      %v295 = vunpack.c.h.b16 %v172
      %v296 = vunpack.c.l.b16 %v173
      %v297 = vpack.c.b16 %v290, %v290
      %v298 = vpack.c.b16 %v291, %v291
      %v299 = vpack.c.b16 %v292, %v292
      %v300 = vpack.c.b16 %v293, %v293
      %v301 = vpack.c.b16 %v294, %v294
      %v302 = vpack.c.b16 %v295, %v295
      %v303 = vpack.c.b16 %v296, %v296
      %v418 = vunpack.c.l.b16 %v174
      %v419 = vunpack.c.l.b16 %v175
      %v420 = vunpack.c.l.b16 %v176
      %v421 = vunpack.c.l.b16 %v177
      %v422 = vunpack.c.l.b16 %v178
      %v423 = vunpack.c.l.b16 %v179
      %v424 = vunpack.c.l.b16 %v180
      %v425 = vunpack.c.l.b16 %v181
      %v426 = vunpack.c.l.b16 %v182
      %v427 = vunpack.c.l.b16 %v183
      %v428 = vunpack.c.l.b16 %v184
      %v429 = vunpack.c.l.b16 %v185
      %v430 = vunpack.c.l.b16 %v186
      %v431 = vunpack.c.l.b16 %v187
      %v432 = vunpack.c.l.b16 %v188
      %v433 = vunpack.c.l.b16 %v189
      %v434 = vunpack.c.l.b16 %v190
      %v435 = vunpack.c.l.b16 %v191
      %v436 = vunpack.c.l.b16 %v192
      %v437 = vunpack.c.l.b16 %v193
      %v438 = vunpack.c.l.b16 %v194
      %v439 = vunpack.c.l.b16 %v195
      %v440 = vunpack.c.l.b16 %v196
      %v441 = vunpack.c.l.b16 %v197
      %v442 = vunpack.c.l.b16 %v198
      %v443 = vunpack.c.l.b16 %v199
      %v444 = vunpack.c.l.b16 %v200
      %v445 = vunpack.c.l.b16 %v201
      %v446 = vunpack.c.l.b16 %v202
      %v447 = vunpack.c.l.b16 %v203
      %v448 = vunpack.c.l.b16 %v204
      %v449 = vunpack.c.l.b16 %v205
      %v450 = vunpack.c.l.b16 %v206
      %v451 = vunpack.c.l.b16 %v207
      %v452 = vunpack.c.l.b16 %v208
      %v453 = vunpack.c.l.b16 %v209
      %v454 = vunpack.c.l.b16 %v210
      %v455 = vunpack.c.l.b16 %v211
      %v456 = vunpack.c.l.b16 %v212
      %v457 = vunpack.c.l.b16 %v213
      %v458 = vunpack.c.l.b16 %v214
      %v459 = vunpack.c.l.b16 %v215
      %v460 = vunpack.c.l.b16 %v216
      %v461 = vunpack.c.l.b16 %v217
      %v462 = vunpack.c.l.b16 %v218
      %v463 = vunpack.c.l.b16 %v219
      %v464 = vunpack.c.l.b16 %v220
      %v465 = vunpack.c.l.b16 %v221
      %v466 = vunpack.c.l.b16 %v222
      %v467 = vunpack.c.l.b16 %v223
      %v468 = vunpack.c.l.b16 %v224
      %v469 = vunpack.c.l.b16 %v225
      %v470 = vunpack.c.l.b16 %v226
      %v471 = vunpack.c.l.b16 %v227
      %v472 = vunpack.c.l.b16 %v228
      %v473 = vunpack.c.l.b16 %v229
      %v474 = vunpack.c.l.b16 %v230
      %v475 = vunpack.c.l.b16 %v231
      %v476 = vunpack.c.l.b16 %v232
      %v477 = vunpack.c.l.b16 %v233
      %v478 = vunpack.c.l.b16 %v234
      %v479 = vunpack.c.l.b16 %v235
      %v480 = vunpack.c.l.b16 %v236
      %v481 = vunpack.c.l.b16 %v237
      %v482 = vunpack.c.l.b16 %v238
      %v483 = vunpack.c.l.b16 %v239
      %v484 = vunpack.c.l.b16 %v240
      %v485 = vunpack.c.l.b16 %v241
      %v486 = vunpack.c.l.b16 %v242
      %v487 = vunpack.c.l.b16 %v243
      %v488 = vunpack.c.l.b16 %v244
      %v489 = vunpack.c.l.b16 %v245
      %v490 = vunpack.c.l.b16 %v246
      %v491 = vunpack.c.l.b16 %v247
      %v492 = vunpack.c.l.b16 %v248
      %v493 = vunpack.c.l.b16 %v249
      %v494 = vunpack.c.l.b16 %v250
      %v495 = vunpack.c.l.b16 %v251
      %v496 = vunpack.c.l.b16 %v252
      %v497 = vunpack.c.l.b16 %v253
      %v498 = vunpack.c.l.b16 %v254
      %v499 = vunpack.c.l.b16 %v255
      %v500 = vunpack.c.l.b16 %v256
      %v501 = vunpack.c.l.b16 %v257
      %v502 = vunpack.c.l.b16 %v258
      %v503 = vunpack.c.l.b16 %v259
      %v504 = vunpack.c.l.b16 %v260
      %v505 = vunpack.c.l.b16 %v261
      %v506 = vunpack.c.l.b16 %v262
      %v507 = vunpack.c.l.b16 %v263
      %v508 = vunpack.c.l.b16 %v264
      %v509 = vunpack.c.l.b16 %v265
      %v510 = vunpack.c.l.b16 %v266
      %v511 = vunpack.c.l.b16 %v267
      %v512 = vunpack.c.l.b16 %v268
      %v513 = vunpack.c.l.b16 %v269
      %v514 = vunpack.c.l.b16 %v270
      %v515 = vunpack.c.l.b16 %v271
      %v516 = vunpack.c.l.b16 %v272
      %v517 = vunpack.c.l.b16 %v273
      %v518 = vunpack.c.l.b16 %v274
      %v519 = vunpack.c.l.b16 %v275
      %v520 = vunpack.c.l.b16 %v276
      %v521 = vunpack.c.l.b16 %v277
      %v522 = vunpack.c.l.b16 %v278
      %v523 = vunpack.c.l.b16 %v279
      %v524 = vunpack.c.l.b16 %v280
      %v525 = vunpack.c.l.b16 %v281
      %v526 = vpack.c.b16 %v419, %v418
      %v527 = vpack.c.b16 %v421, %v420
      %v528 = vpack.c.b16 %v423, %v422
      %v529 = vpack.c.b16 %v425, %v424
      %v530 = vpack.c.b16 %v427, %v426
      %v531 = vpack.c.b16 %v429, %v428
      %v532 = vpack.c.b16 %v431, %v430
      %v533 = vpack.c.b16 %v433, %v432
      %v534 = vpack.c.b16 %v435, %v434
      %v535 = vpack.c.b16 %v437, %v436
      %v536 = vpack.c.b16 %v439, %v438
      %v537 = vpack.c.b16 %v441, %v440
      %v538 = vpack.c.b16 %v443, %v442
      %v539 = vpack.c.b16 %v445, %v444
      %v540 = vpack.c.b16 %v447, %v446
      %v541 = vpack.c.b16 %v449, %v448
      %v542 = vpack.c.b16 %v451, %v450
      %v543 = vpack.c.b16 %v453, %v452
      %v544 = vpack.c.b16 %v455, %v454
      %v545 = vpack.c.b16 %v457, %v456
      %v546 = vpack.c.b16 %v459, %v458
      %v547 = vpack.c.b16 %v461, %v460
      %v548 = vpack.c.b16 %v463, %v462
      %v549 = vpack.c.b16 %v465, %v464
      %v550 = vpack.c.b16 %v467, %v466
      %v551 = vpack.c.b16 %v469, %v468
      %v552 = vpack.c.b16 %v471, %v470
      %v553 = vpack.c.b16 %v473, %v472
      %v554 = vpack.c.b16 %v475, %v474
      %v555 = vpack.c.b16 %v477, %v476
      %v556 = vpack.c.b16 %v479, %v478
      %v557 = vpack.c.b16 %v481, %v480
      %v558 = vpack.c.b16 %v483, %v482
      %v559 = vpack.c.b16 %v485, %v484
      %v560 = vpack.c.b16 %v487, %v486
      %v561 = vpack.c.b16 %v489, %v488
      %v562 = vpack.c.b16 %v491, %v490
      %v563 = vpack.c.b16 %v493, %v492
      %v564 = vpack.c.b16 %v495, %v494
      %v565 = vpack.c.b16 %v497, %v496
      %v566 = vpack.c.b16 %v499, %v498
      %v567 = vpack.c.b16 %v501, %v500
      %v568 = vpack.c.b16 %v503, %v502
      %v569 = vpack.c.b16 %v505, %v504
      %v570 = vpack.c.b16 %v507, %v506
      %v571 = vpack.c.b16 %v509, %v508
      %v572 = vpack.c.b16 %v511, %v510
      %v573 = vpack.c.b16 %v513, %v512
      %v574 = vpack.c.b16 %v515, %v514
      %v575 = vpack.c.b16 %v517, %v516
      %v576 = vpack.c.b16 %v519, %v518
      %v577 = vpack.c.b16 %v521, %v520
      %v578 = vpack.c.b16 %v523, %v522
      %v579 = vpack.c.b16 %v525, %v524
      %vm634 = vcmask 785408
      %v636 = vsel %vm634, %v303, 0
      %638 = vmatpush.bf16.msra.mxu0 %v533
      %639 = vmatpush.bf16.msra.mxu0 %v532
      %640 = vmatpush.bf16.msra.mxu0 %v531
      %641 = vmatpush.bf16.msra.mxu0 %v530
      %642 = vmatpush.bf16.msra.mxu0 %v529
      %643 = vmatpush.bf16.msra.mxu0 %v528
      %644 = vmatpush.bf16.msra.mxu0 %v527
      %645 = vmatpush.bf16.msra.mxu0 %v526
      %646 = vmatmul.bf16.gmra.mxu0 %v297
      %v647 = vpop.f32.mrf.mxu0
      %v648 = vadd.f32 %v284, %v647
      %v649 = vpop.f32.mrf.mxu0
      %650 = vdwg.mxu0
      %651 = vmatpush.bf16.msra.mxu0 %v541
      %652 = vmatpush.bf16.msra.mxu0 %v540
      %653 = vmatpush.bf16.msra.mxu0 %v539
      %654 = vmatpush.bf16.msra.mxu0 %v538
      %655 = vmatpush.bf16.msra.mxu0 %v537
      %656 = vmatpush.bf16.msra.mxu0 %v536
      %657 = vmatpush.bf16.msra.mxu0 %v535
      %658 = vmatpush.bf16.msra.mxu0 %v534
      %659 = vmatmul.bf16.gmra.mxu0 %v298
      %v660 = vpop.f32.mrf.mxu0
      %v661 = vadd.f32 %v648, %v660
      %v662 = vpop.f32.mrf.mxu0
      %663 = vdwg.mxu0
      %664 = vmatpush.bf16.msra.mxu0 %v549
      %665 = vmatpush.bf16.msra.mxu0 %v548
      %666 = vmatpush.bf16.msra.mxu0 %v547
      %667 = vmatpush.bf16.msra.mxu0 %v546
      %668 = vmatpush.bf16.msra.mxu0 %v545
      %669 = vmatpush.bf16.msra.mxu0 %v544
      %670 = vmatpush.bf16.msra.mxu0 %v543
      %671 = vmatpush.bf16.msra.mxu0 %v542
      %672 = vmatmul.bf16.gmra.mxu0 %v299
      %v673 = vpop.f32.mrf.mxu0
      %v674 = vadd.f32 %v661, %v673
      %v675 = vpop.f32.mrf.mxu0
      %676 = vdwg.mxu0
      %677 = vmatpush.bf16.msra.mxu0 %v557
      %678 = vmatpush.bf16.msra.mxu0 %v556
      %679 = vmatpush.bf16.msra.mxu0 %v555
      %680 = vmatpush.bf16.msra.mxu0 %v554
      %681 = vmatpush.bf16.msra.mxu0 %v553
      %682 = vmatpush.bf16.msra.mxu0 %v552
      %683 = vmatpush.bf16.msra.mxu0 %v551
      %684 = vmatpush.bf16.msra.mxu0 %v550
      %685 = vmatmul.bf16.gmra.mxu0 %v300
      %v686 = vpop.f32.mrf.mxu0
      %v687 = vadd.f32 %v674, %v686
      %v688 = vpop.f32.mrf.mxu0
      %689 = vdwg.mxu0
      %690 = vmatpush.bf16.msra.mxu0 %v565
      %691 = vmatpush.bf16.msra.mxu0 %v564
      %692 = vmatpush.bf16.msra.mxu0 %v563
      %693 = vmatpush.bf16.msra.mxu0 %v562
      %694 = vmatpush.bf16.msra.mxu0 %v561
      %695 = vmatpush.bf16.msra.mxu0 %v560
      %696 = vmatpush.bf16.msra.mxu0 %v559
      %697 = vmatpush.bf16.msra.mxu0 %v558
      %698 = vmatmul.bf16.gmra.mxu0 %v301
      %v699 = vpop.f32.mrf.mxu0
      %v700 = vadd.f32 %v687, %v699
      %v701 = vpop.f32.mrf.mxu0
      %702 = vdwg.mxu0
      %703 = vmatpush.bf16.msra.mxu0 %v573
      %704 = vmatpush.bf16.msra.mxu0 %v572
      %705 = vmatpush.bf16.msra.mxu0 %v571
      %706 = vmatpush.bf16.msra.mxu0 %v570
      %707 = vmatpush.bf16.msra.mxu0 %v569
      %708 = vmatpush.bf16.msra.mxu0 %v568
      %709 = vmatpush.bf16.msra.mxu0 %v567
      %710 = vmatpush.bf16.msra.mxu0 %v566
      %711 = vmatmul.bf16.gmra.mxu0 %v302
      %v712 = vpop.f32.mrf.mxu0
      %v713 = vadd.f32 %v700, %v712
      %v714 = vpop.f32.mrf.mxu0
      %715 = vdwg.mxu0
      %716 = vmatpush.bf16.msra.mxu0 0
      %717 = vmatpush.bf16.msra.mxu0 0
      %718 = vmatpush.bf16.msra.mxu0 %v579
      %719 = vmatpush.bf16.msra.mxu0 %v578
      %720 = vmatpush.bf16.msra.mxu0 %v577
      %721 = vmatpush.bf16.msra.mxu0 %v576
      %722 = vmatpush.bf16.msra.mxu0 %v575
      %723 = vmatpush.bf16.msra.mxu0 %v574
      %724 = vmatmul.bf16.gmra.mxu0 %v636
      %v725 = vpop.f32.mrf.mxu0
      %v726 = vadd.f32 %v713, %v725
      %v727 = vpop.f32.mrf.mxu0
      %728 = vdwg.mxu0
      %v729 = vlaneseq
      %v730 = vand.u32 %v729, 127
      %vm731 = vcmp.lt.s32.totalorder %v730, 64
      %v732 = vmax.f32 %v726, 0.0
      %v733 = vsel %vm731, %v732, %v726
      %v734 = vpack.c.bf16 %v733, %v733
      %735 = vst [vmem:[%s168] sm:$0xf] %v734
      %p736 = scmp.lt.s32.totalorder %s14, 1
      %s737 = scalar_select %p736, %s14, 1
      %s738 = smul.addr %s737, 4
      %s739 = scalar_lea.vmem %s3, %s738
      // Predicated region
      $region33: #{psm_gnn_forward.24} parent=31 // pred_check
        %p740 = pneg %p100
      $region34: #{psm_gnn_forward.24} parent=31 // pred_check_branch
        %742 = sbr.rel (%p740) target = $region36
      $region35: #{psm_gnn_forward.24} parent=31 // pred_region
        _
      $region36: #{psm_gnn_forward.24} parent=31 // pred_fallthru
        _
    $region32: #{psm_gnn_forward.24} parent=5 // pred_fallthru
      _
    %p743 = scmp.le.s32.totalorder 2, %s9
    // Predicated region
    $region37: #{psm_gnn_forward.24} parent=5 // pred_check
      %p744 = pneg %p743
    $region38: #{psm_gnn_forward.24} parent=5 // pred_check_branch
      %746 = sbr.rel (%p744) target = $region40
    $region39: #{psm_gnn_forward.24} parent=5 // pred_region
      %s747 = ssub.s32 %s9, 2
      // Predicated region
      $region41: #{psm_gnn_forward.24} parent=39 // pred_check
        %p748 = pneg %p106
      $region42: #{psm_gnn_forward.24} parent=39 // pred_check_branch
        %750 = sbr.rel (%p748) target = $region44
      $region43: #{psm_gnn_forward.24} parent=39 // pred_region
        %p751 = scmp.lt.s32.totalorder %s15, 1
        %s752 = scalar_select %p751, %s15, 1
        %s753 = smul.addr %s752, 4
        %s754 = scalar_lea.vmem %s3, %s753
      $region44: #{psm_gnn_forward.24} parent=39 // pred_fallthru
        _
    $region40: #{psm_gnn_forward.24} parent=5 // pred_fallthru
      _
  $region6: #{psm_gnn_forward.24} parent=0 // loop_footer
    %s13 = sadd.s32 1, %s9
  $region7: #{psm_gnn_forward.24} parent=0 // loop_footer_branch
    %8 = sbr.rel target = $region3
  $region8: #{psm_gnn_forward.24} parent=0 // loop_exit
    _

// kernel: tile.23
$region0: #{tile.23}
  #allocation0 [shape = 's32[1]{0}', space=sflag, size = 0x4, scoped, tag = 'scoped memory for tile.23']
  %s0 = inlined_call_operand.vmem [shape: f32[32], index: 0, kind: input, shape index: {}]
  %s1 = inlined_call_operand.vmem [shape: f32[8,32], index: 1, kind: output, shape index: {}]
  // Predicated region
  $region2: #{tile.23} parent=0 // pred_check
    _
  $region3: #{tile.23} parent=0 // pred_check_branch
    %3 = sbr.rel (0) target = $region5
  $region4: #{tile.23} parent=0 // pred_region
    _
  $region5: #{tile.23} parent=0 // pred_fallthru
    _
  %v4 = vld [vmem:[%s0] ss:$0 sm:$0xff]
  %5 = vst [vmem:[%s1] sm:$0xff] %v4

// kernel: mul.189
$region0: #{mul.189}
  %s0 = inlined_call_operand.vmem [shape: f32[8,32], index: 0, kind: input, shape index: {}]
  %s1 = inlined_call_operand.vmem [shape: f32[256], index: 1, kind: output, shape index: {}]
  $region1: #{mul.189} parent=0
    #allocation0 [shape = 'u8[4096]{0}', space=vmem, size = 0x1000, scoped, tag = 'scoped mem for output reshape']
    %s2 = smov 3
    %v3 = vld [vmem:[%s0] ss:$4 sm:%s2]
    %vm4 = vcmask 261120
    %5 = vst.msk [vmem:[#allocation0] sm:$0x3] %vm4, %v3
    %s6 = scalar_lea.vmem %s0, 3
    %s7 = smov 3
    %v8 = vld [vmem:[%s6] ss:$4 sm:%s7]
    %9 = vrot.lane.b32.xlu0 %v8, 96
    %v10 = vpop.permute.xlu0 %9
    %vm11 = vcmask 1048320
    %12 = vst.msk [vmem:[#allocation0] sm:$0x3] %vm11, %v10
    %s13 = scalar_lea.vmem %s0, 2
    %s14 = smov 3
    %v15 = vld [vmem:[%s13] ss:$4 sm:%s14]
    %16 = vrot.lane.b32.xlu0 %v15, 64
    %v17 = vpop.permute.xlu0 %16
    %vm18 = vcmask 785920
    %19 = vst.msk [vmem:[#allocation0] sm:$0x3] %vm18, %v17
    %s20 = scalar_lea.vmem %s0, 1
    %s21 = smov 3
    %v22 = vld [vmem:[%s20] ss:$4 sm:%s21]
    %23 = vrot.lane.b32.xlu0 %v22, 32
    %v24 = vpop.permute.xlu0 %23
    %vm25 = vcmask 523520
    %26 = vst.msk [vmem:[#allocation0] sm:$0x3] %vm25, %v24
    %s28 = ssub.s32 4, 1
    %v29 = vld [vmem:[#allocation0] sm:%s28]
    %s31 = ssub.s32 4, 1
    %32 = vst [vmem:[%s1] sm:%s31] %v29

// kernel: tile.29
$region0: #{tile.29}
  %s0 = inlined_call_operand.vmem [shape: f32[8,32], index: 0, kind: input, shape index: {}]
  %s1 = inlined_call_operand.vmem [shape: f32[1,256], index: 1, kind: output, shape index: {}]
  $region1: #{tile.29} parent=0
    #allocation0 [shape = 'u8[8192]{0}', space=vmem, size = 0x2000, scoped, tag = 'scoped mem for output reshape']
    %s2 = smov 3
    %v3 = vld [vmem:[%s0] ss:$4 sm:%s2]
    %vm4 = vcmask 261120
    %5 = vst.msk [vmem:[#allocation0] ss:$8 sm:$0x3] %vm4, %v3
    %s6 = scalar_lea.vmem %s0, 3
    %s7 = smov 3
    %v8 = vld [vmem:[%s6] ss:$4 sm:%s7]
    %9 = vrot.lane.b32.xlu0 %v8, 96
    %v10 = vpop.permute.xlu0 %9
    %vm11 = vcmask 1048320
    %12 = vst.msk [vmem:[#allocation0] ss:$8 sm:$0x3] %vm11, %v10
    %s13 = scalar_lea.vmem %s0, 2
    %s14 = smov 3
    %v15 = vld [vmem:[%s13] ss:$4 sm:%s14]
    %16 = vrot.lane.b32.xlu0 %v15, 64
    %v17 = vpop.permute.xlu0 %16
    %vm18 = vcmask 785920
    %19 = vst.msk [vmem:[#allocation0] ss:$8 sm:$0x3] %vm18, %v17
    %s20 = scalar_lea.vmem %s0, 1
    %s21 = smov 3
    %v22 = vld [vmem:[%s20] ss:$4 sm:%s21]
    %23 = vrot.lane.b32.xlu0 %v22, 32
    %v24 = vpop.permute.xlu0 %23
    %vm25 = vcmask 523520
    %26 = vst.msk [vmem:[#allocation0] ss:$8 sm:$0x3] %vm25, %v24
    %s28 = ssub.s32 2, 1
    %v29 = vld [vmem:[#allocation0] sm:%s28]
    %s31 = ssub.s32 2, 1
    %32 = vst [vmem:[%s1] sm:%s31] %v29
    %s33 = scalar_lea.vmem [#allocation0], 8
    %v34 = vld [vmem:[%s33] sm:%s28]
    %s36 = ssub.s32 2, 1
    %s37 = scalar_lea.vmem %s1, 1
    %38 = vst [vmem:[%s37] sm:%s36] %v34

// kernel: tile.33
$region0: #{tile.33}
  #allocation0 [shape = 's32[1]{0}', space=sflag, size = 0x4, scoped, tag = 'scoped memory for tile.33']
  %s0 = inlined_call_operand.vmem [shape: f32[7], index: 0, kind: input, shape index: {}]
  %s1 = inlined_call_operand.vmem [shape: f32[8,7], index: 1, kind: output, shape index: {}]
  // Predicated region
  $region2: #{tile.33} parent=0 // pred_check
    _
  $region3: #{tile.33} parent=0 // pred_check_branch
    %3 = sbr.rel (0) target = $region5
  $region4: #{tile.33} parent=0 // pred_region
    _
  $region5: #{tile.33} parent=0 // pred_fallthru
    _
  %v4 = vld [vmem:[%s0] ss:$0 sm:$0xff]
  %5 = vst [vmem:[%s1] sm:$0xff] %v4

// kernel: mul.207
$region0: #{mul.207}
  %s0 = inlined_call_operand.vmem [shape: f32[8,7], index: 0, kind: input, shape index: {}]
  %s1 = inlined_call_operand.vmem [shape: f32[56], index: 1, kind: output, shape index: {}]
  $region1: #{mul.207} parent=0
    #allocation0 [shape = 'u8[4096]{0}', space=vmem, size = 0x1000, scoped, tag = 'scoped mem for output reshape']
    %v2 = vld [vmem:[%s0] sm:$0x1]
    %vm3 = vcmask 56320
    %4 = vst.msk [vmem:[#allocation0] sm:$0x1] %vm3, %v2
    %s5 = scalar_lea.vmem %s0, 7
    %v6 = vld [vmem:[%s5] sm:$0x1]
    %7 = vrot.lane.b32.xlu0 %v6, 49
    %v8 = vpop.permute.xlu0 %7
    %vm9 = vcmask 458120
    %10 = vst.msk [vmem:[#allocation0] sm:$0x1] %vm9, %v8
    %s11 = scalar_lea.vmem %s0, 6
    %v12 = vld [vmem:[%s11] sm:$0x1]
    %13 = vrot.lane.b32.xlu0 %v12, 42
    %v14 = vpop.permute.xlu0 %13
    %vm15 = vcmask 400720
    %16 = vst.msk [vmem:[#allocation0] sm:$0x1] %vm15, %v14
    %s17 = scalar_lea.vmem %s0, 5
    %v18 = vld [vmem:[%s17] sm:$0x1]
    %19 = vrot.lane.b32.xlu0 %v18, 35
    %v20 = vpop.permute.xlu0 %19
    %vm21 = vcmask 343320
    %22 = vst.msk [vmem:[#allocation0] sm:$0x1] %vm21, %v20
    %s23 = scalar_lea.vmem %s0, 4
    %v24 = vld [vmem:[%s23] sm:$0x1]
    %25 = vrot.lane.b32.xlu0 %v24, 28
    %v26 = vpop.permute.xlu0 %25
    %vm27 = vcmask 285920
    %28 = vst.msk [vmem:[#allocation0] sm:$0x1] %vm27, %v26
    %s29 = scalar_lea.vmem %s0, 3
    %v30 = vld [vmem:[%s29] sm:$0x1]
    %31 = vrot.lane.b32.xlu0 %v30, 21
    %v32 = vpop.permute.xlu0 %31
    %vm33 = vcmask 228520
    %34 = vst.msk [vmem:[#allocation0] sm:$0x1] %vm33, %v32
    %s35 = scalar_lea.vmem %s0, 2
    %v36 = vld [vmem:[%s35] sm:$0x1]
    %37 = vrot.lane.b32.xlu0 %v36, 14
    %v38 = vpop.permute.xlu0 %37
    %vm39 = vcmask 171120
    %40 = vst.msk [vmem:[#allocation0] sm:$0x1] %vm39, %v38
    %s41 = scalar_lea.vmem %s0, 1
    %v42 = vld [vmem:[%s41] sm:$0x1]
    %43 = vrot.lane.b32.xlu0 %v42, 7
    %v44 = vpop.permute.xlu0 %43
    %vm45 = vcmask 113720
    %46 = vst.msk [vmem:[#allocation0] sm:$0x1] %vm45, %v44
    %s48 = ssub.s32 2, 1
    %v49 = vld [vmem:[#allocation0] sm:%s48]
    %s51 = ssub.s32 2, 1
    %52 = vst [vmem:[%s1] sm:%s51] %v49

// kernel: psm_gnn_forward.26
$region0: #{psm_gnn_forward.26}
  #allocation0 [shape = 'u32[]', space=smem, size = 0x4, offset = 0x4, fixed_abs, tag = 'smem constant byte address 0x4 - core index']
  #allocation1 [shape = 'u32[72,128]{1,0:T(1,128)}', space=vmem, size = 0x9000, scoped, tag = 'internal scratch']
  %s0 = inlined_call_operand.vmem [shape: bf16[16,1728], index: 0, kind: input, shape index: {}]
  %s1 = inlined_call_operand.vmem [shape: bf16[1728,64], index: 1, kind: input, shape index: {}]
  %s2 = inlined_call_operand.vmem [shape: f32[1,64], index: 2, kind: input, shape index: {}]
  %s3 = inlined_call_operand.vmem [shape: bf16[16,64], index: 3, kind: output, shape index: {}]
  %s4 = sld [smem:[#allocation0]]
  $region45: #{psm_gnn_forward.26} parent=0
    _
  %s6 = ssub.s32 1, %s4
  %s7 = scalar_select 0, %s6, %s4
  loop: start=0, step=1, limit=4
  $region2: #{psm_gnn_forward.26} parent=0 // loop_pre_header
    _
  $region3: #{psm_gnn_forward.26} parent=0 // loop_header
    %s9 = sphi 0, %s13
    %p10 = scmp.ge.s32.totalorder %s9, 4
    %s19 = sphi 0, %s21
    %s22 = sphi 0, %s19
    %s23 = sphi 0, %s22
    %s39 = sphi 0, %s23
    %s43 = sphi 0, %s43
    %s45 = sphi 0, %s43
    %s46 = sphi 0, %s45
    %s60 = sphi 0, %s46
    %s64 = sphi 0, %s64
    %s66 = sphi 0, %s64
    %s67 = sphi 0, %s66
    %s81 = sphi 0, %s67
    %s87 = sphi 0, %s89
    %s90 = sphi 0, %s87
    %s91 = sphi 0, %s90
    %s107 = sphi 0, %s91
  $region4: #{psm_gnn_forward.26} parent=0 // loop_header_branch
    %12 = sbr.rel (%p10) target = $region8
  $region5: #{psm_gnn_forward.26} parent=0 // loop_body
    %s14 = ssub.s32 %s9, 1
    %s15 = ssub.s32 %s9, 2
    %s16 = sadd.s32 %s9, 1
    %s17 = ssub.s32 %s9, %s16
    %p18 = scmp.eq.s32.totalorder %s17, 0
    %s20 = sadd.s32 %s19, 1
    %s21 = scalar_select %p18, %s19, %s20
    %p24 = pneg %p18
    %p25 = scmp.eq.s32.totalorder %s9, 1
    %p26 = por %p24, %p25
    %p27 = scmp.ne.s32.totalorder %s19, %s22
    %p28 = scmp.eq.s32.totalorder %s9, 0
    %p29 = por %p27, %p28
    %p30 = scmp.ne.s32.totalorder %s19, %s22
    %p31 = scmp.eq.s32.totalorder %s14, 1
    %p32 = por %p30, %p31
    %p33 = scmp.ne.s32.totalorder %s22, %s23
    %p34 = scmp.eq.s32.totalorder %s14, 0
    %p35 = por %p33, %p34
    %p36 = scmp.ne.s32.totalorder %s22, %s23
    %p37 = scmp.eq.s32.totalorder %s15, 1
    %p38 = por %p36, %p37
    %p40 = scmp.ne.s32.totalorder %s23, %s39
    %p41 = scmp.eq.s32.totalorder %s15, 0
    %p42 = por %p40, %p41
    %s44 = sadd.s32 %s43, 1
    %p47 = scmp.eq.s32.totalorder %s9, 1
    %p48 = scmp.ne.s32.totalorder %s43, %s45
    %p49 = scmp.eq.s32.totalorder %s9, 0
    %p50 = por %p48, %p49
    %p51 = scmp.ne.s32.totalorder %s43, %s45
    %p52 = scmp.eq.s32.totalorder %s14, 1
    %p53 = por %p51, %p52
    %p54 = scmp.ne.s32.totalorder %s45, %s46
    %p55 = scmp.eq.s32.totalorder %s14, 0
    %p56 = por %p54, %p55
    %p57 = scmp.ne.s32.totalorder %s45, %s46
    %p58 = scmp.eq.s32.totalorder %s15, 1
    %p59 = por %p57, %p58
    %p61 = scmp.ne.s32.totalorder %s46, %s60
    %p62 = scmp.eq.s32.totalorder %s15, 0
    %p63 = por %p61, %p62
    %s65 = sadd.s32 %s64, 1
    %p68 = scmp.eq.s32.totalorder %s9, 1
    %p69 = scmp.ne.s32.totalorder %s64, %s66
    %p70 = scmp.eq.s32.totalorder %s9, 0
    %p71 = por %p69, %p70
    %p72 = scmp.ne.s32.totalorder %s64, %s66
    %p73 = scmp.eq.s32.totalorder %s14, 1
    %p74 = por %p72, %p73
    %p75 = scmp.ne.s32.totalorder %s66, %s67
    %p76 = scmp.eq.s32.totalorder %s14, 0
    %p77 = por %p75, %p76
    %p78 = scmp.ne.s32.totalorder %s66, %s67
    %p79 = scmp.eq.s32.totalorder %s15, 1
    %p80 = por %p78, %p79
    %p82 = scmp.ne.s32.totalorder %s67, %s81
    %p83 = scmp.eq.s32.totalorder %s15, 0
    %p84 = por %p82, %p83
    %s85 = ssub.s32 %s9, %s16
    %p86 = scmp.eq.s32.totalorder %s85, 0
    %s88 = sadd.s32 %s87, 1
    %s89 = scalar_select %p86, %s87, %s88
    %p92 = pneg %p86
    %p93 = scmp.eq.s32.totalorder %s9, 1
    %p94 = por %p92, %p93
    %p95 = scmp.ne.s32.totalorder %s87, %s90
    %p96 = scmp.eq.s32.totalorder %s9, 0
    %p97 = por %p95, %p96
    %p98 = scmp.ne.s32.totalorder %s87, %s90
    %p99 = scmp.eq.s32.totalorder %s14, 1
    %p100 = por %p98, %p99
    %p101 = scmp.ne.s32.totalorder %s90, %s91
    %p102 = scmp.eq.s32.totalorder %s14, 0
    %p103 = por %p101, %p102
    %p104 = scmp.ne.s32.totalorder %s90, %s91
    %p105 = scmp.eq.s32.totalorder %s15, 1
    %p106 = por %p104, %p105
    %p108 = scmp.ne.s32.totalorder %s91, %s107
    %p109 = scmp.eq.s32.totalorder %s15, 0
    %p110 = por %p108, %p109
    %p111 = scmp.le.s32.totalorder 1, %s9
    %p112 = scmp.lt.s32.totalorder %s9, 3
    %p113 = pnand %p111, %p112
    %p114 = pneg %p113
    // Predicated region
    $region9: #{psm_gnn_forward.26} parent=5 // pred_check
      _
    $region10: #{psm_gnn_forward.26} parent=5 // pred_check_branch
      %116 = sbr.rel (%p113) target = $region12
    $region11: #{psm_gnn_forward.26} parent=5 // pred_region
      %s117 = ssub.s32 %s9, 1
      // Predicated region
      $region13: #{psm_gnn_forward.26} parent=11 // pred_check
        %p118 = pneg %p56
      $region14: #{psm_gnn_forward.26} parent=11 // pred_check_branch
        %120 = sbr.rel (%p118) target = $region16
      $region15: #{psm_gnn_forward.26} parent=11 // pred_region
        _
      $region16: #{psm_gnn_forward.26} parent=11 // pred_fallthru
        _
      // Predicated region
      $region17: #{psm_gnn_forward.26} parent=11 // pred_check
        %p121 = pneg %p77
      $region18: #{psm_gnn_forward.26} parent=11 // pred_check_branch
        %123 = sbr.rel (%p121) target = $region20
      $region19: #{psm_gnn_forward.26} parent=11 // pred_region
        _
      $region20: #{psm_gnn_forward.26} parent=11 // pred_fallthru
        _
    $region12: #{psm_gnn_forward.26} parent=5 // pred_fallthru
      _
    %p124 = scmp.lt.s32.totalorder %s9, 2
    // Predicated region
    $region21: #{psm_gnn_forward.26} parent=5 // pred_check
      %p125 = pneg %p124
    $region22: #{psm_gnn_forward.26} parent=5 // pred_check_branch
      %127 = sbr.rel (%p125) target = $region24
    $region23: #{psm_gnn_forward.26} parent=5 // pred_region
      // Predicated region
      $region25: #{psm_gnn_forward.26} parent=23 // pred_check
        %p128 = pneg %p29
      $region26: #{psm_gnn_forward.26} parent=23 // pred_check_branch
        %130 = sbr.rel (%p128) target = $region28
      $region27: #{psm_gnn_forward.26} parent=23 // pred_region
        %p131 = scmp.lt.s32.totalorder %s9, 1
        %s132 = scalar_select %p131, %s9, 1
        %s133 = smul.addr %s132, 14
        %s134 = smul.addr %s133, 4
        %s135 = scalar_lea.vmem %s0, %s134
      $region28: #{psm_gnn_forward.26} parent=23 // pred_fallthru
        _
    $region24: #{psm_gnn_forward.26} parent=5 // pred_fallthru
      _
    %p136 = scmp.le.s32.totalorder 1, %s9
    %p137 = scmp.lt.s32.totalorder %s9, 3
    %p138 = pnand %p136, %p137
    %p139 = pneg %p138
    // Predicated region
    $region29: #{psm_gnn_forward.26} parent=5 // pred_check
      _
    $region30: #{psm_gnn_forward.26} parent=5 // pred_check_branch
      %141 = sbr.rel (%p138) target = $region32
    $region31: #{psm_gnn_forward.26} parent=5 // pred_region
      %s142 = ssub.s32 %s9, 1
      %p143 = scmp.lt.s32.totalorder %s14, 1
      %s144 = scalar_select %p143, %s14, 1
      %s145 = smul.addr %s144, 14
      %s146 = smul.addr %s145, 4
      %s147 = scalar_lea.vmem %s0, %s146
      %p148 = pneg %p35
      %p149 = pneg %p32
      %p150 = pneg %p56
      %p151 = pneg %p53
      %p152 = pneg %p77
      %p153 = pneg %p74
      %p154 = pneg %p103
      %p155 = pneg %p100
      %p156 = scmp.lt.s32.totalorder %s14, 1
      %s157 = scalar_select %p156, %s14, 1
      %s158 = smul.addr %s157, 4
      %s159 = scalar_lea.vmem %s3, %s158
      %p160 = scmp.lt.s32.totalorder %s14, 1
      %s161 = scalar_select %p160, %s14, 1
      %s162 = smul.addr %s161, 14
      %s163 = smul.addr %s162, 4
      %s164 = scalar_lea.vmem %s0, %s163
      %p165 = scmp.lt.s32.totalorder %s14, 1
      %s166 = scalar_select %p165, %s14, 1
      %s167 = smul.addr %s166, 4
      %s168 = scalar_lea.vmem %s3, %s167
      %v170 = vld [vmem:[%s164] sm:$0xff]
      %v171 = vld [vmem:[%s164 + $0x8] sm:$0xff]
      %v172 = vld [vmem:[%s164 + $0x10] sm:$0xff]
      %v173 = vld [vmem:[%s164 + $0x18] sm:$0xff]
      %v174 = vld [vmem:[%s164 + $0x20] sm:$0xff]
      %v175 = vld [vmem:[%s164 + $0x28] sm:$0xff]
      %v176 = vld [vmem:[%s164 + $0x30] sm:$0xff]
      %v177 = vld [vmem:[%s1] sm:$0xf]
      %v178 = vld [vmem:[%s1 + $0x4] sm:$0xf]
      %v179 = vld [vmem:[%s1 + $0x8] sm:$0xf]
      %v180 = vld [vmem:[%s1 + $0xc] sm:$0xf]
      %v181 = vld [vmem:[%s1 + $0x10] sm:$0xf]
      %v182 = vld [vmem:[%s1 + $0x14] sm:$0xf]
      %v183 = vld [vmem:[%s1 + $0x18] sm:$0xf]
      %v184 = vld [vmem:[%s1 + $0x1c] sm:$0xf]
      %v185 = vld [vmem:[%s1 + $0x20] sm:$0xf]
      %v186 = vld [vmem:[%s1 + $0x24] sm:$0xf]
      %v187 = vld [vmem:[%s1 + $0x28] sm:$0xf]
      %v188 = vld [vmem:[%s1 + $0x2c] sm:$0xf]
      %v189 = vld [vmem:[%s1 + $0x30] sm:$0xf]
      %v190 = vld [vmem:[%s1 + $0x34] sm:$0xf]
      %v191 = vld [vmem:[%s1 + $0x38] sm:$0xf]
      %v192 = vld [vmem:[%s1 + $0x3c] sm:$0xf]
      %v193 = vld [vmem:[%s1 + $0x40] sm:$0xf]
      %v194 = vld [vmem:[%s1 + $0x44] sm:$0xf]
      %v195 = vld [vmem:[%s1 + $0x48] sm:$0xf]
      %v196 = vld [vmem:[%s1 + $0x4c] sm:$0xf]
      %v197 = vld [vmem:[%s1 + $0x50] sm:$0xf]
      %v198 = vld [vmem:[%s1 + $0x54] sm:$0xf]
      %v199 = vld [vmem:[%s1 + $0x58] sm:$0xf]
      %v200 = vld [vmem:[%s1 + $0x5c] sm:$0xf]
      %v201 = vld [vmem:[%s1 + $0x60] sm:$0xf]
      %v202 = vld [vmem:[%s1 + $0x64] sm:$0xf]
      %v203 = vld [vmem:[%s1 + $0x68] sm:$0xf]
      %v204 = vld [vmem:[%s1 + $0x6c] sm:$0xf]
      %v205 = vld [vmem:[%s1 + $0x70] sm:$0xf]
      %v206 = vld [vmem:[%s1 + $0x74] sm:$0xf]
      %v207 = vld [vmem:[%s1 + $0x78] sm:$0xf]
      %v208 = vld [vmem:[%s1 + $0x7c] sm:$0xf]
      %v209 = vld [vmem:[%s1 + $0x80] sm:$0xf]
      %v210 = vld [vmem:[%s1 + $0x84] sm:$0xf]
      %v211 = vld [vmem:[%s1 + $0x88] sm:$0xf]
      %v212 = vld [vmem:[%s1 + $0x8c] sm:$0xf]
      %v213 = vld [vmem:[%s1 + $0x90] sm:$0xf]
      %v214 = vld [vmem:[%s1 + $0x94] sm:$0xf]
      %v215 = vld [vmem:[%s1 + $0x98] sm:$0xf]
      %v216 = vld [vmem:[%s1 + $0x9c] sm:$0xf]
      %v217 = vld [vmem:[%s1 + $0xa0] sm:$0xf]
      %v218 = vld [vmem:[%s1 + $0xa4] sm:$0xf]
      %v219 = vld [vmem:[%s1 + $0xa8] sm:$0xf]
      %v220 = vld [vmem:[%s1 + $0xac] sm:$0xf]
      %v221 = vld [vmem:[%s1 + $0xb0] sm:$0xf]
      %v222 = vld [vmem:[%s1 + $0xb4] sm:$0xf]
      %v223 = vld [vmem:[%s1 + $0xb8] sm:$0xf]
      %v224 = vld [vmem:[%s1 + $0xbc] sm:$0xf]
      %v225 = vld [vmem:[%s1 + $0xc0] sm:$0xf]
      %v226 = vld [vmem:[%s1 + $0xc4] sm:$0xf]
      %v227 = vld [vmem:[%s1 + $0xc8] sm:$0xf]
      %v228 = vld [vmem:[%s1 + $0xcc] sm:$0xf]
      %v229 = vld [vmem:[%s1 + $0xd0] sm:$0xf]
      %v230 = vld [vmem:[%s1 + $0xd4] sm:$0xf]
      %v231 = vld [vmem:[%s1 + $0xd8] sm:$0xf]
      %v232 = vld [vmem:[%s1 + $0xdc] sm:$0xf]
      %v233 = vld [vmem:[%s1 + $0xe0] sm:$0xf]
      %v234 = vld [vmem:[%s1 + $0xe4] sm:$0xf]
      %v235 = vld [vmem:[%s1 + $0xe8] sm:$0xf]
      %v236 = vld [vmem:[%s1 + $0xec] sm:$0xf]
      %v237 = vld [vmem:[%s1 + $0xf0] sm:$0xf]
      %v238 = vld [vmem:[%s1 + $0xf4] sm:$0xf]
      %v239 = vld [vmem:[%s1 + $0xf8] sm:$0xf]
      %v240 = vld [vmem:[%s1 + $0xfc] sm:$0xf]
      %v241 = vld [vmem:[%s1 + $0x100] sm:$0xf]
      %v242 = vld [vmem:[%s1 + $0x104] sm:$0xf]
      %v243 = vld [vmem:[%s1 + $0x108] sm:$0xf]
      %v244 = vld [vmem:[%s1 + $0x10c] sm:$0xf]
      %v245 = vld [vmem:[%s1 + $0x110] sm:$0xf]
      %v246 = vld [vmem:[%s1 + $0x114] sm:$0xf]
      %v247 = vld [vmem:[%s1 + $0x118] sm:$0xf]
      %v248 = vld [vmem:[%s1 + $0x11c] sm:$0xf]
      %v249 = vld [vmem:[%s1 + $0x120] sm:$0xf]
      %v250 = vld [vmem:[%s1 + $0x124] sm:$0xf]
      %v251 = vld [vmem:[%s1 + $0x128] sm:$0xf]
      %v252 = vld [vmem:[%s1 + $0x12c] sm:$0xf]
      %v253 = vld [vmem:[%s1 + $0x130] sm:$0xf]
      %v254 = vld [vmem:[%s1 + $0x134] sm:$0xf]
      %v255 = vld [vmem:[%s1 + $0x138] sm:$0xf]
      %v256 = vld [vmem:[%s1 + $0x13c] sm:$0xf]
      %v257 = vld [vmem:[%s1 + $0x140] sm:$0xf]
      %v258 = vld [vmem:[%s1 + $0x144] sm:$0xf]
      %v259 = vld [vmem:[%s1 + $0x148] sm:$0xf]
      %v260 = vld [vmem:[%s1 + $0x14c] sm:$0xf]
      %v261 = vld [vmem:[%s1 + $0x150] sm:$0xf]
      %v262 = vld [vmem:[%s1 + $0x154] sm:$0xf]
      %v263 = vld [vmem:[%s1 + $0x158] sm:$0xf]
      %v264 = vld [vmem:[%s1 + $0x15c] sm:$0xf]
      %v265 = vld [vmem:[%s1 + $0x160] sm:$0xf]
      %v266 = vld [vmem:[%s1 + $0x164] sm:$0xf]
      %v267 = vld [vmem:[%s1 + $0x168] sm:$0xf]
      %v268 = vld [vmem:[%s1 + $0x16c] sm:$0xf]
      %v269 = vld [vmem:[%s1 + $0x170] sm:$0xf]
      %v270 = vld [vmem:[%s1 + $0x174] sm:$0xf]
      %v271 = vld [vmem:[%s1 + $0x178] sm:$0xf]
      %v272 = vld [vmem:[%s1 + $0x17c] sm:$0xf]
      %v273 = vld [vmem:[%s1 + $0x180] sm:$0xf]
      %v274 = vld [vmem:[%s1 + $0x184] sm:$0xf]
      %v275 = vld [vmem:[%s1 + $0x188] sm:$0xf]
      %v276 = vld [vmem:[%s1 + $0x18c] sm:$0xf]
      %v277 = vld [vmem:[%s1 + $0x190] sm:$0xf]
      %v278 = vld [vmem:[%s1 + $0x194] sm:$0xf]
      %v279 = vld [vmem:[%s1 + $0x198] sm:$0xf]
      %v280 = vld [vmem:[%s1 + $0x19c] sm:$0xf]
      %v281 = vld [vmem:[%s1 + $0x1a0] sm:$0xf]
      %v282 = vld [vmem:[%s1 + $0x1a4] sm:$0xf]
      %v283 = vld [vmem:[%s1 + $0x1a8] sm:$0xf]
      %v284 = vld [vmem:[%s1 + $0x1ac] sm:$0xf]
      %v285 = vld [vmem:[%s1 + $0x1b0] sm:$0xf]
      %v286 = vld [vmem:[%s1 + $0x1b4] sm:$0xf]
      %v287 = vld [vmem:[%s1 + $0x1b8] sm:$0xf]
      %v288 = vld [vmem:[%s1 + $0x1bc] sm:$0xf]
      %v289 = vld [vmem:[%s1 + $0x1c0] sm:$0xf]
      %v290 = vld [vmem:[%s1 + $0x1c4] sm:$0xf]
      %v291 = vld [vmem:[%s1 + $0x1c8] sm:$0xf]
      %v292 = vld [vmem:[%s1 + $0x1cc] sm:$0xf]
      %v293 = vld [vmem:[%s1 + $0x1d0] sm:$0xf]
      %v294 = vld [vmem:[%s1 + $0x1d4] sm:$0xf]
      %v295 = vld [vmem:[%s1 + $0x1d8] sm:$0xf]
      %v296 = vld [vmem:[%s1 + $0x1dc] sm:$0xf]
      %v297 = vld [vmem:[%s1 + $0x1e0] sm:$0xf]
      %v298 = vld [vmem:[%s1 + $0x1e4] sm:$0xf]
      %v299 = vld [vmem:[%s1 + $0x1e8] sm:$0xf]
      %v300 = vld [vmem:[%s1 + $0x1ec] sm:$0xf]
      %v301 = vld [vmem:[%s1 + $0x1f0] sm:$0xf]
      %v302 = vld [vmem:[%s1 + $0x1f4] sm:$0xf]
      %v303 = vld [vmem:[%s1 + $0x1f8] sm:$0xf]
      %v304 = vld [vmem:[%s1 + $0x1fc] sm:$0xf]
      %v305 = vld [vmem:[%s1 + $0x200] sm:$0xf]
      %v306 = vld [vmem:[%s1 + $0x204] sm:$0xf]
      %v307 = vld [vmem:[%s1 + $0x208] sm:$0xf]
      %v308 = vld [vmem:[%s1 + $0x20c] sm:$0xf]
      %v309 = vld [vmem:[%s1 + $0x210] sm:$0xf]
      %v310 = vld [vmem:[%s1 + $0x214] sm:$0xf]
      %v311 = vld [vmem:[%s1 + $0x218] sm:$0xf]
      %v312 = vld [vmem:[%s1 + $0x21c] sm:$0xf]
      %v313 = vld [vmem:[%s1 + $0x220] sm:$0xf]
      %v314 = vld [vmem:[%s1 + $0x224] sm:$0xf]
      %v315 = vld [vmem:[%s1 + $0x228] sm:$0xf]
      %v316 = vld [vmem:[%s1 + $0x22c] sm:$0xf]
      %v317 = vld [vmem:[%s1 + $0x230] sm:$0xf]
      %v318 = vld [vmem:[%s1 + $0x234] sm:$0xf]
      %v319 = vld [vmem:[%s1 + $0x238] sm:$0xf]
      %v320 = vld [vmem:[%s1 + $0x23c] sm:$0xf]
      %v321 = vld [vmem:[%s1 + $0x240] sm:$0xf]
      %v322 = vld [vmem:[%s1 + $0x244] sm:$0xf]
      %v323 = vld [vmem:[%s1 + $0x248] sm:$0xf]
      %v324 = vld [vmem:[%s1 + $0x24c] sm:$0xf]
      %v325 = vld [vmem:[%s1 + $0x250] sm:$0xf]
      %v326 = vld [vmem:[%s1 + $0x254] sm:$0xf]
      %v327 = vld [vmem:[%s1 + $0x258] sm:$0xf]
      %v328 = vld [vmem:[%s1 + $0x25c] sm:$0xf]
      %v329 = vld [vmem:[%s1 + $0x260] sm:$0xf]
      %v330 = vld [vmem:[%s1 + $0x264] sm:$0xf]
      %v331 = vld [vmem:[%s1 + $0x268] sm:$0xf]
      %v332 = vld [vmem:[%s1 + $0x26c] sm:$0xf]
      %v333 = vld [vmem:[%s1 + $0x270] sm:$0xf]
      %v334 = vld [vmem:[%s1 + $0x274] sm:$0xf]
      %v335 = vld [vmem:[%s1 + $0x278] sm:$0xf]
      %v336 = vld [vmem:[%s1 + $0x27c] sm:$0xf]
      %v337 = vld [vmem:[%s1 + $0x280] sm:$0xf]
      %v338 = vld [vmem:[%s1 + $0x284] sm:$0xf]
      %v339 = vld [vmem:[%s1 + $0x288] sm:$0xf]
      %v340 = vld [vmem:[%s1 + $0x28c] sm:$0xf]
      %v341 = vld [vmem:[%s1 + $0x290] sm:$0xf]
      %v342 = vld [vmem:[%s1 + $0x294] sm:$0xf]
      %v343 = vld [vmem:[%s1 + $0x298] sm:$0xf]
      %v344 = vld [vmem:[%s1 + $0x29c] sm:$0xf]
      %v345 = vld [vmem:[%s1 + $0x2a0] sm:$0xf]
      %v346 = vld [vmem:[%s1 + $0x2a4] sm:$0xf]
      %v347 = vld [vmem:[%s1 + $0x2a8] sm:$0xf]
      %v348 = vld [vmem:[%s1 + $0x2ac] sm:$0xf]
      %v349 = vld [vmem:[%s1 + $0x2b0] sm:$0xf]
      %v350 = vld [vmem:[%s1 + $0x2b4] sm:$0xf]
      %v351 = vld [vmem:[%s1 + $0x2b8] sm:$0xf]
      %v352 = vld [vmem:[%s1 + $0x2bc] sm:$0xf]
      %v353 = vld [vmem:[%s1 + $0x2c0] sm:$0xf]
      %v354 = vld [vmem:[%s1 + $0x2c4] sm:$0xf]
      %v355 = vld [vmem:[%s1 + $0x2c8] sm:$0xf]
      %v356 = vld [vmem:[%s1 + $0x2cc] sm:$0xf]
      %v357 = vld [vmem:[%s1 + $0x2d0] sm:$0xf]
      %v358 = vld [vmem:[%s1 + $0x2d4] sm:$0xf]
      %v359 = vld [vmem:[%s1 + $0x2d8] sm:$0xf]
      %v360 = vld [vmem:[%s1 + $0x2dc] sm:$0xf]
      %v361 = vld [vmem:[%s1 + $0x2e0] sm:$0xf]
      %v362 = vld [vmem:[%s1 + $0x2e4] sm:$0xf]
      %v363 = vld [vmem:[%s1 + $0x2e8] sm:$0xf]
      %v364 = vld [vmem:[%s1 + $0x2ec] sm:$0xf]
      %v365 = vld [vmem:[%s1 + $0x2f0] sm:$0xf]
      %v366 = vld [vmem:[%s1 + $0x2f4] sm:$0xf]
      %v367 = vld [vmem:[%s1 + $0x2f8] sm:$0xf]
      %v368 = vld [vmem:[%s1 + $0x2fc] sm:$0xf]
      %v369 = vld [vmem:[%s1 + $0x300] sm:$0xf]
      %v370 = vld [vmem:[%s1 + $0x304] sm:$0xf]
      %v371 = vld [vmem:[%s1 + $0x308] sm:$0xf]
      %v372 = vld [vmem:[%s1 + $0x30c] sm:$0xf]
      %v373 = vld [vmem:[%s1 + $0x310] sm:$0xf]
      %v374 = vld [vmem:[%s1 + $0x314] sm:$0xf]
      %v375 = vld [vmem:[%s1 + $0x318] sm:$0xf]
      %v376 = vld [vmem:[%s1 + $0x31c] sm:$0xf]
      %v377 = vld [vmem:[%s1 + $0x320] sm:$0xf]
      %v378 = vld [vmem:[%s1 + $0x324] sm:$0xf]
      %v379 = vld [vmem:[%s1 + $0x328] sm:$0xf]
      %v380 = vld [vmem:[%s1 + $0x32c] sm:$0xf]
      %v381 = vld [vmem:[%s1 + $0x330] sm:$0xf]
      %v382 = vld [vmem:[%s1 + $0x334] sm:$0xf]
      %v383 = vld [vmem:[%s1 + $0x338] sm:$0xf]
      %v384 = vld [vmem:[%s1 + $0x33c] sm:$0xf]
      %v385 = vld [vmem:[%s1 + $0x340] sm:$0xf]
      %v386 = vld [vmem:[%s1 + $0x344] sm:$0xf]
      %v387 = vld [vmem:[%s1 + $0x348] sm:$0xf]
      %v388 = vld [vmem:[%s1 + $0x34c] sm:$0xf]
      %v389 = vld [vmem:[%s1 + $0x350] sm:$0xf]
      %v390 = vld [vmem:[%s1 + $0x354] sm:$0xf]
      %v391 = vld [vmem:[%s1 + $0x358] sm:$0xf]
      %v392 = vld [vmem:[%s1 + $0x35c] sm:$0xf]
      %v393 = vld [vmem:[%s2] sm:$0x1]
      %v395 = vperm.slane %v393, 0
      %v404 = vunpack.c.l.b16 %v170
      %v405 = vunpack.c.h.b16 %v170
      %v406 = vunpack.c.l.b16 %v171
      %v407 = vunpack.c.h.b16 %v171
      %v408 = vunpack.c.l.b16 %v172
      %v409 = vunpack.c.h.b16 %v172
      %v410 = vunpack.c.l.b16 %v173
      %v411 = vunpack.c.h.b16 %v173
      %v412 = vunpack.c.l.b16 %v174
      %v413 = vunpack.c.h.b16 %v174
      %v414 = vunpack.c.l.b16 %v175
      %v415 = vunpack.c.h.b16 %v175
      %v416 = vunpack.c.l.b16 %v176
      %v417 = vunpack.c.h.b16 %v176
      %v418 = vpack.c.b16 %v404, %v404
      %v419 = vpack.c.b16 %v405, %v405
      %v420 = vpack.c.b16 %v406, %v406
      %v421 = vpack.c.b16 %v407, %v407
      %v422 = vpack.c.b16 %v408, %v408
      %v423 = vpack.c.b16 %v409, %v409
      %v424 = vpack.c.b16 %v410, %v410
      %v425 = vpack.c.b16 %v411, %v411
      %v426 = vpack.c.b16 %v412, %v412
      %v427 = vpack.c.b16 %v413, %v413
      %v428 = vpack.c.b16 %v414, %v414
      %v429 = vpack.c.b16 %v415, %v415
      %v430 = vpack.c.b16 %v416, %v416
      %v431 = vpack.c.b16 %v417, %v417
      %v661 = vunpack.c.l.b16 %v177
      %v662 = vunpack.c.l.b16 %v178
      %v663 = vunpack.c.l.b16 %v179
      %v664 = vunpack.c.l.b16 %v180
      %v665 = vunpack.c.l.b16 %v181
      %v666 = vunpack.c.l.b16 %v182
      %v667 = vunpack.c.l.b16 %v183
      %v668 = vunpack.c.l.b16 %v184
      %v669 = vunpack.c.l.b16 %v185
      %v670 = vunpack.c.l.b16 %v186
      %v671 = vunpack.c.l.b16 %v187
      %v672 = vunpack.c.l.b16 %v188
      %v673 = vunpack.c.l.b16 %v189
      %v674 = vunpack.c.l.b16 %v190
      %v675 = vunpack.c.l.b16 %v191
      %v676 = vunpack.c.l.b16 %v192
      %v677 = vunpack.c.l.b16 %v193
      %v678 = vunpack.c.l.b16 %v194
      %v679 = vunpack.c.l.b16 %v195
      %v680 = vunpack.c.l.b16 %v196
      %v681 = vunpack.c.l.b16 %v197
      %v682 = vunpack.c.l.b16 %v198
      %v683 = vunpack.c.l.b16 %v199
      %v684 = vunpack.c.l.b16 %v200
      %v685 = vunpack.c.l.b16 %v201
      %v686 = vunpack.c.l.b16 %v202
      %v687 = vunpack.c.l.b16 %v203
      %v688 = vunpack.c.l.b16 %v204
      %v689 = vunpack.c.l.b16 %v205
      %v690 = vunpack.c.l.b16 %v206
      %v691 = vunpack.c.l.b16 %v207
      %v692 = vunpack.c.l.b16 %v208
      %v693 = vunpack.c.l.b16 %v209
      %v694 = vunpack.c.l.b16 %v210
      %v695 = vunpack.c.l.b16 %v211
      %v696 = vunpack.c.l.b16 %v212
      %v697 = vunpack.c.l.b16 %v213
      %v698 = vunpack.c.l.b16 %v214
      %v699 = vunpack.c.l.b16 %v215
      %v700 = vunpack.c.l.b16 %v216
      %v701 = vunpack.c.l.b16 %v217
      %v702 = vunpack.c.l.b16 %v218
      %v703 = vunpack.c.l.b16 %v219
      %v704 = vunpack.c.l.b16 %v220
      %v705 = vunpack.c.l.b16 %v221
      %v706 = vunpack.c.l.b16 %v222
      %v707 = vunpack.c.l.b16 %v223
      %v708 = vunpack.c.l.b16 %v224
      %v709 = vunpack.c.l.b16 %v225
      %v710 = vunpack.c.l.b16 %v226
      %v711 = vunpack.c.l.b16 %v227
      %v712 = vunpack.c.l.b16 %v228
      %v713 = vunpack.c.l.b16 %v229
      %v714 = vunpack.c.l.b16 %v230
      %v715 = vunpack.c.l.b16 %v231
      %v716 = vunpack.c.l.b16 %v232
      %v717 = vunpack.c.l.b16 %v233
      %v718 = vunpack.c.l.b16 %v234
      %v719 = vunpack.c.l.b16 %v235
      %v720 = vunpack.c.l.b16 %v236
      %v721 = vunpack.c.l.b16 %v237
      %v722 = vunpack.c.l.b16 %v238
      %v723 = vunpack.c.l.b16 %v239
      %v724 = vunpack.c.l.b16 %v240
      %v725 = vunpack.c.l.b16 %v241
      %v726 = vunpack.c.l.b16 %v242
      %v727 = vunpack.c.l.b16 %v243
      %v728 = vunpack.c.l.b16 %v244
      %v729 = vunpack.c.l.b16 %v245
      %v730 = vunpack.c.l.b16 %v246
      %v731 = vunpack.c.l.b16 %v247
      %v732 = vunpack.c.l.b16 %v248
      %v733 = vunpack.c.l.b16 %v249
      %v734 = vunpack.c.l.b16 %v250
      %v735 = vunpack.c.l.b16 %v251
      %v736 = vunpack.c.l.b16 %v252
      %v737 = vunpack.c.l.b16 %v253
      %v738 = vunpack.c.l.b16 %v254
      %v739 = vunpack.c.l.b16 %v255
      %v740 = vunpack.c.l.b16 %v256
      %v741 = vunpack.c.l.b16 %v257
      %v742 = vunpack.c.l.b16 %v258
      %v743 = vunpack.c.l.b16 %v259
      %v744 = vunpack.c.l.b16 %v260
      %v745 = vunpack.c.l.b16 %v261
      %v746 = vunpack.c.l.b16 %v262
      %v747 = vunpack.c.l.b16 %v263
      %v748 = vunpack.c.l.b16 %v264
      %v749 = vunpack.c.l.b16 %v265
      %v750 = vunpack.c.l.b16 %v266
      %v751 = vunpack.c.l.b16 %v267
      %v752 = vunpack.c.l.b16 %v268
      %v753 = vunpack.c.l.b16 %v269
      %v754 = vunpack.c.l.b16 %v270
      %v755 = vunpack.c.l.b16 %v271
      %v756 = vunpack.c.l.b16 %v272
      %v757 = vunpack.c.l.b16 %v273
      %v758 = vunpack.c.l.b16 %v274
      %v759 = vunpack.c.l.b16 %v275
      %v760 = vunpack.c.l.b16 %v276
      %v761 = vunpack.c.l.b16 %v277
      %v762 = vunpack.c.l.b16 %v278
      %v763 = vunpack.c.l.b16 %v279
      %v764 = vunpack.c.l.b16 %v280
      %v765 = vunpack.c.l.b16 %v281
      %v766 = vunpack.c.l.b16 %v282
      %v767 = vunpack.c.l.b16 %v283
      %v768 = vunpack.c.l.b16 %v284
      %v769 = vunpack.c.l.b16 %v285
      %v770 = vunpack.c.l.b16 %v286
      %v771 = vunpack.c.l.b16 %v287
      %v772 = vunpack.c.l.b16 %v288
      %v773 = vunpack.c.l.b16 %v289
      %v774 = vunpack.c.l.b16 %v290
      %v775 = vunpack.c.l.b16 %v291
      %v776 = vunpack.c.l.b16 %v292
      %v777 = vunpack.c.l.b16 %v293
      %v778 = vunpack.c.l.b16 %v294
      %v779 = vunpack.c.l.b16 %v295
      %v780 = vunpack.c.l.b16 %v296
      %v781 = vunpack.c.l.b16 %v297
      %v782 = vunpack.c.l.b16 %v298
      %v783 = vunpack.c.l.b16 %v299
      %v784 = vunpack.c.l.b16 %v300
      %v785 = vunpack.c.l.b16 %v301
      %v786 = vunpack.c.l.b16 %v302
      %v787 = vunpack.c.l.b16 %v303
      %v788 = vunpack.c.l.b16 %v304
      %v789 = vunpack.c.l.b16 %v305
      %v790 = vunpack.c.l.b16 %v306
      %v791 = vunpack.c.l.b16 %v307
      %v792 = vunpack.c.l.b16 %v308
      %v793 = vunpack.c.l.b16 %v309
      %v794 = vunpack.c.l.b16 %v310
      %v795 = vunpack.c.l.b16 %v311
      %v796 = vunpack.c.l.b16 %v312
      %v797 = vunpack.c.l.b16 %v313
      %v798 = vunpack.c.l.b16 %v314
      %v799 = vunpack.c.l.b16 %v315
      %v800 = vunpack.c.l.b16 %v316
      %v801 = vunpack.c.l.b16 %v317
      %v802 = vunpack.c.l.b16 %v318
      %v803 = vunpack.c.l.b16 %v319
      %v804 = vunpack.c.l.b16 %v320
      %v805 = vunpack.c.l.b16 %v321
      %v806 = vunpack.c.l.b16 %v322
      %v807 = vunpack.c.l.b16 %v323
      %v808 = vunpack.c.l.b16 %v324
      %v809 = vunpack.c.l.b16 %v325
      %v810 = vunpack.c.l.b16 %v326
      %v811 = vunpack.c.l.b16 %v327
      %v812 = vunpack.c.l.b16 %v328
      %v813 = vunpack.c.l.b16 %v329
      %v814 = vunpack.c.l.b16 %v330
      %v815 = vunpack.c.l.b16 %v331
      %v816 = vunpack.c.l.b16 %v332
      %v817 = vunpack.c.l.b16 %v333
      %v818 = vunpack.c.l.b16 %v334
      %v819 = vunpack.c.l.b16 %v335
      %v820 = vunpack.c.l.b16 %v336
      %v821 = vunpack.c.l.b16 %v337
      %v822 = vunpack.c.l.b16 %v338
      %v823 = vunpack.c.l.b16 %v339
      %v824 = vunpack.c.l.b16 %v340
      %v825 = vunpack.c.l.b16 %v341
      %v826 = vunpack.c.l.b16 %v342
      %v827 = vunpack.c.l.b16 %v343
      %v828 = vunpack.c.l.b16 %v344
      %v829 = vunpack.c.l.b16 %v345
      %v830 = vunpack.c.l.b16 %v346
      %v831 = vunpack.c.l.b16 %v347
      %v832 = vunpack.c.l.b16 %v348
      %v833 = vunpack.c.l.b16 %v349
      %v834 = vunpack.c.l.b16 %v350
      %v835 = vunpack.c.l.b16 %v351
      %v836 = vunpack.c.l.b16 %v352
      %v837 = vunpack.c.l.b16 %v353
      %v838 = vunpack.c.l.b16 %v354
      %v839 = vunpack.c.l.b16 %v355
      %v840 = vunpack.c.l.b16 %v356
      %v841 = vunpack.c.l.b16 %v357
      %v842 = vunpack.c.l.b16 %v358
      %v843 = vunpack.c.l.b16 %v359
      %v844 = vunpack.c.l.b16 %v360
      %v845 = vunpack.c.l.b16 %v361
      %v846 = vunpack.c.l.b16 %v362
      %v847 = vunpack.c.l.b16 %v363
      %v848 = vunpack.c.l.b16 %v364
      %v849 = vunpack.c.l.b16 %v365
      %v850 = vunpack.c.l.b16 %v366
      %v851 = vunpack.c.l.b16 %v367
      %v852 = vunpack.c.l.b16 %v368
      %v853 = vunpack.c.l.b16 %v369
      %v854 = vunpack.c.l.b16 %v370
      %v855 = vunpack.c.l.b16 %v371
      %v856 = vunpack.c.l.b16 %v372
      %v857 = vunpack.c.l.b16 %v373
      %v858 = vunpack.c.l.b16 %v374
      %v859 = vunpack.c.l.b16 %v375
      %v860 = vunpack.c.l.b16 %v376
      %v861 = vunpack.c.l.b16 %v377
      %v862 = vunpack.c.l.b16 %v378
      %v863 = vunpack.c.l.b16 %v379
      %v864 = vunpack.c.l.b16 %v380
      %v865 = vunpack.c.l.b16 %v381
      %v866 = vunpack.c.l.b16 %v382
      %v867 = vunpack.c.l.b16 %v383
      %v868 = vunpack.c.l.b16 %v384
      %v869 = vunpack.c.l.b16 %v385
      %v870 = vunpack.c.l.b16 %v386
      %v871 = vunpack.c.l.b16 %v387
      %v872 = vunpack.c.l.b16 %v388
      %v873 = vunpack.c.l.b16 %v389
      %v874 = vunpack.c.l.b16 %v390
      %v875 = vunpack.c.l.b16 %v391
      %v876 = vunpack.c.l.b16 %v392
      %v877 = vpack.c.b16 %v662, %v661
      %v878 = vpack.c.b16 %v664, %v663
      %v879 = vpack.c.b16 %v666, %v665
      %v880 = vpack.c.b16 %v668, %v667
      %v881 = vpack.c.b16 %v670, %v669
      %v882 = vpack.c.b16 %v672, %v671
      %v883 = vpack.c.b16 %v674, %v673
      %v884 = vpack.c.b16 %v676, %v675
      %v885 = vpack.c.b16 %v678, %v677
      %v886 = vpack.c.b16 %v680, %v679
      %v887 = vpack.c.b16 %v682, %v681
      %v888 = vpack.c.b16 %v684, %v683
      %v889 = vpack.c.b16 %v686, %v685
      %v890 = vpack.c.b16 %v688, %v687
      %v891 = vpack.c.b16 %v690, %v689
      %v892 = vpack.c.b16 %v692, %v691
      %v893 = vpack.c.b16 %v694, %v693
      %v894 = vpack.c.b16 %v696, %v695
      %v895 = vpack.c.b16 %v698, %v697
      %v896 = vpack.c.b16 %v700, %v699
      %v897 = vpack.c.b16 %v702, %v701
      %v898 = vpack.c.b16 %v704, %v703
      %v899 = vpack.c.b16 %v706, %v705
      %v900 = vpack.c.b16 %v708, %v707
      %v901 = vpack.c.b16 %v710, %v709
      %v902 = vpack.c.b16 %v712, %v711
      %v903 = vpack.c.b16 %v714, %v713
      %v904 = vpack.c.b16 %v716, %v715
      %v905 = vpack.c.b16 %v718, %v717
      %v906 = vpack.c.b16 %v720, %v719
      %v907 = vpack.c.b16 %v722, %v721
      %v908 = vpack.c.b16 %v724, %v723
      %v909 = vpack.c.b16 %v726, %v725
      %v910 = vpack.c.b16 %v728, %v727
      %v911 = vpack.c.b16 %v730, %v729
      %v912 = vpack.c.b16 %v732, %v731
      %v913 = vpack.c.b16 %v734, %v733
      %v914 = vpack.c.b16 %v736, %v735
      %v915 = vpack.c.b16 %v738, %v737
      %v916 = vpack.c.b16 %v740, %v739
      %v917 = vpack.c.b16 %v742, %v741
      %v918 = vpack.c.b16 %v744, %v743
      %v919 = vpack.c.b16 %v746, %v745
      %v920 = vpack.c.b16 %v748, %v747
      %v921 = vpack.c.b16 %v750, %v749
      %v922 = vpack.c.b16 %v752, %v751
      %v923 = vpack.c.b16 %v754, %v753
      %v924 = vpack.c.b16 %v756, %v755
      %v925 = vpack.c.b16 %v758, %v757
      %v926 = vpack.c.b16 %v760, %v759
      %v927 = vpack.c.b16 %v762, %v761
      %v928 = vpack.c.b16 %v764, %v763
      %v929 = vpack.c.b16 %v766, %v765
      %v930 = vpack.c.b16 %v768, %v767
      %v931 = vpack.c.b16 %v770, %v769
      %v932 = vpack.c.b16 %v772, %v771
      %v933 = vpack.c.b16 %v774, %v773
      %v934 = vpack.c.b16 %v776, %v775
      %v935 = vpack.c.b16 %v778, %v777
      %v936 = vpack.c.b16 %v780, %v779
      %v937 = vpack.c.b16 %v782, %v781
      %v938 = vpack.c.b16 %v784, %v783
      %v939 = vpack.c.b16 %v786, %v785
      %v940 = vpack.c.b16 %v788, %v787
      %v941 = vpack.c.b16 %v790, %v789
      %v942 = vpack.c.b16 %v792, %v791
      %v943 = vpack.c.b16 %v794, %v793
      %v944 = vpack.c.b16 %v796, %v795
      %v945 = vpack.c.b16 %v798, %v797
      %v946 = vpack.c.b16 %v800, %v799
      %v947 = vpack.c.b16 %v802, %v801
      %v948 = vpack.c.b16 %v804, %v803
      %v949 = vpack.c.b16 %v806, %v805
      %v950 = vpack.c.b16 %v808, %v807
      %v951 = vpack.c.b16 %v810, %v809
      %v952 = vpack.c.b16 %v812, %v811
      %v953 = vpack.c.b16 %v814, %v813
      %v954 = vpack.c.b16 %v816, %v815
      %v955 = vpack.c.b16 %v818, %v817
      %v956 = vpack.c.b16 %v820, %v819
      %v957 = vpack.c.b16 %v822, %v821
      %v958 = vpack.c.b16 %v824, %v823
      %v959 = vpack.c.b16 %v826, %v825
      %v960 = vpack.c.b16 %v828, %v827
      %v961 = vpack.c.b16 %v830, %v829
      %v962 = vpack.c.b16 %v832, %v831
      %v963 = vpack.c.b16 %v834, %v833
      %v964 = vpack.c.b16 %v836, %v835
      %v965 = vpack.c.b16 %v838, %v837
      %v966 = vpack.c.b16 %v840, %v839
      %v967 = vpack.c.b16 %v842, %v841
      %v968 = vpack.c.b16 %v844, %v843
      %v969 = vpack.c.b16 %v846, %v845
      %v970 = vpack.c.b16 %v848, %v847
      %v971 = vpack.c.b16 %v850, %v849
      %v972 = vpack.c.b16 %v852, %v851
      %v973 = vpack.c.b16 %v854, %v853
      %v974 = vpack.c.b16 %v856, %v855
      %v975 = vpack.c.b16 %v858, %v857
      %v976 = vpack.c.b16 %v860, %v859
      %v977 = vpack.c.b16 %v862, %v861
      %v978 = vpack.c.b16 %v864, %v863
      %v979 = vpack.c.b16 %v866, %v865
      %v980 = vpack.c.b16 %v868, %v867
      %v981 = vpack.c.b16 %v870, %v869
      %v982 = vpack.c.b16 %v872, %v871
      %v983 = vpack.c.b16 %v874, %v873
      %v984 = vpack.c.b16 %v876, %v875
      %vm1093 = vcmask 523264
      %v1095 = vsel %vm1093, %v431, 0
      %1097 = vmatpush.bf16.msra.mxu0 %v884
      %1098 = vmatpush.bf16.msra.mxu0 %v883
      %1099 = vmatpush.bf16.msra.mxu0 %v882
      %1100 = vmatpush.bf16.msra.mxu0 %v881
      %1101 = vmatpush.bf16.msra.mxu0 %v880
      %1102 = vmatpush.bf16.msra.mxu0 %v879
      %1103 = vmatpush.bf16.msra.mxu0 %v878
      %1104 = vmatpush.bf16.msra.mxu0 %v877
      %1105 = vmatmul.bf16.gmra.mxu0 %v418
      %v1106 = vpop.f32.mrf.mxu0
      %v1107 = vadd.f32 %v395, %v1106
      %v1108 = vpop.f32.mrf.mxu0
      %1109 = vdwg.mxu0
      %1110 = vmatpush.bf16.msra.mxu0 %v892
      %1111 = vmatpush.bf16.msra.mxu0 %v891
      %1112 = vmatpush.bf16.msra.mxu0 %v890
      %1113 = vmatpush.bf16.msra.mxu0 %v889
      %1114 = vmatpush.bf16.msra.mxu0 %v888
      %1115 = vmatpush.bf16.msra.mxu0 %v887
      %1116 = vmatpush.bf16.msra.mxu0 %v886
      %1117 = vmatpush.bf16.msra.mxu0 %v885
      %1118 = vmatmul.bf16.gmra.mxu0 %v419
      %v1119 = vpop.f32.mrf.mxu0
      %v1120 = vadd.f32 %v1107, %v1119
      %v1121 = vpop.f32.mrf.mxu0
      %1122 = vdwg.mxu0
      %1123 = vmatpush.bf16.msra.mxu0 %v900
      %1124 = vmatpush.bf16.msra.mxu0 %v899
      %1125 = vmatpush.bf16.msra.mxu0 %v898
      %1126 = vmatpush.bf16.msra.mxu0 %v897
      %1127 = vmatpush.bf16.msra.mxu0 %v896
      %1128 = vmatpush.bf16.msra.mxu0 %v895
      %1129 = vmatpush.bf16.msra.mxu0 %v894
      %1130 = vmatpush.bf16.msra.mxu0 %v893
      %1131 = vmatmul.bf16.gmra.mxu0 %v420
      %v1132 = vpop.f32.mrf.mxu0
      %v1133 = vadd.f32 %v1120, %v1132
      %v1134 = vpop.f32.mrf.mxu0
      %1135 = vdwg.mxu0
      %1136 = vmatpush.bf16.msra.mxu0 %v908
      %1137 = vmatpush.bf16.msra.mxu0 %v907
      %1138 = vmatpush.bf16.msra.mxu0 %v906
      %1139 = vmatpush.bf16.msra.mxu0 %v905
      %1140 = vmatpush.bf16.msra.mxu0 %v904
      %1141 = vmatpush.bf16.msra.mxu0 %v903
      %1142 = vmatpush.bf16.msra.mxu0 %v902
      %1143 = vmatpush.bf16.msra.mxu0 %v901
      %1144 = vmatmul.bf16.gmra.mxu0 %v421
      %v1145 = vpop.f32.mrf.mxu0
      %v1146 = vadd.f32 %v1133, %v1145
      %v1147 = vpop.f32.mrf.mxu0
      %1148 = vdwg.mxu0
      %1149 = vmatpush.bf16.msra.mxu0 %v916
      %1150 = vmatpush.bf16.msra.mxu0 %v915
      %1151 = vmatpush.bf16.msra.mxu0 %v914
      %1152 = vmatpush.bf16.msra.mxu0 %v913
      %1153 = vmatpush.bf16.msra.mxu0 %v912
      %1154 = vmatpush.bf16.msra.mxu0 %v911
      %1155 = vmatpush.bf16.msra.mxu0 %v910
      %1156 = vmatpush.bf16.msra.mxu0 %v909
      %1157 = vmatmul.bf16.gmra.mxu0 %v422
      %v1158 = vpop.f32.mrf.mxu0
      %v1159 = vadd.f32 %v1146, %v1158
      %v1160 = vpop.f32.mrf.mxu0
      %1161 = vdwg.mxu0
      %1162 = vmatpush.bf16.msra.mxu0 %v924
      %1163 = vmatpush.bf16.msra.mxu0 %v923
      %1164 = vmatpush.bf16.msra.mxu0 %v922
      %1165 = vmatpush.bf16.msra.mxu0 %v921
      %1166 = vmatpush.bf16.msra.mxu0 %v920
      %1167 = vmatpush.bf16.msra.mxu0 %v919
      %1168 = vmatpush.bf16.msra.mxu0 %v918
      %1169 = vmatpush.bf16.msra.mxu0 %v917
      %1170 = vmatmul.bf16.gmra.mxu0 %v423
      %v1171 = vpop.f32.mrf.mxu0
      %v1172 = vadd.f32 %v1159, %v1171
      %v1173 = vpop.f32.mrf.mxu0
      %1174 = vdwg.mxu0
      %1175 = vmatpush.bf16.msra.mxu0 %v932
      %1176 = vmatpush.bf16.msra.mxu0 %v931
      %1177 = vmatpush.bf16.msra.mxu0 %v930
      %1178 = vmatpush.bf16.msra.mxu0 %v929
      %1179 = vmatpush.bf16.msra.mxu0 %v928
      %1180 = vmatpush.bf16.msra.mxu0 %v927
      %1181 = vmatpush.bf16.msra.mxu0 %v926
      %1182 = vmatpush.bf16.msra.mxu0 %v925
      %1183 = vmatmul.bf16.gmra.mxu0 %v424
      %v1184 = vpop.f32.mrf.mxu0
      %v1185 = vadd.f32 %v1172, %v1184
      %v1186 = vpop.f32.mrf.mxu0
      %1187 = vdwg.mxu0
      %1188 = vmatpush.bf16.msra.mxu0 %v940
      %1189 = vmatpush.bf16.msra.mxu0 %v939
      %1190 = vmatpush.bf16.msra.mxu0 %v938
      %1191 = vmatpush.bf16.msra.mxu0 %v937
      %1192 = vmatpush.bf16.msra.mxu0 %v936
      %1193 = vmatpush.bf16.msra.mxu0 %v935
      %1194 = vmatpush.bf16.msra.mxu0 %v934
      %1195 = vmatpush.bf16.msra.mxu0 %v933
      %1196 = vmatmul.bf16.gmra.mxu0 %v425
      %v1197 = vpop.f32.mrf.mxu0
      %v1198 = vadd.f32 %v1185, %v1197
      %v1199 = vpop.f32.mrf.mxu0
      %1200 = vdwg.mxu0
      %1201 = vmatpush.bf16.msra.mxu0 %v948
      %1202 = vmatpush.bf16.msra.mxu0 %v947
      %1203 = vmatpush.bf16.msra.mxu0 %v946
      %1204 = vmatpush.bf16.msra.mxu0 %v945
      %1205 = vmatpush.bf16.msra.mxu0 %v944
      %1206 = vmatpush.bf16.msra.mxu0 %v943
      %1207 = vmatpush.bf16.msra.mxu0 %v942
      %1208 = vmatpush.bf16.msra.mxu0 %v941
      %1209 = vmatmul.bf16.gmra.mxu0 %v426
      %v1210 = vpop.f32.mrf.mxu0
      %v1211 = vadd.f32 %v1198, %v1210
      %v1212 = vpop.f32.mrf.mxu0
      %1213 = vdwg.mxu0
      %1214 = vmatpush.bf16.msra.mxu0 %v956
      %1215 = vmatpush.bf16.msra.mxu0 %v955
      %1216 = vmatpush.bf16.msra.mxu0 %v954
      %1217 = vmatpush.bf16.msra.mxu0 %v953
      %1218 = vmatpush.bf16.msra.mxu0 %v952
      %1219 = vmatpush.bf16.msra.mxu0 %v951
      %1220 = vmatpush.bf16.msra.mxu0 %v950
      %1221 = vmatpush.bf16.msra.mxu0 %v949
      %1222 = vmatmul.bf16.gmra.mxu0 %v427
      %v1223 = vpop.f32.mrf.mxu0
      %v1224 = vadd.f32 %v1211, %v1223
      %v1225 = vpop.f32.mrf.mxu0
      %1226 = vdwg.mxu0
      %1227 = vmatpush.bf16.msra.mxu0 %v964
      %1228 = vmatpush.bf16.msra.mxu0 %v963
      %1229 = vmatpush.bf16.msra.mxu0 %v962
      %1230 = vmatpush.bf16.msra.mxu0 %v961
      %1231 = vmatpush.bf16.msra.mxu0 %v960
      %1232 = vmatpush.bf16.msra.mxu0 %v959
      %1233 = vmatpush.bf16.msra.mxu0 %v958
      %1234 = vmatpush.bf16.msra.mxu0 %v957
      %1235 = vmatmul.bf16.gmra.mxu0 %v428
      %v1236 = vpop.f32.mrf.mxu0
      %v1237 = vadd.f32 %v1224, %v1236
      %v1238 = vpop.f32.mrf.mxu0
      %1239 = vdwg.mxu0
      %1240 = vmatpush.bf16.msra.mxu0 %v972
      %1241 = vmatpush.bf16.msra.mxu0 %v971
      %1242 = vmatpush.bf16.msra.mxu0 %v970
      %1243 = vmatpush.bf16.msra.mxu0 %v969
      %1244 = vmatpush.bf16.msra.mxu0 %v968
      %1245 = vmatpush.bf16.msra.mxu0 %v967
      %1246 = vmatpush.bf16.msra.mxu0 %v966
      %1247 = vmatpush.bf16.msra.mxu0 %v965
      %1248 = vmatmul.bf16.gmra.mxu0 %v429
      %v1249 = vpop.f32.mrf.mxu0
      %v1250 = vadd.f32 %v1237, %v1249
      %v1251 = vpop.f32.mrf.mxu0
      %1252 = vdwg.mxu0
      %1253 = vmatpush.bf16.msra.mxu0 %v980
      %1254 = vmatpush.bf16.msra.mxu0 %v979
      %1255 = vmatpush.bf16.msra.mxu0 %v978
      %1256 = vmatpush.bf16.msra.mxu0 %v977
      %1257 = vmatpush.bf16.msra.mxu0 %v976
      %1258 = vmatpush.bf16.msra.mxu0 %v975
      %1259 = vmatpush.bf16.msra.mxu0 %v974
      %1260 = vmatpush.bf16.msra.mxu0 %v973
      %1261 = vmatmul.bf16.gmra.mxu0 %v430
      %v1262 = vpop.f32.mrf.mxu0
      %v1263 = vadd.f32 %v1250, %v1262
      %v1264 = vpop.f32.mrf.mxu0
      %1265 = vdwg.mxu0
      %1266 = vmatpush.bf16.msra.mxu0 0
      %1267 = vmatpush.bf16.msra.mxu0 0
      %1268 = vmatpush.bf16.msra.mxu0 0
      %1269 = vmatpush.bf16.msra.mxu0 0
      %1270 = vmatpush.bf16.msra.mxu0 %v984
      %1271 = vmatpush.bf16.msra.mxu0 %v983
      %1272 = vmatpush.bf16.msra.mxu0 %v982
      %1273 = vmatpush.bf16.msra.mxu0 %v981
      %1274 = vmatmul.bf16.gmra.mxu0 %v1095
      %v1275 = vpop.f32.mrf.mxu0
      %v1276 = vadd.f32 %v1263, %v1275
      %v1277 = vpop.f32.mrf.mxu0
      %1278 = vdwg.mxu0
      %v1279 = vmax.f32 %v1276, 0.0
      %v1280 = vpack.c.bf16 %v1279, %v1279
      %vm1281 = vcmask 519168
      %1282 = vst.msk [vmem:[%s168] sm:$0xf] %vm1281, %v1280
      %p1283 = scmp.lt.s32.totalorder %s14, 1
      %s1284 = scalar_select %p1283, %s14, 1
      %s1285 = smul.addr %s1284, 4
      %s1286 = scalar_lea.vmem %s3, %s1285
      // Predicated region
      $region33: #{psm_gnn_forward.26} parent=31 // pred_check
        %p1287 = pneg %p100
      $region34: #{psm_gnn_forward.26} parent=31 // pred_check_branch
        %1289 = sbr.rel (%p1287) target = $region36
      $region35: #{psm_gnn_forward.26} parent=31 // pred_region
        _
      $region36: #{psm_gnn_forward.26} parent=31 // pred_fallthru
        _
    $region32: #{psm_gnn_forward.26} parent=5 // pred_fallthru
      _
    %p1290 = scmp.le.s32.totalorder 2, %s9
    // Predicated region
    $region37: #{psm_gnn_forward.26} parent=5 // pred_check
      %p1291 = pneg %p1290
    $region38: #{psm_gnn_forward.26} parent=5 // pred_check_branch
      %1293 = sbr.rel (%p1291) target = $region40
    $region39: #{psm_gnn_forward.26} parent=5 // pred_region
      %s1294 = ssub.s32 %s9, 2
      // Predicated region
      $region41: #{psm_gnn_forward.26} parent=39 // pred_check
        %p1295 = pneg %p106
      $region42: #{psm_gnn_forward.26} parent=39 // pred_check_branch
        %1297 = sbr.rel (%p1295) target = $region44
      $region43: #{psm_gnn_forward.26} parent=39 // pred_region
        %p1298 = scmp.lt.s32.totalorder %s15, 1
        %s1299 = scalar_select %p1298, %s15, 1
        %s1300 = smul.addr %s1299, 4
        %s1301 = scalar_lea.vmem %s3, %s1300
      $region44: #{psm_gnn_forward.26} parent=39 // pred_fallthru
        _
    $region40: #{psm_gnn_forward.26} parent=5 // pred_fallthru
      _
  $region6: #{psm_gnn_forward.26} parent=0 // loop_footer
    %s13 = sadd.s32 1, %s9
  $region7: #{psm_gnn_forward.26} parent=0 // loop_footer_branch
    %8 = sbr.rel target = $region3
  $region8: #{psm_gnn_forward.26} parent=0 // loop_exit
    _

// kernel: psm_gnn_forward.28
$region0: #{psm_gnn_forward.28}
  #allocation0 [shape = 'u32[]', space=smem, size = 0x4, offset = 0x4, fixed_abs, tag = 'smem constant byte address 0x4 - core index']
  #allocation1 [shape = 'u32[72,128]{1,0:T(1,128)}', space=vmem, size = 0x9000, scoped, tag = 'internal scratch']
  %s0 = inlined_call_operand.vmem [shape: bf16[16,64], index: 0, kind: input, shape index: {}]
  %s1 = inlined_call_operand.vmem [shape: bf16[64,256], index: 1, kind: input, shape index: {}]
  %s2 = inlined_call_operand.vmem [shape: f32[1,256], index: 2, kind: input, shape index: {}]
  %s3 = inlined_call_operand.vmem [shape: bf16[16,256], index: 3, kind: input, shape index: {}]
  %s4 = inlined_call_operand.vmem [shape: bf16[16,256], index: 4, kind: output, shape index: {}]
  %s5 = sld [smem:[#allocation0]]
  $region49: #{psm_gnn_forward.28} parent=0
    _
  %s7 = ssub.s32 1, %s5
  %s8 = scalar_select 0, %s7, %s5
  loop: start=0, step=1, limit=4
  $region2: #{psm_gnn_forward.28} parent=0 // loop_pre_header
    _
  $region3: #{psm_gnn_forward.28} parent=0 // loop_header
    %s10 = sphi 0, %s14
    %p11 = scmp.ge.s32.totalorder %s10, 4
    %s20 = sphi 0, %s22
    %s23 = sphi 0, %s20
    %s24 = sphi 0, %s23
    %s40 = sphi 0, %s24
    %s44 = sphi 0, %s44
    %s46 = sphi 0, %s44
    %s47 = sphi 0, %s46
    %s61 = sphi 0, %s47
    %s65 = sphi 0, %s65
    %s67 = sphi 0, %s65
    %s68 = sphi 0, %s67
    %s82 = sphi 0, %s68
    %s88 = sphi 0, %s90
    %s91 = sphi 0, %s88
    %s92 = sphi 0, %s91
    %s108 = sphi 0, %s92
    %s114 = sphi 0, %s116
    %s117 = sphi 0, %s114
    %s118 = sphi 0, %s117
    %s134 = sphi 0, %s118
  $region4: #{psm_gnn_forward.28} parent=0 // loop_header_branch
    %13 = sbr.rel (%p11) target = $region8
  $region5: #{psm_gnn_forward.28} parent=0 // loop_body
    %s15 = ssub.s32 %s10, 1
    %s16 = ssub.s32 %s10, 2
    %s17 = sadd.s32 %s10, 1
    %s18 = ssub.s32 %s10, %s17
    %p19 = scmp.eq.s32.totalorder %s18, 0
    %s21 = sadd.s32 %s20, 1
    %s22 = scalar_select %p19, %s20, %s21
    %p25 = pneg %p19
    %p26 = scmp.eq.s32.totalorder %s10, 1
    %p27 = por %p25, %p26
    %p28 = scmp.ne.s32.totalorder %s20, %s23
    %p29 = scmp.eq.s32.totalorder %s10, 0
    %p30 = por %p28, %p29
    %p31 = scmp.ne.s32.totalorder %s20, %s23
    %p32 = scmp.eq.s32.totalorder %s15, 1
    %p33 = por %p31, %p32
    %p34 = scmp.ne.s32.totalorder %s23, %s24
    %p35 = scmp.eq.s32.totalorder %s15, 0
    %p36 = por %p34, %p35
    %p37 = scmp.ne.s32.totalorder %s23, %s24
    %p38 = scmp.eq.s32.totalorder %s16, 1
    %p39 = por %p37, %p38
    %p41 = scmp.ne.s32.totalorder %s24, %s40
    %p42 = scmp.eq.s32.totalorder %s16, 0
    %p43 = por %p41, %p42
    %s45 = sadd.s32 %s44, 1
    %p48 = scmp.eq.s32.totalorder %s10, 1
    %p49 = scmp.ne.s32.totalorder %s44, %s46
    %p50 = scmp.eq.s32.totalorder %s10, 0
    %p51 = por %p49, %p50
    %p52 = scmp.ne.s32.totalorder %s44, %s46
    %p53 = scmp.eq.s32.totalorder %s15, 1
    %p54 = por %p52, %p53
    %p55 = scmp.ne.s32.totalorder %s46, %s47
    %p56 = scmp.eq.s32.totalorder %s15, 0
    %p57 = por %p55, %p56
    %p58 = scmp.ne.s32.totalorder %s46, %s47
    %p59 = scmp.eq.s32.totalorder %s16, 1
    %p60 = por %p58, %p59
    %p62 = scmp.ne.s32.totalorder %s47, %s61
    %p63 = scmp.eq.s32.totalorder %s16, 0
    %p64 = por %p62, %p63
    %s66 = sadd.s32 %s65, 1
    %p69 = scmp.eq.s32.totalorder %s10, 1
    %p70 = scmp.ne.s32.totalorder %s65, %s67
    %p71 = scmp.eq.s32.totalorder %s10, 0
    %p72 = por %p70, %p71
    %p73 = scmp.ne.s32.totalorder %s65, %s67
    %p74 = scmp.eq.s32.totalorder %s15, 1
    %p75 = por %p73, %p74
    %p76 = scmp.ne.s32.totalorder %s67, %s68
    %p77 = scmp.eq.s32.totalorder %s15, 0
    %p78 = por %p76, %p77
    %p79 = scmp.ne.s32.totalorder %s67, %s68
    %p80 = scmp.eq.s32.totalorder %s16, 1
    %p81 = por %p79, %p80
    %p83 = scmp.ne.s32.totalorder %s68, %s82
    %p84 = scmp.eq.s32.totalorder %s16, 0
    %p85 = por %p83, %p84
    %s86 = ssub.s32 %s10, %s17
    %p87 = scmp.eq.s32.totalorder %s86, 0
    %s89 = sadd.s32 %s88, 1
    %s90 = scalar_select %p87, %s88, %s89
    %p93 = pneg %p87
    %p94 = scmp.eq.s32.totalorder %s10, 1
    %p95 = por %p93, %p94
    %p96 = scmp.ne.s32.totalorder %s88, %s91
    %p97 = scmp.eq.s32.totalorder %s10, 0
    %p98 = por %p96, %p97
    %p99 = scmp.ne.s32.totalorder %s88, %s91
    %p100 = scmp.eq.s32.totalorder %s15, 1
    %p101 = por %p99, %p100
    %p102 = scmp.ne.s32.totalorder %s91, %s92
    %p103 = scmp.eq.s32.totalorder %s15, 0
    %p104 = por %p102, %p103
    %p105 = scmp.ne.s32.totalorder %s91, %s92
    %p106 = scmp.eq.s32.totalorder %s16, 1
    %p107 = por %p105, %p106
    %p109 = scmp.ne.s32.totalorder %s92, %s108
    %p110 = scmp.eq.s32.totalorder %s16, 0
    %p111 = por %p109, %p110
    %s112 = ssub.s32 %s10, %s17
    %p113 = scmp.eq.s32.totalorder %s112, 0
    %s115 = sadd.s32 %s114, 1
    %s116 = scalar_select %p113, %s114, %s115
    %p119 = pneg %p113
    %p120 = scmp.eq.s32.totalorder %s10, 1
    %p121 = por %p119, %p120
    %p122 = scmp.ne.s32.totalorder %s114, %s117
    %p123 = scmp.eq.s32.totalorder %s10, 0
    %p124 = por %p122, %p123
    %p125 = scmp.ne.s32.totalorder %s114, %s117
    %p126 = scmp.eq.s32.totalorder %s15, 1
    %p127 = por %p125, %p126
    %p128 = scmp.ne.s32.totalorder %s117, %s118
    %p129 = scmp.eq.s32.totalorder %s15, 0
    %p130 = por %p128, %p129
    %p131 = scmp.ne.s32.totalorder %s117, %s118
    %p132 = scmp.eq.s32.totalorder %s16, 1
    %p133 = por %p131, %p132
    %p135 = scmp.ne.s32.totalorder %s118, %s134
    %p136 = scmp.eq.s32.totalorder %s16, 0
    %p137 = por %p135, %p136
    %p138 = scmp.le.s32.totalorder 1, %s10
    %p139 = scmp.lt.s32.totalorder %s10, 3
    %p140 = pnand %p138, %p139
    %p141 = pneg %p140
    // Predicated region
    $region9: #{psm_gnn_forward.28} parent=5 // pred_check
      _
    $region10: #{psm_gnn_forward.28} parent=5 // pred_check_branch
      %143 = sbr.rel (%p140) target = $region12
    $region11: #{psm_gnn_forward.28} parent=5 // pred_region
      %s144 = ssub.s32 %s10, 1
      // Predicated region
      $region13: #{psm_gnn_forward.28} parent=11 // pred_check
        %p145 = pneg %p57
      $region14: #{psm_gnn_forward.28} parent=11 // pred_check_branch
        %147 = sbr.rel (%p145) target = $region16
      $region15: #{psm_gnn_forward.28} parent=11 // pred_region
        _
      $region16: #{psm_gnn_forward.28} parent=11 // pred_fallthru
        _
      // Predicated region
      $region17: #{psm_gnn_forward.28} parent=11 // pred_check
        %p148 = pneg %p78
      $region18: #{psm_gnn_forward.28} parent=11 // pred_check_branch
        %150 = sbr.rel (%p148) target = $region20
      $region19: #{psm_gnn_forward.28} parent=11 // pred_region
        _
      $region20: #{psm_gnn_forward.28} parent=11 // pred_fallthru
        _
    $region12: #{psm_gnn_forward.28} parent=5 // pred_fallthru
      _
    %p151 = scmp.lt.s32.totalorder %s10, 2
    // Predicated region
    $region21: #{psm_gnn_forward.28} parent=5 // pred_check
      %p152 = pneg %p151
    $region22: #{psm_gnn_forward.28} parent=5 // pred_check_branch
      %154 = sbr.rel (%p152) target = $region24
    $region23: #{psm_gnn_forward.28} parent=5 // pred_region
      // Predicated region
      $region25: #{psm_gnn_forward.28} parent=23 // pred_check
        %p155 = pneg %p30
      $region26: #{psm_gnn_forward.28} parent=23 // pred_check_branch
        %157 = sbr.rel (%p155) target = $region28
      $region27: #{psm_gnn_forward.28} parent=23 // pred_region
        %p158 = scmp.lt.s32.totalorder %s10, 1
        %s159 = scalar_select %p158, %s10, 1
        %s160 = smul.addr %s159, 4
        %s161 = scalar_lea.vmem %s0, %s160
      $region28: #{psm_gnn_forward.28} parent=23 // pred_fallthru
        _
      // Predicated region
      $region29: #{psm_gnn_forward.28} parent=23 // pred_check
        %p162 = pneg %p98
      $region30: #{psm_gnn_forward.28} parent=23 // pred_check_branch
        %164 = sbr.rel (%p162) target = $region32
      $region31: #{psm_gnn_forward.28} parent=23 // pred_region
        %p165 = scmp.lt.s32.totalorder %s10, 1
        %s166 = scalar_select %p165, %s10, 1
        %s167 = smul.addr %s166, 2
        %s168 = smul.addr %s167, 4
        %s169 = scalar_lea.vmem %s3, %s168
      $region32: #{psm_gnn_forward.28} parent=23 // pred_fallthru
        _
    $region24: #{psm_gnn_forward.28} parent=5 // pred_fallthru
      _
    %p170 = scmp.le.s32.totalorder 1, %s10
    %p171 = scmp.lt.s32.totalorder %s10, 3
    %p172 = pnand %p170, %p171
    %p173 = pneg %p172
    // Predicated region
    $region33: #{psm_gnn_forward.28} parent=5 // pred_check
      _
    $region34: #{psm_gnn_forward.28} parent=5 // pred_check_branch
      %175 = sbr.rel (%p172) target = $region36
    $region35: #{psm_gnn_forward.28} parent=5 // pred_region
      %s176 = ssub.s32 %s10, 1
      %p177 = scmp.lt.s32.totalorder %s15, 1
      %s178 = scalar_select %p177, %s15, 1
      %s179 = smul.addr %s178, 4
      %s180 = scalar_lea.vmem %s0, %s179
      %p181 = pneg %p36
      %p182 = pneg %p33
      %p183 = pneg %p57
      %p184 = pneg %p54
      %p185 = pneg %p78
      %p186 = pneg %p75
      %p187 = scmp.lt.s32.totalorder %s15, 1
      %s188 = scalar_select %p187, %s15, 1
      %s189 = smul.addr %s188, 2
      %s190 = smul.addr %s189, 4
      %s191 = scalar_lea.vmem %s3, %s190
      %p192 = pneg %p104
      %p193 = pneg %p101
      %p194 = pneg %p130
      %p195 = pneg %p127
      %p196 = scmp.lt.s32.totalorder %s15, 1
      %s197 = scalar_select %p196, %s15, 1
      %s198 = smul.addr %s197, 2
      %s199 = smul.addr %s198, 4
      %s200 = scalar_lea.vmem %s4, %s199
      %p201 = scmp.lt.s32.totalorder %s15, 1
      %s202 = scalar_select %p201, %s15, 1
      %s203 = smul.addr %s202, 4
      %s204 = scalar_lea.vmem %s0, %s203
      %p205 = scmp.lt.s32.totalorder %s15, 1
      %s206 = scalar_select %p205, %s15, 1
      %s207 = smul.addr %s206, 2
      %s208 = smul.addr %s207, 4
      %s209 = scalar_lea.vmem %s3, %s208
      %p210 = scmp.lt.s32.totalorder %s15, 1
      %s211 = scalar_select %p210, %s15, 1
      %s212 = smul.addr %s211, 2
      %s213 = smul.addr %s212, 4
      %s214 = scalar_lea.vmem %s4, %s213
      %v216 = vld [vmem:[%s204] sm:$0xf]
      %v217 = vld [vmem:[%s1] sm:$0xff]
      %v218 = vld [vmem:[%s1 + $0x8] sm:$0xff]
      %v219 = vld [vmem:[%s1 + $0x10] sm:$0xff]
      %v220 = vld [vmem:[%s1 + $0x18] sm:$0xff]
      %v221 = vld [vmem:[%s1 + $0x20] sm:$0xff]
      %v222 = vld [vmem:[%s1 + $0x28] sm:$0xff]
      %v223 = vld [vmem:[%s1 + $0x30] sm:$0xff]
      %v224 = vld [vmem:[%s1 + $0x38] sm:$0xff]
      %v225 = vld [vmem:[%s2] sm:$0x3]
      %v227 = vperm.slane %v225, 0
      %v228 = vperm.slane %v225, 1
      %v239 = vunpack.c.l.b16 %v217
      %v240 = vunpack.c.h.b16 %v217
      %v241 = vunpack.c.l.b16 %v218
      %v242 = vunpack.c.h.b16 %v218
      %v243 = vunpack.c.l.b16 %v219
      %v244 = vunpack.c.h.b16 %v219
      %v245 = vunpack.c.l.b16 %v220
      %v246 = vunpack.c.h.b16 %v220
      %v247 = vunpack.c.l.b16 %v221
      %v248 = vunpack.c.h.b16 %v221
      %v249 = vunpack.c.l.b16 %v222
      %v250 = vunpack.c.h.b16 %v222
      %v251 = vunpack.c.l.b16 %v223
      %v252 = vunpack.c.h.b16 %v223
      %v253 = vunpack.c.l.b16 %v224
      %v254 = vunpack.c.h.b16 %v224
      %v255 = vpack.c.b16 %v241, %v239
      %v256 = vpack.c.b16 %v242, %v240
      %v257 = vpack.c.b16 %v245, %v243
      %v258 = vpack.c.b16 %v246, %v244
      %v259 = vpack.c.b16 %v249, %v247
      %v260 = vpack.c.b16 %v250, %v248
      %v261 = vpack.c.b16 %v253, %v251
      %v262 = vpack.c.b16 %v254, %v252
      %vm271 = vcmask 523264
      %v273 = vsel %vm271, %v216, 0
      %275 = vmatpush.bf16.msra.mxu0 0
      %276 = vmatpush.bf16.msra.mxu0 0
      %277 = vmatpush.bf16.msra.mxu0 0
      %278 = vmatpush.bf16.msra.mxu0 0
      %279 = vmatpush.bf16.msra.mxu0 %v261
      %280 = vmatpush.bf16.msra.mxu0 %v259
      %281 = vmatpush.bf16.msra.mxu0 %v257
      %282 = vmatpush.bf16.msra.mxu0 %v255
      %283 = vmatmul.bf16.gmra.mxu0 %v273
      %v284 = vpop.f32.mrf.mxu0
      %v285 = vadd.f32 %v227, %v284
      %v286 = vpop.f32.mrf.mxu0
      %287 = vdwg.mxu0
      %288 = vmatpush.bf16.msra.mxu0 0
      %289 = vmatpush.bf16.msra.mxu0 0
      %290 = vmatpush.bf16.msra.mxu0 0
      %291 = vmatpush.bf16.msra.mxu0 0
      %292 = vmatpush.bf16.msra.mxu0 %v262
      %293 = vmatpush.bf16.msra.mxu0 %v260
      %294 = vmatpush.bf16.msra.mxu0 %v258
      %295 = vmatpush.bf16.msra.mxu0 %v256
      %296 = vmatmul.bf16.gmra.mxu0 %v273
      %v297 = vpop.f32.mrf.mxu0
      %v298 = vadd.f32 %v228, %v297
      %v299 = vpop.f32.mrf.mxu0
      %300 = vdwg.mxu0
      %v301 = vmax.f32 %v285, 0.0
      %v302 = vmax.f32 %v298, 0.0
      %v303 = vld [vmem:[%s209] sm:$0xff]
      %v304 = vunpack.c.l.bf16 %v303
      %v305 = vunpack.c.h.bf16 %v303
      %v306 = vadd.f32 %v301, %v304
      %v307 = vadd.f32 %v302, %v305
      %v308 = vpack.c.bf16 %v307, %v306
      %309 = vst [vmem:[%s214] sm:$0xff] %v308
      %p310 = scmp.lt.s32.totalorder %s15, 1
      %s311 = scalar_select %p310, %s15, 1
      %s312 = smul.addr %s311, 2
      %s313 = smul.addr %s312, 4
      %s314 = scalar_lea.vmem %s4, %s313
      // Predicated region
      $region37: #{psm_gnn_forward.28} parent=35 // pred_check
        %p315 = pneg %p127
      $region38: #{psm_gnn_forward.28} parent=35 // pred_check_branch
        %317 = sbr.rel (%p315) target = $region40
      $region39: #{psm_gnn_forward.28} parent=35 // pred_region
        _
      $region40: #{psm_gnn_forward.28} parent=35 // pred_fallthru
        _
    $region36: #{psm_gnn_forward.28} parent=5 // pred_fallthru
      _
    %p318 = scmp.le.s32.totalorder 2, %s10
    // Predicated region
    $region41: #{psm_gnn_forward.28} parent=5 // pred_check
      %p319 = pneg %p318
    $region42: #{psm_gnn_forward.28} parent=5 // pred_check_branch
      %321 = sbr.rel (%p319) target = $region44
    $region43: #{psm_gnn_forward.28} parent=5 // pred_region
      %s322 = ssub.s32 %s10, 2
      // Predicated region
      $region45: #{psm_gnn_forward.28} parent=43 // pred_check
        %p323 = pneg %p133
      $region46: #{psm_gnn_forward.28} parent=43 // pred_check_branch
        %325 = sbr.rel (%p323) target = $region48
      $region47: #{psm_gnn_forward.28} parent=43 // pred_region
        %p326 = scmp.lt.s32.totalorder %s16, 1
        %s327 = scalar_select %p326, %s16, 1
        %s328 = smul.addr %s327, 2
        %s329 = smul.addr %s328, 4
        %s330 = scalar_lea.vmem %s4, %s329
      $region48: #{psm_gnn_forward.28} parent=43 // pred_fallthru
        _
    $region44: #{psm_gnn_forward.28} parent=5 // pred_fallthru
      _
  $region6: #{psm_gnn_forward.28} parent=0 // loop_footer
    %s14 = sadd.s32 1, %s10
  $region7: #{psm_gnn_forward.28} parent=0 // loop_footer_branch
    %9 = sbr.rel target = $region3
  $region8: #{psm_gnn_forward.28} parent=0 // loop_exit
    _

// kernel: psm_gnn_forward.25
$region0: #{psm_gnn_forward.25}
  #allocation0 [shape = 'u32[]', space=smem, size = 0x4, offset = 0x4, fixed_abs, tag = 'smem constant byte address 0x4 - core index']
  #allocation1 [shape = 'u32[72,128]{1,0:T(1,128)}', space=vmem, size = 0x9000, scoped, tag = 'internal scratch']
  %s0 = inlined_call_operand.vmem [shape: bf16[16,1728], index: 0, kind: input, shape index: {}]
  %s1 = inlined_call_operand.vmem [shape: bf16[1728,64], index: 1, kind: input, shape index: {}]
  %s2 = inlined_call_operand.vmem [shape: f32[1,64], index: 2, kind: input, shape index: {}]
  %s3 = inlined_call_operand.vmem [shape: bf16[16,64], index: 3, kind: input, shape index: {}]
  %s4 = inlined_call_operand.vmem [shape: bf16[16,64], index: 4, kind: output, shape index: {}]
  %s5 = sld [smem:[#allocation0]]
  $region49: #{psm_gnn_forward.25} parent=0
    _
  %s7 = ssub.s32 1, %s5
  %s8 = scalar_select 0, %s7, %s5
  loop: start=0, step=1, limit=4
  $region2: #{psm_gnn_forward.25} parent=0 // loop_pre_header
    _
  $region3: #{psm_gnn_forward.25} parent=0 // loop_header
    %s10 = sphi 0, %s14
    %p11 = scmp.ge.s32.totalorder %s10, 4
    %s20 = sphi 0, %s22
    %s23 = sphi 0, %s20
    %s24 = sphi 0, %s23
    %s40 = sphi 0, %s24
    %s44 = sphi 0, %s44
    %s46 = sphi 0, %s44
    %s47 = sphi 0, %s46
    %s61 = sphi 0, %s47
    %s65 = sphi 0, %s65
    %s67 = sphi 0, %s65
    %s68 = sphi 0, %s67
    %s82 = sphi 0, %s68
    %s88 = sphi 0, %s90
    %s91 = sphi 0, %s88
    %s92 = sphi 0, %s91
    %s108 = sphi 0, %s92
    %s114 = sphi 0, %s116
    %s117 = sphi 0, %s114
    %s118 = sphi 0, %s117
    %s134 = sphi 0, %s118
  $region4: #{psm_gnn_forward.25} parent=0 // loop_header_branch
    %13 = sbr.rel (%p11) target = $region8
  $region5: #{psm_gnn_forward.25} parent=0 // loop_body
    %s15 = ssub.s32 %s10, 1
    %s16 = ssub.s32 %s10, 2
    %s17 = sadd.s32 %s10, 1
    %s18 = ssub.s32 %s10, %s17
    %p19 = scmp.eq.s32.totalorder %s18, 0
    %s21 = sadd.s32 %s20, 1
    %s22 = scalar_select %p19, %s20, %s21
    %p25 = pneg %p19
    %p26 = scmp.eq.s32.totalorder %s10, 1
    %p27 = por %p25, %p26
    %p28 = scmp.ne.s32.totalorder %s20, %s23
    %p29 = scmp.eq.s32.totalorder %s10, 0
    %p30 = por %p28, %p29
    %p31 = scmp.ne.s32.totalorder %s20, %s23
    %p32 = scmp.eq.s32.totalorder %s15, 1
    %p33 = por %p31, %p32
    %p34 = scmp.ne.s32.totalorder %s23, %s24
    %p35 = scmp.eq.s32.totalorder %s15, 0
    %p36 = por %p34, %p35
    %p37 = scmp.ne.s32.totalorder %s23, %s24
    %p38 = scmp.eq.s32.totalorder %s16, 1
    %p39 = por %p37, %p38
    %p41 = scmp.ne.s32.totalorder %s24, %s40
    %p42 = scmp.eq.s32.totalorder %s16, 0
    %p43 = por %p41, %p42
    %s45 = sadd.s32 %s44, 1
    %p48 = scmp.eq.s32.totalorder %s10, 1
    %p49 = scmp.ne.s32.totalorder %s44, %s46
    %p50 = scmp.eq.s32.totalorder %s10, 0
    %p51 = por %p49, %p50
    %p52 = scmp.ne.s32.totalorder %s44, %s46
    %p53 = scmp.eq.s32.totalorder %s15, 1
    %p54 = por %p52, %p53
    %p55 = scmp.ne.s32.totalorder %s46, %s47
    %p56 = scmp.eq.s32.totalorder %s15, 0
    %p57 = por %p55, %p56
    %p58 = scmp.ne.s32.totalorder %s46, %s47
    %p59 = scmp.eq.s32.totalorder %s16, 1
    %p60 = por %p58, %p59
    %p62 = scmp.ne.s32.totalorder %s47, %s61
    %p63 = scmp.eq.s32.totalorder %s16, 0
    %p64 = por %p62, %p63
    %s66 = sadd.s32 %s65, 1
    %p69 = scmp.eq.s32.totalorder %s10, 1
    %p70 = scmp.ne.s32.totalorder %s65, %s67
    %p71 = scmp.eq.s32.totalorder %s10, 0
    %p72 = por %p70, %p71
    %p73 = scmp.ne.s32.totalorder %s65, %s67
    %p74 = scmp.eq.s32.totalorder %s15, 1
    %p75 = por %p73, %p74
    %p76 = scmp.ne.s32.totalorder %s67, %s68
    %p77 = scmp.eq.s32.totalorder %s15, 0
    %p78 = por %p76, %p77
    %p79 = scmp.ne.s32.totalorder %s67, %s68
    %p80 = scmp.eq.s32.totalorder %s16, 1
    %p81 = por %p79, %p80
    %p83 = scmp.ne.s32.totalorder %s68, %s82
    %p84 = scmp.eq.s32.totalorder %s16, 0
    %p85 = por %p83, %p84
    %s86 = ssub.s32 %s10, %s17
    %p87 = scmp.eq.s32.totalorder %s86, 0
    %s89 = sadd.s32 %s88, 1
    %s90 = scalar_select %p87, %s88, %s89
    %p93 = pneg %p87
    %p94 = scmp.eq.s32.totalorder %s10, 1
    %p95 = por %p93, %p94
    %p96 = scmp.ne.s32.totalorder %s88, %s91
    %p97 = scmp.eq.s32.totalorder %s10, 0
    %p98 = por %p96, %p97
    %p99 = scmp.ne.s32.totalorder %s88, %s91
    %p100 = scmp.eq.s32.totalorder %s15, 1
    %p101 = por %p99, %p100
    %p102 = scmp.ne.s32.totalorder %s91, %s92
    %p103 = scmp.eq.s32.totalorder %s15, 0
    %p104 = por %p102, %p103
    %p105 = scmp.ne.s32.totalorder %s91, %s92
    %p106 = scmp.eq.s32.totalorder %s16, 1
    %p107 = por %p105, %p106
    %p109 = scmp.ne.s32.totalorder %s92, %s108
    %p110 = scmp.eq.s32.totalorder %s16, 0
    %p111 = por %p109, %p110
    %s112 = ssub.s32 %s10, %s17
    %p113 = scmp.eq.s32.totalorder %s112, 0
    %s115 = sadd.s32 %s114, 1
    %s116 = scalar_select %p113, %s114, %s115
    %p119 = pneg %p113
    %p120 = scmp.eq.s32.totalorder %s10, 1
    %p121 = por %p119, %p120
    %p122 = scmp.ne.s32.totalorder %s114, %s117
    %p123 = scmp.eq.s32.totalorder %s10, 0
    %p124 = por %p122, %p123
    %p125 = scmp.ne.s32.totalorder %s114, %s117
    %p126 = scmp.eq.s32.totalorder %s15, 1
    %p127 = por %p125, %p126
    %p128 = scmp.ne.s32.totalorder %s117, %s118
    %p129 = scmp.eq.s32.totalorder %s15, 0
    %p130 = por %p128, %p129
    %p131 = scmp.ne.s32.totalorder %s117, %s118
    %p132 = scmp.eq.s32.totalorder %s16, 1
    %p133 = por %p131, %p132
    %p135 = scmp.ne.s32.totalorder %s118, %s134
    %p136 = scmp.eq.s32.totalorder %s16, 0
    %p137 = por %p135, %p136
    %p138 = scmp.le.s32.totalorder 1, %s10
    %p139 = scmp.lt.s32.totalorder %s10, 3
    %p140 = pnand %p138, %p139
    %p141 = pneg %p140
    // Predicated region
    $region9: #{psm_gnn_forward.25} parent=5 // pred_check
      _
    $region10: #{psm_gnn_forward.25} parent=5 // pred_check_branch
      %143 = sbr.rel (%p140) target = $region12
    $region11: #{psm_gnn_forward.25} parent=5 // pred_region
      %s144 = ssub.s32 %s10, 1
      // Predicated region
      $region13: #{psm_gnn_forward.25} parent=11 // pred_check
        %p145 = pneg %p57
      $region14: #{psm_gnn_forward.25} parent=11 // pred_check_branch
        %147 = sbr.rel (%p145) target = $region16
      $region15: #{psm_gnn_forward.25} parent=11 // pred_region
        _
      $region16: #{psm_gnn_forward.25} parent=11 // pred_fallthru
        _
      // Predicated region
      $region17: #{psm_gnn_forward.25} parent=11 // pred_check
        %p148 = pneg %p78
      $region18: #{psm_gnn_forward.25} parent=11 // pred_check_branch
        %150 = sbr.rel (%p148) target = $region20
      $region19: #{psm_gnn_forward.25} parent=11 // pred_region
        _
      $region20: #{psm_gnn_forward.25} parent=11 // pred_fallthru
        _
    $region12: #{psm_gnn_forward.25} parent=5 // pred_fallthru
      _
    %p151 = scmp.lt.s32.totalorder %s10, 2
    // Predicated region
    $region21: #{psm_gnn_forward.25} parent=5 // pred_check
      %p152 = pneg %p151
    $region22: #{psm_gnn_forward.25} parent=5 // pred_check_branch
      %154 = sbr.rel (%p152) target = $region24
    $region23: #{psm_gnn_forward.25} parent=5 // pred_region
      // Predicated region
      $region25: #{psm_gnn_forward.25} parent=23 // pred_check
        %p155 = pneg %p30
      $region26: #{psm_gnn_forward.25} parent=23 // pred_check_branch
        %157 = sbr.rel (%p155) target = $region28
      $region27: #{psm_gnn_forward.25} parent=23 // pred_region
        %p158 = scmp.lt.s32.totalorder %s10, 1
        %s159 = scalar_select %p158, %s10, 1
        %s160 = smul.addr %s159, 14
        %s161 = smul.addr %s160, 4
        %s162 = scalar_lea.vmem %s0, %s161
      $region28: #{psm_gnn_forward.25} parent=23 // pred_fallthru
        _
      // Predicated region
      $region29: #{psm_gnn_forward.25} parent=23 // pred_check
        %p163 = pneg %p98
      $region30: #{psm_gnn_forward.25} parent=23 // pred_check_branch
        %165 = sbr.rel (%p163) target = $region32
      $region31: #{psm_gnn_forward.25} parent=23 // pred_region
        %p166 = scmp.lt.s32.totalorder %s10, 1
        %s167 = scalar_select %p166, %s10, 1
        %s168 = smul.addr %s167, 4
        %s169 = scalar_lea.vmem %s3, %s168
      $region32: #{psm_gnn_forward.25} parent=23 // pred_fallthru
        _
    $region24: #{psm_gnn_forward.25} parent=5 // pred_fallthru
      _
    %p170 = scmp.le.s32.totalorder 1, %s10
    %p171 = scmp.lt.s32.totalorder %s10, 3
    %p172 = pnand %p170, %p171
    %p173 = pneg %p172
    // Predicated region
    $region33: #{psm_gnn_forward.25} parent=5 // pred_check
      _
    $region34: #{psm_gnn_forward.25} parent=5 // pred_check_branch
      %175 = sbr.rel (%p172) target = $region36
    $region35: #{psm_gnn_forward.25} parent=5 // pred_region
      %s176 = ssub.s32 %s10, 1
      %p177 = scmp.lt.s32.totalorder %s15, 1
      %s178 = scalar_select %p177, %s15, 1
      %s179 = smul.addr %s178, 14
      %s180 = smul.addr %s179, 4
      %s181 = scalar_lea.vmem %s0, %s180
      %p182 = pneg %p36
      %p183 = pneg %p33
      %p184 = pneg %p57
      %p185 = pneg %p54
      %p186 = pneg %p78
      %p187 = pneg %p75
      %p188 = scmp.lt.s32.totalorder %s15, 1
      %s189 = scalar_select %p188, %s15, 1
      %s190 = smul.addr %s189, 4
      %s191 = scalar_lea.vmem %s3, %s190
      %p192 = pneg %p104
      %p193 = pneg %p101
      %p194 = pneg %p130
      %p195 = pneg %p127
      %p196 = scmp.lt.s32.totalorder %s15, 1
      %s197 = scalar_select %p196, %s15, 1
      %s198 = smul.addr %s197, 4
      %s199 = scalar_lea.vmem %s4, %s198
      %p200 = scmp.lt.s32.totalorder %s15, 1
      %s201 = scalar_select %p200, %s15, 1
      %s202 = smul.addr %s201, 14
      %s203 = smul.addr %s202, 4
      %s204 = scalar_lea.vmem %s0, %s203
      %p205 = scmp.lt.s32.totalorder %s15, 1
      %s206 = scalar_select %p205, %s15, 1
      %s207 = smul.addr %s206, 4
      %s208 = scalar_lea.vmem %s3, %s207
      %p209 = scmp.lt.s32.totalorder %s15, 1
      %s210 = scalar_select %p209, %s15, 1
      %s211 = smul.addr %s210, 4
      %s212 = scalar_lea.vmem %s4, %s211
      %v214 = vld [vmem:[%s204] sm:$0xff]
      %v215 = vld [vmem:[%s204 + $0x8] sm:$0xff]
      %v216 = vld [vmem:[%s204 + $0x10] sm:$0xff]
      %v217 = vld [vmem:[%s204 + $0x18] sm:$0xff]
      %v218 = vld [vmem:[%s204 + $0x20] sm:$0xff]
      %v219 = vld [vmem:[%s204 + $0x28] sm:$0xff]
      %v220 = vld [vmem:[%s204 + $0x30] sm:$0xff]
      %v221 = vld [vmem:[%s1] sm:$0xf]
      %v222 = vld [vmem:[%s1 + $0x4] sm:$0xf]
      %v223 = vld [vmem:[%s1 + $0x8] sm:$0xf]
      %v224 = vld [vmem:[%s1 + $0xc] sm:$0xf]
      %v225 = vld [vmem:[%s1 + $0x10] sm:$0xf]
      %v226 = vld [vmem:[%s1 + $0x14] sm:$0xf]
      %v227 = vld [vmem:[%s1 + $0x18] sm:$0xf]
      %v228 = vld [vmem:[%s1 + $0x1c] sm:$0xf]
      %v229 = vld [vmem:[%s1 + $0x20] sm:$0xf]
      %v230 = vld [vmem:[%s1 + $0x24] sm:$0xf]
      %v231 = vld [vmem:[%s1 + $0x28] sm:$0xf]
      %v232 = vld [vmem:[%s1 + $0x2c] sm:$0xf]
      %v233 = vld [vmem:[%s1 + $0x30] sm:$0xf]
      %v234 = vld [vmem:[%s1 + $0x34] sm:$0xf]
      %v235 = vld [vmem:[%s1 + $0x38] sm:$0xf]
      %v236 = vld [vmem:[%s1 + $0x3c] sm:$0xf]
      %v237 = vld [vmem:[%s1 + $0x40] sm:$0xf]
      %v238 = vld [vmem:[%s1 + $0x44] sm:$0xf]
      %v239 = vld [vmem:[%s1 + $0x48] sm:$0xf]
      %v240 = vld [vmem:[%s1 + $0x4c] sm:$0xf]
      %v241 = vld [vmem:[%s1 + $0x50] sm:$0xf]
      %v242 = vld [vmem:[%s1 + $0x54] sm:$0xf]
      %v243 = vld [vmem:[%s1 + $0x58] sm:$0xf]
      %v244 = vld [vmem:[%s1 + $0x5c] sm:$0xf]
      %v245 = vld [vmem:[%s1 + $0x60] sm:$0xf]
      %v246 = vld [vmem:[%s1 + $0x64] sm:$0xf]
      %v247 = vld [vmem:[%s1 + $0x68] sm:$0xf]
      %v248 = vld [vmem:[%s1 + $0x6c] sm:$0xf]
      %v249 = vld [vmem:[%s1 + $0x70] sm:$0xf]
      %v250 = vld [vmem:[%s1 + $0x74] sm:$0xf]
      %v251 = vld [vmem:[%s1 + $0x78] sm:$0xf]
      %v252 = vld [vmem:[%s1 + $0x7c] sm:$0xf]
      %v253 = vld [vmem:[%s1 + $0x80] sm:$0xf]
      %v254 = vld [vmem:[%s1 + $0x84] sm:$0xf]
      %v255 = vld [vmem:[%s1 + $0x88] sm:$0xf]
      %v256 = vld [vmem:[%s1 + $0x8c] sm:$0xf]
      %v257 = vld [vmem:[%s1 + $0x90] sm:$0xf]
      %v258 = vld [vmem:[%s1 + $0x94] sm:$0xf]
      %v259 = vld [vmem:[%s1 + $0x98] sm:$0xf]
      %v260 = vld [vmem:[%s1 + $0x9c] sm:$0xf]
      %v261 = vld [vmem:[%s1 + $0xa0] sm:$0xf]
      %v262 = vld [vmem:[%s1 + $0xa4] sm:$0xf]
      %v263 = vld [vmem:[%s1 + $0xa8] sm:$0xf]
      %v264 = vld [vmem:[%s1 + $0xac] sm:$0xf]
      %v265 = vld [vmem:[%s1 + $0xb0] sm:$0xf]
      %v266 = vld [vmem:[%s1 + $0xb4] sm:$0xf]
      %v267 = vld [vmem:[%s1 + $0xb8] sm:$0xf]
      %v268 = vld [vmem:[%s1 + $0xbc] sm:$0xf]
      %v269 = vld [vmem:[%s1 + $0xc0] sm:$0xf]
      %v270 = vld [vmem:[%s1 + $0xc4] sm:$0xf]
      %v271 = vld [vmem:[%s1 + $0xc8] sm:$0xf]
      %v272 = vld [vmem:[%s1 + $0xcc] sm:$0xf]
      %v273 = vld [vmem:[%s1 + $0xd0] sm:$0xf]
      %v274 = vld [vmem:[%s1 + $0xd4] sm:$0xf]
      %v275 = vld [vmem:[%s1 + $0xd8] sm:$0xf]
      %v276 = vld [vmem:[%s1 + $0xdc] sm:$0xf]
      %v277 = vld [vmem:[%s1 + $0xe0] sm:$0xf]
      %v278 = vld [vmem:[%s1 + $0xe4] sm:$0xf]
      %v279 = vld [vmem:[%s1 + $0xe8] sm:$0xf]
      %v280 = vld [vmem:[%s1 + $0xec] sm:$0xf]
      %v281 = vld [vmem:[%s1 + $0xf0] sm:$0xf]
      %v282 = vld [vmem:[%s1 + $0xf4] sm:$0xf]
      %v283 = vld [vmem:[%s1 + $0xf8] sm:$0xf]
      %v284 = vld [vmem:[%s1 + $0xfc] sm:$0xf]
      %v285 = vld [vmem:[%s1 + $0x100] sm:$0xf]
      %v286 = vld [vmem:[%s1 + $0x104] sm:$0xf]
      %v287 = vld [vmem:[%s1 + $0x108] sm:$0xf]
      %v288 = vld [vmem:[%s1 + $0x10c] sm:$0xf]
      %v289 = vld [vmem:[%s1 + $0x110] sm:$0xf]
      %v290 = vld [vmem:[%s1 + $0x114] sm:$0xf]
      %v291 = vld [vmem:[%s1 + $0x118] sm:$0xf]
      %v292 = vld [vmem:[%s1 + $0x11c] sm:$0xf]
      %v293 = vld [vmem:[%s1 + $0x120] sm:$0xf]
      %v294 = vld [vmem:[%s1 + $0x124] sm:$0xf]
      %v295 = vld [vmem:[%s1 + $0x128] sm:$0xf]
      %v296 = vld [vmem:[%s1 + $0x12c] sm:$0xf]
      %v297 = vld [vmem:[%s1 + $0x130] sm:$0xf]
      %v298 = vld [vmem:[%s1 + $0x134] sm:$0xf]
      %v299 = vld [vmem:[%s1 + $0x138] sm:$0xf]
      %v300 = vld [vmem:[%s1 + $0x13c] sm:$0xf]
      %v301 = vld [vmem:[%s1 + $0x140] sm:$0xf]
      %v302 = vld [vmem:[%s1 + $0x144] sm:$0xf]
      %v303 = vld [vmem:[%s1 + $0x148] sm:$0xf]
      %v304 = vld [vmem:[%s1 + $0x14c] sm:$0xf]
      %v305 = vld [vmem:[%s1 + $0x150] sm:$0xf]
      %v306 = vld [vmem:[%s1 + $0x154] sm:$0xf]
      %v307 = vld [vmem:[%s1 + $0x158] sm:$0xf]
      %v308 = vld [vmem:[%s1 + $0x15c] sm:$0xf]
      %v309 = vld [vmem:[%s1 + $0x160] sm:$0xf]
      %v310 = vld [vmem:[%s1 + $0x164] sm:$0xf]
      %v311 = vld [vmem:[%s1 + $0x168] sm:$0xf]
      %v312 = vld [vmem:[%s1 + $0x16c] sm:$0xf]
      %v313 = vld [vmem:[%s1 + $0x170] sm:$0xf]
      %v314 = vld [vmem:[%s1 + $0x174] sm:$0xf]
      %v315 = vld [vmem:[%s1 + $0x178] sm:$0xf]
      %v316 = vld [vmem:[%s1 + $0x17c] sm:$0xf]
      %v317 = vld [vmem:[%s1 + $0x180] sm:$0xf]
      %v318 = vld [vmem:[%s1 + $0x184] sm:$0xf]
      %v319 = vld [vmem:[%s1 + $0x188] sm:$0xf]
      %v320 = vld [vmem:[%s1 + $0x18c] sm:$0xf]
      %v321 = vld [vmem:[%s1 + $0x190] sm:$0xf]
      %v322 = vld [vmem:[%s1 + $0x194] sm:$0xf]
      %v323 = vld [vmem:[%s1 + $0x198] sm:$0xf]
      %v324 = vld [vmem:[%s1 + $0x19c] sm:$0xf]
      %v325 = vld [vmem:[%s1 + $0x1a0] sm:$0xf]
      %v326 = vld [vmem:[%s1 + $0x1a4] sm:$0xf]
      %v327 = vld [vmem:[%s1 + $0x1a8] sm:$0xf]
      %v328 = vld [vmem:[%s1 + $0x1ac] sm:$0xf]
      %v329 = vld [vmem:[%s1 + $0x1b0] sm:$0xf]
      %v330 = vld [vmem:[%s1 + $0x1b4] sm:$0xf]
      %v331 = vld [vmem:[%s1 + $0x1b8] sm:$0xf]
      %v332 = vld [vmem:[%s1 + $0x1bc] sm:$0xf]
      %v333 = vld [vmem:[%s1 + $0x1c0] sm:$0xf]
      %v334 = vld [vmem:[%s1 + $0x1c4] sm:$0xf]
      %v335 = vld [vmem:[%s1 + $0x1c8] sm:$0xf]
      %v336 = vld [vmem:[%s1 + $0x1cc] sm:$0xf]
      %v337 = vld [vmem:[%s1 + $0x1d0] sm:$0xf]
      %v338 = vld [vmem:[%s1 + $0x1d4] sm:$0xf]
      %v339 = vld [vmem:[%s1 + $0x1d8] sm:$0xf]
      %v340 = vld [vmem:[%s1 + $0x1dc] sm:$0xf]
      %v341 = vld [vmem:[%s1 + $0x1e0] sm:$0xf]
      %v342 = vld [vmem:[%s1 + $0x1e4] sm:$0xf]
      %v343 = vld [vmem:[%s1 + $0x1e8] sm:$0xf]
      %v344 = vld [vmem:[%s1 + $0x1ec] sm:$0xf]
      %v345 = vld [vmem:[%s1 + $0x1f0] sm:$0xf]
      %v346 = vld [vmem:[%s1 + $0x1f4] sm:$0xf]
      %v347 = vld [vmem:[%s1 + $0x1f8] sm:$0xf]
      %v348 = vld [vmem:[%s1 + $0x1fc] sm:$0xf]
      %v349 = vld [vmem:[%s1 + $0x200] sm:$0xf]
      %v350 = vld [vmem:[%s1 + $0x204] sm:$0xf]
      %v351 = vld [vmem:[%s1 + $0x208] sm:$0xf]
      %v352 = vld [vmem:[%s1 + $0x20c] sm:$0xf]
      %v353 = vld [vmem:[%s1 + $0x210] sm:$0xf]
      %v354 = vld [vmem:[%s1 + $0x214] sm:$0xf]
      %v355 = vld [vmem:[%s1 + $0x218] sm:$0xf]
      %v356 = vld [vmem:[%s1 + $0x21c] sm:$0xf]
      %v357 = vld [vmem:[%s1 + $0x220] sm:$0xf]
      %v358 = vld [vmem:[%s1 + $0x224] sm:$0xf]
      %v359 = vld [vmem:[%s1 + $0x228] sm:$0xf]
      %v360 = vld [vmem:[%s1 + $0x22c] sm:$0xf]
      %v361 = vld [vmem:[%s1 + $0x230] sm:$0xf]
      %v362 = vld [vmem:[%s1 + $0x234] sm:$0xf]
      %v363 = vld [vmem:[%s1 + $0x238] sm:$0xf]
      %v364 = vld [vmem:[%s1 + $0x23c] sm:$0xf]
      %v365 = vld [vmem:[%s1 + $0x240] sm:$0xf]
      %v366 = vld [vmem:[%s1 + $0x244] sm:$0xf]
      %v367 = vld [vmem:[%s1 + $0x248] sm:$0xf]
      %v368 = vld [vmem:[%s1 + $0x24c] sm:$0xf]
      %v369 = vld [vmem:[%s1 + $0x250] sm:$0xf]
      %v370 = vld [vmem:[%s1 + $0x254] sm:$0xf]
      %v371 = vld [vmem:[%s1 + $0x258] sm:$0xf]
      %v372 = vld [vmem:[%s1 + $0x25c] sm:$0xf]
      %v373 = vld [vmem:[%s1 + $0x260] sm:$0xf]
      %v374 = vld [vmem:[%s1 + $0x264] sm:$0xf]
      %v375 = vld [vmem:[%s1 + $0x268] sm:$0xf]
      %v376 = vld [vmem:[%s1 + $0x26c] sm:$0xf]
      %v377 = vld [vmem:[%s1 + $0x270] sm:$0xf]
      %v378 = vld [vmem:[%s1 + $0x274] sm:$0xf]
      %v379 = vld [vmem:[%s1 + $0x278] sm:$0xf]
      %v380 = vld [vmem:[%s1 + $0x27c] sm:$0xf]
      %v381 = vld [vmem:[%s1 + $0x280] sm:$0xf]
      %v382 = vld [vmem:[%s1 + $0x284] sm:$0xf]
      %v383 = vld [vmem:[%s1 + $0x288] sm:$0xf]
      %v384 = vld [vmem:[%s1 + $0x28c] sm:$0xf]
      %v385 = vld [vmem:[%s1 + $0x290] sm:$0xf]
      %v386 = vld [vmem:[%s1 + $0x294] sm:$0xf]
      %v387 = vld [vmem:[%s1 + $0x298] sm:$0xf]
      %v388 = vld [vmem:[%s1 + $0x29c] sm:$0xf]
      %v389 = vld [vmem:[%s1 + $0x2a0] sm:$0xf]
      %v390 = vld [vmem:[%s1 + $0x2a4] sm:$0xf]
      %v391 = vld [vmem:[%s1 + $0x2a8] sm:$0xf]
      %v392 = vld [vmem:[%s1 + $0x2ac] sm:$0xf]
      %v393 = vld [vmem:[%s1 + $0x2b0] sm:$0xf]
      %v394 = vld [vmem:[%s1 + $0x2b4] sm:$0xf]
      %v395 = vld [vmem:[%s1 + $0x2b8] sm:$0xf]
      %v396 = vld [vmem:[%s1 + $0x2bc] sm:$0xf]
      %v397 = vld [vmem:[%s1 + $0x2c0] sm:$0xf]
      %v398 = vld [vmem:[%s1 + $0x2c4] sm:$0xf]
      %v399 = vld [vmem:[%s1 + $0x2c8] sm:$0xf]
      %v400 = vld [vmem:[%s1 + $0x2cc] sm:$0xf]
      %v401 = vld [vmem:[%s1 + $0x2d0] sm:$0xf]
      %v402 = vld [vmem:[%s1 + $0x2d4] sm:$0xf]
      %v403 = vld [vmem:[%s1 + $0x2d8] sm:$0xf]
      %v404 = vld [vmem:[%s1 + $0x2dc] sm:$0xf]
      %v405 = vld [vmem:[%s1 + $0x2e0] sm:$0xf]
      %v406 = vld [vmem:[%s1 + $0x2e4] sm:$0xf]
      %v407 = vld [vmem:[%s1 + $0x2e8] sm:$0xf]
      %v408 = vld [vmem:[%s1 + $0x2ec] sm:$0xf]
      %v409 = vld [vmem:[%s1 + $0x2f0] sm:$0xf]
      %v410 = vld [vmem:[%s1 + $0x2f4] sm:$0xf]
      %v411 = vld [vmem:[%s1 + $0x2f8] sm:$0xf]
      %v412 = vld [vmem:[%s1 + $0x2fc] sm:$0xf]
      %v413 = vld [vmem:[%s1 + $0x300] sm:$0xf]
      %v414 = vld [vmem:[%s1 + $0x304] sm:$0xf]
      %v415 = vld [vmem:[%s1 + $0x308] sm:$0xf]
      %v416 = vld [vmem:[%s1 + $0x30c] sm:$0xf]
      %v417 = vld [vmem:[%s1 + $0x310] sm:$0xf]
      %v418 = vld [vmem:[%s1 + $0x314] sm:$0xf]
      %v419 = vld [vmem:[%s1 + $0x318] sm:$0xf]
      %v420 = vld [vmem:[%s1 + $0x31c] sm:$0xf]
      %v421 = vld [vmem:[%s1 + $0x320] sm:$0xf]
      %v422 = vld [vmem:[%s1 + $0x324] sm:$0xf]
      %v423 = vld [vmem:[%s1 + $0x328] sm:$0xf]
      %v424 = vld [vmem:[%s1 + $0x32c] sm:$0xf]
      %v425 = vld [vmem:[%s1 + $0x330] sm:$0xf]
      %v426 = vld [vmem:[%s1 + $0x334] sm:$0xf]
      %v427 = vld [vmem:[%s1 + $0x338] sm:$0xf]
      %v428 = vld [vmem:[%s1 + $0x33c] sm:$0xf]
      %v429 = vld [vmem:[%s1 + $0x340] sm:$0xf]
      %v430 = vld [vmem:[%s1 + $0x344] sm:$0xf]
      %v431 = vld [vmem:[%s1 + $0x348] sm:$0xf]
      %v432 = vld [vmem:[%s1 + $0x34c] sm:$0xf]
      %v433 = vld [vmem:[%s1 + $0x350] sm:$0xf]
      %v434 = vld [vmem:[%s1 + $0x354] sm:$0xf]
      %v435 = vld [vmem:[%s1 + $0x358] sm:$0xf]
      %v436 = vld [vmem:[%s1 + $0x35c] sm:$0xf]
      %v437 = vld [vmem:[%s2] sm:$0x1]
      %v439 = vperm.slane %v437, 0
      %v448 = vunpack.c.l.b16 %v214
      %v449 = vunpack.c.h.b16 %v214
      %v450 = vunpack.c.l.b16 %v215
      %v451 = vunpack.c.h.b16 %v215
      %v452 = vunpack.c.l.b16 %v216
      %v453 = vunpack.c.h.b16 %v216
      %v454 = vunpack.c.l.b16 %v217
      %v455 = vunpack.c.h.b16 %v217
      %v456 = vunpack.c.l.b16 %v218
      %v457 = vunpack.c.h.b16 %v218
      %v458 = vunpack.c.l.b16 %v219
      %v459 = vunpack.c.h.b16 %v219
      %v460 = vunpack.c.l.b16 %v220
      %v461 = vunpack.c.h.b16 %v220
      %v462 = vpack.c.b16 %v448, %v448
      %v463 = vpack.c.b16 %v449, %v449
      %v464 = vpack.c.b16 %v450, %v450
      %v465 = vpack.c.b16 %v451, %v451
      %v466 = vpack.c.b16 %v452, %v452
      %v467 = vpack.c.b16 %v453, %v453
      %v468 = vpack.c.b16 %v454, %v454
      %v469 = vpack.c.b16 %v455, %v455
      %v470 = vpack.c.b16 %v456, %v456
      %v471 = vpack.c.b16 %v457, %v457
      %v472 = vpack.c.b16 %v458, %v458
      %v473 = vpack.c.b16 %v459, %v459
      %v474 = vpack.c.b16 %v460, %v460
      %v475 = vpack.c.b16 %v461, %v461
      %v705 = vunpack.c.l.b16 %v221
      %v706 = vunpack.c.l.b16 %v222
      %v707 = vunpack.c.l.b16 %v223
      %v708 = vunpack.c.l.b16 %v224
      %v709 = vunpack.c.l.b16 %v225
      %v710 = vunpack.c.l.b16 %v226
      %v711 = vunpack.c.l.b16 %v227
      %v712 = vunpack.c.l.b16 %v228
      %v713 = vunpack.c.l.b16 %v229
      %v714 = vunpack.c.l.b16 %v230
      %v715 = vunpack.c.l.b16 %v231
      %v716 = vunpack.c.l.b16 %v232
      %v717 = vunpack.c.l.b16 %v233
      %v718 = vunpack.c.l.b16 %v234
      %v719 = vunpack.c.l.b16 %v235
      %v720 = vunpack.c.l.b16 %v236
      %v721 = vunpack.c.l.b16 %v237
      %v722 = vunpack.c.l.b16 %v238
      %v723 = vunpack.c.l.b16 %v239
      %v724 = vunpack.c.l.b16 %v240
      %v725 = vunpack.c.l.b16 %v241
      %v726 = vunpack.c.l.b16 %v242
      %v727 = vunpack.c.l.b16 %v243
      %v728 = vunpack.c.l.b16 %v244
      %v729 = vunpack.c.l.b16 %v245
      %v730 = vunpack.c.l.b16 %v246
      %v731 = vunpack.c.l.b16 %v247
      %v732 = vunpack.c.l.b16 %v248
      %v733 = vunpack.c.l.b16 %v249
      %v734 = vunpack.c.l.b16 %v250
      %v735 = vunpack.c.l.b16 %v251
      %v736 = vunpack.c.l.b16 %v252
      %v737 = vunpack.c.l.b16 %v253
      %v738 = vunpack.c.l.b16 %v254
      %v739 = vunpack.c.l.b16 %v255
      %v740 = vunpack.c.l.b16 %v256
      %v741 = vunpack.c.l.b16 %v257
      %v742 = vunpack.c.l.b16 %v258
      %v743 = vunpack.c.l.b16 %v259
      %v744 = vunpack.c.l.b16 %v260
      %v745 = vunpack.c.l.b16 %v261
      %v746 = vunpack.c.l.b16 %v262
      %v747 = vunpack.c.l.b16 %v263
      %v748 = vunpack.c.l.b16 %v264
      %v749 = vunpack.c.l.b16 %v265
      %v750 = vunpack.c.l.b16 %v266
      %v751 = vunpack.c.l.b16 %v267
      %v752 = vunpack.c.l.b16 %v268
      %v753 = vunpack.c.l.b16 %v269
      %v754 = vunpack.c.l.b16 %v270
      %v755 = vunpack.c.l.b16 %v271
      %v756 = vunpack.c.l.b16 %v272
      %v757 = vunpack.c.l.b16 %v273
      %v758 = vunpack.c.l.b16 %v274
      %v759 = vunpack.c.l.b16 %v275
      %v760 = vunpack.c.l.b16 %v276
      %v761 = vunpack.c.l.b16 %v277
      %v762 = vunpack.c.l.b16 %v278
      %v763 = vunpack.c.l.b16 %v279
      %v764 = vunpack.c.l.b16 %v280
      %v765 = vunpack.c.l.b16 %v281
      %v766 = vunpack.c.l.b16 %v282
      %v767 = vunpack.c.l.b16 %v283
      %v768 = vunpack.c.l.b16 %v284
      %v769 = vunpack.c.l.b16 %v285
      %v770 = vunpack.c.l.b16 %v286
      %v771 = vunpack.c.l.b16 %v287
      %v772 = vunpack.c.l.b16 %v288
      %v773 = vunpack.c.l.b16 %v289
      %v774 = vunpack.c.l.b16 %v290
      %v775 = vunpack.c.l.b16 %v291
      %v776 = vunpack.c.l.b16 %v292
      %v777 = vunpack.c.l.b16 %v293
      %v778 = vunpack.c.l.b16 %v294
      %v779 = vunpack.c.l.b16 %v295
      %v780 = vunpack.c.l.b16 %v296
      %v781 = vunpack.c.l.b16 %v297
      %v782 = vunpack.c.l.b16 %v298
      %v783 = vunpack.c.l.b16 %v299
      %v784 = vunpack.c.l.b16 %v300
      %v785 = vunpack.c.l.b16 %v301
      %v786 = vunpack.c.l.b16 %v302
      %v787 = vunpack.c.l.b16 %v303
      %v788 = vunpack.c.l.b16 %v304
      %v789 = vunpack.c.l.b16 %v305
      %v790 = vunpack.c.l.b16 %v306
      %v791 = vunpack.c.l.b16 %v307
      %v792 = vunpack.c.l.b16 %v308
      %v793 = vunpack.c.l.b16 %v309
      %v794 = vunpack.c.l.b16 %v310
      %v795 = vunpack.c.l.b16 %v311
      %v796 = vunpack.c.l.b16 %v312
      %v797 = vunpack.c.l.b16 %v313
      %v798 = vunpack.c.l.b16 %v314
      %v799 = vunpack.c.l.b16 %v315
      %v800 = vunpack.c.l.b16 %v316
      %v801 = vunpack.c.l.b16 %v317
      %v802 = vunpack.c.l.b16 %v318
      %v803 = vunpack.c.l.b16 %v319
      %v804 = vunpack.c.l.b16 %v320
      %v805 = vunpack.c.l.b16 %v321
      %v806 = vunpack.c.l.b16 %v322
      %v807 = vunpack.c.l.b16 %v323
      %v808 = vunpack.c.l.b16 %v324
      %v809 = vunpack.c.l.b16 %v325
      %v810 = vunpack.c.l.b16 %v326
      %v811 = vunpack.c.l.b16 %v327
      %v812 = vunpack.c.l.b16 %v328
      %v813 = vunpack.c.l.b16 %v329
      %v814 = vunpack.c.l.b16 %v330
      %v815 = vunpack.c.l.b16 %v331
      %v816 = vunpack.c.l.b16 %v332
      %v817 = vunpack.c.l.b16 %v333
      %v818 = vunpack.c.l.b16 %v334
      %v819 = vunpack.c.l.b16 %v335
      %v820 = vunpack.c.l.b16 %v336
      %v821 = vunpack.c.l.b16 %v337
      %v822 = vunpack.c.l.b16 %v338
      %v823 = vunpack.c.l.b16 %v339
      %v824 = vunpack.c.l.b16 %v340
      %v825 = vunpack.c.l.b16 %v341
      %v826 = vunpack.c.l.b16 %v342
      %v827 = vunpack.c.l.b16 %v343
      %v828 = vunpack.c.l.b16 %v344
      %v829 = vunpack.c.l.b16 %v345
      %v830 = vunpack.c.l.b16 %v346
      %v831 = vunpack.c.l.b16 %v347
      %v832 = vunpack.c.l.b16 %v348
      %v833 = vunpack.c.l.b16 %v349
      %v834 = vunpack.c.l.b16 %v350
      %v835 = vunpack.c.l.b16 %v351
      %v836 = vunpack.c.l.b16 %v352
      %v837 = vunpack.c.l.b16 %v353
      %v838 = vunpack.c.l.b16 %v354
      %v839 = vunpack.c.l.b16 %v355
      %v840 = vunpack.c.l.b16 %v356
      %v841 = vunpack.c.l.b16 %v357
      %v842 = vunpack.c.l.b16 %v358
      %v843 = vunpack.c.l.b16 %v359
      %v844 = vunpack.c.l.b16 %v360
      %v845 = vunpack.c.l.b16 %v361
      %v846 = vunpack.c.l.b16 %v362
      %v847 = vunpack.c.l.b16 %v363
      %v848 = vunpack.c.l.b16 %v364
      %v849 = vunpack.c.l.b16 %v365
      %v850 = vunpack.c.l.b16 %v366
      %v851 = vunpack.c.l.b16 %v367
      %v852 = vunpack.c.l.b16 %v368
      %v853 = vunpack.c.l.b16 %v369
      %v854 = vunpack.c.l.b16 %v370
      %v855 = vunpack.c.l.b16 %v371
      %v856 = vunpack.c.l.b16 %v372
      %v857 = vunpack.c.l.b16 %v373
      %v858 = vunpack.c.l.b16 %v374
      %v859 = vunpack.c.l.b16 %v375
      %v860 = vunpack.c.l.b16 %v376
      %v861 = vunpack.c.l.b16 %v377
      %v862 = vunpack.c.l.b16 %v378
      %v863 = vunpack.c.l.b16 %v379
      %v864 = vunpack.c.l.b16 %v380
      %v865 = vunpack.c.l.b16 %v381
      %v866 = vunpack.c.l.b16 %v382
      %v867 = vunpack.c.l.b16 %v383
      %v868 = vunpack.c.l.b16 %v384
      %v869 = vunpack.c.l.b16 %v385
      %v870 = vunpack.c.l.b16 %v386
      %v871 = vunpack.c.l.b16 %v387
      %v872 = vunpack.c.l.b16 %v388
      %v873 = vunpack.c.l.b16 %v389
      %v874 = vunpack.c.l.b16 %v390
      %v875 = vunpack.c.l.b16 %v391
      %v876 = vunpack.c.l.b16 %v392
      %v877 = vunpack.c.l.b16 %v393
      %v878 = vunpack.c.l.b16 %v394
      %v879 = vunpack.c.l.b16 %v395
      %v880 = vunpack.c.l.b16 %v396
      %v881 = vunpack.c.l.b16 %v397
      %v882 = vunpack.c.l.b16 %v398
      %v883 = vunpack.c.l.b16 %v399
      %v884 = vunpack.c.l.b16 %v400
      %v885 = vunpack.c.l.b16 %v401
      %v886 = vunpack.c.l.b16 %v402
      %v887 = vunpack.c.l.b16 %v403
      %v888 = vunpack.c.l.b16 %v404
      %v889 = vunpack.c.l.b16 %v405
      %v890 = vunpack.c.l.b16 %v406
      %v891 = vunpack.c.l.b16 %v407
      %v892 = vunpack.c.l.b16 %v408
      %v893 = vunpack.c.l.b16 %v409
      %v894 = vunpack.c.l.b16 %v410
      %v895 = vunpack.c.l.b16 %v411
      %v896 = vunpack.c.l.b16 %v412
      %v897 = vunpack.c.l.b16 %v413
      %v898 = vunpack.c.l.b16 %v414
      %v899 = vunpack.c.l.b16 %v415
      %v900 = vunpack.c.l.b16 %v416
      %v901 = vunpack.c.l.b16 %v417
      %v902 = vunpack.c.l.b16 %v418
      %v903 = vunpack.c.l.b16 %v419
      %v904 = vunpack.c.l.b16 %v420
      %v905 = vunpack.c.l.b16 %v421
      %v906 = vunpack.c.l.b16 %v422
      %v907 = vunpack.c.l.b16 %v423
      %v908 = vunpack.c.l.b16 %v424
      %v909 = vunpack.c.l.b16 %v425
      %v910 = vunpack.c.l.b16 %v426
      %v911 = vunpack.c.l.b16 %v427
      %v912 = vunpack.c.l.b16 %v428
      %v913 = vunpack.c.l.b16 %v429
      %v914 = vunpack.c.l.b16 %v430
      %v915 = vunpack.c.l.b16 %v431
      %v916 = vunpack.c.l.b16 %v432
      %v917 = vunpack.c.l.b16 %v433
      %v918 = vunpack.c.l.b16 %v434
      %v919 = vunpack.c.l.b16 %v435
      %v920 = vunpack.c.l.b16 %v436
      %v921 = vpack.c.b16 %v706, %v705
      %v922 = vpack.c.b16 %v708, %v707
      %v923 = vpack.c.b16 %v710, %v709
      %v924 = vpack.c.b16 %v712, %v711
      %v925 = vpack.c.b16 %v714, %v713
      %v926 = vpack.c.b16 %v716, %v715
      %v927 = vpack.c.b16 %v718, %v717
      %v928 = vpack.c.b16 %v720, %v719
      %v929 = vpack.c.b16 %v722, %v721
      %v930 = vpack.c.b16 %v724, %v723
      %v931 = vpack.c.b16 %v726, %v725
      %v932 = vpack.c.b16 %v728, %v727
      %v933 = vpack.c.b16 %v730, %v729
      %v934 = vpack.c.b16 %v732, %v731
      %v935 = vpack.c.b16 %v734, %v733
      %v936 = vpack.c.b16 %v736, %v735
      %v937 = vpack.c.b16 %v738, %v737
      %v938 = vpack.c.b16 %v740, %v739
      %v939 = vpack.c.b16 %v742, %v741
      %v940 = vpack.c.b16 %v744, %v743
      %v941 = vpack.c.b16 %v746, %v745
      %v942 = vpack.c.b16 %v748, %v747
      %v943 = vpack.c.b16 %v750, %v749
      %v944 = vpack.c.b16 %v752, %v751
      %v945 = vpack.c.b16 %v754, %v753
      %v946 = vpack.c.b16 %v756, %v755
      %v947 = vpack.c.b16 %v758, %v757
      %v948 = vpack.c.b16 %v760, %v759
      %v949 = vpack.c.b16 %v762, %v761
      %v950 = vpack.c.b16 %v764, %v763
      %v951 = vpack.c.b16 %v766, %v765
      %v952 = vpack.c.b16 %v768, %v767
      %v953 = vpack.c.b16 %v770, %v769
      %v954 = vpack.c.b16 %v772, %v771
      %v955 = vpack.c.b16 %v774, %v773
      %v956 = vpack.c.b16 %v776, %v775
      %v957 = vpack.c.b16 %v778, %v777
      %v958 = vpack.c.b16 %v780, %v779
      %v959 = vpack.c.b16 %v782, %v781
      %v960 = vpack.c.b16 %v784, %v783
      %v961 = vpack.c.b16 %v786, %v785
      %v962 = vpack.c.b16 %v788, %v787
      %v963 = vpack.c.b16 %v790, %v789
      %v964 = vpack.c.b16 %v792, %v791
      %v965 = vpack.c.b16 %v794, %v793
      %v966 = vpack.c.b16 %v796, %v795
      %v967 = vpack.c.b16 %v798, %v797
      %v968 = vpack.c.b16 %v800, %v799
      %v969 = vpack.c.b16 %v802, %v801
      %v970 = vpack.c.b16 %v804, %v803
      %v971 = vpack.c.b16 %v806, %v805
      %v972 = vpack.c.b16 %v808, %v807
      %v973 = vpack.c.b16 %v810, %v809
      %v974 = vpack.c.b16 %v812, %v811
      %v975 = vpack.c.b16 %v814, %v813
      %v976 = vpack.c.b16 %v816, %v815
      %v977 = vpack.c.b16 %v818, %v817
      %v978 = vpack.c.b16 %v820, %v819
      %v979 = vpack.c.b16 %v822, %v821
      %v980 = vpack.c.b16 %v824, %v823
      %v981 = vpack.c.b16 %v826, %v825
      %v982 = vpack.c.b16 %v828, %v827
      %v983 = vpack.c.b16 %v830, %v829
      %v984 = vpack.c.b16 %v832, %v831
      %v985 = vpack.c.b16 %v834, %v833
      %v986 = vpack.c.b16 %v836, %v835
      %v987 = vpack.c.b16 %v838, %v837
      %v988 = vpack.c.b16 %v840, %v839
      %v989 = vpack.c.b16 %v842, %v841
      %v990 = vpack.c.b16 %v844, %v843
      %v991 = vpack.c.b16 %v846, %v845
      %v992 = vpack.c.b16 %v848, %v847
      %v993 = vpack.c.b16 %v850, %v849
      %v994 = vpack.c.b16 %v852, %v851
      %v995 = vpack.c.b16 %v854, %v853
      %v996 = vpack.c.b16 %v856, %v855
      %v997 = vpack.c.b16 %v858, %v857
      %v998 = vpack.c.b16 %v860, %v859
      %v999 = vpack.c.b16 %v862, %v861
      %v1000 = vpack.c.b16 %v864, %v863
      %v1001 = vpack.c.b16 %v866, %v865
      %v1002 = vpack.c.b16 %v868, %v867
      %v1003 = vpack.c.b16 %v870, %v869
      %v1004 = vpack.c.b16 %v872, %v871
      %v1005 = vpack.c.b16 %v874, %v873
      %v1006 = vpack.c.b16 %v876, %v875
      %v1007 = vpack.c.b16 %v878, %v877
      %v1008 = vpack.c.b16 %v880, %v879
      %v1009 = vpack.c.b16 %v882, %v881
      %v1010 = vpack.c.b16 %v884, %v883
      %v1011 = vpack.c.b16 %v886, %v885
      %v1012 = vpack.c.b16 %v888, %v887
      %v1013 = vpack.c.b16 %v890, %v889
      %v1014 = vpack.c.b16 %v892, %v891
      %v1015 = vpack.c.b16 %v894, %v893
      %v1016 = vpack.c.b16 %v896, %v895
      %v1017 = vpack.c.b16 %v898, %v897
      %v1018 = vpack.c.b16 %v900, %v899
      %v1019 = vpack.c.b16 %v902, %v901
      %v1020 = vpack.c.b16 %v904, %v903
      %v1021 = vpack.c.b16 %v906, %v905
      %v1022 = vpack.c.b16 %v908, %v907
      %v1023 = vpack.c.b16 %v910, %v909
      %v1024 = vpack.c.b16 %v912, %v911
      %v1025 = vpack.c.b16 %v914, %v913
      %v1026 = vpack.c.b16 %v916, %v915
      %v1027 = vpack.c.b16 %v918, %v917
      %v1028 = vpack.c.b16 %v920, %v919
      %vm1137 = vcmask 523264
      %v1139 = vsel %vm1137, %v475, 0
      %1141 = vmatpush.bf16.msra.mxu0 %v928
      %1142 = vmatpush.bf16.msra.mxu0 %v927
      %1143 = vmatpush.bf16.msra.mxu0 %v926
      %1144 = vmatpush.bf16.msra.mxu0 %v925
      %1145 = vmatpush.bf16.msra.mxu0 %v924
      %1146 = vmatpush.bf16.msra.mxu0 %v923
      %1147 = vmatpush.bf16.msra.mxu0 %v922
      %1148 = vmatpush.bf16.msra.mxu0 %v921
      %1149 = vmatmul.bf16.gmra.mxu0 %v462
      %v1150 = vpop.f32.mrf.mxu0
      %v1151 = vadd.f32 %v439, %v1150
      %v1152 = vpop.f32.mrf.mxu0
      %1153 = vdwg.mxu0
      %1154 = vmatpush.bf16.msra.mxu0 %v936
      %1155 = vmatpush.bf16.msra.mxu0 %v935
      %1156 = vmatpush.bf16.msra.mxu0 %v934
      %1157 = vmatpush.bf16.msra.mxu0 %v933
      %1158 = vmatpush.bf16.msra.mxu0 %v932
      %1159 = vmatpush.bf16.msra.mxu0 %v931
      %1160 = vmatpush.bf16.msra.mxu0 %v930
      %1161 = vmatpush.bf16.msra.mxu0 %v929
      %1162 = vmatmul.bf16.gmra.mxu0 %v463
      %v1163 = vpop.f32.mrf.mxu0
      %v1164 = vadd.f32 %v1151, %v1163
      %v1165 = vpop.f32.mrf.mxu0
      %1166 = vdwg.mxu0
      %1167 = vmatpush.bf16.msra.mxu0 %v944
      %1168 = vmatpush.bf16.msra.mxu0 %v943
      %1169 = vmatpush.bf16.msra.mxu0 %v942
      %1170 = vmatpush.bf16.msra.mxu0 %v941
      %1171 = vmatpush.bf16.msra.mxu0 %v940
      %1172 = vmatpush.bf16.msra.mxu0 %v939
      %1173 = vmatpush.bf16.msra.mxu0 %v938
      %1174 = vmatpush.bf16.msra.mxu0 %v937
      %1175 = vmatmul.bf16.gmra.mxu0 %v464
      %v1176 = vpop.f32.mrf.mxu0
      %v1177 = vadd.f32 %v1164, %v1176
      %v1178 = vpop.f32.mrf.mxu0
      %1179 = vdwg.mxu0
      %1180 = vmatpush.bf16.msra.mxu0 %v952
      %1181 = vmatpush.bf16.msra.mxu0 %v951
      %1182 = vmatpush.bf16.msra.mxu0 %v950
      %1183 = vmatpush.bf16.msra.mxu0 %v949
      %1184 = vmatpush.bf16.msra.mxu0 %v948
      %1185 = vmatpush.bf16.msra.mxu0 %v947
      %1186 = vmatpush.bf16.msra.mxu0 %v946
      %1187 = vmatpush.bf16.msra.mxu0 %v945
      %1188 = vmatmul.bf16.gmra.mxu0 %v465
      %v1189 = vpop.f32.mrf.mxu0
      %v1190 = vadd.f32 %v1177, %v1189
      %v1191 = vpop.f32.mrf.mxu0
      %1192 = vdwg.mxu0
      %1193 = vmatpush.bf16.msra.mxu0 %v960
      %1194 = vmatpush.bf16.msra.mxu0 %v959
      %1195 = vmatpush.bf16.msra.mxu0 %v958
      %1196 = vmatpush.bf16.msra.mxu0 %v957
      %1197 = vmatpush.bf16.msra.mxu0 %v956
      %1198 = vmatpush.bf16.msra.mxu0 %v955
      %1199 = vmatpush.bf16.msra.mxu0 %v954
      %1200 = vmatpush.bf16.msra.mxu0 %v953
      %1201 = vmatmul.bf16.gmra.mxu0 %v466
      %v1202 = vpop.f32.mrf.mxu0
      %v1203 = vadd.f32 %v1190, %v1202
      %v1204 = vpop.f32.mrf.mxu0
      %1205 = vdwg.mxu0
      %1206 = vmatpush.bf16.msra.mxu0 %v968
      %1207 = vmatpush.bf16.msra.mxu0 %v967
      %1208 = vmatpush.bf16.msra.mxu0 %v966
      %1209 = vmatpush.bf16.msra.mxu0 %v965
      %1210 = vmatpush.bf16.msra.mxu0 %v964
      %1211 = vmatpush.bf16.msra.mxu0 %v963
      %1212 = vmatpush.bf16.msra.mxu0 %v962
      %1213 = vmatpush.bf16.msra.mxu0 %v961
      %1214 = vmatmul.bf16.gmra.mxu0 %v467
      %v1215 = vpop.f32.mrf.mxu0
      %v1216 = vadd.f32 %v1203, %v1215
      %v1217 = vpop.f32.mrf.mxu0
      %1218 = vdwg.mxu0
      %1219 = vmatpush.bf16.msra.mxu0 %v976
      %1220 = vmatpush.bf16.msra.mxu0 %v975
      %1221 = vmatpush.bf16.msra.mxu0 %v974
      %1222 = vmatpush.bf16.msra.mxu0 %v973
      %1223 = vmatpush.bf16.msra.mxu0 %v972
      %1224 = vmatpush.bf16.msra.mxu0 %v971
      %1225 = vmatpush.bf16.msra.mxu0 %v970
      %1226 = vmatpush.bf16.msra.mxu0 %v969
      %1227 = vmatmul.bf16.gmra.mxu0 %v468
      %v1228 = vpop.f32.mrf.mxu0
      %v1229 = vadd.f32 %v1216, %v1228
      %v1230 = vpop.f32.mrf.mxu0
      %1231 = vdwg.mxu0
      %1232 = vmatpush.bf16.msra.mxu0 %v984
      %1233 = vmatpush.bf16.msra.mxu0 %v983
      %1234 = vmatpush.bf16.msra.mxu0 %v982
      %1235 = vmatpush.bf16.msra.mxu0 %v981
      %1236 = vmatpush.bf16.msra.mxu0 %v980
      %1237 = vmatpush.bf16.msra.mxu0 %v979
      %1238 = vmatpush.bf16.msra.mxu0 %v978
      %1239 = vmatpush.bf16.msra.mxu0 %v977
      %1240 = vmatmul.bf16.gmra.mxu0 %v469
      %v1241 = vpop.f32.mrf.mxu0
      %v1242 = vadd.f32 %v1229, %v1241
      %v1243 = vpop.f32.mrf.mxu0
      %1244 = vdwg.mxu0
      %1245 = vmatpush.bf16.msra.mxu0 %v992
      %1246 = vmatpush.bf16.msra.mxu0 %v991
      %1247 = vmatpush.bf16.msra.mxu0 %v990
      %1248 = vmatpush.bf16.msra.mxu0 %v989
      %1249 = vmatpush.bf16.msra.mxu0 %v988
      %1250 = vmatpush.bf16.msra.mxu0 %v987
      %1251 = vmatpush.bf16.msra.mxu0 %v986
      %1252 = vmatpush.bf16.msra.mxu0 %v985
      %1253 = vmatmul.bf16.gmra.mxu0 %v470
      %v1254 = vpop.f32.mrf.mxu0
      %v1255 = vadd.f32 %v1242, %v1254
      %v1256 = vpop.f32.mrf.mxu0
      %1257 = vdwg.mxu0
      %1258 = vmatpush.bf16.msra.mxu0 %v1000
      %1259 = vmatpush.bf16.msra.mxu0 %v999
      %1260 = vmatpush.bf16.msra.mxu0 %v998
      %1261 = vmatpush.bf16.msra.mxu0 %v997
      %1262 = vmatpush.bf16.msra.mxu0 %v996
      %1263 = vmatpush.bf16.msra.mxu0 %v995
      %1264 = vmatpush.bf16.msra.mxu0 %v994
      %1265 = vmatpush.bf16.msra.mxu0 %v993
      %1266 = vmatmul.bf16.gmra.mxu0 %v471
      %v1267 = vpop.f32.mrf.mxu0
      %v1268 = vadd.f32 %v1255, %v1267
      %v1269 = vpop.f32.mrf.mxu0
      %1270 = vdwg.mxu0
      %1271 = vmatpush.bf16.msra.mxu0 %v1008
      %1272 = vmatpush.bf16.msra.mxu0 %v1007
      %1273 = vmatpush.bf16.msra.mxu0 %v1006
      %1274 = vmatpush.bf16.msra.mxu0 %v1005
      %1275 = vmatpush.bf16.msra.mxu0 %v1004
      %1276 = vmatpush.bf16.msra.mxu0 %v1003
      %1277 = vmatpush.bf16.msra.mxu0 %v1002
      %1278 = vmatpush.bf16.msra.mxu0 %v1001
      %1279 = vmatmul.bf16.gmra.mxu0 %v472
      %v1280 = vpop.f32.mrf.mxu0
      %v1281 = vadd.f32 %v1268, %v1280
      %v1282 = vpop.f32.mrf.mxu0
      %1283 = vdwg.mxu0
      %1284 = vmatpush.bf16.msra.mxu0 %v1016
      %1285 = vmatpush.bf16.msra.mxu0 %v1015
      %1286 = vmatpush.bf16.msra.mxu0 %v1014
      %1287 = vmatpush.bf16.msra.mxu0 %v1013
      %1288 = vmatpush.bf16.msra.mxu0 %v1012
      %1289 = vmatpush.bf16.msra.mxu0 %v1011
      %1290 = vmatpush.bf16.msra.mxu0 %v1010
      %1291 = vmatpush.bf16.msra.mxu0 %v1009
      %1292 = vmatmul.bf16.gmra.mxu0 %v473
      %v1293 = vpop.f32.mrf.mxu0
      %v1294 = vadd.f32 %v1281, %v1293
      %v1295 = vpop.f32.mrf.mxu0
      %1296 = vdwg.mxu0
      %1297 = vmatpush.bf16.msra.mxu0 %v1024
      %1298 = vmatpush.bf16.msra.mxu0 %v1023
      %1299 = vmatpush.bf16.msra.mxu0 %v1022
      %1300 = vmatpush.bf16.msra.mxu0 %v1021
      %1301 = vmatpush.bf16.msra.mxu0 %v1020
      %1302 = vmatpush.bf16.msra.mxu0 %v1019
      %1303 = vmatpush.bf16.msra.mxu0 %v1018
      %1304 = vmatpush.bf16.msra.mxu0 %v1017
      %1305 = vmatmul.bf16.gmra.mxu0 %v474
      %v1306 = vpop.f32.mrf.mxu0
      %v1307 = vadd.f32 %v1294, %v1306
      %v1308 = vpop.f32.mrf.mxu0
      %1309 = vdwg.mxu0
      %1310 = vmatpush.bf16.msra.mxu0 0
      %1311 = vmatpush.bf16.msra.mxu0 0
      %1312 = vmatpush.bf16.msra.mxu0 0
      %1313 = vmatpush.bf16.msra.mxu0 0
      %1314 = vmatpush.bf16.msra.mxu0 %v1028
      %1315 = vmatpush.bf16.msra.mxu0 %v1027
      %1316 = vmatpush.bf16.msra.mxu0 %v1026
      %1317 = vmatpush.bf16.msra.mxu0 %v1025
      %1318 = vmatmul.bf16.gmra.mxu0 %v1139
      %v1319 = vpop.f32.mrf.mxu0
      %v1320 = vadd.f32 %v1307, %v1319
      %v1321 = vpop.f32.mrf.mxu0
      %1322 = vdwg.mxu0
      %v1323 = vld [vmem:[%s208] sm:$0xf]
      %v1324 = vunpack.c.l.bf16 %v1323
      %v1325 = vadd.f32 %v1320, %v1324
      %v1326 = vmax.f32 %v1325, 0.0
      %v1327 = vpack.c.bf16 %v1326, %v1326
      %vm1328 = vcmask 519168
      %1329 = vst.msk [vmem:[%s212] sm:$0xf] %vm1328, %v1327
      %p1330 = scmp.lt.s32.totalorder %s15, 1
      %s1331 = scalar_select %p1330, %s15, 1
      %s1332 = smul.addr %s1331, 4
      %s1333 = scalar_lea.vmem %s4, %s1332
      // Predicated region
      $region37: #{psm_gnn_forward.25} parent=35 // pred_check
        %p1334 = pneg %p127
      $region38: #{psm_gnn_forward.25} parent=35 // pred_check_branch
        %1336 = sbr.rel (%p1334) target = $region40
      $region39: #{psm_gnn_forward.25} parent=35 // pred_region
        _
      $region40: #{psm_gnn_forward.25} parent=35 // pred_fallthru
        _
    $region36: #{psm_gnn_forward.25} parent=5 // pred_fallthru
      _
    %p1337 = scmp.le.s32.totalorder 2, %s10
    // Predicated region
    $region41: #{psm_gnn_forward.25} parent=5 // pred_check
      %p1338 = pneg %p1337
    $region42: #{psm_gnn_forward.25} parent=5 // pred_check_branch
      %1340 = sbr.rel (%p1338) target = $region44
    $region43: #{psm_gnn_forward.25} parent=5 // pred_region
      %s1341 = ssub.s32 %s10, 2
      // Predicated region
      $region45: #{psm_gnn_forward.25} parent=43 // pred_check
        %p1342 = pneg %p133
      $region46: #{psm_gnn_forward.25} parent=43 // pred_check_branch
        %1344 = sbr.rel (%p1342) target = $region48
      $region47: #{psm_gnn_forward.25} parent=43 // pred_region
        %p1345 = scmp.lt.s32.totalorder %s16, 1
        %s1346 = scalar_select %p1345, %s16, 1
        %s1347 = smul.addr %s1346, 4
        %s1348 = scalar_lea.vmem %s4, %s1347
      $region48: #{psm_gnn_forward.25} parent=43 // pred_fallthru
        _
    $region44: #{psm_gnn_forward.25} parent=5 // pred_fallthru
      _
  $region6: #{psm_gnn_forward.25} parent=0 // loop_footer
    %s14 = sadd.s32 1, %s10
  $region7: #{psm_gnn_forward.25} parent=0 // loop_footer_branch
    %9 = sbr.rel target = $region3
  $region8: #{psm_gnn_forward.25} parent=0 // loop_exit
    _

// kernel: tile.39
$region0: #{tile.39}
  %s0 = inlined_call_operand.vmem [shape: f32[8,7], index: 0, kind: input, shape index: {}]
  %s1 = inlined_call_operand.vmem [shape: f32[1,56], index: 1, kind: output, shape index: {}]
  $region1: #{tile.39} parent=0
    #allocation0 [shape = 'u8[4096]{0}', space=vmem, size = 0x1000, scoped, tag = 'scoped mem for output reshape']
    %v2 = vld [vmem:[%s0] sm:$0x1]
    %vm3 = vcmask 56320
    %4 = vst.msk [vmem:[#allocation0] sm:$0x1] %vm3, %v2
    %s5 = scalar_lea.vmem %s0, 7
    %v6 = vld [vmem:[%s5] sm:$0x1]
    %7 = vrot.lane.b32.xlu0 %v6, 49
    %v8 = vpop.permute.xlu0 %7
    %vm9 = vcmask 458120
    %10 = vst.msk [vmem:[#allocation0] sm:$0x1] %vm9, %v8
    %s11 = scalar_lea.vmem %s0, 6
    %v12 = vld [vmem:[%s11] sm:$0x1]
    %13 = vrot.lane.b32.xlu0 %v12, 42
    %v14 = vpop.permute.xlu0 %13
    %vm15 = vcmask 400720
    %16 = vst.msk [vmem:[#allocation0] sm:$0x1] %vm15, %v14
    %s17 = scalar_lea.vmem %s0, 5
    %v18 = vld [vmem:[%s17] sm:$0x1]
    %19 = vrot.lane.b32.xlu0 %v18, 35
    %v20 = vpop.permute.xlu0 %19
    %vm21 = vcmask 343320
    %22 = vst.msk [vmem:[#allocation0] sm:$0x1] %vm21, %v20
    %s23 = scalar_lea.vmem %s0, 4
    %v24 = vld [vmem:[%s23] sm:$0x1]
    %25 = vrot.lane.b32.xlu0 %v24, 28
    %v26 = vpop.permute.xlu0 %25
    %vm27 = vcmask 285920
    %28 = vst.msk [vmem:[#allocation0] sm:$0x1] %vm27, %v26
    %s29 = scalar_lea.vmem %s0, 3
    %v30 = vld [vmem:[%s29] sm:$0x1]
    %31 = vrot.lane.b32.xlu0 %v30, 21
    %v32 = vpop.permute.xlu0 %31
    %vm33 = vcmask 228520
    %34 = vst.msk [vmem:[#allocation0] sm:$0x1] %vm33, %v32
    %s35 = scalar_lea.vmem %s0, 2
    %v36 = vld [vmem:[%s35] sm:$0x1]
    %37 = vrot.lane.b32.xlu0 %v36, 14
    %v38 = vpop.permute.xlu0 %37
    %vm39 = vcmask 171120
    %40 = vst.msk [vmem:[#allocation0] sm:$0x1] %vm39, %v38
    %s41 = scalar_lea.vmem %s0, 1
    %v42 = vld [vmem:[%s41] sm:$0x1]
    %43 = vrot.lane.b32.xlu0 %v42, 7
    %v44 = vpop.permute.xlu0 %43
    %vm45 = vcmask 113720
    %46 = vst.msk [vmem:[#allocation0] sm:$0x1] %vm45, %v44
    %s48 = ssub.s32 2, 1
    %v49 = vld [vmem:[#allocation0] sm:%s48]
    %s51 = ssub.s32 2, 1
    %52 = vst [vmem:[%s1] sm:%s51] %v49

// kernel: psm_gnn_forward.31
$region0: #{psm_gnn_forward.31}
  #allocation0 [shape = 'u32[]', space=smem, size = 0x4, offset = 0x4, fixed_abs, tag = 'smem constant byte address 0x4 - core index']
  #allocation1 [shape = 'u32[72,128]{1,0:T(1,128)}', space=vmem, size = 0x9000, scoped, tag = 'internal scratch']
  %s0 = inlined_call_operand.vmem [shape: bf16[128,32], index: 0, kind: input, shape index: {}]
  %s1 = inlined_call_operand.vmem [shape: bf16[32,56], index: 1, kind: input, shape index: {}]
  %s2 = inlined_call_operand.vmem [shape: f32[1,56], index: 2, kind: input, shape index: {}]
  %s3 = inlined_call_operand.vmem [shape: bf16[128,56], index: 3, kind: input, shape index: {}]
  %s4 = inlined_call_operand.vmem [shape: f32[128,56], index: 4, kind: output, shape index: {}]
  %s5 = sld [smem:[#allocation0]]
  $region49: #{psm_gnn_forward.31} parent=0
    _
  %s7 = ssub.s32 1, %s5
  %s8 = scalar_select 0, %s7, %s5
  loop: start=0, step=1, limit=4
  $region2: #{psm_gnn_forward.31} parent=0 // loop_pre_header
    _
  $region3: #{psm_gnn_forward.31} parent=0 // loop_header
    %s10 = sphi 0, %s14
    %p11 = scmp.ge.s32.totalorder %s10, 4
    %s20 = sphi 0, %s22
    %s23 = sphi 0, %s20
    %s24 = sphi 0, %s23
    %s40 = sphi 0, %s24
    %s44 = sphi 0, %s44
    %s46 = sphi 0, %s44
    %s47 = sphi 0, %s46
    %s61 = sphi 0, %s47
    %s65 = sphi 0, %s65
    %s67 = sphi 0, %s65
    %s68 = sphi 0, %s67
    %s82 = sphi 0, %s68
    %s88 = sphi 0, %s90
    %s91 = sphi 0, %s88
    %s92 = sphi 0, %s91
    %s108 = sphi 0, %s92
    %s114 = sphi 0, %s116
    %s117 = sphi 0, %s114
    %s118 = sphi 0, %s117
    %s134 = sphi 0, %s118
  $region4: #{psm_gnn_forward.31} parent=0 // loop_header_branch
    %13 = sbr.rel (%p11) target = $region8
  $region5: #{psm_gnn_forward.31} parent=0 // loop_body
    %s15 = ssub.s32 %s10, 1
    %s16 = ssub.s32 %s10, 2
    %s17 = sadd.s32 %s10, 1
    %s18 = ssub.s32 %s10, %s17
    %p19 = scmp.eq.s32.totalorder %s18, 0
    %s21 = sadd.s32 %s20, 1
    %s22 = scalar_select %p19, %s20, %s21
    %p25 = pneg %p19
    %p26 = scmp.eq.s32.totalorder %s10, 1
    %p27 = por %p25, %p26
    %p28 = scmp.ne.s32.totalorder %s20, %s23
    %p29 = scmp.eq.s32.totalorder %s10, 0
    %p30 = por %p28, %p29
    %p31 = scmp.ne.s32.totalorder %s20, %s23
    %p32 = scmp.eq.s32.totalorder %s15, 1
    %p33 = por %p31, %p32
    %p34 = scmp.ne.s32.totalorder %s23, %s24
    %p35 = scmp.eq.s32.totalorder %s15, 0
    %p36 = por %p34, %p35
    %p37 = scmp.ne.s32.totalorder %s23, %s24
    %p38 = scmp.eq.s32.totalorder %s16, 1
    %p39 = por %p37, %p38
    %p41 = scmp.ne.s32.totalorder %s24, %s40
    %p42 = scmp.eq.s32.totalorder %s16, 0
    %p43 = por %p41, %p42
    %s45 = sadd.s32 %s44, 1
    %p48 = scmp.eq.s32.totalorder %s10, 1
    %p49 = scmp.ne.s32.totalorder %s44, %s46
    %p50 = scmp.eq.s32.totalorder %s10, 0
    %p51 = por %p49, %p50
    %p52 = scmp.ne.s32.totalorder %s44, %s46
    %p53 = scmp.eq.s32.totalorder %s15, 1
    %p54 = por %p52, %p53
    %p55 = scmp.ne.s32.totalorder %s46, %s47
    %p56 = scmp.eq.s32.totalorder %s15, 0
    %p57 = por %p55, %p56
    %p58 = scmp.ne.s32.totalorder %s46, %s47
    %p59 = scmp.eq.s32.totalorder %s16, 1
    %p60 = por %p58, %p59
    %p62 = scmp.ne.s32.totalorder %s47, %s61
    %p63 = scmp.eq.s32.totalorder %s16, 0
    %p64 = por %p62, %p63
    %s66 = sadd.s32 %s65, 1
    %p69 = scmp.eq.s32.totalorder %s10, 1
    %p70 = scmp.ne.s32.totalorder %s65, %s67
    %p71 = scmp.eq.s32.totalorder %s10, 0
    %p72 = por %p70, %p71
    %p73 = scmp.ne.s32.totalorder %s65, %s67
    %p74 = scmp.eq.s32.totalorder %s15, 1
    %p75 = por %p73, %p74
    %p76 = scmp.ne.s32.totalorder %s67, %s68
    %p77 = scmp.eq.s32.totalorder %s15, 0
    %p78 = por %p76, %p77
    %p79 = scmp.ne.s32.totalorder %s67, %s68
    %p80 = scmp.eq.s32.totalorder %s16, 1
    %p81 = por %p79, %p80
    %p83 = scmp.ne.s32.totalorder %s68, %s82
    %p84 = scmp.eq.s32.totalorder %s16, 0
    %p85 = por %p83, %p84
    %s86 = ssub.s32 %s10, %s17
    %p87 = scmp.eq.s32.totalorder %s86, 0
    %s89 = sadd.s32 %s88, 1
    %s90 = scalar_select %p87, %s88, %s89
    %p93 = pneg %p87
    %p94 = scmp.eq.s32.totalorder %s10, 1
    %p95 = por %p93, %p94
    %p96 = scmp.ne.s32.totalorder %s88, %s91
    %p97 = scmp.eq.s32.totalorder %s10, 0
    %p98 = por %p96, %p97
    %p99 = scmp.ne.s32.totalorder %s88, %s91
    %p100 = scmp.eq.s32.totalorder %s15, 1
    %p101 = por %p99, %p100
    %p102 = scmp.ne.s32.totalorder %s91, %s92
    %p103 = scmp.eq.s32.totalorder %s15, 0
    %p104 = por %p102, %p103
    %p105 = scmp.ne.s32.totalorder %s91, %s92
    %p106 = scmp.eq.s32.totalorder %s16, 1
    %p107 = por %p105, %p106
    %p109 = scmp.ne.s32.totalorder %s92, %s108
    %p110 = scmp.eq.s32.totalorder %s16, 0
    %p111 = por %p109, %p110
    %s112 = ssub.s32 %s10, %s17
    %p113 = scmp.eq.s32.totalorder %s112, 0
    %s115 = sadd.s32 %s114, 1
    %s116 = scalar_select %p113, %s114, %s115
    %p119 = pneg %p113
    %p120 = scmp.eq.s32.totalorder %s10, 1
    %p121 = por %p119, %p120
    %p122 = scmp.ne.s32.totalorder %s114, %s117
    %p123 = scmp.eq.s32.totalorder %s10, 0
    %p124 = por %p122, %p123
    %p125 = scmp.ne.s32.totalorder %s114, %s117
    %p126 = scmp.eq.s32.totalorder %s15, 1
    %p127 = por %p125, %p126
    %p128 = scmp.ne.s32.totalorder %s117, %s118
    %p129 = scmp.eq.s32.totalorder %s15, 0
    %p130 = por %p128, %p129
    %p131 = scmp.ne.s32.totalorder %s117, %s118
    %p132 = scmp.eq.s32.totalorder %s16, 1
    %p133 = por %p131, %p132
    %p135 = scmp.ne.s32.totalorder %s118, %s134
    %p136 = scmp.eq.s32.totalorder %s16, 0
    %p137 = por %p135, %p136
    %p138 = scmp.le.s32.totalorder 1, %s10
    %p139 = scmp.lt.s32.totalorder %s10, 3
    %p140 = pnand %p138, %p139
    %p141 = pneg %p140
    // Predicated region
    $region9: #{psm_gnn_forward.31} parent=5 // pred_check
      _
    $region10: #{psm_gnn_forward.31} parent=5 // pred_check_branch
      %143 = sbr.rel (%p140) target = $region12
    $region11: #{psm_gnn_forward.31} parent=5 // pred_region
      %s144 = ssub.s32 %s10, 1
      // Predicated region
      $region13: #{psm_gnn_forward.31} parent=11 // pred_check
        %p145 = pneg %p57
      $region14: #{psm_gnn_forward.31} parent=11 // pred_check_branch
        %147 = sbr.rel (%p145) target = $region16
      $region15: #{psm_gnn_forward.31} parent=11 // pred_region
        _
      $region16: #{psm_gnn_forward.31} parent=11 // pred_fallthru
        _
      // Predicated region
      $region17: #{psm_gnn_forward.31} parent=11 // pred_check
        %p148 = pneg %p78
      $region18: #{psm_gnn_forward.31} parent=11 // pred_check_branch
        %150 = sbr.rel (%p148) target = $region20
      $region19: #{psm_gnn_forward.31} parent=11 // pred_region
        _
      $region20: #{psm_gnn_forward.31} parent=11 // pred_fallthru
        _
    $region12: #{psm_gnn_forward.31} parent=5 // pred_fallthru
      _
    %p151 = scmp.lt.s32.totalorder %s10, 2
    // Predicated region
    $region21: #{psm_gnn_forward.31} parent=5 // pred_check
      %p152 = pneg %p151
    $region22: #{psm_gnn_forward.31} parent=5 // pred_check_branch
      %154 = sbr.rel (%p152) target = $region24
    $region23: #{psm_gnn_forward.31} parent=5 // pred_region
      // Predicated region
      $region25: #{psm_gnn_forward.31} parent=23 // pred_check
        %p155 = pneg %p30
      $region26: #{psm_gnn_forward.31} parent=23 // pred_check_branch
        %157 = sbr.rel (%p155) target = $region28
      $region27: #{psm_gnn_forward.31} parent=23 // pred_region
        %s158 = smul.u32 8, %s10
        %p159 = scmp.lt.s32.totalorder %s158, 15
        %s160 = scalar_select %p159, %s158, 15
        %s161 = smul.addr %s160, 4
        %s162 = scalar_lea.vmem %s0, %s161
        %s163 = smul.u32 8, %s10
      $region28: #{psm_gnn_forward.31} parent=23 // pred_fallthru
        _
      // Predicated region
      $region29: #{psm_gnn_forward.31} parent=23 // pred_check
        %p164 = pneg %p98
      $region30: #{psm_gnn_forward.31} parent=23 // pred_check_branch
        %166 = sbr.rel (%p164) target = $region32
      $region31: #{psm_gnn_forward.31} parent=23 // pred_region
        %s167 = smul.u32 8, %s10
        %p168 = scmp.lt.s32.totalorder %s167, 15
        %s169 = scalar_select %p168, %s167, 15
        %s170 = smul.addr %s169, 4
        %s171 = scalar_lea.vmem %s3, %s170
        %s172 = smul.u32 8, %s10
      $region32: #{psm_gnn_forward.31} parent=23 // pred_fallthru
        _
    $region24: #{psm_gnn_forward.31} parent=5 // pred_fallthru
      _
    %p173 = scmp.le.s32.totalorder 1, %s10
    %p174 = scmp.lt.s32.totalorder %s10, 3
    %p175 = pnand %p173, %p174
    %p176 = pneg %p175
    // Predicated region
    $region33: #{psm_gnn_forward.31} parent=5 // pred_check
      _
    $region34: #{psm_gnn_forward.31} parent=5 // pred_check_branch
      %178 = sbr.rel (%p175) target = $region36
    $region35: #{psm_gnn_forward.31} parent=5 // pred_region
      %s179 = ssub.s32 %s10, 1
      %s180 = smul.u32 8, %s15
      %p181 = scmp.lt.s32.totalorder %s180, 15
      %s182 = scalar_select %p181, %s180, 15
      %s183 = smul.addr %s182, 4
      %s184 = scalar_lea.vmem %s0, %s183
      %p185 = pneg %p36
      %p186 = pneg %p33
      %p187 = pneg %p57
      %p188 = pneg %p54
      %p189 = pneg %p78
      %p190 = pneg %p75
      %s191 = smul.u32 8, %s15
      %p192 = scmp.lt.s32.totalorder %s191, 15
      %s193 = scalar_select %p192, %s191, 15
      %s194 = smul.addr %s193, 4
      %s195 = scalar_lea.vmem %s3, %s194
      %p196 = pneg %p104
      %p197 = pneg %p101
      %p198 = pneg %p130
      %p199 = pneg %p127
      %s200 = smul.u32 8, %s15
      %p201 = scmp.lt.s32.totalorder %s200, 15
      %s202 = scalar_select %p201, %s200, 15
      %s203 = smul.addr %s202, 8
      %s204 = scalar_lea.vmem %s4, %s203
      %s205 = smul.u32 8, %s15
      %p206 = scmp.lt.s32.totalorder %s205, 15
      %s207 = scalar_select %p206, %s205, 15
      %s208 = smul.addr %s207, 4
      %s209 = scalar_lea.vmem %s0, %s208
      %s210 = smul.u32 8, %s15
      %s211 = smul.u32 8, %s15
      %p212 = scmp.lt.s32.totalorder %s211, 15
      %s213 = scalar_select %p212, %s211, 15
      %s214 = smul.addr %s213, 4
      %s215 = scalar_lea.vmem %s3, %s214
      %s216 = smul.u32 8, %s15
      %s217 = smul.u32 8, %s15
      %p218 = scmp.lt.s32.totalorder %s217, 15
      %s219 = scalar_select %p218, %s217, 15
      %s220 = smul.addr %s219, 8
      %s221 = scalar_lea.vmem %s4, %s220
      %s222 = smul.u32 8, %s15
      %v224 = vld [vmem:[%s209] sm:$0xf]
      %v225 = vld [vmem:[%s209 + $0x4] sm:$0xf]
      %v226 = vld [vmem:[%s209 + $0x8] sm:$0xf]
      %v227 = vld [vmem:[%s209 + $0xc] sm:$0xf]
      %v228 = vld [vmem:[%s209 + $0x10] sm:$0xf]
      %v229 = vld [vmem:[%s209 + $0x14] sm:$0xf]
      %v230 = vld [vmem:[%s209 + $0x18] sm:$0xf]
      %v231 = vld [vmem:[%s209 + $0x1c] sm:$0xf]
      %v232 = vld [vmem:[%s1] sm:$0xf]
      %v233 = vld [vmem:[%s1 + $0x4] sm:$0xf]
      %v234 = vld [vmem:[%s1 + $0x8] sm:$0xf]
      %v235 = vld [vmem:[%s1 + $0xc] sm:$0xf]
      %v236 = vld [vmem:[%s2] sm:$0x1]
      %v238 = vperm.slane %v236, 0
      %v248 = vunpack.c.l.b16 %v224
      %v249 = vunpack.c.l.b16 %v225
      %v250 = vunpack.c.l.b16 %v226
      %v251 = vunpack.c.l.b16 %v227
      %v252 = vunpack.c.l.b16 %v228
      %v253 = vunpack.c.l.b16 %v229
      %v254 = vunpack.c.l.b16 %v230
      %v255 = vunpack.c.l.b16 %v231
      %v256 = vpack.c.b16 %v249, %v248
      %v257 = vpack.c.b16 %v251, %v250
      %v258 = vpack.c.b16 %v253, %v252
      %v259 = vpack.c.b16 %v255, %v254
      %v264 = vunpack.c.l.b16 %v232
      %v265 = vunpack.c.l.b16 %v233
      %v266 = vunpack.c.l.b16 %v234
      %v267 = vunpack.c.l.b16 %v235
      %v268 = vpack.c.b16 %v265, %v264
      %v269 = vpack.c.b16 %v267, %v266
      %vm272 = vcmask 261120
      %v274 = vsel %vm272, %v256, 0
      %v277 = vsel %vm272, %v257, 0
      %v280 = vsel %vm272, %v258, 0
      %v283 = vsel %vm272, %v259, 0
      %285 = vmatpush.bf16.msra.mxu0 0
      %286 = vmatpush.bf16.msra.mxu0 0
      %287 = vmatpush.bf16.msra.mxu0 0
      %288 = vmatpush.bf16.msra.mxu0 0
      %289 = vmatpush.bf16.msra.mxu0 0
      %290 = vmatpush.bf16.msra.mxu0 0
      %291 = vmatpush.bf16.msra.mxu0 %v269
      %292 = vmatpush.bf16.msra.mxu0 %v268
      %293 = vmatmul.bf16.gmra.mxu0 %v274
      %v294 = vpop.f32.mrf.mxu0
      %v295 = vadd.f32 %v238, %v294
      %v296 = vpop.f32.mrf.mxu0
      %v297 = vadd.f32 %v238, %v296
      %298 = vmatmul.bf16.gmra.mxu0 %v277
      %v299 = vpop.f32.mrf.mxu0
      %v300 = vadd.f32 %v238, %v299
      %v301 = vpop.f32.mrf.mxu0
      %v302 = vadd.f32 %v238, %v301
      %303 = vmatmul.bf16.gmra.mxu0 %v280
      %v304 = vpop.f32.mrf.mxu0
      %v305 = vadd.f32 %v238, %v304
      %v306 = vpop.f32.mrf.mxu0
      %v307 = vadd.f32 %v238, %v306
      %308 = vmatmul.bf16.gmra.mxu0 %v283
      %v309 = vpop.f32.mrf.mxu0
      %v310 = vadd.f32 %v238, %v309
      %v311 = vpop.f32.mrf.mxu0
      %v312 = vadd.f32 %v238, %v311
      %313 = vdwg.mxu0
      %v314 = vmax.f32 %v295, 0.0
      %v315 = vmax.f32 %v297, 0.0
      %v316 = vmax.f32 %v300, 0.0
      %v317 = vmax.f32 %v302, 0.0
      %v318 = vmax.f32 %v305, 0.0
      %v319 = vmax.f32 %v307, 0.0
      %v320 = vmax.f32 %v310, 0.0
      %v321 = vmax.f32 %v312, 0.0
      %v322 = vld [vmem:[%s215] sm:$0xf]
      %v323 = vld [vmem:[%s215 + $0x4] sm:$0xf]
      %v324 = vld [vmem:[%s215 + $0x8] sm:$0xf]
      %v325 = vld [vmem:[%s215 + $0xc] sm:$0xf]
      %v326 = vld [vmem:[%s215 + $0x10] sm:$0xf]
      %v327 = vld [vmem:[%s215 + $0x14] sm:$0xf]
      %v328 = vld [vmem:[%s215 + $0x18] sm:$0xf]
      %v329 = vld [vmem:[%s215 + $0x1c] sm:$0xf]
      %v330 = vunpack.c.l.bf16 %v322
      %v331 = vunpack.c.l.bf16 %v323
      %v332 = vunpack.c.l.bf16 %v324
      %v333 = vunpack.c.l.bf16 %v325
      %v334 = vunpack.c.l.bf16 %v326
      %v335 = vunpack.c.l.bf16 %v327
      %v336 = vunpack.c.l.bf16 %v328
      %v337 = vunpack.c.l.bf16 %v329
      %v338 = vadd.f32 %v314, %v330
      %v339 = vadd.f32 %v315, %v331
      %v340 = vadd.f32 %v316, %v332
      %v341 = vadd.f32 %v317, %v333
      %v342 = vadd.f32 %v318, %v334
      %v343 = vadd.f32 %v319, %v335
      %v344 = vadd.f32 %v320, %v336
      %v345 = vadd.f32 %v321, %v337
      %vm346 = vcmask 457728
      %347 = vst.msk [vmem:[%s221] sm:$0xff] %vm346, %v338
      %348 = vst.msk [vmem:[%s221 + $0x8] sm:$0xff] %vm346, %v339
      %349 = vst.msk [vmem:[%s221 + $0x10] sm:$0xff] %vm346, %v340
      %350 = vst.msk [vmem:[%s221 + $0x18] sm:$0xff] %vm346, %v341
      %351 = vst.msk [vmem:[%s221 + $0x20] sm:$0xff] %vm346, %v342
      %352 = vst.msk [vmem:[%s221 + $0x28] sm:$0xff] %vm346, %v343
      %353 = vst.msk [vmem:[%s221 + $0x30] sm:$0xff] %vm346, %v344
      %354 = vst.msk [vmem:[%s221 + $0x38] sm:$0xff] %vm346, %v345
      %s355 = smul.u32 8, %s15
      %p356 = scmp.lt.s32.totalorder %s355, 15
      %s357 = scalar_select %p356, %s355, 15
      %s358 = smul.addr %s357, 8
      %s359 = scalar_lea.vmem %s4, %s358
      // Predicated region
      $region37: #{psm_gnn_forward.31} parent=35 // pred_check
        %p360 = pneg %p127
      $region38: #{psm_gnn_forward.31} parent=35 // pred_check_branch
        %362 = sbr.rel (%p360) target = $region40
      $region39: #{psm_gnn_forward.31} parent=35 // pred_region
        %s363 = smul.u32 8, %s15
      $region40: #{psm_gnn_forward.31} parent=35 // pred_fallthru
        _
    $region36: #{psm_gnn_forward.31} parent=5 // pred_fallthru
      _
    %p364 = scmp.le.s32.totalorder 2, %s10
    // Predicated region
    $region41: #{psm_gnn_forward.31} parent=5 // pred_check
      %p365 = pneg %p364
    $region42: #{psm_gnn_forward.31} parent=5 // pred_check_branch
      %367 = sbr.rel (%p365) target = $region44
    $region43: #{psm_gnn_forward.31} parent=5 // pred_region
      %s368 = ssub.s32 %s10, 2
      // Predicated region
      $region45: #{psm_gnn_forward.31} parent=43 // pred_check
        %p369 = pneg %p133
      $region46: #{psm_gnn_forward.31} parent=43 // pred_check_branch
        %371 = sbr.rel (%p369) target = $region48
      $region47: #{psm_gnn_forward.31} parent=43 // pred_region
        %s372 = smul.u32 8, %s16
        %p373 = scmp.lt.s32.totalorder %s372, 15
        %s374 = scalar_select %p373, %s372, 15
        %s375 = smul.addr %s374, 8
        %s376 = scalar_lea.vmem %s4, %s375
      $region48: #{psm_gnn_forward.31} parent=43 // pred_fallthru
        _
    $region44: #{psm_gnn_forward.31} parent=5 // pred_fallthru
      _
  $region6: #{psm_gnn_forward.31} parent=0 // loop_footer
    %s14 = sadd.s32 1, %s10
  $region7: #{psm_gnn_forward.31} parent=0 // loop_footer_branch
    %9 = sbr.rel target = $region3
  $region8: #{psm_gnn_forward.31} parent=0 // loop_exit
    _

</llo_original>
